<compile_context>
chip_gen: v7x
topology: tpu7x:2x2x1
jax: 0.10.0
libtpu: 0.0.40
codegen_flags: <defaults>
</compile_context>

<pallas_src>
import jax
import jax.numpy as jnp
from jax.experimental import pallas as pl
from jax.experimental.pallas import tpu as pltpu


CP = 128      # per-tap channel block, zero-padded to a full lane tile (alignment)
XPAD = 8      # left/right spatial pad columns in the scratch plane (sublane aligned)


# ---------------------------------------------------------------------------
# Fused kernel: conv1 -> conv2 -> (conv3 + avgpool + fc folded)
# ---------------------------------------------------------------------------
def fused_discriminator_kernel(x_ref, w1_ref, b1_ref, w2_ref, b2_ref,
                               w3f_ref, b3f_ref, o_ref,
                               xp1, xp2, xp3, patches):
    # x_ref  : (1, H, W, C0)   NHWC input block (cover || stego channels)
    # w1_ref : (9*CP, C1)      conv1 weights, im2col-packed, lane padded
    # b1_ref : (1, C1)
    # w2_ref : (9*CP, C2)      conv2 weights
    # b2_ref : (1, C2)
    # w3f_ref: (1, 9*CP)       conv3 weights with the fc folded in
    # b3f_ref: (1, 1)          b3 @ fc_w + fc_b
    # o_ref  : (1, 1, 1)       score for this batch element
    # xp*    : (H+2, W+2*XPAD, CP) zero-padded activation planes (VMEM scratch)
    # patches: (H*W, 9*CP)     shared im2col patch matrix (VMEM scratch)
    H = x_ref.shape[1]
    W = x_ref.shape[2]
    C0 = x_ref.shape[3]
    C1 = b1_ref.shape[1]
    C2 = b2_ref.shape[1]
    HW = H * W
    X0 = XPAD                      # sublane-aligned column where the image starts

    # ---- in-VMEM zero padding: clear the planes, then fill the interior ----
    xp1[...] = jnp.zeros_like(xp1)
    xp2[...] = jnp.zeros_like(xp2)
    xp3[...] = jnp.zeros_like(xp3)
    xp1[1:H + 1, X0:X0 + W, :C0] = x_ref[0]

    def build_patches(xp_ref):
        # im2col: 9 shifted (HW, CP) tap windows -> lane-aligned 128-wide columns
        # of the shared patch matrix (every store is a full lane tile).
        for dy in range(3):
            for dx in range(3):
                t = dy * 3 + dx
                col = X0 - 1 + dx
                piece = xp_ref[dy:dy + H, col:col + W, :]
                patches[:, t * CP:(t + 1) * CP] = piece.reshape(HW, CP)

    # ---- conv1: single im2col matmul on the MXU ----
    build_patches(xp1)
    y1 = jnp.dot(patches[...], w1_ref[...],
                 preferred_element_type=jnp.float32) + b1_ref[...]
    xp2[1:H + 1, X0:X0 + W, :C1] = y1.reshape(H, W, C1)

    # ---- conv2 ----
    build_patches(xp2)
    y2 = jnp.dot(patches[...], w2_ref[...],
                 preferred_element_type=jnp.float32) + b2_ref[...]
    xp3[1:H + 1, X0:X0 + W, :C2] = y2.reshape(H, W, C2)

    # ---- conv3 + AdaptiveAvgPool2d(1) + fc, folded (exact: network is affine) ----
    # The spatial mean commutes with the linear map: pool the patch matrix first
    # (sublane reduce) and finish with a VPU multiply-reduce instead of an N=1
    # MXU matmul.
    build_patches(xp3)
    pooled = jnp.mean(patches[...], axis=0, keepdims=True)            # (1, 9*CP)
    score = jnp.sum(pooled * w3f_ref[...], axis=1, keepdims=True)     # (1, 1)
    score = score + b3f_ref[...]
    o_ref[...] = score.reshape(1, 1, 1)


# ---------------------------------------------------------------------------
# Wrapper
# ---------------------------------------------------------------------------
def _pack_conv_weight(w):
    """(3, 3, Cin, Cout) -> (9*CP, Cout); each tap's Cin rows zero-padded to CP."""
    kh, kw, cin, cout = w.shape
    wt = w.reshape(kh * kw, cin, cout)
    wt = jnp.pad(wt, ((0, 0), (0, CP - cin), (0, 0)))
    return wt.reshape(kh * kw * CP, cout)


def discriminator_forward(params, cover_nchw, stego_nchw):
    """Matches Discriminator.forward: cat -> conv1 -> conv2 -> conv3 -> pool -> fc."""
    # NCHW -> NHWC and channel concat (== torch.cat(dim=1)); tiny, done in XLA.
    cover = jnp.transpose(cover_nchw, (0, 2, 3, 1))
    stego = jnp.transpose(stego_nchw, (0, 2, 3, 1))
    x = jnp.concatenate([cover, stego], axis=-1)                       # (B, H, W, 6)
    B, H, W, C0 = x.shape
    assert W % 8 == 0, "W must be a multiple of 8 for the sublane-aligned layout"

    C1 = params["b1"].shape[1]
    C2 = params["b2"].shape[1]

    # Pack conv weights for the im2col matmuls (tiny, pure XLA).
    w1p = _pack_conv_weight(params["w1"])                              # (9*CP, C1)
    w2p = _pack_conv_weight(params["w2"])                              # (9*CP, C2)
    # Fold the fc into conv3 (exact: no nonlinearity between conv3, pool and fc).
    w3f = jnp.einsum("hwio,o->hwi", params["w3"], params["fc_w"][:, 0])  # (3,3,C2)
    w3f = jnp.pad(w3f.reshape(9, C2), ((0, 0), (0, CP - C2))).reshape(1, 9 * CP)
    b3f = params["b3"] @ params["fc_w"] + params["fc_b"]               # (1, 1)

    out = pl.pallas_call(
        fused_discriminator_kernel,
        out_shape=jax.ShapeDtypeStruct((B, 1, 1), jnp.float32),
        grid_spec=pltpu.PrefetchScalarGridSpec(
            num_scalar_prefetch=0,
            grid=(B,),
            in_specs=[
                pl.BlockSpec((1, H, W, C0), lambda i: (i, 0, 0, 0)),
                pl.BlockSpec((9 * CP, C1), lambda i: (0, 0)),
                pl.BlockSpec((1, C1), lambda i: (0, 0)),
                pl.BlockSpec((9 * CP, C2), lambda i: (0, 0)),
                pl.BlockSpec((1, C2), lambda i: (0, 0)),
                pl.BlockSpec((1, 9 * CP), lambda i: (0, 0)),
                pl.BlockSpec((1, 1), lambda i: (0, 0)),
            ],
            out_specs=pl.BlockSpec((1, 1, 1), lambda i: (i, 0, 0)),
            scratch_shapes=[
                pltpu.VMEM((H + 2, W + 2 * XPAD, CP), jnp.float32),    # xp1
                pltpu.VMEM((H + 2, W + 2 * XPAD, CP), jnp.float32),    # xp2
                pltpu.VMEM((H + 2, W + 2 * XPAD, CP), jnp.float32),    # xp3
                pltpu.VMEM((H * W, 9 * CP), jnp.float32),              # patches
            ],
        ),
        compiler_params=pltpu.CompilerParams(
            dimension_semantics=("parallel",)),    # v7x: two TCs split the batch
    )(x, w1p, params["b1"], w2p, params["b2"], w3f, b3f)
    return out.reshape(B, 1)


def init_params(key, in_channels=6, base_channels=8):
    c1, c2, c3 = base_channels, base_channels * 2, base_channels * 4
    ks = jax.random.split(key, 8)
    scale = 0.1
    return {
        "w1": scale * jax.random.normal(ks[0], (3, 3, in_channels, c1), jnp.float32),
        "b1": scale * jax.random.normal(ks[1], (1, c1), jnp.float32),
        "w2": scale * jax.random.normal(ks[2], (3, 3, c1, c2), jnp.float32),
        "b2": scale * jax.random.normal(ks[3], (1, c2), jnp.float32),
        "w3": scale * jax.random.normal(ks[4], (3, 3, c2, c3), jnp.float32),
        "b3": scale * jax.random.normal(ks[5], (1, c3), jnp.float32),
        "fc_w": scale * jax.random.normal(ks[6], (c3, 1), jnp.float32),
        "fc_b": scale * jax.random.normal(ks[7], (1, 1), jnp.float32),
    }


# ---------------------------------------------------------------------------
# Plain-JAX reference (sanity check of the fused Pallas kernel)
# ---------------------------------------------------------------------------
def reference_forward(params, cover_nchw, stego_nchw):
    x = jnp.concatenate([cover_nchw, stego_nchw], axis=1)             # NCHW
    def conv(x, w, b):
        y = jax.lax.conv_general_dilated(
            x, w, window_strides=(1, 1), padding="SAME",
            dimension_numbers=("NCHW", "HWIO", "NCHW"))
        return y + b[0][None, :, None, None]
    x = conv(x, params["w1"], params["b1"])
    x = conv(x, params["w2"], params["b2"])
    x = conv(x, params["w3"], params["b3"])
    pooled = jnp.mean(x, axis=(2, 3))                                  # (B, C)
    return pooled @ params["fc_w"] + params["fc_b"]


if __name__ == "__main__":
    key = jax.random.PRNGKey(0)
    k_param, k_cover, k_stego = jax.random.split(key, 3)

    B, C_each, H, W = 2, 3, 16, 16          # cover/stego each 3 channels -> concat 6
    base_channels = 8

    params = init_params(k_param, in_channels=2 * C_each, base_channels=base_channels)
    cover = jax.random.normal(k_cover, (B, C_each, H, W), jnp.float32)   # NCHW
    stego = jax.random.normal(k_stego, (B, C_each, H, W), jnp.float32)   # NCHW

    fwd = jax.jit(discriminator_forward)
    score = jax.block_until_ready(fwd(params, cover, stego))

    ref = reference_forward(params, cover, stego)
    assert score.shape == (B, 1)
    assert jnp.allclose(score, ref, rtol=1e-3, atol=1e-3), (score, ref)

    print("KERNEL_OK")
</pallas_src>

<mosaic_0001>
module attributes {stable_mosaic.version = 11 : i64} {
  func.func @fused_discriminator_kernel(%arg0: i32, %arg1: memref<1x16x16x6xf32, #tpu.memory_space<vmem>>, %arg2: memref<1152x8xf32, #tpu.memory_space<vmem>>, %arg3: memref<1x8xf32, #tpu.memory_space<vmem>>, %arg4: memref<1152x16xf32, #tpu.memory_space<vmem>>, %arg5: memref<1x16xf32, #tpu.memory_space<vmem>>, %arg6: memref<1x1152xf32, #tpu.memory_space<vmem>>, %arg7: memref<1x1xf32, #tpu.memory_space<vmem>>, %arg8: memref<1x1x1xf32, #tpu.memory_space<vmem>>, %arg9: memref<18x32x128xf32, #tpu.memory_space<vmem>>, %arg10: memref<18x32x128xf32, #tpu.memory_space<vmem>>, %arg11: memref<18x32x128xf32, #tpu.memory_space<vmem>>, %arg12: memref<256x1152xf32, #tpu.memory_space<vmem>>) attributes {dimension_semantics = [#tpu.dimension_semantics<parallel>], iteration_bounds = array<i64: 2>, scalar_prefetch = 0 : i64, scratch_operands = 4 : i64, tpu.core_type = #tpu.core_type<tc>, window_params = [{transform_indices = @transform_0, window_bounds = array<i64: 1, 16, 16, 6>}, {pipeline_mode = #tpu.pipeline_mode<synchronous>, transform_indices = @transform_1, window_bounds = array<i64: 1152, 8>}, {pipeline_mode = #tpu.pipeline_mode<synchronous>, transform_indices = @transform_2, window_bounds = array<i64: 1, 8>}, {pipeline_mode = #tpu.pipeline_mode<synchronous>, transform_indices = @transform_3, window_bounds = array<i64: 1152, 16>}, {pipeline_mode = #tpu.pipeline_mode<synchronous>, transform_indices = @transform_4, window_bounds = array<i64: 1, 16>}, {pipeline_mode = #tpu.pipeline_mode<synchronous>, transform_indices = @transform_5, window_bounds = array<i64: 1, 1152>}, {pipeline_mode = #tpu.pipeline_mode<synchronous>, transform_indices = @transform_6, window_bounds = array<i64: 1, 1>}, {transform_indices = @transform_7, window_bounds = array<i64: 1, 1, 1>}]} {
    %cst = arith.constant 0.000000e+00 : f32
    %0 = vector.broadcast %cst : f32 to vector<18x32x128xf32>
    %c0 = arith.constant 0 : index
    %c0_0 = arith.constant 0 : index
    %c0_1 = arith.constant 0 : index
    %1 = vector.load %arg9[%c0, %c0_0, %c0_1] : memref<18x32x128xf32, #tpu.memory_space<vmem>>, vector<18x32x128xf32>
    tpu.vector_store %arg9[%c0, %c0_0, %c0_1], %0 {strides = array<i32>} : memref<18x32x128xf32, #tpu.memory_space<vmem>>, vector<18x32x128xf32>,
    %cst_2 = arith.constant 0.000000e+00 : f32
    %2 = vector.broadcast %cst_2 : f32 to vector<18x32x128xf32>
    %c0_3 = arith.constant 0 : index
    %c0_4 = arith.constant 0 : index
    %c0_5 = arith.constant 0 : index
    %3 = vector.load %arg10[%c0_3, %c0_4, %c0_5] : memref<18x32x128xf32, #tpu.memory_space<vmem>>, vector<18x32x128xf32>
    tpu.vector_store %arg10[%c0_3, %c0_4, %c0_5], %2 {strides = array<i32>} : memref<18x32x128xf32, #tpu.memory_space<vmem>>, vector<18x32x128xf32>,
    %cst_6 = arith.constant 0.000000e+00 : f32
    %4 = vector.broadcast %cst_6 : f32 to vector<18x32x128xf32>
    %c0_7 = arith.constant 0 : index
    %c0_8 = arith.constant 0 : index
    %c0_9 = arith.constant 0 : index
    %5 = vector.load %arg11[%c0_7, %c0_8, %c0_9] : memref<18x32x128xf32, #tpu.memory_space<vmem>>, vector<18x32x128xf32>
    tpu.vector_store %arg11[%c0_7, %c0_8, %c0_9], %4 {strides = array<i32>} : memref<18x32x128xf32, #tpu.memory_space<vmem>>, vector<18x32x128xf32>,
    %c0_10 = arith.constant 0 : index
    %c0_11 = arith.constant 0 : index
    %c0_12 = arith.constant 0 : index
    %c0_13 = arith.constant 0 : index
    %6 = vector.load %arg1[%c0_10, %c0_11, %c0_12, %c0_13] : memref<1x16x16x6xf32, #tpu.memory_space<vmem>>, vector<1x16x16x6xf32>
    %7 = vector.shape_cast %6 : vector<1x16x16x6xf32> to vector<16x16x6xf32>
    %c1 = arith.constant 1 : index
    %c8 = arith.constant 8 : index
    %c0_14 = arith.constant 0 : index
    %8 = vector.load %arg9[%c1, %c8, %c0_14] : memref<18x32x128xf32, #tpu.memory_space<vmem>>, vector<16x16x6xf32>
    tpu.vector_store %arg9[%c1, %c8, %c0_14], %7 {strides = array<i32>} : memref<18x32x128xf32, #tpu.memory_space<vmem>>, vector<16x16x6xf32>,
    %c0_15 = arith.constant 0 : index
    %c7 = arith.constant 7 : index
    %c0_16 = arith.constant 0 : index
    %9 = vector.load %arg9[%c0_15, %c7, %c0_16] : memref<18x32x128xf32, #tpu.memory_space<vmem>>, vector<16x16x128xf32>
    %10 = vector.shape_cast %9 : vector<16x16x128xf32> to vector<256x128xf32>
    %c0_17 = arith.constant 0 : index
    %c0_18 = arith.constant 0 : index
    %11 = vector.load %arg12[%c0_17, %c0_18] : memref<256x1152xf32, #tpu.memory_space<vmem>>, vector<256x128xf32>
    tpu.vector_store %arg12[%c0_17, %c0_18], %10 {strides = array<i32>} : memref<256x1152xf32, #tpu.memory_space<vmem>>, vector<256x128xf32>,
    %c0_19 = arith.constant 0 : index
    %c8_20 = arith.constant 8 : index
    %c0_21 = arith.constant 0 : index
    %12 = vector.load %arg9[%c0_19, %c8_20, %c0_21] : memref<18x32x128xf32, #tpu.memory_space<vmem>>, vector<16x16x128xf32>
    %13 = vector.shape_cast %12 : vector<16x16x128xf32> to vector<256x128xf32>
    %c0_22 = arith.constant 0 : index
    %c128 = arith.constant 128 : index
    %14 = vector.load %arg12[%c0_22, %c128] : memref<256x1152xf32, #tpu.memory_space<vmem>>, vector<256x128xf32>
    tpu.vector_store %arg12[%c0_22, %c128], %13 {strides = array<i32>} : memref<256x1152xf32, #tpu.memory_space<vmem>>, vector<256x128xf32>,
    %c0_23 = arith.constant 0 : index
    %c9 = arith.constant 9 : index
    %c0_24 = arith.constant 0 : index
    %15 = vector.load %arg9[%c0_23, %c9, %c0_24] : memref<18x32x128xf32, #tpu.memory_space<vmem>>, vector<16x16x128xf32>
    %16 = vector.shape_cast %15 : vector<16x16x128xf32> to vector<256x128xf32>
    %c0_25 = arith.constant 0 : index
    %c256 = arith.constant 256 : index
    %17 = vector.load %arg12[%c0_25, %c256] : memref<256x1152xf32, #tpu.memory_space<vmem>>, vector<256x128xf32>
    tpu.vector_store %arg12[%c0_25, %c256], %16 {strides = array<i32>} : memref<256x1152xf32, #tpu.memory_space<vmem>>, vector<256x128xf32>,
    %c1_26 = arith.constant 1 : index
    %c7_27 = arith.constant 7 : index
    %c0_28 = arith.constant 0 : index
    %18 = vector.load %arg9[%c1_26, %c7_27, %c0_28] : memref<18x32x128xf32, #tpu.memory_space<vmem>>, vector<16x16x128xf32>
    %19 = vector.shape_cast %18 : vector<16x16x128xf32> to vector<256x128xf32>
    %c0_29 = arith.constant 0 : index
    %c384 = arith.constant 384 : index
    %20 = vector.load %arg12[%c0_29, %c384] : memref<256x1152xf32, #tpu.memory_space<vmem>>, vector<256x128xf32>
    tpu.vector_store %arg12[%c0_29, %c384], %19 {strides = array<i32>} : memref<256x1152xf32, #tpu.memory_space<vmem>>, vector<256x128xf32>,
    %c1_30 = arith.constant 1 : index
    %c8_31 = arith.constant 8 : index
    %c0_32 = arith.constant 0 : index
    %21 = vector.load %arg9[%c1_30, %c8_31, %c0_32] : memref<18x32x128xf32, #tpu.memory_space<vmem>>, vector<16x16x128xf32>
    %22 = vector.shape_cast %21 : vector<16x16x128xf32> to vector<256x128xf32>
    %c0_33 = arith.constant 0 : index
    %c512 = arith.constant 512 : index
    %23 = vector.load %arg12[%c0_33, %c512] : memref<256x1152xf32, #tpu.memory_space<vmem>>, vector<256x128xf32>
    tpu.vector_store %arg12[%c0_33, %c512], %22 {strides = array<i32>} : memref<256x1152xf32, #tpu.memory_space<vmem>>, vector<256x128xf32>,
    %c1_34 = arith.constant 1 : index
    %c9_35 = arith.constant 9 : index
    %c0_36 = arith.constant 0 : index
    %24 = vector.load %arg9[%c1_34, %c9_35, %c0_36] : memref<18x32x128xf32, #tpu.memory_space<vmem>>, vector<16x16x128xf32>
    %25 = vector.shape_cast %24 : vector<16x16x128xf32> to vector<256x128xf32>
    %c0_37 = arith.constant 0 : index
    %c640 = arith.constant 640 : index
    %26 = vector.load %arg12[%c0_37, %c640] : memref<256x1152xf32, #tpu.memory_space<vmem>>, vector<256x128xf32>
    tpu.vector_store %arg12[%c0_37, %c640], %25 {strides = array<i32>} : memref<256x1152xf32, #tpu.memory_space<vmem>>, vector<256x128xf32>,
    %c2 = arith.constant 2 : index
    %c7_38 = arith.constant 7 : index
    %c0_39 = arith.constant 0 : index
    %27 = vector.load %arg9[%c2, %c7_38, %c0_39] : memref<18x32x128xf32, #tpu.memory_space<vmem>>, vector<16x16x128xf32>
    %28 = vector.shape_cast %27 : vector<16x16x128xf32> to vector<256x128xf32>
    %c0_40 = arith.constant 0 : index
    %c768 = arith.constant 768 : index
    %29 = vector.load %arg12[%c0_40, %c768] : memref<256x1152xf32, #tpu.memory_space<vmem>>, vector<256x128xf32>
    tpu.vector_store %arg12[%c0_40, %c768], %28 {strides = array<i32>} : memref<256x1152xf32, #tpu.memory_space<vmem>>, vector<256x128xf32>,
    %c2_41 = arith.constant 2 : index
    %c8_42 = arith.constant 8 : index
    %c0_43 = arith.constant 0 : index
    %30 = vector.load %arg9[%c2_41, %c8_42, %c0_43] : memref<18x32x128xf32, #tpu.memory_space<vmem>>, vector<16x16x128xf32>
    %31 = vector.shape_cast %30 : vector<16x16x128xf32> to vector<256x128xf32>
    %c0_44 = arith.constant 0 : index
    %c896 = arith.constant 896 : index
    %32 = vector.load %arg12[%c0_44, %c896] : memref<256x1152xf32, #tpu.memory_space<vmem>>, vector<256x128xf32>
    tpu.vector_store %arg12[%c0_44, %c896], %31 {strides = array<i32>} : memref<256x1152xf32, #tpu.memory_space<vmem>>, vector<256x128xf32>,
    %c2_45 = arith.constant 2 : index
    %c9_46 = arith.constant 9 : index
    %c0_47 = arith.constant 0 : index
    %33 = vector.load %arg9[%c2_45, %c9_46, %c0_47] : memref<18x32x128xf32, #tpu.memory_space<vmem>>, vector<16x16x128xf32>
    %34 = vector.shape_cast %33 : vector<16x16x128xf32> to vector<256x128xf32>
    %c0_48 = arith.constant 0 : index
    %c1024 = arith.constant 1024 : index
    %35 = vector.load %arg12[%c0_48, %c1024] : memref<256x1152xf32, #tpu.memory_space<vmem>>, vector<256x128xf32>
    tpu.vector_store %arg12[%c0_48, %c1024], %34 {strides = array<i32>} : memref<256x1152xf32, #tpu.memory_space<vmem>>, vector<256x128xf32>,
    %c0_49 = arith.constant 0 : index
    %c0_50 = arith.constant 0 : index
    %36 = vector.load %arg12[%c0_49, %c0_50] : memref<256x1152xf32, #tpu.memory_space<vmem>>, vector<256x1152xf32>
    %c0_51 = arith.constant 0 : index
    %c0_52 = arith.constant 0 : index
    %37 = vector.load %arg2[%c0_51, %c0_52] : memref<1152x8xf32, #tpu.memory_space<vmem>>, vector<1152x8xf32>
    %cst_53 = arith.constant dense<0.000000e+00> : vector<256x8xf32>
    %38 = tpu.matmul %36, %37, %cst_53 {dimension_numbers = #tpu.dot_dimension_numbers<[1], [0], [0], [1], [0, 0, 1, 1], [], []>} : vector<256x1152xf32>, vector<1152x8xf32>, vector<256x8xf32> -> vector<256x8xf32>
    %c0_54 = arith.constant 0 : index
    %c0_55 = arith.constant 0 : index
    %39 = vector.load %arg3[%c0_54, %c0_55] : memref<1x8xf32, #tpu.memory_space<vmem>>, vector<1x8xf32>
    %40 = vector.broadcast %39 : vector<1x8xf32> to vector<256x8xf32>
    %41 = arith.addf %38, %40 : vector<256x8xf32>
    %42 = vector.shape_cast %41 : vector<256x8xf32> to vector<16x16x8xf32>
    %c1_56 = arith.constant 1 : index
    %c8_57 = arith.constant 8 : index
    %c0_58 = arith.constant 0 : index
    %43 = vector.load %arg10[%c1_56, %c8_57, %c0_58] : memref<18x32x128xf32, #tpu.memory_space<vmem>>, vector<16x16x8xf32>
    tpu.vector_store %arg10[%c1_56, %c8_57, %c0_58], %42 {strides = array<i32>} : memref<18x32x128xf32, #tpu.memory_space<vmem>>, vector<16x16x8xf32>,
    %c0_59 = arith.constant 0 : index
    %c7_60 = arith.constant 7 : index
    %c0_61 = arith.constant 0 : index
    %44 = vector.load %arg10[%c0_59, %c7_60, %c0_61] : memref<18x32x128xf32, #tpu.memory_space<vmem>>, vector<16x16x128xf32>
    %45 = vector.shape_cast %44 : vector<16x16x128xf32> to vector<256x128xf32>
    %c0_62 = arith.constant 0 : index
    %c0_63 = arith.constant 0 : index
    %46 = vector.load %arg12[%c0_62, %c0_63] : memref<256x1152xf32, #tpu.memory_space<vmem>>, vector<256x128xf32>
    tpu.vector_store %arg12[%c0_62, %c0_63], %45 {strides = array<i32>} : memref<256x1152xf32, #tpu.memory_space<vmem>>, vector<256x128xf32>,
    %c0_64 = arith.constant 0 : index
    %c8_65 = arith.constant 8 : index
    %c0_66 = arith.constant 0 : index
    %47 = vector.load %arg10[%c0_64, %c8_65, %c0_66] : memref<18x32x128xf32, #tpu.memory_space<vmem>>, vector<16x16x128xf32>
    %48 = vector.shape_cast %47 : vector<16x16x128xf32> to vector<256x128xf32>
    %c0_67 = arith.constant 0 : index
    %c128_68 = arith.constant 128 : index
    %49 = vector.load %arg12[%c0_67, %c128_68] : memref<256x1152xf32, #tpu.memory_space<vmem>>, vector<256x128xf32>
    tpu.vector_store %arg12[%c0_67, %c128_68], %48 {strides = array<i32>} : memref<256x1152xf32, #tpu.memory_space<vmem>>, vector<256x128xf32>,
    %c0_69 = arith.constant 0 : index
    %c9_70 = arith.constant 9 : index
    %c0_71 = arith.constant 0 : index
    %50 = vector.load %arg10[%c0_69, %c9_70, %c0_71] : memref<18x32x128xf32, #tpu.memory_space<vmem>>, vector<16x16x128xf32>
    %51 = vector.shape_cast %50 : vector<16x16x128xf32> to vector<256x128xf32>
    %c0_72 = arith.constant 0 : index
    %c256_73 = arith.constant 256 : index
    %52 = vector.load %arg12[%c0_72, %c256_73] : memref<256x1152xf32, #tpu.memory_space<vmem>>, vector<256x128xf32>
    tpu.vector_store %arg12[%c0_72, %c256_73], %51 {strides = array<i32>} : memref<256x1152xf32, #tpu.memory_space<vmem>>, vector<256x128xf32>,
    %c1_74 = arith.constant 1 : index
    %c7_75 = arith.constant 7 : index
    %c0_76 = arith.constant 0 : index
    %53 = vector.load %arg10[%c1_74, %c7_75, %c0_76] : memref<18x32x128xf32, #tpu.memory_space<vmem>>, vector<16x16x128xf32>
    %54 = vector.shape_cast %53 : vector<16x16x128xf32> to vector<256x128xf32>
    %c0_77 = arith.constant 0 : index
    %c384_78 = arith.constant 384 : index
    %55 = vector.load %arg12[%c0_77, %c384_78] : memref<256x1152xf32, #tpu.memory_space<vmem>>, vector<256x128xf32>
    tpu.vector_store %arg12[%c0_77, %c384_78], %54 {strides = array<i32>} : memref<256x1152xf32, #tpu.memory_space<vmem>>, vector<256x128xf32>,
    %c1_79 = arith.constant 1 : index
    %c8_80 = arith.constant 8 : index
    %c0_81 = arith.constant 0 : index
    %56 = vector.load %arg10[%c1_79, %c8_80, %c0_81] : memref<18x32x128xf32, #tpu.memory_space<vmem>>, vector<16x16x128xf32>
    %57 = vector.shape_cast %56 : vector<16x16x128xf32> to vector<256x128xf32>
    %c0_82 = arith.constant 0 : index
    %c512_83 = arith.constant 512 : index
    %58 = vector.load %arg12[%c0_82, %c512_83] : memref<256x1152xf32, #tpu.memory_space<vmem>>, vector<256x128xf32>
    tpu.vector_store %arg12[%c0_82, %c512_83], %57 {strides = array<i32>} : memref<256x1152xf32, #tpu.memory_space<vmem>>, vector<256x128xf32>,
    %c1_84 = arith.constant 1 : index
    %c9_85 = arith.constant 9 : index
    %c0_86 = arith.constant 0 : index
    %59 = vector.load %arg10[%c1_84, %c9_85, %c0_86] : memref<18x32x128xf32, #tpu.memory_space<vmem>>, vector<16x16x128xf32>
    %60 = vector.shape_cast %59 : vector<16x16x128xf32> to vector<256x128xf32>
    %c0_87 = arith.constant 0 : index
    %c640_88 = arith.constant 640 : index
    %61 = vector.load %arg12[%c0_87, %c640_88] : memref<256x1152xf32, #tpu.memory_space<vmem>>, vector<256x128xf32>
    tpu.vector_store %arg12[%c0_87, %c640_88], %60 {strides = array<i32>} : memref<256x1152xf32, #tpu.memory_space<vmem>>, vector<256x128xf32>,
    %c2_89 = arith.constant 2 : index
    %c7_90 = arith.constant 7 : index
    %c0_91 = arith.constant 0 : index
    %62 = vector.load %arg10[%c2_89, %c7_90, %c0_91] : memref<18x32x128xf32, #tpu.memory_space<vmem>>, vector<16x16x128xf32>
    %63 = vector.shape_cast %62 : vector<16x16x128xf32> to vector<256x128xf32>
    %c0_92 = arith.constant 0 : index
    %c768_93 = arith.constant 768 : index
    %64 = vector.load %arg12[%c0_92, %c768_93] : memref<256x1152xf32, #tpu.memory_space<vmem>>, vector<256x128xf32>
    tpu.vector_store %arg12[%c0_92, %c768_93], %63 {strides = array<i32>} : memref<256x1152xf32, #tpu.memory_space<vmem>>, vector<256x128xf32>,
    %c2_94 = arith.constant 2 : index
    %c8_95 = arith.constant 8 : index
    %c0_96 = arith.constant 0 : index
    %65 = vector.load %arg10[%c2_94, %c8_95, %c0_96] : memref<18x32x128xf32, #tpu.memory_space<vmem>>, vector<16x16x128xf32>
    %66 = vector.shape_cast %65 : vector<16x16x128xf32> to vector<256x128xf32>
    %c0_97 = arith.constant 0 : index
    %c896_98 = arith.constant 896 : index
    %67 = vector.load %arg12[%c0_97, %c896_98] : memref<256x1152xf32, #tpu.memory_space<vmem>>, vector<256x128xf32>
    tpu.vector_store %arg12[%c0_97, %c896_98], %66 {strides = array<i32>} : memref<256x1152xf32, #tpu.memory_space<vmem>>, vector<256x128xf32>,
    %c2_99 = arith.constant 2 : index
    %c9_100 = arith.constant 9 : index
    %c0_101 = arith.constant 0 : index
    %68 = vector.load %arg10[%c2_99, %c9_100, %c0_101] : memref<18x32x128xf32, #tpu.memory_space<vmem>>, vector<16x16x128xf32>
    %69 = vector.shape_cast %68 : vector<16x16x128xf32> to vector<256x128xf32>
    %c0_102 = arith.constant 0 : index
    %c1024_103 = arith.constant 1024 : index
    %70 = vector.load %arg12[%c0_102, %c1024_103] : memref<256x1152xf32, #tpu.memory_space<vmem>>, vector<256x128xf32>
    tpu.vector_store %arg12[%c0_102, %c1024_103], %69 {strides = array<i32>} : memref<256x1152xf32, #tpu.memory_space<vmem>>, vector<256x128xf32>,
    %c0_104 = arith.constant 0 : index
    %c0_105 = arith.constant 0 : index
    %71 = vector.load %arg12[%c0_104, %c0_105] : memref<256x1152xf32, #tpu.memory_space<vmem>>, vector<256x1152xf32>
    %c0_106 = arith.constant 0 : index
    %c0_107 = arith.constant 0 : index
    %72 = vector.load %arg4[%c0_106, %c0_107] : memref<1152x16xf32, #tpu.memory_space<vmem>>, vector<1152x16xf32>
    %cst_108 = arith.constant dense<0.000000e+00> : vector<256x16xf32>
    %73 = tpu.matmul %71, %72, %cst_108 {dimension_numbers = #tpu.dot_dimension_numbers<[1], [0], [0], [1], [0, 0, 1, 1], [], []>} : vector<256x1152xf32>, vector<1152x16xf32>, vector<256x16xf32> -> vector<256x16xf32>
    %c0_109 = arith.constant 0 : index
    %c0_110 = arith.constant 0 : index
    %74 = vector.load %arg5[%c0_109, %c0_110] : memref<1x16xf32, #tpu.memory_space<vmem>>, vector<1x16xf32>
    %75 = vector.broadcast %74 : vector<1x16xf32> to vector<256x16xf32>
    %76 = arith.addf %73, %75 : vector<256x16xf32>
    %77 = vector.shape_cast %76 : vector<256x16xf32> to vector<16x16x16xf32>
    %c1_111 = arith.constant 1 : index
    %c8_112 = arith.constant 8 : index
    %c0_113 = arith.constant 0 : index
    %78 = vector.load %arg11[%c1_111, %c8_112, %c0_113] : memref<18x32x128xf32, #tpu.memory_space<vmem>>, vector<16x16x16xf32>
    tpu.vector_store %arg11[%c1_111, %c8_112, %c0_113], %77 {strides = array<i32>} : memref<18x32x128xf32, #tpu.memory_space<vmem>>, vector<16x16x16xf32>,
    %c0_114 = arith.constant 0 : index
    %c7_115 = arith.constant 7 : index
    %c0_116 = arith.constant 0 : index
    %79 = vector.load %arg11[%c0_114, %c7_115, %c0_116] : memref<18x32x128xf32, #tpu.memory_space<vmem>>, vector<16x16x128xf32>
    %80 = vector.shape_cast %79 : vector<16x16x128xf32> to vector<256x128xf32>
    %c0_117 = arith.constant 0 : index
    %c0_118 = arith.constant 0 : index
    %81 = vector.load %arg12[%c0_117, %c0_118] : memref<256x1152xf32, #tpu.memory_space<vmem>>, vector<256x128xf32>
    tpu.vector_store %arg12[%c0_117, %c0_118], %80 {strides = array<i32>} : memref<256x1152xf32, #tpu.memory_space<vmem>>, vector<256x128xf32>,
    %c0_119 = arith.constant 0 : index
    %c8_120 = arith.constant 8 : index
    %c0_121 = arith.constant 0 : index
    %82 = vector.load %arg11[%c0_119, %c8_120, %c0_121] : memref<18x32x128xf32, #tpu.memory_space<vmem>>, vector<16x16x128xf32>
    %83 = vector.shape_cast %82 : vector<16x16x128xf32> to vector<256x128xf32>
    %c0_122 = arith.constant 0 : index
    %c128_123 = arith.constant 128 : index
    %84 = vector.load %arg12[%c0_122, %c128_123] : memref<256x1152xf32, #tpu.memory_space<vmem>>, vector<256x128xf32>
    tpu.vector_store %arg12[%c0_122, %c128_123], %83 {strides = array<i32>} : memref<256x1152xf32, #tpu.memory_space<vmem>>, vector<256x128xf32>,
    %c0_124 = arith.constant 0 : index
    %c9_125 = arith.constant 9 : index
    %c0_126 = arith.constant 0 : index
    %85 = vector.load %arg11[%c0_124, %c9_125, %c0_126] : memref<18x32x128xf32, #tpu.memory_space<vmem>>, vector<16x16x128xf32>
    %86 = vector.shape_cast %85 : vector<16x16x128xf32> to vector<256x128xf32>
    %c0_127 = arith.constant 0 : index
    %c256_128 = arith.constant 256 : index
    %87 = vector.load %arg12[%c0_127, %c256_128] : memref<256x1152xf32, #tpu.memory_space<vmem>>, vector<256x128xf32>
    tpu.vector_store %arg12[%c0_127, %c256_128], %86 {strides = array<i32>} : memref<256x1152xf32, #tpu.memory_space<vmem>>, vector<256x128xf32>,
    %c1_129 = arith.constant 1 : index
    %c7_130 = arith.constant 7 : index
    %c0_131 = arith.constant 0 : index
    %88 = vector.load %arg11[%c1_129, %c7_130, %c0_131] : memref<18x32x128xf32, #tpu.memory_space<vmem>>, vector<16x16x128xf32>
    %89 = vector.shape_cast %88 : vector<16x16x128xf32> to vector<256x128xf32>
    %c0_132 = arith.constant 0 : index
    %c384_133 = arith.constant 384 : index
    %90 = vector.load %arg12[%c0_132, %c384_133] : memref<256x1152xf32, #tpu.memory_space<vmem>>, vector<256x128xf32>
    tpu.vector_store %arg12[%c0_132, %c384_133], %89 {strides = array<i32>} : memref<256x1152xf32, #tpu.memory_space<vmem>>, vector<256x128xf32>,
    %c1_134 = arith.constant 1 : index
    %c8_135 = arith.constant 8 : index
    %c0_136 = arith.constant 0 : index
    %91 = vector.load %arg11[%c1_134, %c8_135, %c0_136] : memref<18x32x128xf32, #tpu.memory_space<vmem>>, vector<16x16x128xf32>
    %92 = vector.shape_cast %91 : vector<16x16x128xf32> to vector<256x128xf32>
    %c0_137 = arith.constant 0 : index
    %c512_138 = arith.constant 512 : index
    %93 = vector.load %arg12[%c0_137, %c512_138] : memref<256x1152xf32, #tpu.memory_space<vmem>>, vector<256x128xf32>
    tpu.vector_store %arg12[%c0_137, %c512_138], %92 {strides = array<i32>} : memref<256x1152xf32, #tpu.memory_space<vmem>>, vector<256x128xf32>,
    %c1_139 = arith.constant 1 : index
    %c9_140 = arith.constant 9 : index
    %c0_141 = arith.constant 0 : index
    %94 = vector.load %arg11[%c1_139, %c9_140, %c0_141] : memref<18x32x128xf32, #tpu.memory_space<vmem>>, vector<16x16x128xf32>
    %95 = vector.shape_cast %94 : vector<16x16x128xf32> to vector<256x128xf32>
    %c0_142 = arith.constant 0 : index
    %c640_143 = arith.constant 640 : index
    %96 = vector.load %arg12[%c0_142, %c640_143] : memref<256x1152xf32, #tpu.memory_space<vmem>>, vector<256x128xf32>
    tpu.vector_store %arg12[%c0_142, %c640_143], %95 {strides = array<i32>} : memref<256x1152xf32, #tpu.memory_space<vmem>>, vector<256x128xf32>,
    %c2_144 = arith.constant 2 : index
    %c7_145 = arith.constant 7 : index
    %c0_146 = arith.constant 0 : index
    %97 = vector.load %arg11[%c2_144, %c7_145, %c0_146] : memref<18x32x128xf32, #tpu.memory_space<vmem>>, vector<16x16x128xf32>
    %98 = vector.shape_cast %97 : vector<16x16x128xf32> to vector<256x128xf32>
    %c0_147 = arith.constant 0 : index
    %c768_148 = arith.constant 768 : index
    %99 = vector.load %arg12[%c0_147, %c768_148] : memref<256x1152xf32, #tpu.memory_space<vmem>>, vector<256x128xf32>
    tpu.vector_store %arg12[%c0_147, %c768_148], %98 {strides = array<i32>} : memref<256x1152xf32, #tpu.memory_space<vmem>>, vector<256x128xf32>,
    %c2_149 = arith.constant 2 : index
    %c8_150 = arith.constant 8 : index
    %c0_151 = arith.constant 0 : index
    %100 = vector.load %arg11[%c2_149, %c8_150, %c0_151] : memref<18x32x128xf32, #tpu.memory_space<vmem>>, vector<16x16x128xf32>
    %101 = vector.shape_cast %100 : vector<16x16x128xf32> to vector<256x128xf32>
    %c0_152 = arith.constant 0 : index
    %c896_153 = arith.constant 896 : index
    %102 = vector.load %arg12[%c0_152, %c896_153] : memref<256x1152xf32, #tpu.memory_space<vmem>>, vector<256x128xf32>
    tpu.vector_store %arg12[%c0_152, %c896_153], %101 {strides = array<i32>} : memref<256x1152xf32, #tpu.memory_space<vmem>>, vector<256x128xf32>,
    %c2_154 = arith.constant 2 : index
    %c9_155 = arith.constant 9 : index
    %c0_156 = arith.constant 0 : index
    %103 = vector.load %arg11[%c2_154, %c9_155, %c0_156] : memref<18x32x128xf32, #tpu.memory_space<vmem>>, vector<16x16x128xf32>
    %104 = vector.shape_cast %103 : vector<16x16x128xf32> to vector<256x128xf32>
    %c0_157 = arith.constant 0 : index
    %c1024_158 = arith.constant 1024 : index
    %105 = vector.load %arg12[%c0_157, %c1024_158] : memref<256x1152xf32, #tpu.memory_space<vmem>>, vector<256x128xf32>
    tpu.vector_store %arg12[%c0_157, %c1024_158], %104 {strides = array<i32>} : memref<256x1152xf32, #tpu.memory_space<vmem>>, vector<256x128xf32>,
    %c0_159 = arith.constant 0 : index
    %c0_160 = arith.constant 0 : index
    %106 = vector.load %arg12[%c0_159, %c0_160] : memref<256x1152xf32, #tpu.memory_space<vmem>>, vector<256x1152xf32>
    %cst_161 = arith.constant dense<0.000000e+00> : vector<1152xf32>
    %107 = vector.multi_reduction <add>, %106, %cst_161 [0] : vector<256x1152xf32> to vector<1152xf32>
    %108 = vector.shape_cast %107 : vector<1152xf32> to vector<1x1152xf32>
    %cst_162 = arith.constant 2.560000e+02 : f32
    %109 = vector.broadcast %cst_162 : f32 to vector<1x1152xf32>
    %110 = arith.divf %108, %109 : vector<1x1152xf32>
    %c0_163 = arith.constant 0 : index
    %c0_164 = arith.constant 0 : index
    %111 = vector.load %arg6[%c0_163, %c0_164] : memref<1x1152xf32, #tpu.memory_space<vmem>>, vector<1x1152xf32>
    %112 = arith.mulf %110, %111 : vector<1x1152xf32>
    %cst_165 = arith.constant dense<0.000000e+00> : vector<1xf32>
    %113 = vector.multi_reduction <add>, %112, %cst_165 [1] : vector<1x1152xf32> to vector<1xf32>
    %114 = vector.shape_cast %113 : vector<1xf32> to vector<1x1xf32>
    %c0_166 = arith.constant 0 : index
    %c0_167 = arith.constant 0 : index
    %115 = vector.load %arg7[%c0_166, %c0_167] : memref<1x1xf32, #tpu.memory_space<vmem>>, vector<1x1xf32>
    %116 = arith.addf %114, %115 : vector<1x1xf32>
    %117 = vector.shape_cast %116 : vector<1x1xf32> to vector<1x1x1xf32>
    %c0_168 = arith.constant 0 : index
    %c0_169 = arith.constant 0 : index
    %c0_170 = arith.constant 0 : index
    %118 = vector.load %arg8[%c0_168, %c0_169, %c0_170] : memref<1x1x1xf32, #tpu.memory_space<vmem>>, vector<1x1x1xf32>
    tpu.vector_store %arg8[%c0_168, %c0_169, %c0_170], %117 {strides = array<i32>} : memref<1x1x1xf32, #tpu.memory_space<vmem>>, vector<1x1x1xf32>,
    return
  }
  func.func @transform_0(%arg0: i32) -> (i32, i32, i32, i32) {
    %c0_i32 = arith.constant 0 : i32
    %c0_i32_0 = arith.constant 0 : i32
    %c0_i32_1 = arith.constant 0 : i32
    %c0_i32_2 = arith.constant 0 : i32
    return %arg0, %c0_i32, %c0_i32_0, %c0_i32_1 : i32, i32, i32, i32
  }
  func.func @transform_1(%arg0: i32) -> (i32, i32) {
    %c0_i32 = arith.constant 0 : i32
    %c0_i32_0 = arith.constant 0 : i32
    %c0_i32_1 = arith.constant 0 : i32
    return %c0_i32, %c0_i32_0 : i32, i32
  }
  func.func @transform_2(%arg0: i32) -> (i32, i32) {
    %c0_i32 = arith.constant 0 : i32
    %c0_i32_0 = arith.constant 0 : i32
    %c0_i32_1 = arith.constant 0 : i32
    return %c0_i32, %c0_i32_0 : i32, i32
  }
  func.func @transform_3(%arg0: i32) -> (i32, i32) {
    %c0_i32 = arith.constant 0 : i32
    %c0_i32_0 = arith.constant 0 : i32
    %c0_i32_1 = arith.constant 0 : i32
    return %c0_i32, %c0_i32_0 : i32, i32
  }
  func.func @transform_4(%arg0: i32) -> (i32, i32) {
    %c0_i32 = arith.constant 0 : i32
    %c0_i32_0 = arith.constant 0 : i32
    %c0_i32_1 = arith.constant 0 : i32
    return %c0_i32, %c0_i32_0 : i32, i32
  }
  func.func @transform_5(%arg0: i32) -> (i32, i32) {
    %c0_i32 = arith.constant 0 : i32
    %c0_i32_0 = arith.constant 0 : i32
    %c0_i32_1 = arith.constant 0 : i32
    return %c0_i32, %c0_i32_0 : i32, i32
  }
  func.func @transform_6(%arg0: i32) -> (i32, i32) {
    %c0_i32 = arith.constant 0 : i32
    %c0_i32_0 = arith.constant 0 : i32
    %c0_i32_1 = arith.constant 0 : i32
    return %c0_i32, %c0_i32_0 : i32, i32
  }
  func.func @transform_7(%arg0: i32) -> (i32, i32, i32) {
    %c0_i32 = arith.constant 0 : i32
    %c0_i32_0 = arith.constant 0 : i32
    %c0_i32_1 = arith.constant 0 : i32
    return %arg0, %c0_i32, %c0_i32_0 : i32, i32, i32
  }
}

</mosaic_0001>

<llo_original>
// kernel: discriminator_forward.1
$region0: #{discriminator_forward.1}
  #allocation0 [shape = 'u32[]', space=smem, size = 0x4, offset = 0x4, fixed_abs, tag = 'smem constant byte address 0x4 - core index']
  #allocation1 [shape = 'u32[144,128]{1,0:T(1,128)}', space=vmem, size = 0x12000, scoped, tag = 'internal scratch']
  #allocation2 [shape = 'f32[18,32,128]{2,1,0:T(8,128)}', space=vmem, size = 0x48000, scoped, tag = 'scratch operand']
  #allocation3 [shape = 'f32[18,32,128]{2,1,0:T(8,128)}', space=vmem, size = 0x48000, scoped, tag = 'scratch operand']
  #allocation4 [shape = 'f32[18,32,128]{2,1,0:T(8,128)}', space=vmem, size = 0x48000, scoped, tag = 'scratch operand']
  #allocation5 [shape = 'f32[256,1152]{1,0:T(8,128)}', space=vmem, size = 0x120000, scoped, tag = 'scratch operand']
  #allocation6 [shape = 'f32[1,1]{1,0:T(1,128)S(1)}', space=vmem, size = 0x200, scoped, tag = 'scoped memory for discriminator_forward.1']
  %s0 = inlined_call_operand.vmem [shape: f32[2,16,16,6], index: 0, kind: input, shape index: {}]
  %s1 = inlined_call_operand.vmem [shape: f32[1152,8], index: 1, kind: input, shape index: {}]
  %s2 = inlined_call_operand.vmem [shape: f32[1,8], index: 2, kind: input, shape index: {}]
  %s3 = inlined_call_operand.vmem [shape: f32[1152,16], index: 3, kind: input, shape index: {}]
  %s4 = inlined_call_operand.vmem [shape: f32[1,16], index: 4, kind: input, shape index: {}]
  %s5 = inlined_call_operand.vmem [shape: f32[1,1152], index: 5, kind: input, shape index: {}]
  %s6 = inlined_call_operand.<no memory space> [shape: f32[1,1], index: 6, kind: input, shape index: {}]
  %s7 = inlined_call_operand.vmem [shape: f32[2,1,1], index: 7, kind: output, shape index: {}]
  %s8 = sld [smem:[#allocation0]]
  $region61: #{discriminator_forward.1} parent=0
    _
  %s10 = ssub.s32 1, %s8
  %s11 = scalar_select 0, %s10, %s8
  %v12 = vstv %s6
  %13 = vst [vmem:[#allocation6] sm:$0x1] %v12
  loop: start=0, step=1, limit=4
  $region2: #{discriminator_forward.1} parent=0 // loop_pre_header
    _
  $region3: #{discriminator_forward.1} parent=0 // loop_header
    %s15 = sphi 0, %s19
    %p16 = scmp.ge.s32.totalorder %s15, 4
    %s25 = sphi 0, %s27
    %s28 = sphi 0, %s25
    %s29 = sphi 0, %s28
    %s45 = sphi 0, %s29
    %s49 = sphi 0, %s49
    %s51 = sphi 0, %s49
    %s52 = sphi 0, %s51
    %s66 = sphi 0, %s52
    %s70 = sphi 0, %s70
    %s72 = sphi 0, %s70
    %s73 = sphi 0, %s72
    %s87 = sphi 0, %s73
    %s91 = sphi 0, %s91
    %s93 = sphi 0, %s91
    %s94 = sphi 0, %s93
    %s108 = sphi 0, %s94
    %s112 = sphi 0, %s112
    %s114 = sphi 0, %s112
    %s115 = sphi 0, %s114
    %s129 = sphi 0, %s115
    %s133 = sphi 0, %s133
    %s135 = sphi 0, %s133
    %s136 = sphi 0, %s135
    %s150 = sphi 0, %s136
    %s154 = sphi 0, %s154
    %s156 = sphi 0, %s154
    %s157 = sphi 0, %s156
    %s171 = sphi 0, %s157
    %s177 = sphi 0, %s179
    %s180 = sphi 0, %s177
    %s181 = sphi 0, %s180
    %s197 = sphi 0, %s181
  $region4: #{discriminator_forward.1} parent=0 // loop_header_branch
    %18 = sbr.rel (%p16) target = $region8
  $region5: #{discriminator_forward.1} parent=0 // loop_body
    %s20 = ssub.s32 %s15, 1
    %s21 = ssub.s32 %s15, 2
    %s22 = sadd.s32 %s15, 1
    %s23 = ssub.s32 %s15, %s22
    %p24 = scmp.eq.s32.totalorder %s23, 0
    %s26 = sadd.s32 %s25, 1
    %s27 = scalar_select %p24, %s25, %s26
    %p30 = pneg %p24
    %p31 = scmp.eq.s32.totalorder %s15, 1
    %p32 = por %p30, %p31
    %p33 = scmp.ne.s32.totalorder %s25, %s28
    %p34 = scmp.eq.s32.totalorder %s15, 0
    %p35 = por %p33, %p34
    %p36 = scmp.ne.s32.totalorder %s25, %s28
    %p37 = scmp.eq.s32.totalorder %s20, 1
    %p38 = por %p36, %p37
    %p39 = scmp.ne.s32.totalorder %s28, %s29
    %p40 = scmp.eq.s32.totalorder %s20, 0
    %p41 = por %p39, %p40
    %p42 = scmp.ne.s32.totalorder %s28, %s29
    %p43 = scmp.eq.s32.totalorder %s21, 1
    %p44 = por %p42, %p43
    %p46 = scmp.ne.s32.totalorder %s29, %s45
    %p47 = scmp.eq.s32.totalorder %s21, 0
    %p48 = por %p46, %p47
    %s50 = sadd.s32 %s49, 1
    %p53 = scmp.eq.s32.totalorder %s15, 1
    %p54 = scmp.ne.s32.totalorder %s49, %s51
    %p55 = scmp.eq.s32.totalorder %s15, 0
    %p56 = por %p54, %p55
    %p57 = scmp.ne.s32.totalorder %s49, %s51
    %p58 = scmp.eq.s32.totalorder %s20, 1
    %p59 = por %p57, %p58
    %p60 = scmp.ne.s32.totalorder %s51, %s52
    %p61 = scmp.eq.s32.totalorder %s20, 0
    %p62 = por %p60, %p61
    %p63 = scmp.ne.s32.totalorder %s51, %s52
    %p64 = scmp.eq.s32.totalorder %s21, 1
    %p65 = por %p63, %p64
    %p67 = scmp.ne.s32.totalorder %s52, %s66
    %p68 = scmp.eq.s32.totalorder %s21, 0
    %p69 = por %p67, %p68
    %s71 = sadd.s32 %s70, 1
    %p74 = scmp.eq.s32.totalorder %s15, 1
    %p75 = scmp.ne.s32.totalorder %s70, %s72
    %p76 = scmp.eq.s32.totalorder %s15, 0
    %p77 = por %p75, %p76
    %p78 = scmp.ne.s32.totalorder %s70, %s72
    %p79 = scmp.eq.s32.totalorder %s20, 1
    %p80 = por %p78, %p79
    %p81 = scmp.ne.s32.totalorder %s72, %s73
    %p82 = scmp.eq.s32.totalorder %s20, 0
    %p83 = por %p81, %p82
    %p84 = scmp.ne.s32.totalorder %s72, %s73
    %p85 = scmp.eq.s32.totalorder %s21, 1
    %p86 = por %p84, %p85
    %p88 = scmp.ne.s32.totalorder %s73, %s87
    %p89 = scmp.eq.s32.totalorder %s21, 0
    %p90 = por %p88, %p89
    %s92 = sadd.s32 %s91, 1
    %p95 = scmp.eq.s32.totalorder %s15, 1
    %p96 = scmp.ne.s32.totalorder %s91, %s93
    %p97 = scmp.eq.s32.totalorder %s15, 0
    %p98 = por %p96, %p97
    %p99 = scmp.ne.s32.totalorder %s91, %s93
    %p100 = scmp.eq.s32.totalorder %s20, 1
    %p101 = por %p99, %p100
    %p102 = scmp.ne.s32.totalorder %s93, %s94
    %p103 = scmp.eq.s32.totalorder %s20, 0
    %p104 = por %p102, %p103
    %p105 = scmp.ne.s32.totalorder %s93, %s94
    %p106 = scmp.eq.s32.totalorder %s21, 1
    %p107 = por %p105, %p106
    %p109 = scmp.ne.s32.totalorder %s94, %s108
    %p110 = scmp.eq.s32.totalorder %s21, 0
    %p111 = por %p109, %p110
    %s113 = sadd.s32 %s112, 1
    %p116 = scmp.eq.s32.totalorder %s15, 1
    %p117 = scmp.ne.s32.totalorder %s112, %s114
    %p118 = scmp.eq.s32.totalorder %s15, 0
    %p119 = por %p117, %p118
    %p120 = scmp.ne.s32.totalorder %s112, %s114
    %p121 = scmp.eq.s32.totalorder %s20, 1
    %p122 = por %p120, %p121
    %p123 = scmp.ne.s32.totalorder %s114, %s115
    %p124 = scmp.eq.s32.totalorder %s20, 0
    %p125 = por %p123, %p124
    %p126 = scmp.ne.s32.totalorder %s114, %s115
    %p127 = scmp.eq.s32.totalorder %s21, 1
    %p128 = por %p126, %p127
    %p130 = scmp.ne.s32.totalorder %s115, %s129
    %p131 = scmp.eq.s32.totalorder %s21, 0
    %p132 = por %p130, %p131
    %s134 = sadd.s32 %s133, 1
    %p137 = scmp.eq.s32.totalorder %s15, 1
    %p138 = scmp.ne.s32.totalorder %s133, %s135
    %p139 = scmp.eq.s32.totalorder %s15, 0
    %p140 = por %p138, %p139
    %p141 = scmp.ne.s32.totalorder %s133, %s135
    %p142 = scmp.eq.s32.totalorder %s20, 1
    %p143 = por %p141, %p142
    %p144 = scmp.ne.s32.totalorder %s135, %s136
    %p145 = scmp.eq.s32.totalorder %s20, 0
    %p146 = por %p144, %p145
    %p147 = scmp.ne.s32.totalorder %s135, %s136
    %p148 = scmp.eq.s32.totalorder %s21, 1
    %p149 = por %p147, %p148
    %p151 = scmp.ne.s32.totalorder %s136, %s150
    %p152 = scmp.eq.s32.totalorder %s21, 0
    %p153 = por %p151, %p152
    %s155 = sadd.s32 %s154, 1
    %p158 = scmp.eq.s32.totalorder %s15, 1
    %p159 = scmp.ne.s32.totalorder %s154, %s156
    %p160 = scmp.eq.s32.totalorder %s15, 0
    %p161 = por %p159, %p160
    %p162 = scmp.ne.s32.totalorder %s154, %s156
    %p163 = scmp.eq.s32.totalorder %s20, 1
    %p164 = por %p162, %p163
    %p165 = scmp.ne.s32.totalorder %s156, %s157
    %p166 = scmp.eq.s32.totalorder %s20, 0
    %p167 = por %p165, %p166
    %p168 = scmp.ne.s32.totalorder %s156, %s157
    %p169 = scmp.eq.s32.totalorder %s21, 1
    %p170 = por %p168, %p169
    %p172 = scmp.ne.s32.totalorder %s157, %s171
    %p173 = scmp.eq.s32.totalorder %s21, 0
    %p174 = por %p172, %p173
    %s175 = ssub.s32 %s15, %s22
    %p176 = scmp.eq.s32.totalorder %s175, 0
    %s178 = sadd.s32 %s177, 1
    %s179 = scalar_select %p176, %s177, %s178
    %p182 = pneg %p176
    %p183 = scmp.eq.s32.totalorder %s15, 1
    %p184 = por %p182, %p183
    %p185 = scmp.ne.s32.totalorder %s177, %s180
    %p186 = scmp.eq.s32.totalorder %s15, 0
    %p187 = por %p185, %p186
    %p188 = scmp.ne.s32.totalorder %s177, %s180
    %p189 = scmp.eq.s32.totalorder %s20, 1
    %p190 = por %p188, %p189
    %p191 = scmp.ne.s32.totalorder %s180, %s181
    %p192 = scmp.eq.s32.totalorder %s20, 0
    %p193 = por %p191, %p192
    %p194 = scmp.ne.s32.totalorder %s180, %s181
    %p195 = scmp.eq.s32.totalorder %s21, 1
    %p196 = por %p194, %p195
    %p198 = scmp.ne.s32.totalorder %s181, %s197
    %p199 = scmp.eq.s32.totalorder %s21, 0
    %p200 = por %p198, %p199
    %p201 = scmp.le.s32.totalorder 1, %s15
    %p202 = scmp.lt.s32.totalorder %s15, 3
    %p203 = pnand %p201, %p202
    %p204 = pneg %p203
    // Predicated region
    $region9: #{discriminator_forward.1} parent=5 // pred_check
      _
    $region10: #{discriminator_forward.1} parent=5 // pred_check_branch
      %206 = sbr.rel (%p203) target = $region12
    $region11: #{discriminator_forward.1} parent=5 // pred_region
      %s207 = ssub.s32 %s15, 1
      // Predicated region
      $region13: #{discriminator_forward.1} parent=11 // pred_check
        %p208 = pneg %p62
      $region14: #{discriminator_forward.1} parent=11 // pred_check_branch
        %210 = sbr.rel (%p208) target = $region16
      $region15: #{discriminator_forward.1} parent=11 // pred_region
        _
      $region16: #{discriminator_forward.1} parent=11 // pred_fallthru
        _
      // Predicated region
      $region17: #{discriminator_forward.1} parent=11 // pred_check
        %p211 = pneg %p83
      $region18: #{discriminator_forward.1} parent=11 // pred_check_branch
        %213 = sbr.rel (%p211) target = $region20
      $region19: #{discriminator_forward.1} parent=11 // pred_region
        _
      $region20: #{discriminator_forward.1} parent=11 // pred_fallthru
        _
      // Predicated region
      $region21: #{discriminator_forward.1} parent=11 // pred_check
        %p214 = pneg %p104
      $region22: #{discriminator_forward.1} parent=11 // pred_check_branch
        %216 = sbr.rel (%p214) target = $region24
      $region23: #{discriminator_forward.1} parent=11 // pred_region
        _
      $region24: #{discriminator_forward.1} parent=11 // pred_fallthru
        _
      // Predicated region
      $region25: #{discriminator_forward.1} parent=11 // pred_check
        %p217 = pneg %p125
      $region26: #{discriminator_forward.1} parent=11 // pred_check_branch
        %219 = sbr.rel (%p217) target = $region28
      $region27: #{discriminator_forward.1} parent=11 // pred_region
        _
      $region28: #{discriminator_forward.1} parent=11 // pred_fallthru
        _
      // Predicated region
      $region29: #{discriminator_forward.1} parent=11 // pred_check
        %p220 = pneg %p146
      $region30: #{discriminator_forward.1} parent=11 // pred_check_branch
        %222 = sbr.rel (%p220) target = $region32
      $region31: #{discriminator_forward.1} parent=11 // pred_region
        _
      $region32: #{discriminator_forward.1} parent=11 // pred_fallthru
        _
      // Predicated region
      $region33: #{discriminator_forward.1} parent=11 // pred_check
        %p223 = pneg %p167
      $region34: #{discriminator_forward.1} parent=11 // pred_check_branch
        %225 = sbr.rel (%p223) target = $region36
      $region35: #{discriminator_forward.1} parent=11 // pred_region
        _
      $region36: #{discriminator_forward.1} parent=11 // pred_fallthru
        _
    $region12: #{discriminator_forward.1} parent=5 // pred_fallthru
      _
    %p226 = scmp.lt.s32.totalorder %s15, 2
    // Predicated region
    $region37: #{discriminator_forward.1} parent=5 // pred_check
      %p227 = pneg %p226
    $region38: #{discriminator_forward.1} parent=5 // pred_check_branch
      %229 = sbr.rel (%p227) target = $region40
    $region39: #{discriminator_forward.1} parent=5 // pred_region
      // Predicated region
      $region41: #{discriminator_forward.1} parent=39 // pred_check
        %p230 = pneg %p35
      $region42: #{discriminator_forward.1} parent=39 // pred_check_branch
        %232 = sbr.rel (%p230) target = $region44
      $region43: #{discriminator_forward.1} parent=39 // pred_region
        %p233 = scmp.lt.s32.totalorder %s15, 1
        %s234 = scalar_select %p233, %s15, 1
        %s235 = smul.addr %s234, 32
        %s236 = smul.addr %s235, 8
        %s237 = scalar_lea.vmem %s0, %s236
      $region44: #{discriminator_forward.1} parent=39 // pred_fallthru
        _
    $region40: #{discriminator_forward.1} parent=5 // pred_fallthru
      _
    %p238 = scmp.le.s32.totalorder 1, %s15
    %p239 = scmp.lt.s32.totalorder %s15, 3
    %p240 = pnand %p238, %p239
    %p241 = pneg %p240
    // Predicated region
    $region45: #{discriminator_forward.1} parent=5 // pred_check
      _
    $region46: #{discriminator_forward.1} parent=5 // pred_check_branch
      %243 = sbr.rel (%p240) target = $region48
    $region47: #{discriminator_forward.1} parent=5 // pred_region
      %s244 = ssub.s32 %s15, 1
      %p245 = scmp.lt.s32.totalorder %s20, 1
      %s246 = scalar_select %p245, %s20, 1
      %s247 = smul.addr %s246, 32
      %s248 = smul.addr %s247, 8
      %s249 = scalar_lea.vmem %s0, %s248
      %p250 = pneg %p41
      %p251 = pneg %p38
      %p252 = pneg %p62
      %p253 = pneg %p59
      %p254 = pneg %p83
      %p255 = pneg %p80
      %p256 = pneg %p104
      %p257 = pneg %p101
      %p258 = pneg %p125
      %p259 = pneg %p122
      %p260 = pneg %p146
      %p261 = pneg %p143
      %p262 = pneg %p167
      %p263 = pneg %p164
      %p264 = pneg %p193
      %p265 = pneg %p190
      %p266 = scmp.lt.s32.totalorder %s20, 1
      %s267 = scalar_select %p266, %s20, 1
      %s268 = scalar_lea.vmem %s7, %s267
      %p269 = scmp.lt.s32.totalorder %s20, 1
      %s270 = scalar_select %p269, %s20, 1
      %s271 = smul.addr %s270, 32
      %s272 = smul.addr %s271, 8
      %s273 = scalar_lea.vmem %s0, %s272
      %p274 = scmp.lt.s32.totalorder %s20, 1
      %s275 = scalar_select %p274, %s20, 1
      %s276 = scalar_lea.vmem %s7, %s275
      %277 = vst [vmem:[#allocation2] sm:$0xff] 0.0
      %278 = vst [vmem:[#allocation2 + $0x8] sm:$0xff] 0.0
      %279 = vst [vmem:[#allocation2 + $0x10] sm:$0xff] 0.0
      %280 = vst [vmem:[#allocation2 + $0x18] sm:$0xff] 0.0
      %281 = vst [vmem:[#allocation2 + $0x20] sm:$0xff] 0.0
      %282 = vst [vmem:[#allocation2 + $0x28] sm:$0xff] 0.0
      %283 = vst [vmem:[#allocation2 + $0x30] sm:$0xff] 0.0
      %284 = vst [vmem:[#allocation2 + $0x38] sm:$0xff] 0.0
      %285 = vst [vmem:[#allocation2 + $0x40] sm:$0xff] 0.0
      %286 = vst [vmem:[#allocation2 + $0x48] sm:$0xff] 0.0
      %287 = vst [vmem:[#allocation2 + $0x50] sm:$0xff] 0.0
      %288 = vst [vmem:[#allocation2 + $0x58] sm:$0xff] 0.0
      %289 = vst [vmem:[#allocation2 + $0x60] sm:$0xff] 0.0
      %290 = vst [vmem:[#allocation2 + $0x68] sm:$0xff] 0.0
      %291 = vst [vmem:[#allocation2 + $0x70] sm:$0xff] 0.0
      %292 = vst [vmem:[#allocation2 + $0x78] sm:$0xff] 0.0
      %293 = vst [vmem:[#allocation2 + $0x80] sm:$0xff] 0.0
      %294 = vst [vmem:[#allocation2 + $0x88] sm:$0xff] 0.0
      %295 = vst [vmem:[#allocation2 + $0x90] sm:$0xff] 0.0
      %296 = vst [vmem:[#allocation2 + $0x98] sm:$0xff] 0.0
      %297 = vst [vmem:[#allocation2 + $0xa0] sm:$0xff] 0.0
      %298 = vst [vmem:[#allocation2 + $0xa8] sm:$0xff] 0.0
      %299 = vst [vmem:[#allocation2 + $0xb0] sm:$0xff] 0.0
      %300 = vst [vmem:[#allocation2 + $0xb8] sm:$0xff] 0.0
      %301 = vst [vmem:[#allocation2 + $0xc0] sm:$0xff] 0.0
      %302 = vst [vmem:[#allocation2 + $0xc8] sm:$0xff] 0.0
      %303 = vst [vmem:[#allocation2 + $0xd0] sm:$0xff] 0.0
      %304 = vst [vmem:[#allocation2 + $0xd8] sm:$0xff] 0.0
      %305 = vst [vmem:[#allocation2 + $0xe0] sm:$0xff] 0.0
      %306 = vst [vmem:[#allocation2 + $0xe8] sm:$0xff] 0.0
      %307 = vst [vmem:[#allocation2 + $0xf0] sm:$0xff] 0.0
      %308 = vst [vmem:[#allocation2 + $0xf8] sm:$0xff] 0.0
      %309 = vst [vmem:[#allocation2 + $0x100] sm:$0xff] 0.0
      %310 = vst [vmem:[#allocation2 + $0x108] sm:$0xff] 0.0
      %311 = vst [vmem:[#allocation2 + $0x110] sm:$0xff] 0.0
      %312 = vst [vmem:[#allocation2 + $0x118] sm:$0xff] 0.0
      %313 = vst [vmem:[#allocation2 + $0x120] sm:$0xff] 0.0
      %314 = vst [vmem:[#allocation2 + $0x128] sm:$0xff] 0.0
      %315 = vst [vmem:[#allocation2 + $0x130] sm:$0xff] 0.0
      %316 = vst [vmem:[#allocation2 + $0x138] sm:$0xff] 0.0
      %317 = vst [vmem:[#allocation2 + $0x140] sm:$0xff] 0.0
      %318 = vst [vmem:[#allocation2 + $0x148] sm:$0xff] 0.0
      %319 = vst [vmem:[#allocation2 + $0x150] sm:$0xff] 0.0
      %320 = vst [vmem:[#allocation2 + $0x158] sm:$0xff] 0.0
      %321 = vst [vmem:[#allocation2 + $0x160] sm:$0xff] 0.0
      %322 = vst [vmem:[#allocation2 + $0x168] sm:$0xff] 0.0
      %323 = vst [vmem:[#allocation2 + $0x170] sm:$0xff] 0.0
      %324 = vst [vmem:[#allocation2 + $0x178] sm:$0xff] 0.0
      %325 = vst [vmem:[#allocation2 + $0x180] sm:$0xff] 0.0
      %326 = vst [vmem:[#allocation2 + $0x188] sm:$0xff] 0.0
      %327 = vst [vmem:[#allocation2 + $0x190] sm:$0xff] 0.0
      %328 = vst [vmem:[#allocation2 + $0x198] sm:$0xff] 0.0
      %329 = vst [vmem:[#allocation2 + $0x1a0] sm:$0xff] 0.0
      %330 = vst [vmem:[#allocation2 + $0x1a8] sm:$0xff] 0.0
      %331 = vst [vmem:[#allocation2 + $0x1b0] sm:$0xff] 0.0
      %332 = vst [vmem:[#allocation2 + $0x1b8] sm:$0xff] 0.0
      %333 = vst [vmem:[#allocation2 + $0x1c0] sm:$0xff] 0.0
      %334 = vst [vmem:[#allocation2 + $0x1c8] sm:$0xff] 0.0
      %335 = vst [vmem:[#allocation2 + $0x1d0] sm:$0xff] 0.0
      %336 = vst [vmem:[#allocation2 + $0x1d8] sm:$0xff] 0.0
      %337 = vst [vmem:[#allocation2 + $0x1e0] sm:$0xff] 0.0
      %338 = vst [vmem:[#allocation2 + $0x1e8] sm:$0xff] 0.0
      %339 = vst [vmem:[#allocation2 + $0x1f0] sm:$0xff] 0.0
      %340 = vst [vmem:[#allocation2 + $0x1f8] sm:$0xff] 0.0
      %341 = vst [vmem:[#allocation2 + $0x200] sm:$0xff] 0.0
      %342 = vst [vmem:[#allocation2 + $0x208] sm:$0xff] 0.0
      %343 = vst [vmem:[#allocation2 + $0x210] sm:$0xff] 0.0
      %344 = vst [vmem:[#allocation2 + $0x218] sm:$0xff] 0.0
      %345 = vst [vmem:[#allocation2 + $0x220] sm:$0xff] 0.0
      %346 = vst [vmem:[#allocation2 + $0x228] sm:$0xff] 0.0
      %347 = vst [vmem:[#allocation2 + $0x230] sm:$0xff] 0.0
      %348 = vst [vmem:[#allocation2 + $0x238] sm:$0xff] 0.0
      %349 = vst [vmem:[#allocation3] sm:$0xff] 0.0
      %350 = vst [vmem:[#allocation3 + $0x8] sm:$0xff] 0.0
      %351 = vst [vmem:[#allocation3 + $0x10] sm:$0xff] 0.0
      %352 = vst [vmem:[#allocation3 + $0x18] sm:$0xff] 0.0
      %353 = vst [vmem:[#allocation3 + $0x20] sm:$0xff] 0.0
      %354 = vst [vmem:[#allocation3 + $0x28] sm:$0xff] 0.0
      %355 = vst [vmem:[#allocation3 + $0x30] sm:$0xff] 0.0
      %356 = vst [vmem:[#allocation3 + $0x38] sm:$0xff] 0.0
      %357 = vst [vmem:[#allocation3 + $0x40] sm:$0xff] 0.0
      %358 = vst [vmem:[#allocation3 + $0x48] sm:$0xff] 0.0
      %359 = vst [vmem:[#allocation3 + $0x50] sm:$0xff] 0.0
      %360 = vst [vmem:[#allocation3 + $0x58] sm:$0xff] 0.0
      %361 = vst [vmem:[#allocation3 + $0x60] sm:$0xff] 0.0
      %362 = vst [vmem:[#allocation3 + $0x68] sm:$0xff] 0.0
      %363 = vst [vmem:[#allocation3 + $0x70] sm:$0xff] 0.0
      %364 = vst [vmem:[#allocation3 + $0x78] sm:$0xff] 0.0
      %365 = vst [vmem:[#allocation3 + $0x80] sm:$0xff] 0.0
      %366 = vst [vmem:[#allocation3 + $0x88] sm:$0xff] 0.0
      %367 = vst [vmem:[#allocation3 + $0x90] sm:$0xff] 0.0
      %368 = vst [vmem:[#allocation3 + $0x98] sm:$0xff] 0.0
      %369 = vst [vmem:[#allocation3 + $0xa0] sm:$0xff] 0.0
      %370 = vst [vmem:[#allocation3 + $0xa8] sm:$0xff] 0.0
      %371 = vst [vmem:[#allocation3 + $0xb0] sm:$0xff] 0.0
      %372 = vst [vmem:[#allocation3 + $0xb8] sm:$0xff] 0.0
      %373 = vst [vmem:[#allocation3 + $0xc0] sm:$0xff] 0.0
      %374 = vst [vmem:[#allocation3 + $0xc8] sm:$0xff] 0.0
      %375 = vst [vmem:[#allocation3 + $0xd0] sm:$0xff] 0.0
      %376 = vst [vmem:[#allocation3 + $0xd8] sm:$0xff] 0.0
      %377 = vst [vmem:[#allocation3 + $0xe0] sm:$0xff] 0.0
      %378 = vst [vmem:[#allocation3 + $0xe8] sm:$0xff] 0.0
      %379 = vst [vmem:[#allocation3 + $0xf0] sm:$0xff] 0.0
      %380 = vst [vmem:[#allocation3 + $0xf8] sm:$0xff] 0.0
      %381 = vst [vmem:[#allocation3 + $0x100] sm:$0xff] 0.0
      %382 = vst [vmem:[#allocation3 + $0x108] sm:$0xff] 0.0
      %383 = vst [vmem:[#allocation3 + $0x110] sm:$0xff] 0.0
      %384 = vst [vmem:[#allocation3 + $0x118] sm:$0xff] 0.0
      %385 = vst [vmem:[#allocation3 + $0x120] sm:$0xff] 0.0
      %386 = vst [vmem:[#allocation3 + $0x128] sm:$0xff] 0.0
      %387 = vst [vmem:[#allocation3 + $0x130] sm:$0xff] 0.0
      %388 = vst [vmem:[#allocation3 + $0x138] sm:$0xff] 0.0
      %389 = vst [vmem:[#allocation3 + $0x140] sm:$0xff] 0.0
      %390 = vst [vmem:[#allocation3 + $0x148] sm:$0xff] 0.0
      %391 = vst [vmem:[#allocation3 + $0x150] sm:$0xff] 0.0
      %392 = vst [vmem:[#allocation3 + $0x158] sm:$0xff] 0.0
      %393 = vst [vmem:[#allocation3 + $0x160] sm:$0xff] 0.0
      %394 = vst [vmem:[#allocation3 + $0x168] sm:$0xff] 0.0
      %395 = vst [vmem:[#allocation3 + $0x170] sm:$0xff] 0.0
      %396 = vst [vmem:[#allocation3 + $0x178] sm:$0xff] 0.0
      %397 = vst [vmem:[#allocation3 + $0x180] sm:$0xff] 0.0
      %398 = vst [vmem:[#allocation3 + $0x188] sm:$0xff] 0.0
      %399 = vst [vmem:[#allocation3 + $0x190] sm:$0xff] 0.0
      %400 = vst [vmem:[#allocation3 + $0x198] sm:$0xff] 0.0
      %401 = vst [vmem:[#allocation3 + $0x1a0] sm:$0xff] 0.0
      %402 = vst [vmem:[#allocation3 + $0x1a8] sm:$0xff] 0.0
      %403 = vst [vmem:[#allocation3 + $0x1b0] sm:$0xff] 0.0
      %404 = vst [vmem:[#allocation3 + $0x1b8] sm:$0xff] 0.0
      %405 = vst [vmem:[#allocation3 + $0x1c0] sm:$0xff] 0.0
      %406 = vst [vmem:[#allocation3 + $0x1c8] sm:$0xff] 0.0
      %407 = vst [vmem:[#allocation3 + $0x1d0] sm:$0xff] 0.0
      %408 = vst [vmem:[#allocation3 + $0x1d8] sm:$0xff] 0.0
      %409 = vst [vmem:[#allocation3 + $0x1e0] sm:$0xff] 0.0
      %410 = vst [vmem:[#allocation3 + $0x1e8] sm:$0xff] 0.0
      %411 = vst [vmem:[#allocation3 + $0x1f0] sm:$0xff] 0.0
      %412 = vst [vmem:[#allocation3 + $0x1f8] sm:$0xff] 0.0
      %413 = vst [vmem:[#allocation3 + $0x200] sm:$0xff] 0.0
      %414 = vst [vmem:[#allocation3 + $0x208] sm:$0xff] 0.0
      %415 = vst [vmem:[#allocation3 + $0x210] sm:$0xff] 0.0
      %416 = vst [vmem:[#allocation3 + $0x218] sm:$0xff] 0.0
      %417 = vst [vmem:[#allocation3 + $0x220] sm:$0xff] 0.0
      %418 = vst [vmem:[#allocation3 + $0x228] sm:$0xff] 0.0
      %419 = vst [vmem:[#allocation3 + $0x230] sm:$0xff] 0.0
      %420 = vst [vmem:[#allocation3 + $0x238] sm:$0xff] 0.0
      %421 = vst [vmem:[#allocation4] sm:$0xff] 0.0
      %422 = vst [vmem:[#allocation4 + $0x8] sm:$0xff] 0.0
      %423 = vst [vmem:[#allocation4 + $0x10] sm:$0xff] 0.0
      %424 = vst [vmem:[#allocation4 + $0x18] sm:$0xff] 0.0
      %425 = vst [vmem:[#allocation4 + $0x20] sm:$0xff] 0.0
      %426 = vst [vmem:[#allocation4 + $0x28] sm:$0xff] 0.0
      %427 = vst [vmem:[#allocation4 + $0x30] sm:$0xff] 0.0
      %428 = vst [vmem:[#allocation4 + $0x38] sm:$0xff] 0.0
      %429 = vst [vmem:[#allocation4 + $0x40] sm:$0xff] 0.0
      %430 = vst [vmem:[#allocation4 + $0x48] sm:$0xff] 0.0
      %431 = vst [vmem:[#allocation4 + $0x50] sm:$0xff] 0.0
      %432 = vst [vmem:[#allocation4 + $0x58] sm:$0xff] 0.0
      %433 = vst [vmem:[#allocation4 + $0x60] sm:$0xff] 0.0
      %434 = vst [vmem:[#allocation4 + $0x68] sm:$0xff] 0.0
      %435 = vst [vmem:[#allocation4 + $0x70] sm:$0xff] 0.0
      %436 = vst [vmem:[#allocation4 + $0x78] sm:$0xff] 0.0
      %437 = vst [vmem:[#allocation4 + $0x80] sm:$0xff] 0.0
      %438 = vst [vmem:[#allocation4 + $0x88] sm:$0xff] 0.0
      %439 = vst [vmem:[#allocation4 + $0x90] sm:$0xff] 0.0
      %440 = vst [vmem:[#allocation4 + $0x98] sm:$0xff] 0.0
      %441 = vst [vmem:[#allocation4 + $0xa0] sm:$0xff] 0.0
      %442 = vst [vmem:[#allocation4 + $0xa8] sm:$0xff] 0.0
      %443 = vst [vmem:[#allocation4 + $0xb0] sm:$0xff] 0.0
      %444 = vst [vmem:[#allocation4 + $0xb8] sm:$0xff] 0.0
      %445 = vst [vmem:[#allocation4 + $0xc0] sm:$0xff] 0.0
      %446 = vst [vmem:[#allocation4 + $0xc8] sm:$0xff] 0.0
      %447 = vst [vmem:[#allocation4 + $0xd0] sm:$0xff] 0.0
      %448 = vst [vmem:[#allocation4 + $0xd8] sm:$0xff] 0.0
      %449 = vst [vmem:[#allocation4 + $0xe0] sm:$0xff] 0.0
      %450 = vst [vmem:[#allocation4 + $0xe8] sm:$0xff] 0.0
      %451 = vst [vmem:[#allocation4 + $0xf0] sm:$0xff] 0.0
      %452 = vst [vmem:[#allocation4 + $0xf8] sm:$0xff] 0.0
      %453 = vst [vmem:[#allocation4 + $0x100] sm:$0xff] 0.0
      %454 = vst [vmem:[#allocation4 + $0x108] sm:$0xff] 0.0
      %455 = vst [vmem:[#allocation4 + $0x110] sm:$0xff] 0.0
      %456 = vst [vmem:[#allocation4 + $0x118] sm:$0xff] 0.0
      %457 = vst [vmem:[#allocation4 + $0x120] sm:$0xff] 0.0
      %458 = vst [vmem:[#allocation4 + $0x128] sm:$0xff] 0.0
      %459 = vst [vmem:[#allocation4 + $0x130] sm:$0xff] 0.0
      %460 = vst [vmem:[#allocation4 + $0x138] sm:$0xff] 0.0
      %461 = vst [vmem:[#allocation4 + $0x140] sm:$0xff] 0.0
      %462 = vst [vmem:[#allocation4 + $0x148] sm:$0xff] 0.0
      %463 = vst [vmem:[#allocation4 + $0x150] sm:$0xff] 0.0
      %464 = vst [vmem:[#allocation4 + $0x158] sm:$0xff] 0.0
      %465 = vst [vmem:[#allocation4 + $0x160] sm:$0xff] 0.0
      %466 = vst [vmem:[#allocation4 + $0x168] sm:$0xff] 0.0
      %467 = vst [vmem:[#allocation4 + $0x170] sm:$0xff] 0.0
      %468 = vst [vmem:[#allocation4 + $0x178] sm:$0xff] 0.0
      %469 = vst [vmem:[#allocation4 + $0x180] sm:$0xff] 0.0
      %470 = vst [vmem:[#allocation4 + $0x188] sm:$0xff] 0.0
      %471 = vst [vmem:[#allocation4 + $0x190] sm:$0xff] 0.0
      %472 = vst [vmem:[#allocation4 + $0x198] sm:$0xff] 0.0
      %473 = vst [vmem:[#allocation4 + $0x1a0] sm:$0xff] 0.0
      %474 = vst [vmem:[#allocation4 + $0x1a8] sm:$0xff] 0.0
      %475 = vst [vmem:[#allocation4 + $0x1b0] sm:$0xff] 0.0
      %476 = vst [vmem:[#allocation4 + $0x1b8] sm:$0xff] 0.0
      %477 = vst [vmem:[#allocation4 + $0x1c0] sm:$0xff] 0.0
      %478 = vst [vmem:[#allocation4 + $0x1c8] sm:$0xff] 0.0
      %479 = vst [vmem:[#allocation4 + $0x1d0] sm:$0xff] 0.0
      %480 = vst [vmem:[#allocation4 + $0x1d8] sm:$0xff] 0.0
      %481 = vst [vmem:[#allocation4 + $0x1e0] sm:$0xff] 0.0
      %482 = vst [vmem:[#allocation4 + $0x1e8] sm:$0xff] 0.0
      %483 = vst [vmem:[#allocation4 + $0x1f0] sm:$0xff] 0.0
      %484 = vst [vmem:[#allocation4 + $0x1f8] sm:$0xff] 0.0
      %485 = vst [vmem:[#allocation4 + $0x200] sm:$0xff] 0.0
      %486 = vst [vmem:[#allocation4 + $0x208] sm:$0xff] 0.0
      %487 = vst [vmem:[#allocation4 + $0x210] sm:$0xff] 0.0
      %488 = vst [vmem:[#allocation4 + $0x218] sm:$0xff] 0.0
      %489 = vst [vmem:[#allocation4 + $0x220] sm:$0xff] 0.0
      %490 = vst [vmem:[#allocation4 + $0x228] sm:$0xff] 0.0
      %491 = vst [vmem:[#allocation4 + $0x230] sm:$0xff] 0.0
      %492 = vst [vmem:[#allocation4 + $0x238] sm:$0xff] 0.0
      %v493 = vld [vmem:[%s273] sm:$0xff]
      %v494 = vld [vmem:[%s273 + $0x8] sm:$0xff]
      %v495 = vld [vmem:[%s273 + $0x10] sm:$0xff]
      %v496 = vld [vmem:[%s273 + $0x18] sm:$0xff]
      %v497 = vld [vmem:[%s273 + $0x20] sm:$0xff]
      %v498 = vld [vmem:[%s273 + $0x28] sm:$0xff]
      %v499 = vld [vmem:[%s273 + $0x30] sm:$0xff]
      %v500 = vld [vmem:[%s273 + $0x38] sm:$0xff]
      %v501 = vld [vmem:[%s273 + $0x40] sm:$0xff]
      %v502 = vld [vmem:[%s273 + $0x48] sm:$0xff]
      %v503 = vld [vmem:[%s273 + $0x50] sm:$0xff]
      %v504 = vld [vmem:[%s273 + $0x58] sm:$0xff]
      %v505 = vld [vmem:[%s273 + $0x60] sm:$0xff]
      %v506 = vld [vmem:[%s273 + $0x68] sm:$0xff]
      %v507 = vld [vmem:[%s273 + $0x70] sm:$0xff]
      %v508 = vld [vmem:[%s273 + $0x78] sm:$0xff]
      %v509 = vld [vmem:[%s273 + $0x80] sm:$0xff]
      %v510 = vld [vmem:[%s273 + $0x88] sm:$0xff]
      %v511 = vld [vmem:[%s273 + $0x90] sm:$0xff]
      %v512 = vld [vmem:[%s273 + $0x98] sm:$0xff]
      %v513 = vld [vmem:[%s273 + $0xa0] sm:$0xff]
      %v514 = vld [vmem:[%s273 + $0xa8] sm:$0xff]
      %v515 = vld [vmem:[%s273 + $0xb0] sm:$0xff]
      %v516 = vld [vmem:[%s273 + $0xb8] sm:$0xff]
      %v517 = vld [vmem:[%s273 + $0xc0] sm:$0xff]
      %v518 = vld [vmem:[%s273 + $0xc8] sm:$0xff]
      %v519 = vld [vmem:[%s273 + $0xd0] sm:$0xff]
      %v520 = vld [vmem:[%s273 + $0xd8] sm:$0xff]
      %v521 = vld [vmem:[%s273 + $0xe0] sm:$0xff]
      %v522 = vld [vmem:[%s273 + $0xe8] sm:$0xff]
      %v523 = vld [vmem:[%s273 + $0xf0] sm:$0xff]
      %v524 = vld [vmem:[%s273 + $0xf8] sm:$0xff]
      %s525 = scalar_lea.vmem [#allocation2], 32
      %vm526 = vcmask 48128
      %527 = vst.msk [vmem:[%s525 + $0x8] sm:$0xff] %vm526, %v493
      %528 = vst.msk [vmem:[%s525 + $0x10] sm:$0xff] %vm526, %v494
      %529 = vst.msk [vmem:[%s525 + $0x28] sm:$0xff] %vm526, %v495
      %530 = vst.msk [vmem:[%s525 + $0x30] sm:$0xff] %vm526, %v496
      %531 = vst.msk [vmem:[%s525 + $0x48] sm:$0xff] %vm526, %v497
      %532 = vst.msk [vmem:[%s525 + $0x50] sm:$0xff] %vm526, %v498
      %533 = vst.msk [vmem:[%s525 + $0x68] sm:$0xff] %vm526, %v499
      %534 = vst.msk [vmem:[%s525 + $0x70] sm:$0xff] %vm526, %v500
      %535 = vst.msk [vmem:[%s525 + $0x88] sm:$0xff] %vm526, %v501
      %536 = vst.msk [vmem:[%s525 + $0x90] sm:$0xff] %vm526, %v502
      %537 = vst.msk [vmem:[%s525 + $0xa8] sm:$0xff] %vm526, %v503
      %538 = vst.msk [vmem:[%s525 + $0xb0] sm:$0xff] %vm526, %v504
      %539 = vst.msk [vmem:[%s525 + $0xc8] sm:$0xff] %vm526, %v505
      %540 = vst.msk [vmem:[%s525 + $0xd0] sm:$0xff] %vm526, %v506
      %541 = vst.msk [vmem:[%s525 + $0xe8] sm:$0xff] %vm526, %v507
      %542 = vst.msk [vmem:[%s525 + $0xf0] sm:$0xff] %vm526, %v508
      %543 = vst.msk [vmem:[%s525 + $0x108] sm:$0xff] %vm526, %v509
      %544 = vst.msk [vmem:[%s525 + $0x110] sm:$0xff] %vm526, %v510
      %545 = vst.msk [vmem:[%s525 + $0x128] sm:$0xff] %vm526, %v511
      %546 = vst.msk [vmem:[%s525 + $0x130] sm:$0xff] %vm526, %v512
      %547 = vst.msk [vmem:[%s525 + $0x148] sm:$0xff] %vm526, %v513
      %548 = vst.msk [vmem:[%s525 + $0x150] sm:$0xff] %vm526, %v514
      %549 = vst.msk [vmem:[%s525 + $0x168] sm:$0xff] %vm526, %v515
      %550 = vst.msk [vmem:[%s525 + $0x170] sm:$0xff] %vm526, %v516
      %551 = vst.msk [vmem:[%s525 + $0x188] sm:$0xff] %vm526, %v517
      %552 = vst.msk [vmem:[%s525 + $0x190] sm:$0xff] %vm526, %v518
      %553 = vst.msk [vmem:[%s525 + $0x1a8] sm:$0xff] %vm526, %v519
      %554 = vst.msk [vmem:[%s525 + $0x1b0] sm:$0xff] %vm526, %v520
      %555 = vst.msk [vmem:[%s525 + $0x1c8] sm:$0xff] %vm526, %v521
      %556 = vst.msk [vmem:[%s525 + $0x1d0] sm:$0xff] %vm526, %v522
      %557 = vst.msk [vmem:[%s525 + $0x1e8] sm:$0xff] %vm526, %v523
      %558 = vst.msk [vmem:[%s525 + $0x1f0] sm:$0xff] %vm526, %v524
      %v559 = vld [vmem:[#allocation2 + $0x7] sm:$0xff]
      %v560 = vld [vmem:[#allocation2 + $0xf] sm:$0xff]
      %v561 = vld [vmem:[#allocation2 + $0x27] sm:$0xff]
      %v562 = vld [vmem:[#allocation2 + $0x2f] sm:$0xff]
      %v563 = vld [vmem:[#allocation2 + $0x47] sm:$0xff]
      %v564 = vld [vmem:[#allocation2 + $0x4f] sm:$0xff]
      %v565 = vld [vmem:[#allocation2 + $0x67] sm:$0xff]
      %v566 = vld [vmem:[#allocation2 + $0x6f] sm:$0xff]
      %v567 = vld [vmem:[#allocation2 + $0x87] sm:$0xff]
      %v568 = vld [vmem:[#allocation2 + $0x8f] sm:$0xff]
      %v569 = vld [vmem:[#allocation2 + $0xa7] sm:$0xff]
      %v570 = vld [vmem:[#allocation2 + $0xaf] sm:$0xff]
      %v571 = vld [vmem:[#allocation2 + $0xc7] sm:$0xff]
      %v572 = vld [vmem:[#allocation2 + $0xcf] sm:$0xff]
      %v573 = vld [vmem:[#allocation2 + $0xe7] sm:$0xff]
      %v574 = vld [vmem:[#allocation2 + $0xef] sm:$0xff]
      %v575 = vld [vmem:[#allocation2 + $0x107] sm:$0xff]
      %v576 = vld [vmem:[#allocation2 + $0x10f] sm:$0xff]
      %v577 = vld [vmem:[#allocation2 + $0x127] sm:$0xff]
      %v578 = vld [vmem:[#allocation2 + $0x12f] sm:$0xff]
      %v579 = vld [vmem:[#allocation2 + $0x147] sm:$0xff]
      %v580 = vld [vmem:[#allocation2 + $0x14f] sm:$0xff]
      %v581 = vld [vmem:[#allocation2 + $0x167] sm:$0xff]
      %v582 = vld [vmem:[#allocation2 + $0x16f] sm:$0xff]
      %v583 = vld [vmem:[#allocation2 + $0x187] sm:$0xff]
      %v584 = vld [vmem:[#allocation2 + $0x18f] sm:$0xff]
      %v585 = vld [vmem:[#allocation2 + $0x1a7] sm:$0xff]
      %v586 = vld [vmem:[#allocation2 + $0x1af] sm:$0xff]
      %v587 = vld [vmem:[#allocation2 + $0x1c7] sm:$0xff]
      %v588 = vld [vmem:[#allocation2 + $0x1cf] sm:$0xff]
      %v589 = vld [vmem:[#allocation2 + $0x1e7] sm:$0xff]
      %v590 = vld [vmem:[#allocation2 + $0x1ef] sm:$0xff]
      %591 = vst [vmem:[#allocation5] sm:$0xff] %v559
      %592 = vst [vmem:[#allocation5 + $0x48] sm:$0xff] %v560
      %593 = vst [vmem:[#allocation5 + $0x90] sm:$0xff] %v561
      %594 = vst [vmem:[#allocation5 + $0xd8] sm:$0xff] %v562
      %595 = vst [vmem:[#allocation5 + $0x120] sm:$0xff] %v563
      %596 = vst [vmem:[#allocation5 + $0x168] sm:$0xff] %v564
      %597 = vst [vmem:[#allocation5 + $0x1b0] sm:$0xff] %v565
      %598 = vst [vmem:[#allocation5 + $0x1f8] sm:$0xff] %v566
      %599 = vst [vmem:[#allocation5 + $0x240] sm:$0xff] %v567
      %600 = vst [vmem:[#allocation5 + $0x288] sm:$0xff] %v568
      %601 = vst [vmem:[#allocation5 + $0x2d0] sm:$0xff] %v569
      %602 = vst [vmem:[#allocation5 + $0x318] sm:$0xff] %v570
      %603 = vst [vmem:[#allocation5 + $0x360] sm:$0xff] %v571
      %604 = vst [vmem:[#allocation5 + $0x3a8] sm:$0xff] %v572
      %605 = vst [vmem:[#allocation5 + $0x3f0] sm:$0xff] %v573
      %606 = vst [vmem:[#allocation5 + $0x438] sm:$0xff] %v574
      %607 = vst [vmem:[#allocation5 + $0x480] sm:$0xff] %v575
      %608 = vst [vmem:[#allocation5 + $0x4c8] sm:$0xff] %v576
      %609 = vst [vmem:[#allocation5 + $0x510] sm:$0xff] %v577
      %610 = vst [vmem:[#allocation5 + $0x558] sm:$0xff] %v578
      %611 = vst [vmem:[#allocation5 + $0x5a0] sm:$0xff] %v579
      %612 = vst [vmem:[#allocation5 + $0x5e8] sm:$0xff] %v580
      %613 = vst [vmem:[#allocation5 + $0x630] sm:$0xff] %v581
      %614 = vst [vmem:[#allocation5 + $0x678] sm:$0xff] %v582
      %615 = vst [vmem:[#allocation5 + $0x6c0] sm:$0xff] %v583
      %616 = vst [vmem:[#allocation5 + $0x708] sm:$0xff] %v584
      %617 = vst [vmem:[#allocation5 + $0x750] sm:$0xff] %v585
      %618 = vst [vmem:[#allocation5 + $0x798] sm:$0xff] %v586
      %619 = vst [vmem:[#allocation5 + $0x7e0] sm:$0xff] %v587
      %620 = vst [vmem:[#allocation5 + $0x828] sm:$0xff] %v588
      %621 = vst [vmem:[#allocation5 + $0x870] sm:$0xff] %v589
      %622 = vst [vmem:[#allocation5 + $0x8b8] sm:$0xff] %v590
      %v623 = vld [vmem:[#allocation2 + $0x8] sm:$0xff]
      %v624 = vld [vmem:[#allocation2 + $0x10] sm:$0xff]
      %v625 = vld [vmem:[#allocation2 + $0x28] sm:$0xff]
      %v626 = vld [vmem:[#allocation2 + $0x30] sm:$0xff]
      %v627 = vld [vmem:[#allocation2 + $0x48] sm:$0xff]
      %v628 = vld [vmem:[#allocation2 + $0x50] sm:$0xff]
      %v629 = vld [vmem:[#allocation2 + $0x68] sm:$0xff]
      %v630 = vld [vmem:[#allocation2 + $0x70] sm:$0xff]
      %v631 = vld [vmem:[#allocation2 + $0x88] sm:$0xff]
      %v632 = vld [vmem:[#allocation2 + $0x90] sm:$0xff]
      %v633 = vld [vmem:[#allocation2 + $0xa8] sm:$0xff]
      %v634 = vld [vmem:[#allocation2 + $0xb0] sm:$0xff]
      %v635 = vld [vmem:[#allocation2 + $0xc8] sm:$0xff]
      %v636 = vld [vmem:[#allocation2 + $0xd0] sm:$0xff]
      %v637 = vld [vmem:[#allocation2 + $0xe8] sm:$0xff]
      %v638 = vld [vmem:[#allocation2 + $0xf0] sm:$0xff]
      %v639 = vld [vmem:[#allocation2 + $0x108] sm:$0xff]
      %v640 = vld [vmem:[#allocation2 + $0x110] sm:$0xff]
      %v641 = vld [vmem:[#allocation2 + $0x128] sm:$0xff]
      %v642 = vld [vmem:[#allocation2 + $0x130] sm:$0xff]
      %v643 = vld [vmem:[#allocation2 + $0x148] sm:$0xff]
      %v644 = vld [vmem:[#allocation2 + $0x150] sm:$0xff]
      %v645 = vld [vmem:[#allocation2 + $0x168] sm:$0xff]
      %v646 = vld [vmem:[#allocation2 + $0x170] sm:$0xff]
      %v647 = vld [vmem:[#allocation2 + $0x188] sm:$0xff]
      %v648 = vld [vmem:[#allocation2 + $0x190] sm:$0xff]
      %v649 = vld [vmem:[#allocation2 + $0x1a8] sm:$0xff]
      %v650 = vld [vmem:[#allocation2 + $0x1b0] sm:$0xff]
      %v651 = vld [vmem:[#allocation2 + $0x1c8] sm:$0xff]
      %v652 = vld [vmem:[#allocation2 + $0x1d0] sm:$0xff]
      %v653 = vld [vmem:[#allocation2 + $0x1e8] sm:$0xff]
      %v654 = vld [vmem:[#allocation2 + $0x1f0] sm:$0xff]
      %655 = vst [vmem:[#allocation5 + $0x8] sm:$0xff] %v623
      %656 = vst [vmem:[#allocation5 + $0x50] sm:$0xff] %v624
      %657 = vst [vmem:[#allocation5 + $0x98] sm:$0xff] %v625
      %658 = vst [vmem:[#allocation5 + $0xe0] sm:$0xff] %v626
      %659 = vst [vmem:[#allocation5 + $0x128] sm:$0xff] %v627
      %660 = vst [vmem:[#allocation5 + $0x170] sm:$0xff] %v628
      %661 = vst [vmem:[#allocation5 + $0x1b8] sm:$0xff] %v629
      %662 = vst [vmem:[#allocation5 + $0x200] sm:$0xff] %v630
      %663 = vst [vmem:[#allocation5 + $0x248] sm:$0xff] %v631
      %664 = vst [vmem:[#allocation5 + $0x290] sm:$0xff] %v632
      %665 = vst [vmem:[#allocation5 + $0x2d8] sm:$0xff] %v633
      %666 = vst [vmem:[#allocation5 + $0x320] sm:$0xff] %v634
      %667 = vst [vmem:[#allocation5 + $0x368] sm:$0xff] %v635
      %668 = vst [vmem:[#allocation5 + $0x3b0] sm:$0xff] %v636
      %669 = vst [vmem:[#allocation5 + $0x3f8] sm:$0xff] %v637
      %670 = vst [vmem:[#allocation5 + $0x440] sm:$0xff] %v638
      %671 = vst [vmem:[#allocation5 + $0x488] sm:$0xff] %v639
      %672 = vst [vmem:[#allocation5 + $0x4d0] sm:$0xff] %v640
      %673 = vst [vmem:[#allocation5 + $0x518] sm:$0xff] %v641
      %674 = vst [vmem:[#allocation5 + $0x560] sm:$0xff] %v642
      %675 = vst [vmem:[#allocation5 + $0x5a8] sm:$0xff] %v643
      %676 = vst [vmem:[#allocation5 + $0x5f0] sm:$0xff] %v644
      %677 = vst [vmem:[#allocation5 + $0x638] sm:$0xff] %v645
      %678 = vst [vmem:[#allocation5 + $0x680] sm:$0xff] %v646
      %679 = vst [vmem:[#allocation5 + $0x6c8] sm:$0xff] %v647
      %680 = vst [vmem:[#allocation5 + $0x710] sm:$0xff] %v648
      %681 = vst [vmem:[#allocation5 + $0x758] sm:$0xff] %v649
      %682 = vst [vmem:[#allocation5 + $0x7a0] sm:$0xff] %v650
      %683 = vst [vmem:[#allocation5 + $0x7e8] sm:$0xff] %v651
      %684 = vst [vmem:[#allocation5 + $0x830] sm:$0xff] %v652
      %685 = vst [vmem:[#allocation5 + $0x878] sm:$0xff] %v653
      %686 = vst [vmem:[#allocation5 + $0x8c0] sm:$0xff] %v654
      %v687 = vld [vmem:[#allocation2 + $0x9] sm:$0xff]
      %v688 = vld [vmem:[#allocation2 + $0x11] sm:$0xff]
      %v689 = vld [vmem:[#allocation2 + $0x29] sm:$0xff]
      %v690 = vld [vmem:[#allocation2 + $0x31] sm:$0xff]
      %v691 = vld [vmem:[#allocation2 + $0x49] sm:$0xff]
      %v692 = vld [vmem:[#allocation2 + $0x51] sm:$0xff]
      %v693 = vld [vmem:[#allocation2 + $0x69] sm:$0xff]
      %v694 = vld [vmem:[#allocation2 + $0x71] sm:$0xff]
      %v695 = vld [vmem:[#allocation2 + $0x89] sm:$0xff]
      %v696 = vld [vmem:[#allocation2 + $0x91] sm:$0xff]
      %v697 = vld [vmem:[#allocation2 + $0xa9] sm:$0xff]
      %v698 = vld [vmem:[#allocation2 + $0xb1] sm:$0xff]
      %v699 = vld [vmem:[#allocation2 + $0xc9] sm:$0xff]
      %v700 = vld [vmem:[#allocation2 + $0xd1] sm:$0xff]
      %v701 = vld [vmem:[#allocation2 + $0xe9] sm:$0xff]
      %v702 = vld [vmem:[#allocation2 + $0xf1] sm:$0xff]
      %v703 = vld [vmem:[#allocation2 + $0x109] sm:$0xff]
      %v704 = vld [vmem:[#allocation2 + $0x111] sm:$0xff]
      %v705 = vld [vmem:[#allocation2 + $0x129] sm:$0xff]
      %v706 = vld [vmem:[#allocation2 + $0x131] sm:$0xff]
      %v707 = vld [vmem:[#allocation2 + $0x149] sm:$0xff]
      %v708 = vld [vmem:[#allocation2 + $0x151] sm:$0xff]
      %v709 = vld [vmem:[#allocation2 + $0x169] sm:$0xff]
      %v710 = vld [vmem:[#allocation2 + $0x171] sm:$0xff]
      %v711 = vld [vmem:[#allocation2 + $0x189] sm:$0xff]
      %v712 = vld [vmem:[#allocation2 + $0x191] sm:$0xff]
      %v713 = vld [vmem:[#allocation2 + $0x1a9] sm:$0xff]
      %v714 = vld [vmem:[#allocation2 + $0x1b1] sm:$0xff]
      %v715 = vld [vmem:[#allocation2 + $0x1c9] sm:$0xff]
      %v716 = vld [vmem:[#allocation2 + $0x1d1] sm:$0xff]
      %v717 = vld [vmem:[#allocation2 + $0x1e9] sm:$0xff]
      %v718 = vld [vmem:[#allocation2 + $0x1f1] sm:$0xff]
      %719 = vst [vmem:[#allocation5 + $0x10] sm:$0xff] %v687
      %720 = vst [vmem:[#allocation5 + $0x58] sm:$0xff] %v688
      %721 = vst [vmem:[#allocation5 + $0xa0] sm:$0xff] %v689
      %722 = vst [vmem:[#allocation5 + $0xe8] sm:$0xff] %v690
      %723 = vst [vmem:[#allocation5 + $0x130] sm:$0xff] %v691
      %724 = vst [vmem:[#allocation5 + $0x178] sm:$0xff] %v692
      %725 = vst [vmem:[#allocation5 + $0x1c0] sm:$0xff] %v693
      %726 = vst [vmem:[#allocation5 + $0x208] sm:$0xff] %v694
      %727 = vst [vmem:[#allocation5 + $0x250] sm:$0xff] %v695
      %728 = vst [vmem:[#allocation5 + $0x298] sm:$0xff] %v696
      %729 = vst [vmem:[#allocation5 + $0x2e0] sm:$0xff] %v697
      %730 = vst [vmem:[#allocation5 + $0x328] sm:$0xff] %v698
      %731 = vst [vmem:[#allocation5 + $0x370] sm:$0xff] %v699
      %732 = vst [vmem:[#allocation5 + $0x3b8] sm:$0xff] %v700
      %733 = vst [vmem:[#allocation5 + $0x400] sm:$0xff] %v701
      %734 = vst [vmem:[#allocation5 + $0x448] sm:$0xff] %v702
      %735 = vst [vmem:[#allocation5 + $0x490] sm:$0xff] %v703
      %736 = vst [vmem:[#allocation5 + $0x4d8] sm:$0xff] %v704
      %737 = vst [vmem:[#allocation5 + $0x520] sm:$0xff] %v705
      %738 = vst [vmem:[#allocation5 + $0x568] sm:$0xff] %v706
      %739 = vst [vmem:[#allocation5 + $0x5b0] sm:$0xff] %v707
      %740 = vst [vmem:[#allocation5 + $0x5f8] sm:$0xff] %v708
      %741 = vst [vmem:[#allocation5 + $0x640] sm:$0xff] %v709
      %742 = vst [vmem:[#allocation5 + $0x688] sm:$0xff] %v710
      %743 = vst [vmem:[#allocation5 + $0x6d0] sm:$0xff] %v711
      %744 = vst [vmem:[#allocation5 + $0x718] sm:$0xff] %v712
      %745 = vst [vmem:[#allocation5 + $0x760] sm:$0xff] %v713
      %746 = vst [vmem:[#allocation5 + $0x7a8] sm:$0xff] %v714
      %747 = vst [vmem:[#allocation5 + $0x7f0] sm:$0xff] %v715
      %748 = vst [vmem:[#allocation5 + $0x838] sm:$0xff] %v716
      %749 = vst [vmem:[#allocation5 + $0x880] sm:$0xff] %v717
      %750 = vst [vmem:[#allocation5 + $0x8c8] sm:$0xff] %v718
      %v751 = vld [vmem:[%s525 + $0x7] sm:$0xff]
      %v752 = vld [vmem:[%s525 + $0xf] sm:$0xff]
      %v753 = vld [vmem:[%s525 + $0x27] sm:$0xff]
      %v754 = vld [vmem:[%s525 + $0x2f] sm:$0xff]
      %v755 = vld [vmem:[%s525 + $0x47] sm:$0xff]
      %v756 = vld [vmem:[%s525 + $0x4f] sm:$0xff]
      %v757 = vld [vmem:[%s525 + $0x67] sm:$0xff]
      %v758 = vld [vmem:[%s525 + $0x6f] sm:$0xff]
      %v759 = vld [vmem:[%s525 + $0x87] sm:$0xff]
      %v760 = vld [vmem:[%s525 + $0x8f] sm:$0xff]
      %v761 = vld [vmem:[%s525 + $0xa7] sm:$0xff]
      %v762 = vld [vmem:[%s525 + $0xaf] sm:$0xff]
      %v763 = vld [vmem:[%s525 + $0xc7] sm:$0xff]
      %v764 = vld [vmem:[%s525 + $0xcf] sm:$0xff]
      %v765 = vld [vmem:[%s525 + $0xe7] sm:$0xff]
      %v766 = vld [vmem:[%s525 + $0xef] sm:$0xff]
      %v767 = vld [vmem:[%s525 + $0x107] sm:$0xff]
      %v768 = vld [vmem:[%s525 + $0x10f] sm:$0xff]
      %v769 = vld [vmem:[%s525 + $0x127] sm:$0xff]
      %v770 = vld [vmem:[%s525 + $0x12f] sm:$0xff]
      %v771 = vld [vmem:[%s525 + $0x147] sm:$0xff]
      %v772 = vld [vmem:[%s525 + $0x14f] sm:$0xff]
      %v773 = vld [vmem:[%s525 + $0x167] sm:$0xff]
      %v774 = vld [vmem:[%s525 + $0x16f] sm:$0xff]
      %v775 = vld [vmem:[%s525 + $0x187] sm:$0xff]
      %v776 = vld [vmem:[%s525 + $0x18f] sm:$0xff]
      %v777 = vld [vmem:[%s525 + $0x1a7] sm:$0xff]
      %v778 = vld [vmem:[%s525 + $0x1af] sm:$0xff]
      %v779 = vld [vmem:[%s525 + $0x1c7] sm:$0xff]
      %v780 = vld [vmem:[%s525 + $0x1cf] sm:$0xff]
      %v781 = vld [vmem:[%s525 + $0x1e7] sm:$0xff]
      %v782 = vld [vmem:[%s525 + $0x1ef] sm:$0xff]
      %783 = vst [vmem:[#allocation5 + $0x18] sm:$0xff] %v751
      %784 = vst [vmem:[#allocation5 + $0x60] sm:$0xff] %v752
      %785 = vst [vmem:[#allocation5 + $0xa8] sm:$0xff] %v753
      %786 = vst [vmem:[#allocation5 + $0xf0] sm:$0xff] %v754
      %787 = vst [vmem:[#allocation5 + $0x138] sm:$0xff] %v755
      %788 = vst [vmem:[#allocation5 + $0x180] sm:$0xff] %v756
      %789 = vst [vmem:[#allocation5 + $0x1c8] sm:$0xff] %v757
      %790 = vst [vmem:[#allocation5 + $0x210] sm:$0xff] %v758
      %791 = vst [vmem:[#allocation5 + $0x258] sm:$0xff] %v759
      %792 = vst [vmem:[#allocation5 + $0x2a0] sm:$0xff] %v760
      %793 = vst [vmem:[#allocation5 + $0x2e8] sm:$0xff] %v761
      %794 = vst [vmem:[#allocation5 + $0x330] sm:$0xff] %v762
      %795 = vst [vmem:[#allocation5 + $0x378] sm:$0xff] %v763
      %796 = vst [vmem:[#allocation5 + $0x3c0] sm:$0xff] %v764
      %797 = vst [vmem:[#allocation5 + $0x408] sm:$0xff] %v765
      %798 = vst [vmem:[#allocation5 + $0x450] sm:$0xff] %v766
      %799 = vst [vmem:[#allocation5 + $0x498] sm:$0xff] %v767
      %800 = vst [vmem:[#allocation5 + $0x4e0] sm:$0xff] %v768
      %801 = vst [vmem:[#allocation5 + $0x528] sm:$0xff] %v769
      %802 = vst [vmem:[#allocation5 + $0x570] sm:$0xff] %v770
      %803 = vst [vmem:[#allocation5 + $0x5b8] sm:$0xff] %v771
      %804 = vst [vmem:[#allocation5 + $0x600] sm:$0xff] %v772
      %805 = vst [vmem:[#allocation5 + $0x648] sm:$0xff] %v773
      %806 = vst [vmem:[#allocation5 + $0x690] sm:$0xff] %v774
      %807 = vst [vmem:[#allocation5 + $0x6d8] sm:$0xff] %v775
      %808 = vst [vmem:[#allocation5 + $0x720] sm:$0xff] %v776
      %809 = vst [vmem:[#allocation5 + $0x768] sm:$0xff] %v777
      %810 = vst [vmem:[#allocation5 + $0x7b0] sm:$0xff] %v778
      %811 = vst [vmem:[#allocation5 + $0x7f8] sm:$0xff] %v779
      %812 = vst [vmem:[#allocation5 + $0x840] sm:$0xff] %v780
      %813 = vst [vmem:[#allocation5 + $0x888] sm:$0xff] %v781
      %814 = vst [vmem:[#allocation5 + $0x8d0] sm:$0xff] %v782
      %v815 = vld [vmem:[%s525 + $0x8] sm:$0xff]
      %v816 = vld [vmem:[%s525 + $0x10] sm:$0xff]
      %v817 = vld [vmem:[%s525 + $0x28] sm:$0xff]
      %v818 = vld [vmem:[%s525 + $0x30] sm:$0xff]
      %v819 = vld [vmem:[%s525 + $0x48] sm:$0xff]
      %v820 = vld [vmem:[%s525 + $0x50] sm:$0xff]
      %v821 = vld [vmem:[%s525 + $0x68] sm:$0xff]
      %v822 = vld [vmem:[%s525 + $0x70] sm:$0xff]
      %v823 = vld [vmem:[%s525 + $0x88] sm:$0xff]
      %v824 = vld [vmem:[%s525 + $0x90] sm:$0xff]
      %v825 = vld [vmem:[%s525 + $0xa8] sm:$0xff]
      %v826 = vld [vmem:[%s525 + $0xb0] sm:$0xff]
      %v827 = vld [vmem:[%s525 + $0xc8] sm:$0xff]
      %v828 = vld [vmem:[%s525 + $0xd0] sm:$0xff]
      %v829 = vld [vmem:[%s525 + $0xe8] sm:$0xff]
      %v830 = vld [vmem:[%s525 + $0xf0] sm:$0xff]
      %v831 = vld [vmem:[%s525 + $0x108] sm:$0xff]
      %v832 = vld [vmem:[%s525 + $0x110] sm:$0xff]
      %v833 = vld [vmem:[%s525 + $0x128] sm:$0xff]
      %v834 = vld [vmem:[%s525 + $0x130] sm:$0xff]
      %v835 = vld [vmem:[%s525 + $0x148] sm:$0xff]
      %v836 = vld [vmem:[%s525 + $0x150] sm:$0xff]
      %v837 = vld [vmem:[%s525 + $0x168] sm:$0xff]
      %v838 = vld [vmem:[%s525 + $0x170] sm:$0xff]
      %v839 = vld [vmem:[%s525 + $0x188] sm:$0xff]
      %v840 = vld [vmem:[%s525 + $0x190] sm:$0xff]
      %v841 = vld [vmem:[%s525 + $0x1a8] sm:$0xff]
      %v842 = vld [vmem:[%s525 + $0x1b0] sm:$0xff]
      %v843 = vld [vmem:[%s525 + $0x1c8] sm:$0xff]
      %v844 = vld [vmem:[%s525 + $0x1d0] sm:$0xff]
      %v845 = vld [vmem:[%s525 + $0x1e8] sm:$0xff]
      %v846 = vld [vmem:[%s525 + $0x1f0] sm:$0xff]
      %847 = vst [vmem:[#allocation5 + $0x20] sm:$0xff] %v815
      %848 = vst [vmem:[#allocation5 + $0x68] sm:$0xff] %v816
      %849 = vst [vmem:[#allocation5 + $0xb0] sm:$0xff] %v817
      %850 = vst [vmem:[#allocation5 + $0xf8] sm:$0xff] %v818
      %851 = vst [vmem:[#allocation5 + $0x140] sm:$0xff] %v819
      %852 = vst [vmem:[#allocation5 + $0x188] sm:$0xff] %v820
      %853 = vst [vmem:[#allocation5 + $0x1d0] sm:$0xff] %v821
      %854 = vst [vmem:[#allocation5 + $0x218] sm:$0xff] %v822
      %855 = vst [vmem:[#allocation5 + $0x260] sm:$0xff] %v823
      %856 = vst [vmem:[#allocation5 + $0x2a8] sm:$0xff] %v824
      %857 = vst [vmem:[#allocation5 + $0x2f0] sm:$0xff] %v825
      %858 = vst [vmem:[#allocation5 + $0x338] sm:$0xff] %v826
      %859 = vst [vmem:[#allocation5 + $0x380] sm:$0xff] %v827
      %860 = vst [vmem:[#allocation5 + $0x3c8] sm:$0xff] %v828
      %861 = vst [vmem:[#allocation5 + $0x410] sm:$0xff] %v829
      %862 = vst [vmem:[#allocation5 + $0x458] sm:$0xff] %v830
      %863 = vst [vmem:[#allocation5 + $0x4a0] sm:$0xff] %v831
      %864 = vst [vmem:[#allocation5 + $0x4e8] sm:$0xff] %v832
      %865 = vst [vmem:[#allocation5 + $0x530] sm:$0xff] %v833
      %866 = vst [vmem:[#allocation5 + $0x578] sm:$0xff] %v834
      %867 = vst [vmem:[#allocation5 + $0x5c0] sm:$0xff] %v835
      %868 = vst [vmem:[#allocation5 + $0x608] sm:$0xff] %v836
      %869 = vst [vmem:[#allocation5 + $0x650] sm:$0xff] %v837
      %870 = vst [vmem:[#allocation5 + $0x698] sm:$0xff] %v838
      %871 = vst [vmem:[#allocation5 + $0x6e0] sm:$0xff] %v839
      %872 = vst [vmem:[#allocation5 + $0x728] sm:$0xff] %v840
      %873 = vst [vmem:[#allocation5 + $0x770] sm:$0xff] %v841
      %874 = vst [vmem:[#allocation5 + $0x7b8] sm:$0xff] %v842
      %875 = vst [vmem:[#allocation5 + $0x800] sm:$0xff] %v843
      %876 = vst [vmem:[#allocation5 + $0x848] sm:$0xff] %v844
      %877 = vst [vmem:[#allocation5 + $0x890] sm:$0xff] %v845
      %878 = vst [vmem:[#allocation5 + $0x8d8] sm:$0xff] %v846
      %v879 = vld [vmem:[%s525 + $0x9] sm:$0xff]
      %v880 = vld [vmem:[%s525 + $0x11] sm:$0xff]
      %v881 = vld [vmem:[%s525 + $0x29] sm:$0xff]
      %v882 = vld [vmem:[%s525 + $0x31] sm:$0xff]
      %v883 = vld [vmem:[%s525 + $0x49] sm:$0xff]
      %v884 = vld [vmem:[%s525 + $0x51] sm:$0xff]
      %v885 = vld [vmem:[%s525 + $0x69] sm:$0xff]
      %v886 = vld [vmem:[%s525 + $0x71] sm:$0xff]
      %v887 = vld [vmem:[%s525 + $0x89] sm:$0xff]
      %v888 = vld [vmem:[%s525 + $0x91] sm:$0xff]
      %v889 = vld [vmem:[%s525 + $0xa9] sm:$0xff]
      %v890 = vld [vmem:[%s525 + $0xb1] sm:$0xff]
      %v891 = vld [vmem:[%s525 + $0xc9] sm:$0xff]
      %v892 = vld [vmem:[%s525 + $0xd1] sm:$0xff]
      %v893 = vld [vmem:[%s525 + $0xe9] sm:$0xff]
      %v894 = vld [vmem:[%s525 + $0xf1] sm:$0xff]
      %v895 = vld [vmem:[%s525 + $0x109] sm:$0xff]
      %v896 = vld [vmem:[%s525 + $0x111] sm:$0xff]
      %v897 = vld [vmem:[%s525 + $0x129] sm:$0xff]
      %v898 = vld [vmem:[%s525 + $0x131] sm:$0xff]
      %v899 = vld [vmem:[%s525 + $0x149] sm:$0xff]
      %v900 = vld [vmem:[%s525 + $0x151] sm:$0xff]
      %v901 = vld [vmem:[%s525 + $0x169] sm:$0xff]
      %v902 = vld [vmem:[%s525 + $0x171] sm:$0xff]
      %v903 = vld [vmem:[%s525 + $0x189] sm:$0xff]
      %v904 = vld [vmem:[%s525 + $0x191] sm:$0xff]
      %v905 = vld [vmem:[%s525 + $0x1a9] sm:$0xff]
      %v906 = vld [vmem:[%s525 + $0x1b1] sm:$0xff]
      %v907 = vld [vmem:[%s525 + $0x1c9] sm:$0xff]
      %v908 = vld [vmem:[%s525 + $0x1d1] sm:$0xff]
      %v909 = vld [vmem:[%s525 + $0x1e9] sm:$0xff]
      %v910 = vld [vmem:[%s525 + $0x1f1] sm:$0xff]
      %911 = vst [vmem:[#allocation5 + $0x28] sm:$0xff] %v879
      %912 = vst [vmem:[#allocation5 + $0x70] sm:$0xff] %v880
      %913 = vst [vmem:[#allocation5 + $0xb8] sm:$0xff] %v881
      %914 = vst [vmem:[#allocation5 + $0x100] sm:$0xff] %v882
      %915 = vst [vmem:[#allocation5 + $0x148] sm:$0xff] %v883
      %916 = vst [vmem:[#allocation5 + $0x190] sm:$0xff] %v884
      %917 = vst [vmem:[#allocation5 + $0x1d8] sm:$0xff] %v885
      %918 = vst [vmem:[#allocation5 + $0x220] sm:$0xff] %v886
      %919 = vst [vmem:[#allocation5 + $0x268] sm:$0xff] %v887
      %920 = vst [vmem:[#allocation5 + $0x2b0] sm:$0xff] %v888
      %921 = vst [vmem:[#allocation5 + $0x2f8] sm:$0xff] %v889
      %922 = vst [vmem:[#allocation5 + $0x340] sm:$0xff] %v890
      %923 = vst [vmem:[#allocation5 + $0x388] sm:$0xff] %v891
      %924 = vst [vmem:[#allocation5 + $0x3d0] sm:$0xff] %v892
      %925 = vst [vmem:[#allocation5 + $0x418] sm:$0xff] %v893
      %926 = vst [vmem:[#allocation5 + $0x460] sm:$0xff] %v894
      %927 = vst [vmem:[#allocation5 + $0x4a8] sm:$0xff] %v895
      %928 = vst [vmem:[#allocation5 + $0x4f0] sm:$0xff] %v896
      %929 = vst [vmem:[#allocation5 + $0x538] sm:$0xff] %v897
      %930 = vst [vmem:[#allocation5 + $0x580] sm:$0xff] %v898
      %931 = vst [vmem:[#allocation5 + $0x5c8] sm:$0xff] %v899
      %932 = vst [vmem:[#allocation5 + $0x610] sm:$0xff] %v900
      %933 = vst [vmem:[#allocation5 + $0x658] sm:$0xff] %v901
      %934 = vst [vmem:[#allocation5 + $0x6a0] sm:$0xff] %v902
      %935 = vst [vmem:[#allocation5 + $0x6e8] sm:$0xff] %v903
      %936 = vst [vmem:[#allocation5 + $0x730] sm:$0xff] %v904
      %937 = vst [vmem:[#allocation5 + $0x778] sm:$0xff] %v905
      %938 = vst [vmem:[#allocation5 + $0x7c0] sm:$0xff] %v906
      %939 = vst [vmem:[#allocation5 + $0x808] sm:$0xff] %v907
      %940 = vst [vmem:[#allocation5 + $0x850] sm:$0xff] %v908
      %941 = vst [vmem:[#allocation5 + $0x898] sm:$0xff] %v909
      %942 = vst [vmem:[#allocation5 + $0x8e0] sm:$0xff] %v910
      %s943 = scalar_lea.vmem [#allocation2], 64
      %v944 = vld [vmem:[%s943 + $0x7] sm:$0xff]
      %v945 = vld [vmem:[%s943 + $0xf] sm:$0xff]
      %v946 = vld [vmem:[%s943 + $0x27] sm:$0xff]
      %v947 = vld [vmem:[%s943 + $0x2f] sm:$0xff]
      %v948 = vld [vmem:[%s943 + $0x47] sm:$0xff]
      %v949 = vld [vmem:[%s943 + $0x4f] sm:$0xff]
      %v950 = vld [vmem:[%s943 + $0x67] sm:$0xff]
      %v951 = vld [vmem:[%s943 + $0x6f] sm:$0xff]
      %v952 = vld [vmem:[%s943 + $0x87] sm:$0xff]
      %v953 = vld [vmem:[%s943 + $0x8f] sm:$0xff]
      %v954 = vld [vmem:[%s943 + $0xa7] sm:$0xff]
      %v955 = vld [vmem:[%s943 + $0xaf] sm:$0xff]
      %v956 = vld [vmem:[%s943 + $0xc7] sm:$0xff]
      %v957 = vld [vmem:[%s943 + $0xcf] sm:$0xff]
      %v958 = vld [vmem:[%s943 + $0xe7] sm:$0xff]
      %v959 = vld [vmem:[%s943 + $0xef] sm:$0xff]
      %v960 = vld [vmem:[%s943 + $0x107] sm:$0xff]
      %v961 = vld [vmem:[%s943 + $0x10f] sm:$0xff]
      %v962 = vld [vmem:[%s943 + $0x127] sm:$0xff]
      %v963 = vld [vmem:[%s943 + $0x12f] sm:$0xff]
      %v964 = vld [vmem:[%s943 + $0x147] sm:$0xff]
      %v965 = vld [vmem:[%s943 + $0x14f] sm:$0xff]
      %v966 = vld [vmem:[%s943 + $0x167] sm:$0xff]
      %v967 = vld [vmem:[%s943 + $0x16f] sm:$0xff]
      %v968 = vld [vmem:[%s943 + $0x187] sm:$0xff]
      %v969 = vld [vmem:[%s943 + $0x18f] sm:$0xff]
      %v970 = vld [vmem:[%s943 + $0x1a7] sm:$0xff]
      %v971 = vld [vmem:[%s943 + $0x1af] sm:$0xff]
      %v972 = vld [vmem:[%s943 + $0x1c7] sm:$0xff]
      %v973 = vld [vmem:[%s943 + $0x1cf] sm:$0xff]
      %v974 = vld [vmem:[%s943 + $0x1e7] sm:$0xff]
      %v975 = vld [vmem:[%s943 + $0x1ef] sm:$0xff]
      %976 = vst [vmem:[#allocation5 + $0x30] sm:$0xff] %v944
      %977 = vst [vmem:[#allocation5 + $0x78] sm:$0xff] %v945
      %978 = vst [vmem:[#allocation5 + $0xc0] sm:$0xff] %v946
      %979 = vst [vmem:[#allocation5 + $0x108] sm:$0xff] %v947
      %980 = vst [vmem:[#allocation5 + $0x150] sm:$0xff] %v948
      %981 = vst [vmem:[#allocation5 + $0x198] sm:$0xff] %v949
      %982 = vst [vmem:[#allocation5 + $0x1e0] sm:$0xff] %v950
      %983 = vst [vmem:[#allocation5 + $0x228] sm:$0xff] %v951
      %984 = vst [vmem:[#allocation5 + $0x270] sm:$0xff] %v952
      %985 = vst [vmem:[#allocation5 + $0x2b8] sm:$0xff] %v953
      %986 = vst [vmem:[#allocation5 + $0x300] sm:$0xff] %v954
      %987 = vst [vmem:[#allocation5 + $0x348] sm:$0xff] %v955
      %988 = vst [vmem:[#allocation5 + $0x390] sm:$0xff] %v956
      %989 = vst [vmem:[#allocation5 + $0x3d8] sm:$0xff] %v957
      %990 = vst [vmem:[#allocation5 + $0x420] sm:$0xff] %v958
      %991 = vst [vmem:[#allocation5 + $0x468] sm:$0xff] %v959
      %992 = vst [vmem:[#allocation5 + $0x4b0] sm:$0xff] %v960
      %993 = vst [vmem:[#allocation5 + $0x4f8] sm:$0xff] %v961
      %994 = vst [vmem:[#allocation5 + $0x540] sm:$0xff] %v962
      %995 = vst [vmem:[#allocation5 + $0x588] sm:$0xff] %v963
      %996 = vst [vmem:[#allocation5 + $0x5d0] sm:$0xff] %v964
      %997 = vst [vmem:[#allocation5 + $0x618] sm:$0xff] %v965
      %998 = vst [vmem:[#allocation5 + $0x660] sm:$0xff] %v966
      %999 = vst [vmem:[#allocation5 + $0x6a8] sm:$0xff] %v967
      %1000 = vst [vmem:[#allocation5 + $0x6f0] sm:$0xff] %v968
      %1001 = vst [vmem:[#allocation5 + $0x738] sm:$0xff] %v969
      %1002 = vst [vmem:[#allocation5 + $0x780] sm:$0xff] %v970
      %1003 = vst [vmem:[#allocation5 + $0x7c8] sm:$0xff] %v971
      %1004 = vst [vmem:[#allocation5 + $0x810] sm:$0xff] %v972
      %1005 = vst [vmem:[#allocation5 + $0x858] sm:$0xff] %v973
      %1006 = vst [vmem:[#allocation5 + $0x8a0] sm:$0xff] %v974
      %1007 = vst [vmem:[#allocation5 + $0x8e8] sm:$0xff] %v975
      %v1008 = vld [vmem:[%s943 + $0x8] sm:$0xff]
      %v1009 = vld [vmem:[%s943 + $0x10] sm:$0xff]
      %v1010 = vld [vmem:[%s943 + $0x28] sm:$0xff]
      %v1011 = vld [vmem:[%s943 + $0x30] sm:$0xff]
      %v1012 = vld [vmem:[%s943 + $0x48] sm:$0xff]
      %v1013 = vld [vmem:[%s943 + $0x50] sm:$0xff]
      %v1014 = vld [vmem:[%s943 + $0x68] sm:$0xff]
      %v1015 = vld [vmem:[%s943 + $0x70] sm:$0xff]
      %v1016 = vld [vmem:[%s943 + $0x88] sm:$0xff]
      %v1017 = vld [vmem:[%s943 + $0x90] sm:$0xff]
      %v1018 = vld [vmem:[%s943 + $0xa8] sm:$0xff]
      %v1019 = vld [vmem:[%s943 + $0xb0] sm:$0xff]
      %v1020 = vld [vmem:[%s943 + $0xc8] sm:$0xff]
      %v1021 = vld [vmem:[%s943 + $0xd0] sm:$0xff]
      %v1022 = vld [vmem:[%s943 + $0xe8] sm:$0xff]
      %v1023 = vld [vmem:[%s943 + $0xf0] sm:$0xff]
      %v1024 = vld [vmem:[%s943 + $0x108] sm:$0xff]
      %v1025 = vld [vmem:[%s943 + $0x110] sm:$0xff]
      %v1026 = vld [vmem:[%s943 + $0x128] sm:$0xff]
      %v1027 = vld [vmem:[%s943 + $0x130] sm:$0xff]
      %v1028 = vld [vmem:[%s943 + $0x148] sm:$0xff]
      %v1029 = vld [vmem:[%s943 + $0x150] sm:$0xff]
      %v1030 = vld [vmem:[%s943 + $0x168] sm:$0xff]
      %v1031 = vld [vmem:[%s943 + $0x170] sm:$0xff]
      %v1032 = vld [vmem:[%s943 + $0x188] sm:$0xff]
      %v1033 = vld [vmem:[%s943 + $0x190] sm:$0xff]
      %v1034 = vld [vmem:[%s943 + $0x1a8] sm:$0xff]
      %v1035 = vld [vmem:[%s943 + $0x1b0] sm:$0xff]
      %v1036 = vld [vmem:[%s943 + $0x1c8] sm:$0xff]
      %v1037 = vld [vmem:[%s943 + $0x1d0] sm:$0xff]
      %v1038 = vld [vmem:[%s943 + $0x1e8] sm:$0xff]
      %v1039 = vld [vmem:[%s943 + $0x1f0] sm:$0xff]
      %1040 = vst [vmem:[#allocation5 + $0x38] sm:$0xff] %v1008
      %1041 = vst [vmem:[#allocation5 + $0x80] sm:$0xff] %v1009
      %1042 = vst [vmem:[#allocation5 + $0xc8] sm:$0xff] %v1010
      %1043 = vst [vmem:[#allocation5 + $0x110] sm:$0xff] %v1011
      %1044 = vst [vmem:[#allocation5 + $0x158] sm:$0xff] %v1012
      %1045 = vst [vmem:[#allocation5 + $0x1a0] sm:$0xff] %v1013
      %1046 = vst [vmem:[#allocation5 + $0x1e8] sm:$0xff] %v1014
      %1047 = vst [vmem:[#allocation5 + $0x230] sm:$0xff] %v1015
      %1048 = vst [vmem:[#allocation5 + $0x278] sm:$0xff] %v1016
      %1049 = vst [vmem:[#allocation5 + $0x2c0] sm:$0xff] %v1017
      %1050 = vst [vmem:[#allocation5 + $0x308] sm:$0xff] %v1018
      %1051 = vst [vmem:[#allocation5 + $0x350] sm:$0xff] %v1019
      %1052 = vst [vmem:[#allocation5 + $0x398] sm:$0xff] %v1020
      %1053 = vst [vmem:[#allocation5 + $0x3e0] sm:$0xff] %v1021
      %1054 = vst [vmem:[#allocation5 + $0x428] sm:$0xff] %v1022
      %1055 = vst [vmem:[#allocation5 + $0x470] sm:$0xff] %v1023
      %1056 = vst [vmem:[#allocation5 + $0x4b8] sm:$0xff] %v1024
      %1057 = vst [vmem:[#allocation5 + $0x500] sm:$0xff] %v1025
      %1058 = vst [vmem:[#allocation5 + $0x548] sm:$0xff] %v1026
      %1059 = vst [vmem:[#allocation5 + $0x590] sm:$0xff] %v1027
      %1060 = vst [vmem:[#allocation5 + $0x5d8] sm:$0xff] %v1028
      %1061 = vst [vmem:[#allocation5 + $0x620] sm:$0xff] %v1029
      %1062 = vst [vmem:[#allocation5 + $0x668] sm:$0xff] %v1030
      %1063 = vst [vmem:[#allocation5 + $0x6b0] sm:$0xff] %v1031
      %1064 = vst [vmem:[#allocation5 + $0x6f8] sm:$0xff] %v1032
      %1065 = vst [vmem:[#allocation5 + $0x740] sm:$0xff] %v1033
      %1066 = vst [vmem:[#allocation5 + $0x788] sm:$0xff] %v1034
      %1067 = vst [vmem:[#allocation5 + $0x7d0] sm:$0xff] %v1035
      %1068 = vst [vmem:[#allocation5 + $0x818] sm:$0xff] %v1036
      %1069 = vst [vmem:[#allocation5 + $0x860] sm:$0xff] %v1037
      %1070 = vst [vmem:[#allocation5 + $0x8a8] sm:$0xff] %v1038
      %1071 = vst [vmem:[#allocation5 + $0x8f0] sm:$0xff] %v1039
      %v1072 = vld [vmem:[%s943 + $0x9] sm:$0xff]
      %v1073 = vld [vmem:[%s943 + $0x11] sm:$0xff]
      %v1074 = vld [vmem:[%s943 + $0x29] sm:$0xff]
      %v1075 = vld [vmem:[%s943 + $0x31] sm:$0xff]
      %v1076 = vld [vmem:[%s943 + $0x49] sm:$0xff]
      %v1077 = vld [vmem:[%s943 + $0x51] sm:$0xff]
      %v1078 = vld [vmem:[%s943 + $0x69] sm:$0xff]
      %v1079 = vld [vmem:[%s943 + $0x71] sm:$0xff]
      %v1080 = vld [vmem:[%s943 + $0x89] sm:$0xff]
      %v1081 = vld [vmem:[%s943 + $0x91] sm:$0xff]
      %v1082 = vld [vmem:[%s943 + $0xa9] sm:$0xff]
      %v1083 = vld [vmem:[%s943 + $0xb1] sm:$0xff]
      %v1084 = vld [vmem:[%s943 + $0xc9] sm:$0xff]
      %v1085 = vld [vmem:[%s943 + $0xd1] sm:$0xff]
      %v1086 = vld [vmem:[%s943 + $0xe9] sm:$0xff]
      %v1087 = vld [vmem:[%s943 + $0xf1] sm:$0xff]
      %v1088 = vld [vmem:[%s943 + $0x109] sm:$0xff]
      %v1089 = vld [vmem:[%s943 + $0x111] sm:$0xff]
      %v1090 = vld [vmem:[%s943 + $0x129] sm:$0xff]
      %v1091 = vld [vmem:[%s943 + $0x131] sm:$0xff]
      %v1092 = vld [vmem:[%s943 + $0x149] sm:$0xff]
      %v1093 = vld [vmem:[%s943 + $0x151] sm:$0xff]
      %v1094 = vld [vmem:[%s943 + $0x169] sm:$0xff]
      %v1095 = vld [vmem:[%s943 + $0x171] sm:$0xff]
      %v1096 = vld [vmem:[%s943 + $0x189] sm:$0xff]
      %v1097 = vld [vmem:[%s943 + $0x191] sm:$0xff]
      %v1098 = vld [vmem:[%s943 + $0x1a9] sm:$0xff]
      %v1099 = vld [vmem:[%s943 + $0x1b1] sm:$0xff]
      %v1100 = vld [vmem:[%s943 + $0x1c9] sm:$0xff]
      %v1101 = vld [vmem:[%s943 + $0x1d1] sm:$0xff]
      %v1102 = vld [vmem:[%s943 + $0x1e9] sm:$0xff]
      %v1103 = vld [vmem:[%s943 + $0x1f1] sm:$0xff]
      %1104 = vst [vmem:[#allocation5 + $0x40] sm:$0xff] %v1072
      %1105 = vst [vmem:[#allocation5 + $0x88] sm:$0xff] %v1073
      %1106 = vst [vmem:[#allocation5 + $0xd0] sm:$0xff] %v1074
      %1107 = vst [vmem:[#allocation5 + $0x118] sm:$0xff] %v1075
      %1108 = vst [vmem:[#allocation5 + $0x160] sm:$0xff] %v1076
      %1109 = vst [vmem:[#allocation5 + $0x1a8] sm:$0xff] %v1077
      %1110 = vst [vmem:[#allocation5 + $0x1f0] sm:$0xff] %v1078
      %1111 = vst [vmem:[#allocation5 + $0x238] sm:$0xff] %v1079
      %1112 = vst [vmem:[#allocation5 + $0x280] sm:$0xff] %v1080
      %1113 = vst [vmem:[#allocation5 + $0x2c8] sm:$0xff] %v1081
      %1114 = vst [vmem:[#allocation5 + $0x310] sm:$0xff] %v1082
      %1115 = vst [vmem:[#allocation5 + $0x358] sm:$0xff] %v1083
      %1116 = vst [vmem:[#allocation5 + $0x3a0] sm:$0xff] %v1084
      %1117 = vst [vmem:[#allocation5 + $0x3e8] sm:$0xff] %v1085
      %1118 = vst [vmem:[#allocation5 + $0x430] sm:$0xff] %v1086
      %1119 = vst [vmem:[#allocation5 + $0x478] sm:$0xff] %v1087
      %1120 = vst [vmem:[#allocation5 + $0x4c0] sm:$0xff] %v1088
      %1121 = vst [vmem:[#allocation5 + $0x508] sm:$0xff] %v1089
      %1122 = vst [vmem:[#allocation5 + $0x550] sm:$0xff] %v1090
      %1123 = vst [vmem:[#allocation5 + $0x598] sm:$0xff] %v1091
      %1124 = vst [vmem:[#allocation5 + $0x5e0] sm:$0xff] %v1092
      %1125 = vst [vmem:[#allocation5 + $0x628] sm:$0xff] %v1093
      %1126 = vst [vmem:[#allocation5 + $0x670] sm:$0xff] %v1094
      %1127 = vst [vmem:[#allocation5 + $0x6b8] sm:$0xff] %v1095
      %1128 = vst [vmem:[#allocation5 + $0x700] sm:$0xff] %v1096
      %1129 = vst [vmem:[#allocation5 + $0x748] sm:$0xff] %v1097
      %1130 = vst [vmem:[#allocation5 + $0x790] sm:$0xff] %v1098
      %1131 = vst [vmem:[#allocation5 + $0x7d8] sm:$0xff] %v1099
      %1132 = vst [vmem:[#allocation5 + $0x820] sm:$0xff] %v1100
      %1133 = vst [vmem:[#allocation5 + $0x868] sm:$0xff] %v1101
      %1134 = vst [vmem:[#allocation5 + $0x8b0] sm:$0xff] %v1102
      %1135 = vst [vmem:[#allocation5 + $0x8f8] sm:$0xff] %v1103
      %v1136 = vld [vmem:[#allocation5] sm:$0xff]
      %v1137 = vld [vmem:[#allocation5 + $0x8] sm:$0xff]
      %v1138 = vld [vmem:[#allocation5 + $0x10] sm:$0xff]
      %v1139 = vld [vmem:[#allocation5 + $0x18] sm:$0xff]
      %v1140 = vld [vmem:[#allocation5 + $0x20] sm:$0xff]
      %v1141 = vld [vmem:[#allocation5 + $0x28] sm:$0xff]
      %v1142 = vld [vmem:[#allocation5 + $0x30] sm:$0xff]
      %v1143 = vld [vmem:[#allocation5 + $0x38] sm:$0xff]
      %v1144 = vld [vmem:[#allocation5 + $0x40] sm:$0xff]
      %v1145 = vld [vmem:[#allocation5 + $0x48] sm:$0xff]
      %v1146 = vld [vmem:[#allocation5 + $0x50] sm:$0xff]
      %v1147 = vld [vmem:[#allocation5 + $0x58] sm:$0xff]
      %v1148 = vld [vmem:[#allocation5 + $0x60] sm:$0xff]
      %v1149 = vld [vmem:[#allocation5 + $0x68] sm:$0xff]
      %v1150 = vld [vmem:[#allocation5 + $0x70] sm:$0xff]
      %v1151 = vld [vmem:[#allocation5 + $0x78] sm:$0xff]
      %v1152 = vld [vmem:[#allocation5 + $0x80] sm:$0xff]
      %v1153 = vld [vmem:[#allocation5 + $0x88] sm:$0xff]
      %v1154 = vld [vmem:[#allocation5 + $0x90] sm:$0xff]
      %v1155 = vld [vmem:[#allocation5 + $0x98] sm:$0xff]
      %v1156 = vld [vmem:[#allocation5 + $0xa0] sm:$0xff]
      %v1157 = vld [vmem:[#allocation5 + $0xa8] sm:$0xff]
      %v1158 = vld [vmem:[#allocation5 + $0xb0] sm:$0xff]
      %v1159 = vld [vmem:[#allocation5 + $0xb8] sm:$0xff]
      %v1160 = vld [vmem:[#allocation5 + $0xc0] sm:$0xff]
      %v1161 = vld [vmem:[#allocation5 + $0xc8] sm:$0xff]
      %v1162 = vld [vmem:[#allocation5 + $0xd0] sm:$0xff]
      %v1163 = vld [vmem:[#allocation5 + $0xd8] sm:$0xff]
      %v1164 = vld [vmem:[#allocation5 + $0xe0] sm:$0xff]
      %v1165 = vld [vmem:[#allocation5 + $0xe8] sm:$0xff]
      %v1166 = vld [vmem:[#allocation5 + $0xf0] sm:$0xff]
      %v1167 = vld [vmem:[#allocation5 + $0xf8] sm:$0xff]
      %v1168 = vld [vmem:[#allocation5 + $0x100] sm:$0xff]
      %v1169 = vld [vmem:[#allocation5 + $0x108] sm:$0xff]
      %v1170 = vld [vmem:[#allocation5 + $0x110] sm:$0xff]
      %v1171 = vld [vmem:[#allocation5 + $0x118] sm:$0xff]
      %v1172 = vld [vmem:[#allocation5 + $0x120] sm:$0xff]
      %v1173 = vld [vmem:[#allocation5 + $0x128] sm:$0xff]
      %v1174 = vld [vmem:[#allocation5 + $0x130] sm:$0xff]
      %v1175 = vld [vmem:[#allocation5 + $0x138] sm:$0xff]
      %v1176 = vld [vmem:[#allocation5 + $0x140] sm:$0xff]
      %v1177 = vld [vmem:[#allocation5 + $0x148] sm:$0xff]
      %v1178 = vld [vmem:[#allocation5 + $0x150] sm:$0xff]
      %v1179 = vld [vmem:[#allocation5 + $0x158] sm:$0xff]
      %v1180 = vld [vmem:[#allocation5 + $0x160] sm:$0xff]
      %v1181 = vld [vmem:[#allocation5 + $0x168] sm:$0xff]
      %v1182 = vld [vmem:[#allocation5 + $0x170] sm:$0xff]
      %v1183 = vld [vmem:[#allocation5 + $0x178] sm:$0xff]
      %v1184 = vld [vmem:[#allocation5 + $0x180] sm:$0xff]
      %v1185 = vld [vmem:[#allocation5 + $0x188] sm:$0xff]
      %v1186 = vld [vmem:[#allocation5 + $0x190] sm:$0xff]
      %v1187 = vld [vmem:[#allocation5 + $0x198] sm:$0xff]
      %v1188 = vld [vmem:[#allocation5 + $0x1a0] sm:$0xff]
      %v1189 = vld [vmem:[#allocation5 + $0x1a8] sm:$0xff]
      %v1190 = vld [vmem:[#allocation5 + $0x1b0] sm:$0xff]
      %v1191 = vld [vmem:[#allocation5 + $0x1b8] sm:$0xff]
      %v1192 = vld [vmem:[#allocation5 + $0x1c0] sm:$0xff]
      %v1193 = vld [vmem:[#allocation5 + $0x1c8] sm:$0xff]
      %v1194 = vld [vmem:[#allocation5 + $0x1d0] sm:$0xff]
      %v1195 = vld [vmem:[#allocation5 + $0x1d8] sm:$0xff]
      %v1196 = vld [vmem:[#allocation5 + $0x1e0] sm:$0xff]
      %v1197 = vld [vmem:[#allocation5 + $0x1e8] sm:$0xff]
      %v1198 = vld [vmem:[#allocation5 + $0x1f0] sm:$0xff]
      %v1199 = vld [vmem:[#allocation5 + $0x1f8] sm:$0xff]
      %v1200 = vld [vmem:[#allocation5 + $0x200] sm:$0xff]
      %v1201 = vld [vmem:[#allocation5 + $0x208] sm:$0xff]
      %v1202 = vld [vmem:[#allocation5 + $0x210] sm:$0xff]
      %v1203 = vld [vmem:[#allocation5 + $0x218] sm:$0xff]
      %v1204 = vld [vmem:[#allocation5 + $0x220] sm:$0xff]
      %v1205 = vld [vmem:[#allocation5 + $0x228] sm:$0xff]
      %v1206 = vld [vmem:[#allocation5 + $0x230] sm:$0xff]
      %v1207 = vld [vmem:[#allocation5 + $0x238] sm:$0xff]
      %v1208 = vld [vmem:[#allocation5 + $0x240] sm:$0xff]
      %v1209 = vld [vmem:[#allocation5 + $0x248] sm:$0xff]
      %v1210 = vld [vmem:[#allocation5 + $0x250] sm:$0xff]
      %v1211 = vld [vmem:[#allocation5 + $0x258] sm:$0xff]
      %v1212 = vld [vmem:[#allocation5 + $0x260] sm:$0xff]
      %v1213 = vld [vmem:[#allocation5 + $0x268] sm:$0xff]
      %v1214 = vld [vmem:[#allocation5 + $0x270] sm:$0xff]
      %v1215 = vld [vmem:[#allocation5 + $0x278] sm:$0xff]
      %v1216 = vld [vmem:[#allocation5 + $0x280] sm:$0xff]
      %v1217 = vld [vmem:[#allocation5 + $0x288] sm:$0xff]
      %v1218 = vld [vmem:[#allocation5 + $0x290] sm:$0xff]
      %v1219 = vld [vmem:[#allocation5 + $0x298] sm:$0xff]
      %v1220 = vld [vmem:[#allocation5 + $0x2a0] sm:$0xff]
      %v1221 = vld [vmem:[#allocation5 + $0x2a8] sm:$0xff]
      %v1222 = vld [vmem:[#allocation5 + $0x2b0] sm:$0xff]
      %v1223 = vld [vmem:[#allocation5 + $0x2b8] sm:$0xff]
      %v1224 = vld [vmem:[#allocation5 + $0x2c0] sm:$0xff]
      %v1225 = vld [vmem:[#allocation5 + $0x2c8] sm:$0xff]
      %v1226 = vld [vmem:[#allocation5 + $0x2d0] sm:$0xff]
      %v1227 = vld [vmem:[#allocation5 + $0x2d8] sm:$0xff]
      %v1228 = vld [vmem:[#allocation5 + $0x2e0] sm:$0xff]
      %v1229 = vld [vmem:[#allocation5 + $0x2e8] sm:$0xff]
      %v1230 = vld [vmem:[#allocation5 + $0x2f0] sm:$0xff]
      %v1231 = vld [vmem:[#allocation5 + $0x2f8] sm:$0xff]
      %v1232 = vld [vmem:[#allocation5 + $0x300] sm:$0xff]
      %v1233 = vld [vmem:[#allocation5 + $0x308] sm:$0xff]
      %v1234 = vld [vmem:[#allocation5 + $0x310] sm:$0xff]
      %v1235 = vld [vmem:[#allocation5 + $0x318] sm:$0xff]
      %v1236 = vld [vmem:[#allocation5 + $0x320] sm:$0xff]
      %v1237 = vld [vmem:[#allocation5 + $0x328] sm:$0xff]
      %v1238 = vld [vmem:[#allocation5 + $0x330] sm:$0xff]
      %v1239 = vld [vmem:[#allocation5 + $0x338] sm:$0xff]
      %v1240 = vld [vmem:[#allocation5 + $0x340] sm:$0xff]
      %v1241 = vld [vmem:[#allocation5 + $0x348] sm:$0xff]
      %v1242 = vld [vmem:[#allocation5 + $0x350] sm:$0xff]
      %v1243 = vld [vmem:[#allocation5 + $0x358] sm:$0xff]
      %v1244 = vld [vmem:[#allocation5 + $0x360] sm:$0xff]
      %v1245 = vld [vmem:[#allocation5 + $0x368] sm:$0xff]
      %v1246 = vld [vmem:[#allocation5 + $0x370] sm:$0xff]
      %v1247 = vld [vmem:[#allocation5 + $0x378] sm:$0xff]
      %v1248 = vld [vmem:[#allocation5 + $0x380] sm:$0xff]
      %v1249 = vld [vmem:[#allocation5 + $0x388] sm:$0xff]
      %v1250 = vld [vmem:[#allocation5 + $0x390] sm:$0xff]
      %v1251 = vld [vmem:[#allocation5 + $0x398] sm:$0xff]
      %v1252 = vld [vmem:[#allocation5 + $0x3a0] sm:$0xff]
      %v1253 = vld [vmem:[#allocation5 + $0x3a8] sm:$0xff]
      %v1254 = vld [vmem:[#allocation5 + $0x3b0] sm:$0xff]
      %v1255 = vld [vmem:[#allocation5 + $0x3b8] sm:$0xff]
      %v1256 = vld [vmem:[#allocation5 + $0x3c0] sm:$0xff]
      %v1257 = vld [vmem:[#allocation5 + $0x3c8] sm:$0xff]
      %v1258 = vld [vmem:[#allocation5 + $0x3d0] sm:$0xff]
      %v1259 = vld [vmem:[#allocation5 + $0x3d8] sm:$0xff]
      %v1260 = vld [vmem:[#allocation5 + $0x3e0] sm:$0xff]
      %v1261 = vld [vmem:[#allocation5 + $0x3e8] sm:$0xff]
      %v1262 = vld [vmem:[#allocation5 + $0x3f0] sm:$0xff]
      %v1263 = vld [vmem:[#allocation5 + $0x3f8] sm:$0xff]
      %v1264 = vld [vmem:[#allocation5 + $0x400] sm:$0xff]
      %v1265 = vld [vmem:[#allocation5 + $0x408] sm:$0xff]
      %v1266 = vld [vmem:[#allocation5 + $0x410] sm:$0xff]
      %v1267 = vld [vmem:[#allocation5 + $0x418] sm:$0xff]
      %v1268 = vld [vmem:[#allocation5 + $0x420] sm:$0xff]
      %v1269 = vld [vmem:[#allocation5 + $0x428] sm:$0xff]
      %v1270 = vld [vmem:[#allocation5 + $0x430] sm:$0xff]
      %v1271 = vld [vmem:[#allocation5 + $0x438] sm:$0xff]
      %v1272 = vld [vmem:[#allocation5 + $0x440] sm:$0xff]
      %v1273 = vld [vmem:[#allocation5 + $0x448] sm:$0xff]
      %v1274 = vld [vmem:[#allocation5 + $0x450] sm:$0xff]
      %v1275 = vld [vmem:[#allocation5 + $0x458] sm:$0xff]
      %v1276 = vld [vmem:[#allocation5 + $0x460] sm:$0xff]
      %v1277 = vld [vmem:[#allocation5 + $0x468] sm:$0xff]
      %v1278 = vld [vmem:[#allocation5 + $0x470] sm:$0xff]
      %v1279 = vld [vmem:[#allocation5 + $0x478] sm:$0xff]
      %v1280 = vld [vmem:[#allocation5 + $0x480] sm:$0xff]
      %v1281 = vld [vmem:[#allocation5 + $0x488] sm:$0xff]
      %v1282 = vld [vmem:[#allocation5 + $0x490] sm:$0xff]
      %v1283 = vld [vmem:[#allocation5 + $0x498] sm:$0xff]
      %v1284 = vld [vmem:[#allocation5 + $0x4a0] sm:$0xff]
      %v1285 = vld [vmem:[#allocation5 + $0x4a8] sm:$0xff]
      %v1286 = vld [vmem:[#allocation5 + $0x4b0] sm:$0xff]
      %v1287 = vld [vmem:[#allocation5 + $0x4b8] sm:$0xff]
      %v1288 = vld [vmem:[#allocation5 + $0x4c0] sm:$0xff]
      %v1289 = vld [vmem:[#allocation5 + $0x4c8] sm:$0xff]
      %v1290 = vld [vmem:[#allocation5 + $0x4d0] sm:$0xff]
      %v1291 = vld [vmem:[#allocation5 + $0x4d8] sm:$0xff]
      %v1292 = vld [vmem:[#allocation5 + $0x4e0] sm:$0xff]
      %v1293 = vld [vmem:[#allocation5 + $0x4e8] sm:$0xff]
      %v1294 = vld [vmem:[#allocation5 + $0x4f0] sm:$0xff]
      %v1295 = vld [vmem:[#allocation5 + $0x4f8] sm:$0xff]
      %v1296 = vld [vmem:[#allocation5 + $0x500] sm:$0xff]
      %v1297 = vld [vmem:[#allocation5 + $0x508] sm:$0xff]
      %v1298 = vld [vmem:[#allocation5 + $0x510] sm:$0xff]
      %v1299 = vld [vmem:[#allocation5 + $0x518] sm:$0xff]
      %v1300 = vld [vmem:[#allocation5 + $0x520] sm:$0xff]
      %v1301 = vld [vmem:[#allocation5 + $0x528] sm:$0xff]
      %v1302 = vld [vmem:[#allocation5 + $0x530] sm:$0xff]
      %v1303 = vld [vmem:[#allocation5 + $0x538] sm:$0xff]
      %v1304 = vld [vmem:[#allocation5 + $0x540] sm:$0xff]
      %v1305 = vld [vmem:[#allocation5 + $0x548] sm:$0xff]
      %v1306 = vld [vmem:[#allocation5 + $0x550] sm:$0xff]
      %v1307 = vld [vmem:[#allocation5 + $0x558] sm:$0xff]
      %v1308 = vld [vmem:[#allocation5 + $0x560] sm:$0xff]
      %v1309 = vld [vmem:[#allocation5 + $0x568] sm:$0xff]
      %v1310 = vld [vmem:[#allocation5 + $0x570] sm:$0xff]
      %v1311 = vld [vmem:[#allocation5 + $0x578] sm:$0xff]
      %v1312 = vld [vmem:[#allocation5 + $0x580] sm:$0xff]
      %v1313 = vld [vmem:[#allocation5 + $0x588] sm:$0xff]
      %v1314 = vld [vmem:[#allocation5 + $0x590] sm:$0xff]
      %v1315 = vld [vmem:[#allocation5 + $0x598] sm:$0xff]
      %v1316 = vld [vmem:[#allocation5 + $0x5a0] sm:$0xff]
      %v1317 = vld [vmem:[#allocation5 + $0x5a8] sm:$0xff]
      %v1318 = vld [vmem:[#allocation5 + $0x5b0] sm:$0xff]
      %v1319 = vld [vmem:[#allocation5 + $0x5b8] sm:$0xff]
      %v1320 = vld [vmem:[#allocation5 + $0x5c0] sm:$0xff]
      %v1321 = vld [vmem:[#allocation5 + $0x5c8] sm:$0xff]
      %v1322 = vld [vmem:[#allocation5 + $0x5d0] sm:$0xff]
      %v1323 = vld [vmem:[#allocation5 + $0x5d8] sm:$0xff]
      %v1324 = vld [vmem:[#allocation5 + $0x5e0] sm:$0xff]
      %v1325 = vld [vmem:[#allocation5 + $0x5e8] sm:$0xff]
      %v1326 = vld [vmem:[#allocation5 + $0x5f0] sm:$0xff]
      %v1327 = vld [vmem:[#allocation5 + $0x5f8] sm:$0xff]
      %v1328 = vld [vmem:[#allocation5 + $0x600] sm:$0xff]
      %v1329 = vld [vmem:[#allocation5 + $0x608] sm:$0xff]
      %v1330 = vld [vmem:[#allocation5 + $0x610] sm:$0xff]
      %v1331 = vld [vmem:[#allocation5 + $0x618] sm:$0xff]
      %v1332 = vld [vmem:[#allocation5 + $0x620] sm:$0xff]
      %v1333 = vld [vmem:[#allocation5 + $0x628] sm:$0xff]
      %v1334 = vld [vmem:[#allocation5 + $0x630] sm:$0xff]
      %v1335 = vld [vmem:[#allocation5 + $0x638] sm:$0xff]
      %v1336 = vld [vmem:[#allocation5 + $0x640] sm:$0xff]
      %v1337 = vld [vmem:[#allocation5 + $0x648] sm:$0xff]
      %v1338 = vld [vmem:[#allocation5 + $0x650] sm:$0xff]
      %v1339 = vld [vmem:[#allocation5 + $0x658] sm:$0xff]
      %v1340 = vld [vmem:[#allocation5 + $0x660] sm:$0xff]
      %v1341 = vld [vmem:[#allocation5 + $0x668] sm:$0xff]
      %v1342 = vld [vmem:[#allocation5 + $0x670] sm:$0xff]
      %v1343 = vld [vmem:[#allocation5 + $0x678] sm:$0xff]
      %v1344 = vld [vmem:[#allocation5 + $0x680] sm:$0xff]
      %v1345 = vld [vmem:[#allocation5 + $0x688] sm:$0xff]
      %v1346 = vld [vmem:[#allocation5 + $0x690] sm:$0xff]
      %v1347 = vld [vmem:[#allocation5 + $0x698] sm:$0xff]
      %v1348 = vld [vmem:[#allocation5 + $0x6a0] sm:$0xff]
      %v1349 = vld [vmem:[#allocation5 + $0x6a8] sm:$0xff]
      %v1350 = vld [vmem:[#allocation5 + $0x6b0] sm:$0xff]
      %v1351 = vld [vmem:[#allocation5 + $0x6b8] sm:$0xff]
      %v1352 = vld [vmem:[#allocation5 + $0x6c0] sm:$0xff]
      %v1353 = vld [vmem:[#allocation5 + $0x6c8] sm:$0xff]
      %v1354 = vld [vmem:[#allocation5 + $0x6d0] sm:$0xff]
      %v1355 = vld [vmem:[#allocation5 + $0x6d8] sm:$0xff]
      %v1356 = vld [vmem:[#allocation5 + $0x6e0] sm:$0xff]
      %v1357 = vld [vmem:[#allocation5 + $0x6e8] sm:$0xff]
      %v1358 = vld [vmem:[#allocation5 + $0x6f0] sm:$0xff]
      %v1359 = vld [vmem:[#allocation5 + $0x6f8] sm:$0xff]
      %v1360 = vld [vmem:[#allocation5 + $0x700] sm:$0xff]
      %v1361 = vld [vmem:[#allocation5 + $0x708] sm:$0xff]
      %v1362 = vld [vmem:[#allocation5 + $0x710] sm:$0xff]
      %v1363 = vld [vmem:[#allocation5 + $0x718] sm:$0xff]
      %v1364 = vld [vmem:[#allocation5 + $0x720] sm:$0xff]
      %v1365 = vld [vmem:[#allocation5 + $0x728] sm:$0xff]
      %v1366 = vld [vmem:[#allocation5 + $0x730] sm:$0xff]
      %v1367 = vld [vmem:[#allocation5 + $0x738] sm:$0xff]
      %v1368 = vld [vmem:[#allocation5 + $0x740] sm:$0xff]
      %v1369 = vld [vmem:[#allocation5 + $0x748] sm:$0xff]
      %v1370 = vld [vmem:[#allocation5 + $0x750] sm:$0xff]
      %v1371 = vld [vmem:[#allocation5 + $0x758] sm:$0xff]
      %v1372 = vld [vmem:[#allocation5 + $0x760] sm:$0xff]
      %v1373 = vld [vmem:[#allocation5 + $0x768] sm:$0xff]
      %v1374 = vld [vmem:[#allocation5 + $0x770] sm:$0xff]
      %v1375 = vld [vmem:[#allocation5 + $0x778] sm:$0xff]
      %v1376 = vld [vmem:[#allocation5 + $0x780] sm:$0xff]
      %v1377 = vld [vmem:[#allocation5 + $0x788] sm:$0xff]
      %v1378 = vld [vmem:[#allocation5 + $0x790] sm:$0xff]
      %v1379 = vld [vmem:[#allocation5 + $0x798] sm:$0xff]
      %v1380 = vld [vmem:[#allocation5 + $0x7a0] sm:$0xff]
      %v1381 = vld [vmem:[#allocation5 + $0x7a8] sm:$0xff]
      %v1382 = vld [vmem:[#allocation5 + $0x7b0] sm:$0xff]
      %v1383 = vld [vmem:[#allocation5 + $0x7b8] sm:$0xff]
      %v1384 = vld [vmem:[#allocation5 + $0x7c0] sm:$0xff]
      %v1385 = vld [vmem:[#allocation5 + $0x7c8] sm:$0xff]
      %v1386 = vld [vmem:[#allocation5 + $0x7d0] sm:$0xff]
      %v1387 = vld [vmem:[#allocation5 + $0x7d8] sm:$0xff]
      %v1388 = vld [vmem:[#allocation5 + $0x7e0] sm:$0xff]
      %v1389 = vld [vmem:[#allocation5 + $0x7e8] sm:$0xff]
      %v1390 = vld [vmem:[#allocation5 + $0x7f0] sm:$0xff]
      %v1391 = vld [vmem:[#allocation5 + $0x7f8] sm:$0xff]
      %v1392 = vld [vmem:[#allocation5 + $0x800] sm:$0xff]
      %v1393 = vld [vmem:[#allocation5 + $0x808] sm:$0xff]
      %v1394 = vld [vmem:[#allocation5 + $0x810] sm:$0xff]
      %v1395 = vld [vmem:[#allocation5 + $0x818] sm:$0xff]
      %v1396 = vld [vmem:[#allocation5 + $0x820] sm:$0xff]
      %v1397 = vld [vmem:[#allocation5 + $0x828] sm:$0xff]
      %v1398 = vld [vmem:[#allocation5 + $0x830] sm:$0xff]
      %v1399 = vld [vmem:[#allocation5 + $0x838] sm:$0xff]
      %v1400 = vld [vmem:[#allocation5 + $0x840] sm:$0xff]
      %v1401 = vld [vmem:[#allocation5 + $0x848] sm:$0xff]
      %v1402 = vld [vmem:[#allocation5 + $0x850] sm:$0xff]
      %v1403 = vld [vmem:[#allocation5 + $0x858] sm:$0xff]
      %v1404 = vld [vmem:[#allocation5 + $0x860] sm:$0xff]
      %v1405 = vld [vmem:[#allocation5 + $0x868] sm:$0xff]
      %v1406 = vld [vmem:[#allocation5 + $0x870] sm:$0xff]
      %v1407 = vld [vmem:[#allocation5 + $0x878] sm:$0xff]
      %v1408 = vld [vmem:[#allocation5 + $0x880] sm:$0xff]
      %v1409 = vld [vmem:[#allocation5 + $0x888] sm:$0xff]
      %v1410 = vld [vmem:[#allocation5 + $0x890] sm:$0xff]
      %v1411 = vld [vmem:[#allocation5 + $0x898] sm:$0xff]
      %v1412 = vld [vmem:[#allocation5 + $0x8a0] sm:$0xff]
      %v1413 = vld [vmem:[#allocation5 + $0x8a8] sm:$0xff]
      %v1414 = vld [vmem:[#allocation5 + $0x8b0] sm:$0xff]
      %v1415 = vld [vmem:[#allocation5 + $0x8b8] sm:$0xff]
      %v1416 = vld [vmem:[#allocation5 + $0x8c0] sm:$0xff]
      %v1417 = vld [vmem:[#allocation5 + $0x8c8] sm:$0xff]
      %v1418 = vld [vmem:[#allocation5 + $0x8d0] sm:$0xff]
      %v1419 = vld [vmem:[#allocation5 + $0x8d8] sm:$0xff]
      %v1420 = vld [vmem:[#allocation5 + $0x8e0] sm:$0xff]
      %v1421 = vld [vmem:[#allocation5 + $0x8e8] sm:$0xff]
      %v1422 = vld [vmem:[#allocation5 + $0x8f0] sm:$0xff]
      %v1423 = vld [vmem:[#allocation5 + $0x8f8] sm:$0xff]
      %v1424 = vld [vmem:[%s1] sm:$0xff]
      %v1425 = vld [vmem:[%s1 + $0x8] sm:$0xff]
      %v1426 = vld [vmem:[%s1 + $0x10] sm:$0xff]
      %v1427 = vld [vmem:[%s1 + $0x18] sm:$0xff]
      %v1428 = vld [vmem:[%s1 + $0x20] sm:$0xff]
      %v1429 = vld [vmem:[%s1 + $0x28] sm:$0xff]
      %v1430 = vld [vmem:[%s1 + $0x30] sm:$0xff]
      %v1431 = vld [vmem:[%s1 + $0x38] sm:$0xff]
      %v1432 = vld [vmem:[%s1 + $0x40] sm:$0xff]
      %v1433 = vld [vmem:[%s1 + $0x48] sm:$0xff]
      %v1434 = vld [vmem:[%s1 + $0x50] sm:$0xff]
      %v1435 = vld [vmem:[%s1 + $0x58] sm:$0xff]
      %v1436 = vld [vmem:[%s1 + $0x60] sm:$0xff]
      %v1437 = vld [vmem:[%s1 + $0x68] sm:$0xff]
      %v1438 = vld [vmem:[%s1 + $0x70] sm:$0xff]
      %v1439 = vld [vmem:[%s1 + $0x78] sm:$0xff]
      %v1440 = vld [vmem:[%s1 + $0x80] sm:$0xff]
      %v1441 = vld [vmem:[%s1 + $0x88] sm:$0xff]
      %v1442 = vld [vmem:[%s1 + $0x90] sm:$0xff]
      %v1443 = vld [vmem:[%s1 + $0x98] sm:$0xff]
      %v1444 = vld [vmem:[%s1 + $0xa0] sm:$0xff]
      %v1445 = vld [vmem:[%s1 + $0xa8] sm:$0xff]
      %v1446 = vld [vmem:[%s1 + $0xb0] sm:$0xff]
      %v1447 = vld [vmem:[%s1 + $0xb8] sm:$0xff]
      %v1448 = vld [vmem:[%s1 + $0xc0] sm:$0xff]
      %v1449 = vld [vmem:[%s1 + $0xc8] sm:$0xff]
      %v1450 = vld [vmem:[%s1 + $0xd0] sm:$0xff]
      %v1451 = vld [vmem:[%s1 + $0xd8] sm:$0xff]
      %v1452 = vld [vmem:[%s1 + $0xe0] sm:$0xff]
      %v1453 = vld [vmem:[%s1 + $0xe8] sm:$0xff]
      %v1454 = vld [vmem:[%s1 + $0xf0] sm:$0xff]
      %v1455 = vld [vmem:[%s1 + $0xf8] sm:$0xff]
      %v1456 = vld [vmem:[%s1 + $0x100] sm:$0xff]
      %v1457 = vld [vmem:[%s1 + $0x108] sm:$0xff]
      %v1458 = vld [vmem:[%s1 + $0x110] sm:$0xff]
      %v1459 = vld [vmem:[%s1 + $0x118] sm:$0xff]
      %v1460 = vld [vmem:[%s1 + $0x120] sm:$0xff]
      %v1461 = vld [vmem:[%s1 + $0x128] sm:$0xff]
      %v1462 = vld [vmem:[%s1 + $0x130] sm:$0xff]
      %v1463 = vld [vmem:[%s1 + $0x138] sm:$0xff]
      %v1464 = vld [vmem:[%s1 + $0x140] sm:$0xff]
      %v1465 = vld [vmem:[%s1 + $0x148] sm:$0xff]
      %v1466 = vld [vmem:[%s1 + $0x150] sm:$0xff]
      %v1467 = vld [vmem:[%s1 + $0x158] sm:$0xff]
      %v1468 = vld [vmem:[%s1 + $0x160] sm:$0xff]
      %v1469 = vld [vmem:[%s1 + $0x168] sm:$0xff]
      %v1470 = vld [vmem:[%s1 + $0x170] sm:$0xff]
      %v1471 = vld [vmem:[%s1 + $0x178] sm:$0xff]
      %v1472 = vld [vmem:[%s1 + $0x180] sm:$0xff]
      %v1473 = vld [vmem:[%s1 + $0x188] sm:$0xff]
      %v1474 = vld [vmem:[%s1 + $0x190] sm:$0xff]
      %v1475 = vld [vmem:[%s1 + $0x198] sm:$0xff]
      %v1476 = vld [vmem:[%s1 + $0x1a0] sm:$0xff]
      %v1477 = vld [vmem:[%s1 + $0x1a8] sm:$0xff]
      %v1478 = vld [vmem:[%s1 + $0x1b0] sm:$0xff]
      %v1479 = vld [vmem:[%s1 + $0x1b8] sm:$0xff]
      %v1480 = vld [vmem:[%s1 + $0x1c0] sm:$0xff]
      %v1481 = vld [vmem:[%s1 + $0x1c8] sm:$0xff]
      %v1482 = vld [vmem:[%s1 + $0x1d0] sm:$0xff]
      %v1483 = vld [vmem:[%s1 + $0x1d8] sm:$0xff]
      %v1484 = vld [vmem:[%s1 + $0x1e0] sm:$0xff]
      %v1485 = vld [vmem:[%s1 + $0x1e8] sm:$0xff]
      %v1486 = vld [vmem:[%s1 + $0x1f0] sm:$0xff]
      %v1487 = vld [vmem:[%s1 + $0x1f8] sm:$0xff]
      %v1488 = vld [vmem:[%s1 + $0x200] sm:$0xff]
      %v1489 = vld [vmem:[%s1 + $0x208] sm:$0xff]
      %v1490 = vld [vmem:[%s1 + $0x210] sm:$0xff]
      %v1491 = vld [vmem:[%s1 + $0x218] sm:$0xff]
      %v1492 = vld [vmem:[%s1 + $0x220] sm:$0xff]
      %v1493 = vld [vmem:[%s1 + $0x228] sm:$0xff]
      %v1494 = vld [vmem:[%s1 + $0x230] sm:$0xff]
      %v1495 = vld [vmem:[%s1 + $0x238] sm:$0xff]
      %v1496 = vld [vmem:[%s1 + $0x240] sm:$0xff]
      %v1497 = vld [vmem:[%s1 + $0x248] sm:$0xff]
      %v1498 = vld [vmem:[%s1 + $0x250] sm:$0xff]
      %v1499 = vld [vmem:[%s1 + $0x258] sm:$0xff]
      %v1500 = vld [vmem:[%s1 + $0x260] sm:$0xff]
      %v1501 = vld [vmem:[%s1 + $0x268] sm:$0xff]
      %v1502 = vld [vmem:[%s1 + $0x270] sm:$0xff]
      %v1503 = vld [vmem:[%s1 + $0x278] sm:$0xff]
      %v1504 = vld [vmem:[%s1 + $0x280] sm:$0xff]
      %v1505 = vld [vmem:[%s1 + $0x288] sm:$0xff]
      %v1506 = vld [vmem:[%s1 + $0x290] sm:$0xff]
      %v1507 = vld [vmem:[%s1 + $0x298] sm:$0xff]
      %v1508 = vld [vmem:[%s1 + $0x2a0] sm:$0xff]
      %v1509 = vld [vmem:[%s1 + $0x2a8] sm:$0xff]
      %v1510 = vld [vmem:[%s1 + $0x2b0] sm:$0xff]
      %v1511 = vld [vmem:[%s1 + $0x2b8] sm:$0xff]
      %v1512 = vld [vmem:[%s1 + $0x2c0] sm:$0xff]
      %v1513 = vld [vmem:[%s1 + $0x2c8] sm:$0xff]
      %v1514 = vld [vmem:[%s1 + $0x2d0] sm:$0xff]
      %v1515 = vld [vmem:[%s1 + $0x2d8] sm:$0xff]
      %v1516 = vld [vmem:[%s1 + $0x2e0] sm:$0xff]
      %v1517 = vld [vmem:[%s1 + $0x2e8] sm:$0xff]
      %v1518 = vld [vmem:[%s1 + $0x2f0] sm:$0xff]
      %v1519 = vld [vmem:[%s1 + $0x2f8] sm:$0xff]
      %v1520 = vld [vmem:[%s1 + $0x300] sm:$0xff]
      %v1521 = vld [vmem:[%s1 + $0x308] sm:$0xff]
      %v1522 = vld [vmem:[%s1 + $0x310] sm:$0xff]
      %v1523 = vld [vmem:[%s1 + $0x318] sm:$0xff]
      %v1524 = vld [vmem:[%s1 + $0x320] sm:$0xff]
      %v1525 = vld [vmem:[%s1 + $0x328] sm:$0xff]
      %v1526 = vld [vmem:[%s1 + $0x330] sm:$0xff]
      %v1527 = vld [vmem:[%s1 + $0x338] sm:$0xff]
      %v1528 = vld [vmem:[%s1 + $0x340] sm:$0xff]
      %v1529 = vld [vmem:[%s1 + $0x348] sm:$0xff]
      %v1530 = vld [vmem:[%s1 + $0x350] sm:$0xff]
      %v1531 = vld [vmem:[%s1 + $0x358] sm:$0xff]
      %v1532 = vld [vmem:[%s1 + $0x360] sm:$0xff]
      %v1533 = vld [vmem:[%s1 + $0x368] sm:$0xff]
      %v1534 = vld [vmem:[%s1 + $0x370] sm:$0xff]
      %v1535 = vld [vmem:[%s1 + $0x378] sm:$0xff]
      %v1536 = vld [vmem:[%s1 + $0x380] sm:$0xff]
      %v1537 = vld [vmem:[%s1 + $0x388] sm:$0xff]
      %v1538 = vld [vmem:[%s1 + $0x390] sm:$0xff]
      %v1539 = vld [vmem:[%s1 + $0x398] sm:$0xff]
      %v1540 = vld [vmem:[%s1 + $0x3a0] sm:$0xff]
      %v1541 = vld [vmem:[%s1 + $0x3a8] sm:$0xff]
      %v1542 = vld [vmem:[%s1 + $0x3b0] sm:$0xff]
      %v1543 = vld [vmem:[%s1 + $0x3b8] sm:$0xff]
      %v1544 = vld [vmem:[%s1 + $0x3c0] sm:$0xff]
      %v1545 = vld [vmem:[%s1 + $0x3c8] sm:$0xff]
      %v1546 = vld [vmem:[%s1 + $0x3d0] sm:$0xff]
      %v1547 = vld [vmem:[%s1 + $0x3d8] sm:$0xff]
      %v1548 = vld [vmem:[%s1 + $0x3e0] sm:$0xff]
      %v1549 = vld [vmem:[%s1 + $0x3e8] sm:$0xff]
      %v1550 = vld [vmem:[%s1 + $0x3f0] sm:$0xff]
      %v1551 = vld [vmem:[%s1 + $0x3f8] sm:$0xff]
      %v1552 = vld [vmem:[%s1 + $0x400] sm:$0xff]
      %v1553 = vld [vmem:[%s1 + $0x408] sm:$0xff]
      %v1554 = vld [vmem:[%s1 + $0x410] sm:$0xff]
      %v1555 = vld [vmem:[%s1 + $0x418] sm:$0xff]
      %v1556 = vld [vmem:[%s1 + $0x420] sm:$0xff]
      %v1557 = vld [vmem:[%s1 + $0x428] sm:$0xff]
      %v1558 = vld [vmem:[%s1 + $0x430] sm:$0xff]
      %v1559 = vld [vmem:[%s1 + $0x438] sm:$0xff]
      %v1560 = vld [vmem:[%s1 + $0x440] sm:$0xff]
      %v1561 = vld [vmem:[%s1 + $0x448] sm:$0xff]
      %v1562 = vld [vmem:[%s1 + $0x450] sm:$0xff]
      %v1563 = vld [vmem:[%s1 + $0x458] sm:$0xff]
      %v1564 = vld [vmem:[%s1 + $0x460] sm:$0xff]
      %v1565 = vld [vmem:[%s1 + $0x468] sm:$0xff]
      %v1566 = vld [vmem:[%s1 + $0x470] sm:$0xff]
      %v1567 = vld [vmem:[%s1 + $0x478] sm:$0xff]
      %v1568 = vld [vmem:[%s2] sm:$0x1]
      %v1570 = vlaneseq
      %v1571 = vshrl.u32 %v1570, 7
      %v1572 = vsub.s32 0, %v1571
      %v1573 = vrot.slane %v1568, %v1572
      %1575 = vmatprep.subr.mxu0 0.0
      %1576 = vmatpush1.msra.mxu0 %v1424
      %1577 = vmatprep.subr.mxu0 0.0
      %1578 = vmatpush1.msra.mxu0 %v1425
      %1579 = vmatprep.subr.mxu0 0.0
      %1580 = vmatpush1.msra.mxu0 %v1426
      %1581 = vmatprep.subr.mxu0 0.0
      %1582 = vmatpush1.msra.mxu0 %v1427
      %1583 = vmatprep.subr.mxu0 0.0
      %1584 = vmatpush1.msra.mxu0 %v1428
      %1585 = vmatprep.subr.mxu0 0.0
      %1586 = vmatpush1.msra.mxu0 %v1429
      %1587 = vmatprep.subr.mxu0 0.0
      %1588 = vmatpush1.msra.mxu0 %v1430
      %1589 = vmatprep.subr.mxu0 0.0
      %1590 = vmatpush1.msra.mxu0 %v1431
      %1591 = vmatprep.subr.mxu0 0.0
      %1592 = vmatpush1.msra.mxu0 %v1432
      %1593 = vmatprep.subr.mxu0 0.0
      %1594 = vmatpush1.msra.mxu0 %v1433
      %1595 = vmatprep.subr.mxu0 0.0
      %1596 = vmatpush1.msra.mxu0 %v1434
      %1597 = vmatprep.subr.mxu0 0.0
      %1598 = vmatpush1.msra.mxu0 %v1435
      %1599 = vmatprep.subr.mxu0 0.0
      %1600 = vmatpush1.msra.mxu0 %v1436
      %1601 = vmatprep.subr.mxu0 0.0
      %1602 = vmatpush1.msra.mxu0 %v1437
      %1603 = vmatprep.subr.mxu0 0.0
      %1604 = vmatpush1.msra.mxu0 %v1438
      %1605 = vmatprep.subr.mxu0 0.0
      %1606 = vmatpush1.msra.mxu0 %v1439
      %1607 = vmatprep.subr.mxu0 0.0
      %1608 = vmatpush1.msra.mxu0 %v1440
      %1609 = vmatprep.subr.mxu0 0.0
      %1610 = vmatpush1.msra.mxu0 %v1441
      %1611 = vmatprep.subr.mxu0 0.0
      %1612 = vmatpush1.msra.mxu0 %v1442
      %1613 = vmatprep.subr.mxu0 0.0
      %1614 = vmatpush1.msra.mxu0 %v1443
      %1615 = vmatprep.subr.mxu0 0.0
      %1616 = vmatpush1.msra.mxu0 %v1444
      %1617 = vmatprep.subr.mxu0 0.0
      %1618 = vmatpush1.msra.mxu0 %v1445
      %1619 = vmatprep.subr.mxu0 0.0
      %1620 = vmatpush1.msra.mxu0 %v1446
      %1621 = vmatprep.subr.mxu0 0.0
      %1622 = vmatpush1.msra.mxu0 %v1447
      %1623 = vmatprep.subr.mxu0 0.0
      %1624 = vmatpush1.msra.mxu0 %v1448
      %1625 = vmatprep.subr.mxu0 0.0
      %1626 = vmatpush1.msra.mxu0 %v1449
      %1627 = vmatprep.subr.mxu0 0.0
      %1628 = vmatpush1.msra.mxu0 %v1450
      %1629 = vmatprep.subr.mxu0 0.0
      %1630 = vmatpush1.msra.mxu0 %v1451
      %1631 = vmatprep.subr.mxu0 0.0
      %1632 = vmatpush1.msra.mxu0 %v1452
      %1633 = vmatprep.subr.mxu0 0.0
      %1634 = vmatpush1.msra.mxu0 %v1453
      %1635 = vmatprep.subr.mxu0 0.0
      %1636 = vmatpush1.msra.mxu0 %v1454
      %1637 = vmatprep.subr.mxu0 0.0
      %1638 = vmatpush1.msra.mxu0 %v1455
      %1639 = vmatprep.mubr.f32.mxu0 %v1137
      %1640 = vmatmul.mubr.f32.gmra.mrb[0].mxu0 %v1136
      %v1641 = vpop.f32.mrb[0].mxu0
      %v1642 = vadd.f32 %v1573, %v1641
      %v1643 = vpop.f32.mrb[0].mxu0
      %1644 = vmatprep.mubr.f32.mxu0 %v1146
      %1645 = vmatmul.mubr.f32.gmra.mrb[0].mxu0 %v1145
      %v1646 = vpop.f32.mrb[0].mxu0
      %v1647 = vadd.f32 %v1573, %v1646
      %v1648 = vpop.f32.mrb[0].mxu0
      %1649 = vmatprep.mubr.f32.mxu0 %v1155
      %1650 = vmatmul.mubr.f32.gmra.mrb[0].mxu0 %v1154
      %v1651 = vpop.f32.mrb[0].mxu0
      %v1652 = vadd.f32 %v1573, %v1651
      %v1653 = vpop.f32.mrb[0].mxu0
      %1654 = vmatprep.mubr.f32.mxu0 %v1164
      %1655 = vmatmul.mubr.f32.gmra.mrb[0].mxu0 %v1163
      %v1656 = vpop.f32.mrb[0].mxu0
      %v1657 = vadd.f32 %v1573, %v1656
      %v1658 = vpop.f32.mrb[0].mxu0
      %1659 = vmatprep.mubr.f32.mxu0 %v1173
      %1660 = vmatmul.mubr.f32.gmra.mrb[0].mxu0 %v1172
      %v1661 = vpop.f32.mrb[0].mxu0
      %v1662 = vadd.f32 %v1573, %v1661
      %v1663 = vpop.f32.mrb[0].mxu0
      %1664 = vmatprep.mubr.f32.mxu0 %v1182
      %1665 = vmatmul.mubr.f32.gmra.mrb[0].mxu0 %v1181
      %v1666 = vpop.f32.mrb[0].mxu0
      %v1667 = vadd.f32 %v1573, %v1666
      %v1668 = vpop.f32.mrb[0].mxu0
      %1669 = vmatprep.mubr.f32.mxu0 %v1191
      %1670 = vmatmul.mubr.f32.gmra.mrb[0].mxu0 %v1190
      %v1671 = vpop.f32.mrb[0].mxu0
      %v1672 = vadd.f32 %v1573, %v1671
      %v1673 = vpop.f32.mrb[0].mxu0
      %1674 = vmatprep.mubr.f32.mxu0 %v1200
      %1675 = vmatmul.mubr.f32.gmra.mrb[0].mxu0 %v1199
      %v1676 = vpop.f32.mrb[0].mxu0
      %v1677 = vadd.f32 %v1573, %v1676
      %v1678 = vpop.f32.mrb[0].mxu0
      %1679 = vmatprep.mubr.f32.mxu0 %v1209
      %1680 = vmatmul.mubr.f32.gmra.mrb[0].mxu0 %v1208
      %v1681 = vpop.f32.mrb[0].mxu0
      %v1682 = vadd.f32 %v1573, %v1681
      %v1683 = vpop.f32.mrb[0].mxu0
      %1684 = vmatprep.mubr.f32.mxu0 %v1218
      %1685 = vmatmul.mubr.f32.gmra.mrb[0].mxu0 %v1217
      %v1686 = vpop.f32.mrb[0].mxu0
      %v1687 = vadd.f32 %v1573, %v1686
      %v1688 = vpop.f32.mrb[0].mxu0
      %1689 = vmatprep.mubr.f32.mxu0 %v1227
      %1690 = vmatmul.mubr.f32.gmra.mrb[0].mxu0 %v1226
      %v1691 = vpop.f32.mrb[0].mxu0
      %v1692 = vadd.f32 %v1573, %v1691
      %v1693 = vpop.f32.mrb[0].mxu0
      %1694 = vmatprep.mubr.f32.mxu0 %v1236
      %1695 = vmatmul.mubr.f32.gmra.mrb[0].mxu0 %v1235
      %v1696 = vpop.f32.mrb[0].mxu0
      %v1697 = vadd.f32 %v1573, %v1696
      %v1698 = vpop.f32.mrb[0].mxu0
      %1699 = vmatprep.mubr.f32.mxu0 %v1245
      %1700 = vmatmul.mubr.f32.gmra.mrb[0].mxu0 %v1244
      %v1701 = vpop.f32.mrb[0].mxu0
      %v1702 = vadd.f32 %v1573, %v1701
      %v1703 = vpop.f32.mrb[0].mxu0
      %1704 = vmatprep.mubr.f32.mxu0 %v1254
      %1705 = vmatmul.mubr.f32.gmra.mrb[0].mxu0 %v1253
      %v1706 = vpop.f32.mrb[0].mxu0
      %v1707 = vadd.f32 %v1573, %v1706
      %v1708 = vpop.f32.mrb[0].mxu0
      %1709 = vmatprep.mubr.f32.mxu0 %v1263
      %1710 = vmatmul.mubr.f32.gmra.mrb[0].mxu0 %v1262
      %v1711 = vpop.f32.mrb[0].mxu0
      %v1712 = vadd.f32 %v1573, %v1711
      %v1713 = vpop.f32.mrb[0].mxu0
      %1714 = vmatprep.mubr.f32.mxu0 %v1272
      %1715 = vmatmul.mubr.f32.gmra.mrb[0].mxu0 %v1271
      %v1716 = vpop.f32.mrb[0].mxu0
      %v1717 = vadd.f32 %v1573, %v1716
      %v1718 = vpop.f32.mrb[0].mxu0
      %1719 = vmatprep.mubr.f32.mxu0 %v1281
      %1720 = vmatmul.mubr.f32.gmra.mrb[0].mxu0 %v1280
      %v1721 = vpop.f32.mrb[0].mxu0
      %v1722 = vadd.f32 %v1573, %v1721
      %v1723 = vpop.f32.mrb[0].mxu0
      %1724 = vmatprep.mubr.f32.mxu0 %v1290
      %1725 = vmatmul.mubr.f32.gmra.mrb[0].mxu0 %v1289
      %v1726 = vpop.f32.mrb[0].mxu0
      %v1727 = vadd.f32 %v1573, %v1726
      %v1728 = vpop.f32.mrb[0].mxu0
      %1729 = vmatprep.mubr.f32.mxu0 %v1299
      %1730 = vmatmul.mubr.f32.gmra.mrb[0].mxu0 %v1298
      %v1731 = vpop.f32.mrb[0].mxu0
      %v1732 = vadd.f32 %v1573, %v1731
      %v1733 = vpop.f32.mrb[0].mxu0
      %1734 = vmatprep.mubr.f32.mxu0 %v1308
      %1735 = vmatmul.mubr.f32.gmra.mrb[0].mxu0 %v1307
      %v1736 = vpop.f32.mrb[0].mxu0
      %v1737 = vadd.f32 %v1573, %v1736
      %v1738 = vpop.f32.mrb[0].mxu0
      %1739 = vmatprep.mubr.f32.mxu0 %v1317
      %1740 = vmatmul.mubr.f32.gmra.mrb[0].mxu0 %v1316
      %v1741 = vpop.f32.mrb[0].mxu0
      %v1742 = vadd.f32 %v1573, %v1741
      %v1743 = vpop.f32.mrb[0].mxu0
      %1744 = vmatprep.mubr.f32.mxu0 %v1326
      %1745 = vmatmul.mubr.f32.gmra.mrb[0].mxu0 %v1325
      %v1746 = vpop.f32.mrb[0].mxu0
      %v1747 = vadd.f32 %v1573, %v1746
      %v1748 = vpop.f32.mrb[0].mxu0
      %1749 = vmatprep.mubr.f32.mxu0 %v1335
      %1750 = vmatmul.mubr.f32.gmra.mrb[0].mxu0 %v1334
      %v1751 = vpop.f32.mrb[0].mxu0
      %v1752 = vadd.f32 %v1573, %v1751
      %v1753 = vpop.f32.mrb[0].mxu0
      %1754 = vmatprep.mubr.f32.mxu0 %v1344
      %1755 = vmatmul.mubr.f32.gmra.mrb[0].mxu0 %v1343
      %v1756 = vpop.f32.mrb[0].mxu0
      %v1757 = vadd.f32 %v1573, %v1756
      %v1758 = vpop.f32.mrb[0].mxu0
      %1759 = vmatprep.mubr.f32.mxu0 %v1353
      %1760 = vmatmul.mubr.f32.gmra.mrb[0].mxu0 %v1352
      %v1761 = vpop.f32.mrb[0].mxu0
      %v1762 = vadd.f32 %v1573, %v1761
      %v1763 = vpop.f32.mrb[0].mxu0
      %1764 = vmatprep.mubr.f32.mxu0 %v1362
      %1765 = vmatmul.mubr.f32.gmra.mrb[0].mxu0 %v1361
      %v1766 = vpop.f32.mrb[0].mxu0
      %v1767 = vadd.f32 %v1573, %v1766
      %v1768 = vpop.f32.mrb[0].mxu0
      %1769 = vmatprep.mubr.f32.mxu0 %v1371
      %1770 = vmatmul.mubr.f32.gmra.mrb[0].mxu0 %v1370
      %v1771 = vpop.f32.mrb[0].mxu0
      %v1772 = vadd.f32 %v1573, %v1771
      %v1773 = vpop.f32.mrb[0].mxu0
      %1774 = vmatprep.mubr.f32.mxu0 %v1380
      %1775 = vmatmul.mubr.f32.gmra.mrb[0].mxu0 %v1379
      %v1776 = vpop.f32.mrb[0].mxu0
      %v1777 = vadd.f32 %v1573, %v1776
      %v1778 = vpop.f32.mrb[0].mxu0
      %1779 = vmatprep.mubr.f32.mxu0 %v1389
      %1780 = vmatmul.mubr.f32.gmra.mrb[0].mxu0 %v1388
      %v1781 = vpop.f32.mrb[0].mxu0
      %v1782 = vadd.f32 %v1573, %v1781
      %v1783 = vpop.f32.mrb[0].mxu0
      %1784 = vmatprep.mubr.f32.mxu0 %v1398
      %1785 = vmatmul.mubr.f32.gmra.mrb[0].mxu0 %v1397
      %v1786 = vpop.f32.mrb[0].mxu0
      %v1787 = vadd.f32 %v1573, %v1786
      %v1788 = vpop.f32.mrb[0].mxu0
      %1789 = vmatprep.mubr.f32.mxu0 %v1407
      %1790 = vmatmul.mubr.f32.gmra.mrb[0].mxu0 %v1406
      %v1791 = vpop.f32.mrb[0].mxu0
      %v1792 = vadd.f32 %v1573, %v1791
      %v1793 = vpop.f32.mrb[0].mxu0
      %1794 = vmatprep.mubr.f32.mxu0 %v1416
      %1795 = vmatmul.mubr.f32.gmra.mrb[0].mxu0 %v1415
      %v1796 = vpop.f32.mrb[0].mxu0
      %v1797 = vadd.f32 %v1573, %v1796
      %v1798 = vpop.f32.mrb[0].mxu0
      %1799 = vdwg.mxu0
      %1800 = vmatprep.subr.mxu0 0.0
      %1801 = vmatpush1.msra.mxu0 %v1456
      %1802 = vmatprep.subr.mxu0 0.0
      %1803 = vmatpush1.msra.mxu0 %v1457
      %1804 = vmatprep.subr.mxu0 0.0
      %1805 = vmatpush1.msra.mxu0 %v1458
      %1806 = vmatprep.subr.mxu0 0.0
      %1807 = vmatpush1.msra.mxu0 %v1459
      %1808 = vmatprep.subr.mxu0 0.0
      %1809 = vmatpush1.msra.mxu0 %v1460
      %1810 = vmatprep.subr.mxu0 0.0
      %1811 = vmatpush1.msra.mxu0 %v1461
      %1812 = vmatprep.subr.mxu0 0.0
      %1813 = vmatpush1.msra.mxu0 %v1462
      %1814 = vmatprep.subr.mxu0 0.0
      %1815 = vmatpush1.msra.mxu0 %v1463
      %1816 = vmatprep.subr.mxu0 0.0
      %1817 = vmatpush1.msra.mxu0 %v1464
      %1818 = vmatprep.subr.mxu0 0.0
      %1819 = vmatpush1.msra.mxu0 %v1465
      %1820 = vmatprep.subr.mxu0 0.0
      %1821 = vmatpush1.msra.mxu0 %v1466
      %1822 = vmatprep.subr.mxu0 0.0
      %1823 = vmatpush1.msra.mxu0 %v1467
      %1824 = vmatprep.subr.mxu0 0.0
      %1825 = vmatpush1.msra.mxu0 %v1468
      %1826 = vmatprep.subr.mxu0 0.0
      %1827 = vmatpush1.msra.mxu0 %v1469
      %1828 = vmatprep.subr.mxu0 0.0
      %1829 = vmatpush1.msra.mxu0 %v1470
      %1830 = vmatprep.subr.mxu0 0.0
      %1831 = vmatpush1.msra.mxu0 %v1471
      %1832 = vmatprep.subr.mxu0 0.0
      %1833 = vmatpush1.msra.mxu0 %v1472
      %1834 = vmatprep.subr.mxu0 0.0
      %1835 = vmatpush1.msra.mxu0 %v1473
      %1836 = vmatprep.subr.mxu0 0.0
      %1837 = vmatpush1.msra.mxu0 %v1474
      %1838 = vmatprep.subr.mxu0 0.0
      %1839 = vmatpush1.msra.mxu0 %v1475
      %1840 = vmatprep.subr.mxu0 0.0
      %1841 = vmatpush1.msra.mxu0 %v1476
      %1842 = vmatprep.subr.mxu0 0.0
      %1843 = vmatpush1.msra.mxu0 %v1477
      %1844 = vmatprep.subr.mxu0 0.0
      %1845 = vmatpush1.msra.mxu0 %v1478
      %1846 = vmatprep.subr.mxu0 0.0
      %1847 = vmatpush1.msra.mxu0 %v1479
      %1848 = vmatprep.subr.mxu0 0.0
      %1849 = vmatpush1.msra.mxu0 %v1480
      %1850 = vmatprep.subr.mxu0 0.0
      %1851 = vmatpush1.msra.mxu0 %v1481
      %1852 = vmatprep.subr.mxu0 0.0
      %1853 = vmatpush1.msra.mxu0 %v1482
      %1854 = vmatprep.subr.mxu0 0.0
      %1855 = vmatpush1.msra.mxu0 %v1483
      %1856 = vmatprep.subr.mxu0 0.0
      %1857 = vmatpush1.msra.mxu0 %v1484
      %1858 = vmatprep.subr.mxu0 0.0
      %1859 = vmatpush1.msra.mxu0 %v1485
      %1860 = vmatprep.subr.mxu0 0.0
      %1861 = vmatpush1.msra.mxu0 %v1486
      %1862 = vmatprep.subr.mxu0 0.0
      %1863 = vmatpush1.msra.mxu0 %v1487
      %1864 = vmatprep.mubr.f32.mxu0 %v1139
      %1865 = vmatmul.mubr.f32.gmra.mrb[0].mxu0 %v1138
      %v1866 = vpop.f32.mrb[0].mxu0
      %v1867 = vadd.f32 %v1642, %v1866
      %v1868 = vpop.f32.mrb[0].mxu0
      %1869 = vmatprep.mubr.f32.mxu0 %v1148
      %1870 = vmatmul.mubr.f32.gmra.mrb[0].mxu0 %v1147
      %v1871 = vpop.f32.mrb[0].mxu0
      %v1872 = vadd.f32 %v1647, %v1871
      %v1873 = vpop.f32.mrb[0].mxu0
      %1874 = vmatprep.mubr.f32.mxu0 %v1157
      %1875 = vmatmul.mubr.f32.gmra.mrb[0].mxu0 %v1156
      %v1876 = vpop.f32.mrb[0].mxu0
      %v1877 = vadd.f32 %v1652, %v1876
      %v1878 = vpop.f32.mrb[0].mxu0
      %1879 = vmatprep.mubr.f32.mxu0 %v1166
      %1880 = vmatmul.mubr.f32.gmra.mrb[0].mxu0 %v1165
      %v1881 = vpop.f32.mrb[0].mxu0
      %v1882 = vadd.f32 %v1657, %v1881
      %v1883 = vpop.f32.mrb[0].mxu0
      %1884 = vmatprep.mubr.f32.mxu0 %v1175
      %1885 = vmatmul.mubr.f32.gmra.mrb[0].mxu0 %v1174
      %v1886 = vpop.f32.mrb[0].mxu0
      %v1887 = vadd.f32 %v1662, %v1886
      %v1888 = vpop.f32.mrb[0].mxu0
      %1889 = vmatprep.mubr.f32.mxu0 %v1184
      %1890 = vmatmul.mubr.f32.gmra.mrb[0].mxu0 %v1183
      %v1891 = vpop.f32.mrb[0].mxu0
      %v1892 = vadd.f32 %v1667, %v1891
      %v1893 = vpop.f32.mrb[0].mxu0
      %1894 = vmatprep.mubr.f32.mxu0 %v1193
      %1895 = vmatmul.mubr.f32.gmra.mrb[0].mxu0 %v1192
      %v1896 = vpop.f32.mrb[0].mxu0
      %v1897 = vadd.f32 %v1672, %v1896
      %v1898 = vpop.f32.mrb[0].mxu0
      %1899 = vmatprep.mubr.f32.mxu0 %v1202
      %1900 = vmatmul.mubr.f32.gmra.mrb[0].mxu0 %v1201
      %v1901 = vpop.f32.mrb[0].mxu0
      %v1902 = vadd.f32 %v1677, %v1901
      %v1903 = vpop.f32.mrb[0].mxu0
      %1904 = vmatprep.mubr.f32.mxu0 %v1211
      %1905 = vmatmul.mubr.f32.gmra.mrb[0].mxu0 %v1210
      %v1906 = vpop.f32.mrb[0].mxu0
      %v1907 = vadd.f32 %v1682, %v1906
      %v1908 = vpop.f32.mrb[0].mxu0
      %1909 = vmatprep.mubr.f32.mxu0 %v1220
      %1910 = vmatmul.mubr.f32.gmra.mrb[0].mxu0 %v1219
      %v1911 = vpop.f32.mrb[0].mxu0
      %v1912 = vadd.f32 %v1687, %v1911
      %v1913 = vpop.f32.mrb[0].mxu0
      %1914 = vmatprep.mubr.f32.mxu0 %v1229
      %1915 = vmatmul.mubr.f32.gmra.mrb[0].mxu0 %v1228
      %v1916 = vpop.f32.mrb[0].mxu0
      %v1917 = vadd.f32 %v1692, %v1916
      %v1918 = vpop.f32.mrb[0].mxu0
      %1919 = vmatprep.mubr.f32.mxu0 %v1238
      %1920 = vmatmul.mubr.f32.gmra.mrb[0].mxu0 %v1237
      %v1921 = vpop.f32.mrb[0].mxu0
      %v1922 = vadd.f32 %v1697, %v1921
      %v1923 = vpop.f32.mrb[0].mxu0
      %1924 = vmatprep.mubr.f32.mxu0 %v1247
      %1925 = vmatmul.mubr.f32.gmra.mrb[0].mxu0 %v1246
      %v1926 = vpop.f32.mrb[0].mxu0
      %v1927 = vadd.f32 %v1702, %v1926
      %v1928 = vpop.f32.mrb[0].mxu0
      %1929 = vmatprep.mubr.f32.mxu0 %v1256
      %1930 = vmatmul.mubr.f32.gmra.mrb[0].mxu0 %v1255
      %v1931 = vpop.f32.mrb[0].mxu0
      %v1932 = vadd.f32 %v1707, %v1931
      %v1933 = vpop.f32.mrb[0].mxu0
      %1934 = vmatprep.mubr.f32.mxu0 %v1265
      %1935 = vmatmul.mubr.f32.gmra.mrb[0].mxu0 %v1264
      %v1936 = vpop.f32.mrb[0].mxu0
      %v1937 = vadd.f32 %v1712, %v1936
      %v1938 = vpop.f32.mrb[0].mxu0
      %1939 = vmatprep.mubr.f32.mxu0 %v1274
      %1940 = vmatmul.mubr.f32.gmra.mrb[0].mxu0 %v1273
      %v1941 = vpop.f32.mrb[0].mxu0
      %v1942 = vadd.f32 %v1717, %v1941
      %v1943 = vpop.f32.mrb[0].mxu0
      %1944 = vmatprep.mubr.f32.mxu0 %v1283
      %1945 = vmatmul.mubr.f32.gmra.mrb[0].mxu0 %v1282
      %v1946 = vpop.f32.mrb[0].mxu0
      %v1947 = vadd.f32 %v1722, %v1946
      %v1948 = vpop.f32.mrb[0].mxu0
      %1949 = vmatprep.mubr.f32.mxu0 %v1292
      %1950 = vmatmul.mubr.f32.gmra.mrb[0].mxu0 %v1291
      %v1951 = vpop.f32.mrb[0].mxu0
      %v1952 = vadd.f32 %v1727, %v1951
      %v1953 = vpop.f32.mrb[0].mxu0
      %1954 = vmatprep.mubr.f32.mxu0 %v1301
      %1955 = vmatmul.mubr.f32.gmra.mrb[0].mxu0 %v1300
      %v1956 = vpop.f32.mrb[0].mxu0
      %v1957 = vadd.f32 %v1732, %v1956
      %v1958 = vpop.f32.mrb[0].mxu0
      %1959 = vmatprep.mubr.f32.mxu0 %v1310
      %1960 = vmatmul.mubr.f32.gmra.mrb[0].mxu0 %v1309
      %v1961 = vpop.f32.mrb[0].mxu0
      %v1962 = vadd.f32 %v1737, %v1961
      %v1963 = vpop.f32.mrb[0].mxu0
      %1964 = vmatprep.mubr.f32.mxu0 %v1319
      %1965 = vmatmul.mubr.f32.gmra.mrb[0].mxu0 %v1318
      %v1966 = vpop.f32.mrb[0].mxu0
      %v1967 = vadd.f32 %v1742, %v1966
      %v1968 = vpop.f32.mrb[0].mxu0
      %1969 = vmatprep.mubr.f32.mxu0 %v1328
      %1970 = vmatmul.mubr.f32.gmra.mrb[0].mxu0 %v1327
      %v1971 = vpop.f32.mrb[0].mxu0
      %v1972 = vadd.f32 %v1747, %v1971
      %v1973 = vpop.f32.mrb[0].mxu0
      %1974 = vmatprep.mubr.f32.mxu0 %v1337
      %1975 = vmatmul.mubr.f32.gmra.mrb[0].mxu0 %v1336
      %v1976 = vpop.f32.mrb[0].mxu0
      %v1977 = vadd.f32 %v1752, %v1976
      %v1978 = vpop.f32.mrb[0].mxu0
      %1979 = vmatprep.mubr.f32.mxu0 %v1346
      %1980 = vmatmul.mubr.f32.gmra.mrb[0].mxu0 %v1345
      %v1981 = vpop.f32.mrb[0].mxu0
      %v1982 = vadd.f32 %v1757, %v1981
      %v1983 = vpop.f32.mrb[0].mxu0
      %1984 = vmatprep.mubr.f32.mxu0 %v1355
      %1985 = vmatmul.mubr.f32.gmra.mrb[0].mxu0 %v1354
      %v1986 = vpop.f32.mrb[0].mxu0
      %v1987 = vadd.f32 %v1762, %v1986
      %v1988 = vpop.f32.mrb[0].mxu0
      %1989 = vmatprep.mubr.f32.mxu0 %v1364
      %1990 = vmatmul.mubr.f32.gmra.mrb[0].mxu0 %v1363
      %v1991 = vpop.f32.mrb[0].mxu0
      %v1992 = vadd.f32 %v1767, %v1991
      %v1993 = vpop.f32.mrb[0].mxu0
      %1994 = vmatprep.mubr.f32.mxu0 %v1373
      %1995 = vmatmul.mubr.f32.gmra.mrb[0].mxu0 %v1372
      %v1996 = vpop.f32.mrb[0].mxu0
      %v1997 = vadd.f32 %v1772, %v1996
      %v1998 = vpop.f32.mrb[0].mxu0
      %1999 = vmatprep.mubr.f32.mxu0 %v1382
      %2000 = vmatmul.mubr.f32.gmra.mrb[0].mxu0 %v1381
      %v2001 = vpop.f32.mrb[0].mxu0
      %v2002 = vadd.f32 %v1777, %v2001
      %v2003 = vpop.f32.mrb[0].mxu0
      %2004 = vmatprep.mubr.f32.mxu0 %v1391
      %2005 = vmatmul.mubr.f32.gmra.mrb[0].mxu0 %v1390
      %v2006 = vpop.f32.mrb[0].mxu0
      %v2007 = vadd.f32 %v1782, %v2006
      %v2008 = vpop.f32.mrb[0].mxu0
      %2009 = vmatprep.mubr.f32.mxu0 %v1400
      %2010 = vmatmul.mubr.f32.gmra.mrb[0].mxu0 %v1399
      %v2011 = vpop.f32.mrb[0].mxu0
      %v2012 = vadd.f32 %v1787, %v2011
      %v2013 = vpop.f32.mrb[0].mxu0
      %2014 = vmatprep.mubr.f32.mxu0 %v1409
      %2015 = vmatmul.mubr.f32.gmra.mrb[0].mxu0 %v1408
      %v2016 = vpop.f32.mrb[0].mxu0
      %v2017 = vadd.f32 %v1792, %v2016
      %v2018 = vpop.f32.mrb[0].mxu0
      %2019 = vmatprep.mubr.f32.mxu0 %v1418
      %2020 = vmatmul.mubr.f32.gmra.mrb[0].mxu0 %v1417
      %v2021 = vpop.f32.mrb[0].mxu0
      %v2022 = vadd.f32 %v1797, %v2021
      %v2023 = vpop.f32.mrb[0].mxu0
      %2024 = vdwg.mxu0
      %2025 = vmatprep.subr.mxu0 0.0
      %2026 = vmatpush1.msra.mxu0 %v1488
      %2027 = vmatprep.subr.mxu0 0.0
      %2028 = vmatpush1.msra.mxu0 %v1489
      %2029 = vmatprep.subr.mxu0 0.0
      %2030 = vmatpush1.msra.mxu0 %v1490
      %2031 = vmatprep.subr.mxu0 0.0
      %2032 = vmatpush1.msra.mxu0 %v1491
      %2033 = vmatprep.subr.mxu0 0.0
      %2034 = vmatpush1.msra.mxu0 %v1492
      %2035 = vmatprep.subr.mxu0 0.0
      %2036 = vmatpush1.msra.mxu0 %v1493
      %2037 = vmatprep.subr.mxu0 0.0
      %2038 = vmatpush1.msra.mxu0 %v1494
      %2039 = vmatprep.subr.mxu0 0.0
      %2040 = vmatpush1.msra.mxu0 %v1495
      %2041 = vmatprep.subr.mxu0 0.0
      %2042 = vmatpush1.msra.mxu0 %v1496
      %2043 = vmatprep.subr.mxu0 0.0
      %2044 = vmatpush1.msra.mxu0 %v1497
      %2045 = vmatprep.subr.mxu0 0.0
      %2046 = vmatpush1.msra.mxu0 %v1498
      %2047 = vmatprep.subr.mxu0 0.0
      %2048 = vmatpush1.msra.mxu0 %v1499
      %2049 = vmatprep.subr.mxu0 0.0
      %2050 = vmatpush1.msra.mxu0 %v1500
      %2051 = vmatprep.subr.mxu0 0.0
      %2052 = vmatpush1.msra.mxu0 %v1501
      %2053 = vmatprep.subr.mxu0 0.0
      %2054 = vmatpush1.msra.mxu0 %v1502
      %2055 = vmatprep.subr.mxu0 0.0
      %2056 = vmatpush1.msra.mxu0 %v1503
      %2057 = vmatprep.subr.mxu0 0.0
      %2058 = vmatpush1.msra.mxu0 %v1504
      %2059 = vmatprep.subr.mxu0 0.0
      %2060 = vmatpush1.msra.mxu0 %v1505
      %2061 = vmatprep.subr.mxu0 0.0
      %2062 = vmatpush1.msra.mxu0 %v1506
      %2063 = vmatprep.subr.mxu0 0.0
      %2064 = vmatpush1.msra.mxu0 %v1507
      %2065 = vmatprep.subr.mxu0 0.0
      %2066 = vmatpush1.msra.mxu0 %v1508
      %2067 = vmatprep.subr.mxu0 0.0
      %2068 = vmatpush1.msra.mxu0 %v1509
      %2069 = vmatprep.subr.mxu0 0.0
      %2070 = vmatpush1.msra.mxu0 %v1510
      %2071 = vmatprep.subr.mxu0 0.0
      %2072 = vmatpush1.msra.mxu0 %v1511
      %2073 = vmatprep.subr.mxu0 0.0
      %2074 = vmatpush1.msra.mxu0 %v1512
      %2075 = vmatprep.subr.mxu0 0.0
      %2076 = vmatpush1.msra.mxu0 %v1513
      %2077 = vmatprep.subr.mxu0 0.0
      %2078 = vmatpush1.msra.mxu0 %v1514
      %2079 = vmatprep.subr.mxu0 0.0
      %2080 = vmatpush1.msra.mxu0 %v1515
      %2081 = vmatprep.subr.mxu0 0.0
      %2082 = vmatpush1.msra.mxu0 %v1516
      %2083 = vmatprep.subr.mxu0 0.0
      %2084 = vmatpush1.msra.mxu0 %v1517
      %2085 = vmatprep.subr.mxu0 0.0
      %2086 = vmatpush1.msra.mxu0 %v1518
      %2087 = vmatprep.subr.mxu0 0.0
      %2088 = vmatpush1.msra.mxu0 %v1519
      %2089 = vmatprep.mubr.f32.mxu0 %v1141
      %2090 = vmatmul.mubr.f32.gmra.mrb[0].mxu0 %v1140
      %v2091 = vpop.f32.mrb[0].mxu0
      %v2092 = vadd.f32 %v1867, %v2091
      %v2093 = vpop.f32.mrb[0].mxu0
      %2094 = vmatprep.mubr.f32.mxu0 %v1150
      %2095 = vmatmul.mubr.f32.gmra.mrb[0].mxu0 %v1149
      %v2096 = vpop.f32.mrb[0].mxu0
      %v2097 = vadd.f32 %v1872, %v2096
      %v2098 = vpop.f32.mrb[0].mxu0
      %2099 = vmatprep.mubr.f32.mxu0 %v1159
      %2100 = vmatmul.mubr.f32.gmra.mrb[0].mxu0 %v1158
      %v2101 = vpop.f32.mrb[0].mxu0
      %v2102 = vadd.f32 %v1877, %v2101
      %v2103 = vpop.f32.mrb[0].mxu0
      %2104 = vmatprep.mubr.f32.mxu0 %v1168
      %2105 = vmatmul.mubr.f32.gmra.mrb[0].mxu0 %v1167
      %v2106 = vpop.f32.mrb[0].mxu0
      %v2107 = vadd.f32 %v1882, %v2106
      %v2108 = vpop.f32.mrb[0].mxu0
      %2109 = vmatprep.mubr.f32.mxu0 %v1177
      %2110 = vmatmul.mubr.f32.gmra.mrb[0].mxu0 %v1176
      %v2111 = vpop.f32.mrb[0].mxu0
      %v2112 = vadd.f32 %v1887, %v2111
      %v2113 = vpop.f32.mrb[0].mxu0
      %2114 = vmatprep.mubr.f32.mxu0 %v1186
      %2115 = vmatmul.mubr.f32.gmra.mrb[0].mxu0 %v1185
      %v2116 = vpop.f32.mrb[0].mxu0
      %v2117 = vadd.f32 %v1892, %v2116
      %v2118 = vpop.f32.mrb[0].mxu0
      %2119 = vmatprep.mubr.f32.mxu0 %v1195
      %2120 = vmatmul.mubr.f32.gmra.mrb[0].mxu0 %v1194
      %v2121 = vpop.f32.mrb[0].mxu0
      %v2122 = vadd.f32 %v1897, %v2121
      %v2123 = vpop.f32.mrb[0].mxu0
      %2124 = vmatprep.mubr.f32.mxu0 %v1204
      %2125 = vmatmul.mubr.f32.gmra.mrb[0].mxu0 %v1203
      %v2126 = vpop.f32.mrb[0].mxu0
      %v2127 = vadd.f32 %v1902, %v2126
      %v2128 = vpop.f32.mrb[0].mxu0
      %2129 = vmatprep.mubr.f32.mxu0 %v1213
      %2130 = vmatmul.mubr.f32.gmra.mrb[0].mxu0 %v1212
      %v2131 = vpop.f32.mrb[0].mxu0
      %v2132 = vadd.f32 %v1907, %v2131
      %v2133 = vpop.f32.mrb[0].mxu0
      %2134 = vmatprep.mubr.f32.mxu0 %v1222
      %2135 = vmatmul.mubr.f32.gmra.mrb[0].mxu0 %v1221
      %v2136 = vpop.f32.mrb[0].mxu0
      %v2137 = vadd.f32 %v1912, %v2136
      %v2138 = vpop.f32.mrb[0].mxu0
      %2139 = vmatprep.mubr.f32.mxu0 %v1231
      %2140 = vmatmul.mubr.f32.gmra.mrb[0].mxu0 %v1230
      %v2141 = vpop.f32.mrb[0].mxu0
      %v2142 = vadd.f32 %v1917, %v2141
      %v2143 = vpop.f32.mrb[0].mxu0
      %2144 = vmatprep.mubr.f32.mxu0 %v1240
      %2145 = vmatmul.mubr.f32.gmra.mrb[0].mxu0 %v1239
      %v2146 = vpop.f32.mrb[0].mxu0
      %v2147 = vadd.f32 %v1922, %v2146
      %v2148 = vpop.f32.mrb[0].mxu0
      %2149 = vmatprep.mubr.f32.mxu0 %v1249
      %2150 = vmatmul.mubr.f32.gmra.mrb[0].mxu0 %v1248
      %v2151 = vpop.f32.mrb[0].mxu0
      %v2152 = vadd.f32 %v1927, %v2151
      %v2153 = vpop.f32.mrb[0].mxu0
      %2154 = vmatprep.mubr.f32.mxu0 %v1258
      %2155 = vmatmul.mubr.f32.gmra.mrb[0].mxu0 %v1257
      %v2156 = vpop.f32.mrb[0].mxu0
      %v2157 = vadd.f32 %v1932, %v2156
      %v2158 = vpop.f32.mrb[0].mxu0
      %2159 = vmatprep.mubr.f32.mxu0 %v1267
      %2160 = vmatmul.mubr.f32.gmra.mrb[0].mxu0 %v1266
      %v2161 = vpop.f32.mrb[0].mxu0
      %v2162 = vadd.f32 %v1937, %v2161
      %v2163 = vpop.f32.mrb[0].mxu0
      %2164 = vmatprep.mubr.f32.mxu0 %v1276
      %2165 = vmatmul.mubr.f32.gmra.mrb[0].mxu0 %v1275
      %v2166 = vpop.f32.mrb[0].mxu0
      %v2167 = vadd.f32 %v1942, %v2166
      %v2168 = vpop.f32.mrb[0].mxu0
      %2169 = vmatprep.mubr.f32.mxu0 %v1285
      %2170 = vmatmul.mubr.f32.gmra.mrb[0].mxu0 %v1284
      %v2171 = vpop.f32.mrb[0].mxu0
      %v2172 = vadd.f32 %v1947, %v2171
      %v2173 = vpop.f32.mrb[0].mxu0
      %2174 = vmatprep.mubr.f32.mxu0 %v1294
      %2175 = vmatmul.mubr.f32.gmra.mrb[0].mxu0 %v1293
      %v2176 = vpop.f32.mrb[0].mxu0
      %v2177 = vadd.f32 %v1952, %v2176
      %v2178 = vpop.f32.mrb[0].mxu0
      %2179 = vmatprep.mubr.f32.mxu0 %v1303
      %2180 = vmatmul.mubr.f32.gmra.mrb[0].mxu0 %v1302
      %v2181 = vpop.f32.mrb[0].mxu0
      %v2182 = vadd.f32 %v1957, %v2181
      %v2183 = vpop.f32.mrb[0].mxu0
      %2184 = vmatprep.mubr.f32.mxu0 %v1312
      %2185 = vmatmul.mubr.f32.gmra.mrb[0].mxu0 %v1311
      %v2186 = vpop.f32.mrb[0].mxu0
      %v2187 = vadd.f32 %v1962, %v2186
      %v2188 = vpop.f32.mrb[0].mxu0
      %2189 = vmatprep.mubr.f32.mxu0 %v1321
      %2190 = vmatmul.mubr.f32.gmra.mrb[0].mxu0 %v1320
      %v2191 = vpop.f32.mrb[0].mxu0
      %v2192 = vadd.f32 %v1967, %v2191
      %v2193 = vpop.f32.mrb[0].mxu0
      %2194 = vmatprep.mubr.f32.mxu0 %v1330
      %2195 = vmatmul.mubr.f32.gmra.mrb[0].mxu0 %v1329
      %v2196 = vpop.f32.mrb[0].mxu0
      %v2197 = vadd.f32 %v1972, %v2196
      %v2198 = vpop.f32.mrb[0].mxu0
      %2199 = vmatprep.mubr.f32.mxu0 %v1339
      %2200 = vmatmul.mubr.f32.gmra.mrb[0].mxu0 %v1338
      %v2201 = vpop.f32.mrb[0].mxu0
      %v2202 = vadd.f32 %v1977, %v2201
      %v2203 = vpop.f32.mrb[0].mxu0
      %2204 = vmatprep.mubr.f32.mxu0 %v1348
      %2205 = vmatmul.mubr.f32.gmra.mrb[0].mxu0 %v1347
      %v2206 = vpop.f32.mrb[0].mxu0
      %v2207 = vadd.f32 %v1982, %v2206
      %v2208 = vpop.f32.mrb[0].mxu0
      %2209 = vmatprep.mubr.f32.mxu0 %v1357
      %2210 = vmatmul.mubr.f32.gmra.mrb[0].mxu0 %v1356
      %v2211 = vpop.f32.mrb[0].mxu0
      %v2212 = vadd.f32 %v1987, %v2211
      %v2213 = vpop.f32.mrb[0].mxu0
      %2214 = vmatprep.mubr.f32.mxu0 %v1366
      %2215 = vmatmul.mubr.f32.gmra.mrb[0].mxu0 %v1365
      %v2216 = vpop.f32.mrb[0].mxu0
      %v2217 = vadd.f32 %v1992, %v2216
      %v2218 = vpop.f32.mrb[0].mxu0
      %2219 = vmatprep.mubr.f32.mxu0 %v1375
      %2220 = vmatmul.mubr.f32.gmra.mrb[0].mxu0 %v1374
      %v2221 = vpop.f32.mrb[0].mxu0
      %v2222 = vadd.f32 %v1997, %v2221
      %v2223 = vpop.f32.mrb[0].mxu0
      %2224 = vmatprep.mubr.f32.mxu0 %v1384
      %2225 = vmatmul.mubr.f32.gmra.mrb[0].mxu0 %v1383
      %v2226 = vpop.f32.mrb[0].mxu0
      %v2227 = vadd.f32 %v2002, %v2226
      %v2228 = vpop.f32.mrb[0].mxu0
      %2229 = vmatprep.mubr.f32.mxu0 %v1393
      %2230 = vmatmul.mubr.f32.gmra.mrb[0].mxu0 %v1392
      %v2231 = vpop.f32.mrb[0].mxu0
      %v2232 = vadd.f32 %v2007, %v2231
      %v2233 = vpop.f32.mrb[0].mxu0
      %2234 = vmatprep.mubr.f32.mxu0 %v1402
      %2235 = vmatmul.mubr.f32.gmra.mrb[0].mxu0 %v1401
      %v2236 = vpop.f32.mrb[0].mxu0
      %v2237 = vadd.f32 %v2012, %v2236
      %v2238 = vpop.f32.mrb[0].mxu0
      %2239 = vmatprep.mubr.f32.mxu0 %v1411
      %2240 = vmatmul.mubr.f32.gmra.mrb[0].mxu0 %v1410
      %v2241 = vpop.f32.mrb[0].mxu0
      %v2242 = vadd.f32 %v2017, %v2241
      %v2243 = vpop.f32.mrb[0].mxu0
      %2244 = vmatprep.mubr.f32.mxu0 %v1420
      %2245 = vmatmul.mubr.f32.gmra.mrb[0].mxu0 %v1419
      %v2246 = vpop.f32.mrb[0].mxu0
      %v2247 = vadd.f32 %v2022, %v2246
      %v2248 = vpop.f32.mrb[0].mxu0
      %2249 = vdwg.mxu0
      %2250 = vmatprep.subr.mxu0 0.0
      %2251 = vmatpush1.msra.mxu0 %v1520
      %2252 = vmatprep.subr.mxu0 0.0
      %2253 = vmatpush1.msra.mxu0 %v1521
      %2254 = vmatprep.subr.mxu0 0.0
      %2255 = vmatpush1.msra.mxu0 %v1522
      %2256 = vmatprep.subr.mxu0 0.0
      %2257 = vmatpush1.msra.mxu0 %v1523
      %2258 = vmatprep.subr.mxu0 0.0
      %2259 = vmatpush1.msra.mxu0 %v1524
      %2260 = vmatprep.subr.mxu0 0.0
      %2261 = vmatpush1.msra.mxu0 %v1525
      %2262 = vmatprep.subr.mxu0 0.0
      %2263 = vmatpush1.msra.mxu0 %v1526
      %2264 = vmatprep.subr.mxu0 0.0
      %2265 = vmatpush1.msra.mxu0 %v1527
      %2266 = vmatprep.subr.mxu0 0.0
      %2267 = vmatpush1.msra.mxu0 %v1528
      %2268 = vmatprep.subr.mxu0 0.0
      %2269 = vmatpush1.msra.mxu0 %v1529
      %2270 = vmatprep.subr.mxu0 0.0
      %2271 = vmatpush1.msra.mxu0 %v1530
      %2272 = vmatprep.subr.mxu0 0.0
      %2273 = vmatpush1.msra.mxu0 %v1531
      %2274 = vmatprep.subr.mxu0 0.0
      %2275 = vmatpush1.msra.mxu0 %v1532
      %2276 = vmatprep.subr.mxu0 0.0
      %2277 = vmatpush1.msra.mxu0 %v1533
      %2278 = vmatprep.subr.mxu0 0.0
      %2279 = vmatpush1.msra.mxu0 %v1534
      %2280 = vmatprep.subr.mxu0 0.0
      %2281 = vmatpush1.msra.mxu0 %v1535
      %2282 = vmatprep.subr.mxu0 0.0
      %2283 = vmatpush1.msra.mxu0 %v1536
      %2284 = vmatprep.subr.mxu0 0.0
      %2285 = vmatpush1.msra.mxu0 %v1537
      %2286 = vmatprep.subr.mxu0 0.0
      %2287 = vmatpush1.msra.mxu0 %v1538
      %2288 = vmatprep.subr.mxu0 0.0
      %2289 = vmatpush1.msra.mxu0 %v1539
      %2290 = vmatprep.subr.mxu0 0.0
      %2291 = vmatpush1.msra.mxu0 %v1540
      %2292 = vmatprep.subr.mxu0 0.0
      %2293 = vmatpush1.msra.mxu0 %v1541
      %2294 = vmatprep.subr.mxu0 0.0
      %2295 = vmatpush1.msra.mxu0 %v1542
      %2296 = vmatprep.subr.mxu0 0.0
      %2297 = vmatpush1.msra.mxu0 %v1543
      %2298 = vmatprep.subr.mxu0 0.0
      %2299 = vmatpush1.msra.mxu0 %v1544
      %2300 = vmatprep.subr.mxu0 0.0
      %2301 = vmatpush1.msra.mxu0 %v1545
      %2302 = vmatprep.subr.mxu0 0.0
      %2303 = vmatpush1.msra.mxu0 %v1546
      %2304 = vmatprep.subr.mxu0 0.0
      %2305 = vmatpush1.msra.mxu0 %v1547
      %2306 = vmatprep.subr.mxu0 0.0
      %2307 = vmatpush1.msra.mxu0 %v1548
      %2308 = vmatprep.subr.mxu0 0.0
      %2309 = vmatpush1.msra.mxu0 %v1549
      %2310 = vmatprep.subr.mxu0 0.0
      %2311 = vmatpush1.msra.mxu0 %v1550
      %2312 = vmatprep.subr.mxu0 0.0
      %2313 = vmatpush1.msra.mxu0 %v1551
      %2314 = vmatprep.mubr.f32.mxu0 %v1143
      %2315 = vmatmul.mubr.f32.gmra.mrb[0].mxu0 %v1142
      %v2316 = vpop.f32.mrb[0].mxu0
      %v2317 = vadd.f32 %v2092, %v2316
      %v2318 = vpop.f32.mrb[0].mxu0
      %2319 = vmatprep.mubr.f32.mxu0 %v1152
      %2320 = vmatmul.mubr.f32.gmra.mrb[0].mxu0 %v1151
      %v2321 = vpop.f32.mrb[0].mxu0
      %v2322 = vadd.f32 %v2097, %v2321
      %v2323 = vpop.f32.mrb[0].mxu0
      %2324 = vmatprep.mubr.f32.mxu0 %v1161
      %2325 = vmatmul.mubr.f32.gmra.mrb[0].mxu0 %v1160
      %v2326 = vpop.f32.mrb[0].mxu0
      %v2327 = vadd.f32 %v2102, %v2326
      %v2328 = vpop.f32.mrb[0].mxu0
      %2329 = vmatprep.mubr.f32.mxu0 %v1170
      %2330 = vmatmul.mubr.f32.gmra.mrb[0].mxu0 %v1169
      %v2331 = vpop.f32.mrb[0].mxu0
      %v2332 = vadd.f32 %v2107, %v2331
      %v2333 = vpop.f32.mrb[0].mxu0
      %2334 = vmatprep.mubr.f32.mxu0 %v1179
      %2335 = vmatmul.mubr.f32.gmra.mrb[0].mxu0 %v1178
      %v2336 = vpop.f32.mrb[0].mxu0
      %v2337 = vadd.f32 %v2112, %v2336
      %v2338 = vpop.f32.mrb[0].mxu0
      %2339 = vmatprep.mubr.f32.mxu0 %v1188
      %2340 = vmatmul.mubr.f32.gmra.mrb[0].mxu0 %v1187
      %v2341 = vpop.f32.mrb[0].mxu0
      %v2342 = vadd.f32 %v2117, %v2341
      %v2343 = vpop.f32.mrb[0].mxu0
      %2344 = vmatprep.mubr.f32.mxu0 %v1197
      %2345 = vmatmul.mubr.f32.gmra.mrb[0].mxu0 %v1196
      %v2346 = vpop.f32.mrb[0].mxu0
      %v2347 = vadd.f32 %v2122, %v2346
      %v2348 = vpop.f32.mrb[0].mxu0
      %2349 = vmatprep.mubr.f32.mxu0 %v1206
      %2350 = vmatmul.mubr.f32.gmra.mrb[0].mxu0 %v1205
      %v2351 = vpop.f32.mrb[0].mxu0
      %v2352 = vadd.f32 %v2127, %v2351
      %v2353 = vpop.f32.mrb[0].mxu0
      %2354 = vmatprep.mubr.f32.mxu0 %v1215
      %2355 = vmatmul.mubr.f32.gmra.mrb[0].mxu0 %v1214
      %v2356 = vpop.f32.mrb[0].mxu0
      %v2357 = vadd.f32 %v2132, %v2356
      %v2358 = vpop.f32.mrb[0].mxu0
      %2359 = vmatprep.mubr.f32.mxu0 %v1224
      %2360 = vmatmul.mubr.f32.gmra.mrb[0].mxu0 %v1223
      %v2361 = vpop.f32.mrb[0].mxu0
      %v2362 = vadd.f32 %v2137, %v2361
      %v2363 = vpop.f32.mrb[0].mxu0
      %2364 = vmatprep.mubr.f32.mxu0 %v1233
      %2365 = vmatmul.mubr.f32.gmra.mrb[0].mxu0 %v1232
      %v2366 = vpop.f32.mrb[0].mxu0
      %v2367 = vadd.f32 %v2142, %v2366
      %v2368 = vpop.f32.mrb[0].mxu0
      %2369 = vmatprep.mubr.f32.mxu0 %v1242
      %2370 = vmatmul.mubr.f32.gmra.mrb[0].mxu0 %v1241
      %v2371 = vpop.f32.mrb[0].mxu0
      %v2372 = vadd.f32 %v2147, %v2371
      %v2373 = vpop.f32.mrb[0].mxu0
      %2374 = vmatprep.mubr.f32.mxu0 %v1251
      %2375 = vmatmul.mubr.f32.gmra.mrb[0].mxu0 %v1250
      %v2376 = vpop.f32.mrb[0].mxu0
      %v2377 = vadd.f32 %v2152, %v2376
      %v2378 = vpop.f32.mrb[0].mxu0
      %2379 = vmatprep.mubr.f32.mxu0 %v1260
      %2380 = vmatmul.mubr.f32.gmra.mrb[0].mxu0 %v1259
      %v2381 = vpop.f32.mrb[0].mxu0
      %v2382 = vadd.f32 %v2157, %v2381
      %v2383 = vpop.f32.mrb[0].mxu0
      %2384 = vmatprep.mubr.f32.mxu0 %v1269
      %2385 = vmatmul.mubr.f32.gmra.mrb[0].mxu0 %v1268
      %v2386 = vpop.f32.mrb[0].mxu0
      %v2387 = vadd.f32 %v2162, %v2386
      %v2388 = vpop.f32.mrb[0].mxu0
      %2389 = vmatprep.mubr.f32.mxu0 %v1278
      %2390 = vmatmul.mubr.f32.gmra.mrb[0].mxu0 %v1277
      %v2391 = vpop.f32.mrb[0].mxu0
      %v2392 = vadd.f32 %v2167, %v2391
      %v2393 = vpop.f32.mrb[0].mxu0
      %2394 = vmatprep.mubr.f32.mxu0 %v1287
      %2395 = vmatmul.mubr.f32.gmra.mrb[0].mxu0 %v1286
      %v2396 = vpop.f32.mrb[0].mxu0
      %v2397 = vadd.f32 %v2172, %v2396
      %v2398 = vpop.f32.mrb[0].mxu0
      %2399 = vmatprep.mubr.f32.mxu0 %v1296
      %2400 = vmatmul.mubr.f32.gmra.mrb[0].mxu0 %v1295
      %v2401 = vpop.f32.mrb[0].mxu0
      %v2402 = vadd.f32 %v2177, %v2401
      %v2403 = vpop.f32.mrb[0].mxu0
      %2404 = vmatprep.mubr.f32.mxu0 %v1305
      %2405 = vmatmul.mubr.f32.gmra.mrb[0].mxu0 %v1304
      %v2406 = vpop.f32.mrb[0].mxu0
      %v2407 = vadd.f32 %v2182, %v2406
      %v2408 = vpop.f32.mrb[0].mxu0
      %2409 = vmatprep.mubr.f32.mxu0 %v1314
      %2410 = vmatmul.mubr.f32.gmra.mrb[0].mxu0 %v1313
      %v2411 = vpop.f32.mrb[0].mxu0
      %v2412 = vadd.f32 %v2187, %v2411
      %v2413 = vpop.f32.mrb[0].mxu0
      %2414 = vmatprep.mubr.f32.mxu0 %v1323
      %2415 = vmatmul.mubr.f32.gmra.mrb[0].mxu0 %v1322
      %v2416 = vpop.f32.mrb[0].mxu0
      %v2417 = vadd.f32 %v2192, %v2416
      %v2418 = vpop.f32.mrb[0].mxu0
      %2419 = vmatprep.mubr.f32.mxu0 %v1332
      %2420 = vmatmul.mubr.f32.gmra.mrb[0].mxu0 %v1331
      %v2421 = vpop.f32.mrb[0].mxu0
      %v2422 = vadd.f32 %v2197, %v2421
      %v2423 = vpop.f32.mrb[0].mxu0
      %2424 = vmatprep.mubr.f32.mxu0 %v1341
      %2425 = vmatmul.mubr.f32.gmra.mrb[0].mxu0 %v1340
      %v2426 = vpop.f32.mrb[0].mxu0
      %v2427 = vadd.f32 %v2202, %v2426
      %v2428 = vpop.f32.mrb[0].mxu0
      %2429 = vmatprep.mubr.f32.mxu0 %v1350
      %2430 = vmatmul.mubr.f32.gmra.mrb[0].mxu0 %v1349
      %v2431 = vpop.f32.mrb[0].mxu0
      %v2432 = vadd.f32 %v2207, %v2431
      %v2433 = vpop.f32.mrb[0].mxu0
      %2434 = vmatprep.mubr.f32.mxu0 %v1359
      %2435 = vmatmul.mubr.f32.gmra.mrb[0].mxu0 %v1358
      %v2436 = vpop.f32.mrb[0].mxu0
      %v2437 = vadd.f32 %v2212, %v2436
      %v2438 = vpop.f32.mrb[0].mxu0
      %2439 = vmatprep.mubr.f32.mxu0 %v1368
      %2440 = vmatmul.mubr.f32.gmra.mrb[0].mxu0 %v1367
      %v2441 = vpop.f32.mrb[0].mxu0
      %v2442 = vadd.f32 %v2217, %v2441
      %v2443 = vpop.f32.mrb[0].mxu0
      %2444 = vmatprep.mubr.f32.mxu0 %v1377
      %2445 = vmatmul.mubr.f32.gmra.mrb[0].mxu0 %v1376
      %v2446 = vpop.f32.mrb[0].mxu0
      %v2447 = vadd.f32 %v2222, %v2446
      %v2448 = vpop.f32.mrb[0].mxu0
      %2449 = vmatprep.mubr.f32.mxu0 %v1386
      %2450 = vmatmul.mubr.f32.gmra.mrb[0].mxu0 %v1385
      %v2451 = vpop.f32.mrb[0].mxu0
      %v2452 = vadd.f32 %v2227, %v2451
      %v2453 = vpop.f32.mrb[0].mxu0
      %2454 = vmatprep.mubr.f32.mxu0 %v1395
      %2455 = vmatmul.mubr.f32.gmra.mrb[0].mxu0 %v1394
      %v2456 = vpop.f32.mrb[0].mxu0
      %v2457 = vadd.f32 %v2232, %v2456
      %v2458 = vpop.f32.mrb[0].mxu0
      %2459 = vmatprep.mubr.f32.mxu0 %v1404
      %2460 = vmatmul.mubr.f32.gmra.mrb[0].mxu0 %v1403
      %v2461 = vpop.f32.mrb[0].mxu0
      %v2462 = vadd.f32 %v2237, %v2461
      %v2463 = vpop.f32.mrb[0].mxu0
      %2464 = vmatprep.mubr.f32.mxu0 %v1413
      %2465 = vmatmul.mubr.f32.gmra.mrb[0].mxu0 %v1412
      %v2466 = vpop.f32.mrb[0].mxu0
      %v2467 = vadd.f32 %v2242, %v2466
      %v2468 = vpop.f32.mrb[0].mxu0
      %2469 = vmatprep.mubr.f32.mxu0 %v1422
      %2470 = vmatmul.mubr.f32.gmra.mrb[0].mxu0 %v1421
      %v2471 = vpop.f32.mrb[0].mxu0
      %v2472 = vadd.f32 %v2247, %v2471
      %v2473 = vpop.f32.mrb[0].mxu0
      %2474 = vdwg.mxu0
      %2475 = vmatprep.subr.mxu0 0.0
      %2476 = vmatpush1.msra.mxu0 %v1552
      %2477 = vmatprep.subr.mxu0 0.0
      %2478 = vmatpush1.msra.mxu0 %v1553
      %2479 = vmatprep.subr.mxu0 0.0
      %2480 = vmatpush1.msra.mxu0 %v1554
      %2481 = vmatprep.subr.mxu0 0.0
      %2482 = vmatpush1.msra.mxu0 %v1555
      %2483 = vmatprep.subr.mxu0 0.0
      %2484 = vmatpush1.msra.mxu0 %v1556
      %2485 = vmatprep.subr.mxu0 0.0
      %2486 = vmatpush1.msra.mxu0 %v1557
      %2487 = vmatprep.subr.mxu0 0.0
      %2488 = vmatpush1.msra.mxu0 %v1558
      %2489 = vmatprep.subr.mxu0 0.0
      %2490 = vmatpush1.msra.mxu0 %v1559
      %2491 = vmatprep.subr.mxu0 0.0
      %2492 = vmatpush1.msra.mxu0 %v1560
      %2493 = vmatprep.subr.mxu0 0.0
      %2494 = vmatpush1.msra.mxu0 %v1561
      %2495 = vmatprep.subr.mxu0 0.0
      %2496 = vmatpush1.msra.mxu0 %v1562
      %2497 = vmatprep.subr.mxu0 0.0
      %2498 = vmatpush1.msra.mxu0 %v1563
      %2499 = vmatprep.subr.mxu0 0.0
      %2500 = vmatpush1.msra.mxu0 %v1564
      %2501 = vmatprep.subr.mxu0 0.0
      %2502 = vmatpush1.msra.mxu0 %v1565
      %2503 = vmatprep.subr.mxu0 0.0
      %2504 = vmatpush1.msra.mxu0 %v1566
      %2505 = vmatprep.subr.mxu0 0.0
      %2506 = vmatpush1.msra.mxu0 %v1567
      %2507 = vmatprep.subr.mxu0 0.0
      %2508 = vmatpush1.msra.mxu0 0.0
      %2509 = vmatprep.subr.mxu0 0.0
      %2510 = vmatpush1.msra.mxu0 0.0
      %2511 = vmatprep.subr.mxu0 0.0
      %2512 = vmatpush1.msra.mxu0 0.0
      %2513 = vmatprep.subr.mxu0 0.0
      %2514 = vmatpush1.msra.mxu0 0.0
      %2515 = vmatprep.subr.mxu0 0.0
      %2516 = vmatpush1.msra.mxu0 0.0
      %2517 = vmatprep.subr.mxu0 0.0
      %2518 = vmatpush1.msra.mxu0 0.0
      %2519 = vmatprep.subr.mxu0 0.0
      %2520 = vmatpush1.msra.mxu0 0.0
      %2521 = vmatprep.subr.mxu0 0.0
      %2522 = vmatpush1.msra.mxu0 0.0
      %2523 = vmatprep.subr.mxu0 0.0
      %2524 = vmatpush1.msra.mxu0 0.0
      %2525 = vmatprep.subr.mxu0 0.0
      %2526 = vmatpush1.msra.mxu0 0.0
      %2527 = vmatprep.subr.mxu0 0.0
      %2528 = vmatpush1.msra.mxu0 0.0
      %2529 = vmatprep.subr.mxu0 0.0
      %2530 = vmatpush1.msra.mxu0 0.0
      %2531 = vmatprep.subr.mxu0 0.0
      %2532 = vmatpush1.msra.mxu0 0.0
      %2533 = vmatprep.subr.mxu0 0.0
      %2534 = vmatpush1.msra.mxu0 0.0
      %2535 = vmatprep.subr.mxu0 0.0
      %2536 = vmatpush1.msra.mxu0 0.0
      %2537 = vmatprep.subr.mxu0 0.0
      %2538 = vmatpush1.msra.mxu0 0.0
      %2539 = vmatprep.mubr.f32.mxu0 0.0
      %2540 = vmatmul.mubr.f32.gmra.mrb[0].mxu0 %v1144
      %v2541 = vpop.f32.mrb[0].mxu0
      %v2542 = vadd.f32 %v2317, %v2541
      %v2543 = vpop.f32.mrb[0].mxu0
      %2544 = vmatprep.mubr.f32.mxu0 0.0
      %2545 = vmatmul.mubr.f32.gmra.mrb[0].mxu0 %v1153
      %v2546 = vpop.f32.mrb[0].mxu0
      %v2547 = vadd.f32 %v2322, %v2546
      %v2548 = vpop.f32.mrb[0].mxu0
      %2549 = vmatprep.mubr.f32.mxu0 0.0
      %2550 = vmatmul.mubr.f32.gmra.mrb[0].mxu0 %v1162
      %v2551 = vpop.f32.mrb[0].mxu0
      %v2552 = vadd.f32 %v2327, %v2551
      %v2553 = vpop.f32.mrb[0].mxu0
      %2554 = vmatprep.mubr.f32.mxu0 0.0
      %2555 = vmatmul.mubr.f32.gmra.mrb[0].mxu0 %v1171
      %v2556 = vpop.f32.mrb[0].mxu0
      %v2557 = vadd.f32 %v2332, %v2556
      %v2558 = vpop.f32.mrb[0].mxu0
      %2559 = vmatprep.mubr.f32.mxu0 0.0
      %2560 = vmatmul.mubr.f32.gmra.mrb[0].mxu0 %v1180
      %v2561 = vpop.f32.mrb[0].mxu0
      %v2562 = vadd.f32 %v2337, %v2561
      %v2563 = vpop.f32.mrb[0].mxu0
      %2564 = vmatprep.mubr.f32.mxu0 0.0
      %2565 = vmatmul.mubr.f32.gmra.mrb[0].mxu0 %v1189
      %v2566 = vpop.f32.mrb[0].mxu0
      %v2567 = vadd.f32 %v2342, %v2566
      %v2568 = vpop.f32.mrb[0].mxu0
      %2569 = vmatprep.mubr.f32.mxu0 0.0
      %2570 = vmatmul.mubr.f32.gmra.mrb[0].mxu0 %v1198
      %v2571 = vpop.f32.mrb[0].mxu0
      %v2572 = vadd.f32 %v2347, %v2571
      %v2573 = vpop.f32.mrb[0].mxu0
      %2574 = vmatprep.mubr.f32.mxu0 0.0
      %2575 = vmatmul.mubr.f32.gmra.mrb[0].mxu0 %v1207
      %v2576 = vpop.f32.mrb[0].mxu0
      %v2577 = vadd.f32 %v2352, %v2576
      %v2578 = vpop.f32.mrb[0].mxu0
      %2579 = vmatprep.mubr.f32.mxu0 0.0
      %2580 = vmatmul.mubr.f32.gmra.mrb[0].mxu0 %v1216
      %v2581 = vpop.f32.mrb[0].mxu0
      %v2582 = vadd.f32 %v2357, %v2581
      %v2583 = vpop.f32.mrb[0].mxu0
      %2584 = vmatprep.mubr.f32.mxu0 0.0
      %2585 = vmatmul.mubr.f32.gmra.mrb[0].mxu0 %v1225
      %v2586 = vpop.f32.mrb[0].mxu0
      %v2587 = vadd.f32 %v2362, %v2586
      %v2588 = vpop.f32.mrb[0].mxu0
      %2589 = vmatprep.mubr.f32.mxu0 0.0
      %2590 = vmatmul.mubr.f32.gmra.mrb[0].mxu0 %v1234
      %v2591 = vpop.f32.mrb[0].mxu0
      %v2592 = vadd.f32 %v2367, %v2591
      %v2593 = vpop.f32.mrb[0].mxu0
      %2594 = vmatprep.mubr.f32.mxu0 0.0
      %2595 = vmatmul.mubr.f32.gmra.mrb[0].mxu0 %v1243
      %v2596 = vpop.f32.mrb[0].mxu0
      %v2597 = vadd.f32 %v2372, %v2596
      %v2598 = vpop.f32.mrb[0].mxu0
      %2599 = vmatprep.mubr.f32.mxu0 0.0
      %2600 = vmatmul.mubr.f32.gmra.mrb[0].mxu0 %v1252
      %v2601 = vpop.f32.mrb[0].mxu0
      %v2602 = vadd.f32 %v2377, %v2601
      %v2603 = vpop.f32.mrb[0].mxu0
      %2604 = vmatprep.mubr.f32.mxu0 0.0
      %2605 = vmatmul.mubr.f32.gmra.mrb[0].mxu0 %v1261
      %v2606 = vpop.f32.mrb[0].mxu0
      %v2607 = vadd.f32 %v2382, %v2606
      %v2608 = vpop.f32.mrb[0].mxu0
      %2609 = vmatprep.mubr.f32.mxu0 0.0
      %2610 = vmatmul.mubr.f32.gmra.mrb[0].mxu0 %v1270
      %v2611 = vpop.f32.mrb[0].mxu0
      %v2612 = vadd.f32 %v2387, %v2611
      %v2613 = vpop.f32.mrb[0].mxu0
      %2614 = vmatprep.mubr.f32.mxu0 0.0
      %2615 = vmatmul.mubr.f32.gmra.mrb[0].mxu0 %v1279
      %v2616 = vpop.f32.mrb[0].mxu0
      %v2617 = vadd.f32 %v2392, %v2616
      %v2618 = vpop.f32.mrb[0].mxu0
      %2619 = vmatprep.mubr.f32.mxu0 0.0
      %2620 = vmatmul.mubr.f32.gmra.mrb[0].mxu0 %v1288
      %v2621 = vpop.f32.mrb[0].mxu0
      %v2622 = vadd.f32 %v2397, %v2621
      %v2623 = vpop.f32.mrb[0].mxu0
      %2624 = vmatprep.mubr.f32.mxu0 0.0
      %2625 = vmatmul.mubr.f32.gmra.mrb[0].mxu0 %v1297
      %v2626 = vpop.f32.mrb[0].mxu0
      %v2627 = vadd.f32 %v2402, %v2626
      %v2628 = vpop.f32.mrb[0].mxu0
      %2629 = vmatprep.mubr.f32.mxu0 0.0
      %2630 = vmatmul.mubr.f32.gmra.mrb[0].mxu0 %v1306
      %v2631 = vpop.f32.mrb[0].mxu0
      %v2632 = vadd.f32 %v2407, %v2631
      %v2633 = vpop.f32.mrb[0].mxu0
      %2634 = vmatprep.mubr.f32.mxu0 0.0
      %2635 = vmatmul.mubr.f32.gmra.mrb[0].mxu0 %v1315
      %v2636 = vpop.f32.mrb[0].mxu0
      %v2637 = vadd.f32 %v2412, %v2636
      %v2638 = vpop.f32.mrb[0].mxu0
      %2639 = vmatprep.mubr.f32.mxu0 0.0
      %2640 = vmatmul.mubr.f32.gmra.mrb[0].mxu0 %v1324
      %v2641 = vpop.f32.mrb[0].mxu0
      %v2642 = vadd.f32 %v2417, %v2641
      %v2643 = vpop.f32.mrb[0].mxu0
      %2644 = vmatprep.mubr.f32.mxu0 0.0
      %2645 = vmatmul.mubr.f32.gmra.mrb[0].mxu0 %v1333
      %v2646 = vpop.f32.mrb[0].mxu0
      %v2647 = vadd.f32 %v2422, %v2646
      %v2648 = vpop.f32.mrb[0].mxu0
      %2649 = vmatprep.mubr.f32.mxu0 0.0
      %2650 = vmatmul.mubr.f32.gmra.mrb[0].mxu0 %v1342
      %v2651 = vpop.f32.mrb[0].mxu0
      %v2652 = vadd.f32 %v2427, %v2651
      %v2653 = vpop.f32.mrb[0].mxu0
      %2654 = vmatprep.mubr.f32.mxu0 0.0
      %2655 = vmatmul.mubr.f32.gmra.mrb[0].mxu0 %v1351
      %v2656 = vpop.f32.mrb[0].mxu0
      %v2657 = vadd.f32 %v2432, %v2656
      %v2658 = vpop.f32.mrb[0].mxu0
      %2659 = vmatprep.mubr.f32.mxu0 0.0
      %2660 = vmatmul.mubr.f32.gmra.mrb[0].mxu0 %v1360
      %v2661 = vpop.f32.mrb[0].mxu0
      %v2662 = vadd.f32 %v2437, %v2661
      %v2663 = vpop.f32.mrb[0].mxu0
      %2664 = vmatprep.mubr.f32.mxu0 0.0
      %2665 = vmatmul.mubr.f32.gmra.mrb[0].mxu0 %v1369
      %v2666 = vpop.f32.mrb[0].mxu0
      %v2667 = vadd.f32 %v2442, %v2666
      %v2668 = vpop.f32.mrb[0].mxu0
      %2669 = vmatprep.mubr.f32.mxu0 0.0
      %2670 = vmatmul.mubr.f32.gmra.mrb[0].mxu0 %v1378
      %v2671 = vpop.f32.mrb[0].mxu0
      %v2672 = vadd.f32 %v2447, %v2671
      %v2673 = vpop.f32.mrb[0].mxu0
      %2674 = vmatprep.mubr.f32.mxu0 0.0
      %2675 = vmatmul.mubr.f32.gmra.mrb[0].mxu0 %v1387
      %v2676 = vpop.f32.mrb[0].mxu0
      %v2677 = vadd.f32 %v2452, %v2676
      %v2678 = vpop.f32.mrb[0].mxu0
      %2679 = vmatprep.mubr.f32.mxu0 0.0
      %2680 = vmatmul.mubr.f32.gmra.mrb[0].mxu0 %v1396
      %v2681 = vpop.f32.mrb[0].mxu0
      %v2682 = vadd.f32 %v2457, %v2681
      %v2683 = vpop.f32.mrb[0].mxu0
      %2684 = vmatprep.mubr.f32.mxu0 0.0
      %2685 = vmatmul.mubr.f32.gmra.mrb[0].mxu0 %v1405
      %v2686 = vpop.f32.mrb[0].mxu0
      %v2687 = vadd.f32 %v2462, %v2686
      %v2688 = vpop.f32.mrb[0].mxu0
      %2689 = vmatprep.mubr.f32.mxu0 0.0
      %2690 = vmatmul.mubr.f32.gmra.mrb[0].mxu0 %v1414
      %v2691 = vpop.f32.mrb[0].mxu0
      %v2692 = vadd.f32 %v2467, %v2691
      %v2693 = vpop.f32.mrb[0].mxu0
      %2694 = vmatprep.mubr.f32.mxu0 0.0
      %2695 = vmatmul.mubr.f32.gmra.mrb[0].mxu0 %v1423
      %v2696 = vpop.f32.mrb[0].mxu0
      %v2697 = vadd.f32 %v2472, %v2696
      %v2698 = vpop.f32.mrb[0].mxu0
      %2699 = vdwg.mxu0
      %s2700 = scalar_lea.vmem [#allocation3], 32
      %vm2701 = vcmask 64512
      %2702 = vst.msk [vmem:[%s2700 + $0x8] sm:$0xff] %vm2701, %v2542
      %2703 = vst.msk [vmem:[%s2700 + $0x10] sm:$0xff] %vm2701, %v2547
      %2704 = vst.msk [vmem:[%s2700 + $0x28] sm:$0xff] %vm2701, %v2552
      %2705 = vst.msk [vmem:[%s2700 + $0x30] sm:$0xff] %vm2701, %v2557
      %2706 = vst.msk [vmem:[%s2700 + $0x48] sm:$0xff] %vm2701, %v2562
      %2707 = vst.msk [vmem:[%s2700 + $0x50] sm:$0xff] %vm2701, %v2567
      %2708 = vst.msk [vmem:[%s2700 + $0x68] sm:$0xff] %vm2701, %v2572
      %2709 = vst.msk [vmem:[%s2700 + $0x70] sm:$0xff] %vm2701, %v2577
      %2710 = vst.msk [vmem:[%s2700 + $0x88] sm:$0xff] %vm2701, %v2582
      %2711 = vst.msk [vmem:[%s2700 + $0x90] sm:$0xff] %vm2701, %v2587
      %2712 = vst.msk [vmem:[%s2700 + $0xa8] sm:$0xff] %vm2701, %v2592
      %2713 = vst.msk [vmem:[%s2700 + $0xb0] sm:$0xff] %vm2701, %v2597
      %2714 = vst.msk [vmem:[%s2700 + $0xc8] sm:$0xff] %vm2701, %v2602
      %2715 = vst.msk [vmem:[%s2700 + $0xd0] sm:$0xff] %vm2701, %v2607
      %2716 = vst.msk [vmem:[%s2700 + $0xe8] sm:$0xff] %vm2701, %v2612
      %2717 = vst.msk [vmem:[%s2700 + $0xf0] sm:$0xff] %vm2701, %v2617
      %2718 = vst.msk [vmem:[%s2700 + $0x108] sm:$0xff] %vm2701, %v2622
      %2719 = vst.msk [vmem:[%s2700 + $0x110] sm:$0xff] %vm2701, %v2627
      %2720 = vst.msk [vmem:[%s2700 + $0x128] sm:$0xff] %vm2701, %v2632
      %2721 = vst.msk [vmem:[%s2700 + $0x130] sm:$0xff] %vm2701, %v2637
      %2722 = vst.msk [vmem:[%s2700 + $0x148] sm:$0xff] %vm2701, %v2642
      %2723 = vst.msk [vmem:[%s2700 + $0x150] sm:$0xff] %vm2701, %v2647
      %2724 = vst.msk [vmem:[%s2700 + $0x168] sm:$0xff] %vm2701, %v2652
      %2725 = vst.msk [vmem:[%s2700 + $0x170] sm:$0xff] %vm2701, %v2657
      %2726 = vst.msk [vmem:[%s2700 + $0x188] sm:$0xff] %vm2701, %v2662
      %2727 = vst.msk [vmem:[%s2700 + $0x190] sm:$0xff] %vm2701, %v2667
      %2728 = vst.msk [vmem:[%s2700 + $0x1a8] sm:$0xff] %vm2701, %v2672
      %2729 = vst.msk [vmem:[%s2700 + $0x1b0] sm:$0xff] %vm2701, %v2677
      %2730 = vst.msk [vmem:[%s2700 + $0x1c8] sm:$0xff] %vm2701, %v2682
      %2731 = vst.msk [vmem:[%s2700 + $0x1d0] sm:$0xff] %vm2701, %v2687
      %2732 = vst.msk [vmem:[%s2700 + $0x1e8] sm:$0xff] %vm2701, %v2692
      %2733 = vst.msk [vmem:[%s2700 + $0x1f0] sm:$0xff] %vm2701, %v2697
      %v2734 = vld [vmem:[#allocation3 + $0x7] sm:$0xff]
      %v2735 = vld [vmem:[#allocation3 + $0xf] sm:$0xff]
      %v2736 = vld [vmem:[#allocation3 + $0x27] sm:$0xff]
      %v2737 = vld [vmem:[#allocation3 + $0x2f] sm:$0xff]
      %v2738 = vld [vmem:[#allocation3 + $0x47] sm:$0xff]
      %v2739 = vld [vmem:[#allocation3 + $0x4f] sm:$0xff]
      %v2740 = vld [vmem:[#allocation3 + $0x67] sm:$0xff]
      %v2741 = vld [vmem:[#allocation3 + $0x6f] sm:$0xff]
      %v2742 = vld [vmem:[#allocation3 + $0x87] sm:$0xff]
      %v2743 = vld [vmem:[#allocation3 + $0x8f] sm:$0xff]
      %v2744 = vld [vmem:[#allocation3 + $0xa7] sm:$0xff]
      %v2745 = vld [vmem:[#allocation3 + $0xaf] sm:$0xff]
      %v2746 = vld [vmem:[#allocation3 + $0xc7] sm:$0xff]
      %v2747 = vld [vmem:[#allocation3 + $0xcf] sm:$0xff]
      %v2748 = vld [vmem:[#allocation3 + $0xe7] sm:$0xff]
      %v2749 = vld [vmem:[#allocation3 + $0xef] sm:$0xff]
      %v2750 = vld [vmem:[#allocation3 + $0x107] sm:$0xff]
      %v2751 = vld [vmem:[#allocation3 + $0x10f] sm:$0xff]
      %v2752 = vld [vmem:[#allocation3 + $0x127] sm:$0xff]
      %v2753 = vld [vmem:[#allocation3 + $0x12f] sm:$0xff]
      %v2754 = vld [vmem:[#allocation3 + $0x147] sm:$0xff]
      %v2755 = vld [vmem:[#allocation3 + $0x14f] sm:$0xff]
      %v2756 = vld [vmem:[#allocation3 + $0x167] sm:$0xff]
      %v2757 = vld [vmem:[#allocation3 + $0x16f] sm:$0xff]
      %v2758 = vld [vmem:[#allocation3 + $0x187] sm:$0xff]
      %v2759 = vld [vmem:[#allocation3 + $0x18f] sm:$0xff]
      %v2760 = vld [vmem:[#allocation3 + $0x1a7] sm:$0xff]
      %v2761 = vld [vmem:[#allocation3 + $0x1af] sm:$0xff]
      %v2762 = vld [vmem:[#allocation3 + $0x1c7] sm:$0xff]
      %v2763 = vld [vmem:[#allocation3 + $0x1cf] sm:$0xff]
      %v2764 = vld [vmem:[#allocation3 + $0x1e7] sm:$0xff]
      %v2765 = vld [vmem:[#allocation3 + $0x1ef] sm:$0xff]
      %2766 = vst [vmem:[#allocation5] sm:$0xff] %v2734
      %2767 = vst [vmem:[#allocation5 + $0x48] sm:$0xff] %v2735
      %2768 = vst [vmem:[#allocation5 + $0x90] sm:$0xff] %v2736
      %2769 = vst [vmem:[#allocation5 + $0xd8] sm:$0xff] %v2737
      %2770 = vst [vmem:[#allocation5 + $0x120] sm:$0xff] %v2738
      %2771 = vst [vmem:[#allocation5 + $0x168] sm:$0xff] %v2739
      %2772 = vst [vmem:[#allocation5 + $0x1b0] sm:$0xff] %v2740
      %2773 = vst [vmem:[#allocation5 + $0x1f8] sm:$0xff] %v2741
      %2774 = vst [vmem:[#allocation5 + $0x240] sm:$0xff] %v2742
      %2775 = vst [vmem:[#allocation5 + $0x288] sm:$0xff] %v2743
      %2776 = vst [vmem:[#allocation5 + $0x2d0] sm:$0xff] %v2744
      %2777 = vst [vmem:[#allocation5 + $0x318] sm:$0xff] %v2745
      %2778 = vst [vmem:[#allocation5 + $0x360] sm:$0xff] %v2746
      %2779 = vst [vmem:[#allocation5 + $0x3a8] sm:$0xff] %v2747
      %2780 = vst [vmem:[#allocation5 + $0x3f0] sm:$0xff] %v2748
      %2781 = vst [vmem:[#allocation5 + $0x438] sm:$0xff] %v2749
      %2782 = vst [vmem:[#allocation5 + $0x480] sm:$0xff] %v2750
      %2783 = vst [vmem:[#allocation5 + $0x4c8] sm:$0xff] %v2751
      %2784 = vst [vmem:[#allocation5 + $0x510] sm:$0xff] %v2752
      %2785 = vst [vmem:[#allocation5 + $0x558] sm:$0xff] %v2753
      %2786 = vst [vmem:[#allocation5 + $0x5a0] sm:$0xff] %v2754
      %2787 = vst [vmem:[#allocation5 + $0x5e8] sm:$0xff] %v2755
      %2788 = vst [vmem:[#allocation5 + $0x630] sm:$0xff] %v2756
      %2789 = vst [vmem:[#allocation5 + $0x678] sm:$0xff] %v2757
      %2790 = vst [vmem:[#allocation5 + $0x6c0] sm:$0xff] %v2758
      %2791 = vst [vmem:[#allocation5 + $0x708] sm:$0xff] %v2759
      %2792 = vst [vmem:[#allocation5 + $0x750] sm:$0xff] %v2760
      %2793 = vst [vmem:[#allocation5 + $0x798] sm:$0xff] %v2761
      %2794 = vst [vmem:[#allocation5 + $0x7e0] sm:$0xff] %v2762
      %2795 = vst [vmem:[#allocation5 + $0x828] sm:$0xff] %v2763
      %2796 = vst [vmem:[#allocation5 + $0x870] sm:$0xff] %v2764
      %2797 = vst [vmem:[#allocation5 + $0x8b8] sm:$0xff] %v2765
      %v2798 = vld [vmem:[#allocation3 + $0x8] sm:$0xff]
      %v2799 = vld [vmem:[#allocation3 + $0x10] sm:$0xff]
      %v2800 = vld [vmem:[#allocation3 + $0x28] sm:$0xff]
      %v2801 = vld [vmem:[#allocation3 + $0x30] sm:$0xff]
      %v2802 = vld [vmem:[#allocation3 + $0x48] sm:$0xff]
      %v2803 = vld [vmem:[#allocation3 + $0x50] sm:$0xff]
      %v2804 = vld [vmem:[#allocation3 + $0x68] sm:$0xff]
      %v2805 = vld [vmem:[#allocation3 + $0x70] sm:$0xff]
      %v2806 = vld [vmem:[#allocation3 + $0x88] sm:$0xff]
      %v2807 = vld [vmem:[#allocation3 + $0x90] sm:$0xff]
      %v2808 = vld [vmem:[#allocation3 + $0xa8] sm:$0xff]
      %v2809 = vld [vmem:[#allocation3 + $0xb0] sm:$0xff]
      %v2810 = vld [vmem:[#allocation3 + $0xc8] sm:$0xff]
      %v2811 = vld [vmem:[#allocation3 + $0xd0] sm:$0xff]
      %v2812 = vld [vmem:[#allocation3 + $0xe8] sm:$0xff]
      %v2813 = vld [vmem:[#allocation3 + $0xf0] sm:$0xff]
      %v2814 = vld [vmem:[#allocation3 + $0x108] sm:$0xff]
      %v2815 = vld [vmem:[#allocation3 + $0x110] sm:$0xff]
      %v2816 = vld [vmem:[#allocation3 + $0x128] sm:$0xff]
      %v2817 = vld [vmem:[#allocation3 + $0x130] sm:$0xff]
      %v2818 = vld [vmem:[#allocation3 + $0x148] sm:$0xff]
      %v2819 = vld [vmem:[#allocation3 + $0x150] sm:$0xff]
      %v2820 = vld [vmem:[#allocation3 + $0x168] sm:$0xff]
      %v2821 = vld [vmem:[#allocation3 + $0x170] sm:$0xff]
      %v2822 = vld [vmem:[#allocation3 + $0x188] sm:$0xff]
      %v2823 = vld [vmem:[#allocation3 + $0x190] sm:$0xff]
      %v2824 = vld [vmem:[#allocation3 + $0x1a8] sm:$0xff]
      %v2825 = vld [vmem:[#allocation3 + $0x1b0] sm:$0xff]
      %v2826 = vld [vmem:[#allocation3 + $0x1c8] sm:$0xff]
      %v2827 = vld [vmem:[#allocation3 + $0x1d0] sm:$0xff]
      %v2828 = vld [vmem:[#allocation3 + $0x1e8] sm:$0xff]
      %v2829 = vld [vmem:[#allocation3 + $0x1f0] sm:$0xff]
      %2830 = vst [vmem:[#allocation5 + $0x8] sm:$0xff] %v2798
      %2831 = vst [vmem:[#allocation5 + $0x50] sm:$0xff] %v2799
      %2832 = vst [vmem:[#allocation5 + $0x98] sm:$0xff] %v2800
      %2833 = vst [vmem:[#allocation5 + $0xe0] sm:$0xff] %v2801
      %2834 = vst [vmem:[#allocation5 + $0x128] sm:$0xff] %v2802
      %2835 = vst [vmem:[#allocation5 + $0x170] sm:$0xff] %v2803
      %2836 = vst [vmem:[#allocation5 + $0x1b8] sm:$0xff] %v2804
      %2837 = vst [vmem:[#allocation5 + $0x200] sm:$0xff] %v2805
      %2838 = vst [vmem:[#allocation5 + $0x248] sm:$0xff] %v2806
      %2839 = vst [vmem:[#allocation5 + $0x290] sm:$0xff] %v2807
      %2840 = vst [vmem:[#allocation5 + $0x2d8] sm:$0xff] %v2808
      %2841 = vst [vmem:[#allocation5 + $0x320] sm:$0xff] %v2809
      %2842 = vst [vmem:[#allocation5 + $0x368] sm:$0xff] %v2810
      %2843 = vst [vmem:[#allocation5 + $0x3b0] sm:$0xff] %v2811
      %2844 = vst [vmem:[#allocation5 + $0x3f8] sm:$0xff] %v2812
      %2845 = vst [vmem:[#allocation5 + $0x440] sm:$0xff] %v2813
      %2846 = vst [vmem:[#allocation5 + $0x488] sm:$0xff] %v2814
      %2847 = vst [vmem:[#allocation5 + $0x4d0] sm:$0xff] %v2815
      %2848 = vst [vmem:[#allocation5 + $0x518] sm:$0xff] %v2816
      %2849 = vst [vmem:[#allocation5 + $0x560] sm:$0xff] %v2817
      %2850 = vst [vmem:[#allocation5 + $0x5a8] sm:$0xff] %v2818
      %2851 = vst [vmem:[#allocation5 + $0x5f0] sm:$0xff] %v2819
      %2852 = vst [vmem:[#allocation5 + $0x638] sm:$0xff] %v2820
      %2853 = vst [vmem:[#allocation5 + $0x680] sm:$0xff] %v2821
      %2854 = vst [vmem:[#allocation5 + $0x6c8] sm:$0xff] %v2822
      %2855 = vst [vmem:[#allocation5 + $0x710] sm:$0xff] %v2823
      %2856 = vst [vmem:[#allocation5 + $0x758] sm:$0xff] %v2824
      %2857 = vst [vmem:[#allocation5 + $0x7a0] sm:$0xff] %v2825
      %2858 = vst [vmem:[#allocation5 + $0x7e8] sm:$0xff] %v2826
      %2859 = vst [vmem:[#allocation5 + $0x830] sm:$0xff] %v2827
      %2860 = vst [vmem:[#allocation5 + $0x878] sm:$0xff] %v2828
      %2861 = vst [vmem:[#allocation5 + $0x8c0] sm:$0xff] %v2829
      %v2862 = vld [vmem:[#allocation3 + $0x9] sm:$0xff]
      %v2863 = vld [vmem:[#allocation3 + $0x11] sm:$0xff]
      %v2864 = vld [vmem:[#allocation3 + $0x29] sm:$0xff]
      %v2865 = vld [vmem:[#allocation3 + $0x31] sm:$0xff]
      %v2866 = vld [vmem:[#allocation3 + $0x49] sm:$0xff]
      %v2867 = vld [vmem:[#allocation3 + $0x51] sm:$0xff]
      %v2868 = vld [vmem:[#allocation3 + $0x69] sm:$0xff]
      %v2869 = vld [vmem:[#allocation3 + $0x71] sm:$0xff]
      %v2870 = vld [vmem:[#allocation3 + $0x89] sm:$0xff]
      %v2871 = vld [vmem:[#allocation3 + $0x91] sm:$0xff]
      %v2872 = vld [vmem:[#allocation3 + $0xa9] sm:$0xff]
      %v2873 = vld [vmem:[#allocation3 + $0xb1] sm:$0xff]
      %v2874 = vld [vmem:[#allocation3 + $0xc9] sm:$0xff]
      %v2875 = vld [vmem:[#allocation3 + $0xd1] sm:$0xff]
      %v2876 = vld [vmem:[#allocation3 + $0xe9] sm:$0xff]
      %v2877 = vld [vmem:[#allocation3 + $0xf1] sm:$0xff]
      %v2878 = vld [vmem:[#allocation3 + $0x109] sm:$0xff]
      %v2879 = vld [vmem:[#allocation3 + $0x111] sm:$0xff]
      %v2880 = vld [vmem:[#allocation3 + $0x129] sm:$0xff]
      %v2881 = vld [vmem:[#allocation3 + $0x131] sm:$0xff]
      %v2882 = vld [vmem:[#allocation3 + $0x149] sm:$0xff]
      %v2883 = vld [vmem:[#allocation3 + $0x151] sm:$0xff]
      %v2884 = vld [vmem:[#allocation3 + $0x169] sm:$0xff]
      %v2885 = vld [vmem:[#allocation3 + $0x171] sm:$0xff]
      %v2886 = vld [vmem:[#allocation3 + $0x189] sm:$0xff]
      %v2887 = vld [vmem:[#allocation3 + $0x191] sm:$0xff]
      %v2888 = vld [vmem:[#allocation3 + $0x1a9] sm:$0xff]
      %v2889 = vld [vmem:[#allocation3 + $0x1b1] sm:$0xff]
      %v2890 = vld [vmem:[#allocation3 + $0x1c9] sm:$0xff]
      %v2891 = vld [vmem:[#allocation3 + $0x1d1] sm:$0xff]
      %v2892 = vld [vmem:[#allocation3 + $0x1e9] sm:$0xff]
      %v2893 = vld [vmem:[#allocation3 + $0x1f1] sm:$0xff]
      %2894 = vst [vmem:[#allocation5 + $0x10] sm:$0xff] %v2862
      %2895 = vst [vmem:[#allocation5 + $0x58] sm:$0xff] %v2863
      %2896 = vst [vmem:[#allocation5 + $0xa0] sm:$0xff] %v2864
      %2897 = vst [vmem:[#allocation5 + $0xe8] sm:$0xff] %v2865
      %2898 = vst [vmem:[#allocation5 + $0x130] sm:$0xff] %v2866
      %2899 = vst [vmem:[#allocation5 + $0x178] sm:$0xff] %v2867
      %2900 = vst [vmem:[#allocation5 + $0x1c0] sm:$0xff] %v2868
      %2901 = vst [vmem:[#allocation5 + $0x208] sm:$0xff] %v2869
      %2902 = vst [vmem:[#allocation5 + $0x250] sm:$0xff] %v2870
      %2903 = vst [vmem:[#allocation5 + $0x298] sm:$0xff] %v2871
      %2904 = vst [vmem:[#allocation5 + $0x2e0] sm:$0xff] %v2872
      %2905 = vst [vmem:[#allocation5 + $0x328] sm:$0xff] %v2873
      %2906 = vst [vmem:[#allocation5 + $0x370] sm:$0xff] %v2874
      %2907 = vst [vmem:[#allocation5 + $0x3b8] sm:$0xff] %v2875
      %2908 = vst [vmem:[#allocation5 + $0x400] sm:$0xff] %v2876
      %2909 = vst [vmem:[#allocation5 + $0x448] sm:$0xff] %v2877
      %2910 = vst [vmem:[#allocation5 + $0x490] sm:$0xff] %v2878
      %2911 = vst [vmem:[#allocation5 + $0x4d8] sm:$0xff] %v2879
      %2912 = vst [vmem:[#allocation5 + $0x520] sm:$0xff] %v2880
      %2913 = vst [vmem:[#allocation5 + $0x568] sm:$0xff] %v2881
      %2914 = vst [vmem:[#allocation5 + $0x5b0] sm:$0xff] %v2882
      %2915 = vst [vmem:[#allocation5 + $0x5f8] sm:$0xff] %v2883
      %2916 = vst [vmem:[#allocation5 + $0x640] sm:$0xff] %v2884
      %2917 = vst [vmem:[#allocation5 + $0x688] sm:$0xff] %v2885
      %2918 = vst [vmem:[#allocation5 + $0x6d0] sm:$0xff] %v2886
      %2919 = vst [vmem:[#allocation5 + $0x718] sm:$0xff] %v2887
      %2920 = vst [vmem:[#allocation5 + $0x760] sm:$0xff] %v2888
      %2921 = vst [vmem:[#allocation5 + $0x7a8] sm:$0xff] %v2889
      %2922 = vst [vmem:[#allocation5 + $0x7f0] sm:$0xff] %v2890
      %2923 = vst [vmem:[#allocation5 + $0x838] sm:$0xff] %v2891
      %2924 = vst [vmem:[#allocation5 + $0x880] sm:$0xff] %v2892
      %2925 = vst [vmem:[#allocation5 + $0x8c8] sm:$0xff] %v2893
      %v2926 = vld [vmem:[%s2700 + $0x7] sm:$0xff]
      %v2927 = vld [vmem:[%s2700 + $0xf] sm:$0xff]
      %v2928 = vld [vmem:[%s2700 + $0x27] sm:$0xff]
      %v2929 = vld [vmem:[%s2700 + $0x2f] sm:$0xff]
      %v2930 = vld [vmem:[%s2700 + $0x47] sm:$0xff]
      %v2931 = vld [vmem:[%s2700 + $0x4f] sm:$0xff]
      %v2932 = vld [vmem:[%s2700 + $0x67] sm:$0xff]
      %v2933 = vld [vmem:[%s2700 + $0x6f] sm:$0xff]
      %v2934 = vld [vmem:[%s2700 + $0x87] sm:$0xff]
      %v2935 = vld [vmem:[%s2700 + $0x8f] sm:$0xff]
      %v2936 = vld [vmem:[%s2700 + $0xa7] sm:$0xff]
      %v2937 = vld [vmem:[%s2700 + $0xaf] sm:$0xff]
      %v2938 = vld [vmem:[%s2700 + $0xc7] sm:$0xff]
      %v2939 = vld [vmem:[%s2700 + $0xcf] sm:$0xff]
      %v2940 = vld [vmem:[%s2700 + $0xe7] sm:$0xff]
      %v2941 = vld [vmem:[%s2700 + $0xef] sm:$0xff]
      %v2942 = vld [vmem:[%s2700 + $0x107] sm:$0xff]
      %v2943 = vld [vmem:[%s2700 + $0x10f] sm:$0xff]
      %v2944 = vld [vmem:[%s2700 + $0x127] sm:$0xff]
      %v2945 = vld [vmem:[%s2700 + $0x12f] sm:$0xff]
      %v2946 = vld [vmem:[%s2700 + $0x147] sm:$0xff]
      %v2947 = vld [vmem:[%s2700 + $0x14f] sm:$0xff]
      %v2948 = vld [vmem:[%s2700 + $0x167] sm:$0xff]
      %v2949 = vld [vmem:[%s2700 + $0x16f] sm:$0xff]
      %v2950 = vld [vmem:[%s2700 + $0x187] sm:$0xff]
      %v2951 = vld [vmem:[%s2700 + $0x18f] sm:$0xff]
      %v2952 = vld [vmem:[%s2700 + $0x1a7] sm:$0xff]
      %v2953 = vld [vmem:[%s2700 + $0x1af] sm:$0xff]
      %v2954 = vld [vmem:[%s2700 + $0x1c7] sm:$0xff]
      %v2955 = vld [vmem:[%s2700 + $0x1cf] sm:$0xff]
      %v2956 = vld [vmem:[%s2700 + $0x1e7] sm:$0xff]
      %v2957 = vld [vmem:[%s2700 + $0x1ef] sm:$0xff]
      %2958 = vst [vmem:[#allocation5 + $0x18] sm:$0xff] %v2926
      %2959 = vst [vmem:[#allocation5 + $0x60] sm:$0xff] %v2927
      %2960 = vst [vmem:[#allocation5 + $0xa8] sm:$0xff] %v2928
      %2961 = vst [vmem:[#allocation5 + $0xf0] sm:$0xff] %v2929
      %2962 = vst [vmem:[#allocation5 + $0x138] sm:$0xff] %v2930
      %2963 = vst [vmem:[#allocation5 + $0x180] sm:$0xff] %v2931
      %2964 = vst [vmem:[#allocation5 + $0x1c8] sm:$0xff] %v2932
      %2965 = vst [vmem:[#allocation5 + $0x210] sm:$0xff] %v2933
      %2966 = vst [vmem:[#allocation5 + $0x258] sm:$0xff] %v2934
      %2967 = vst [vmem:[#allocation5 + $0x2a0] sm:$0xff] %v2935
      %2968 = vst [vmem:[#allocation5 + $0x2e8] sm:$0xff] %v2936
      %2969 = vst [vmem:[#allocation5 + $0x330] sm:$0xff] %v2937
      %2970 = vst [vmem:[#allocation5 + $0x378] sm:$0xff] %v2938
      %2971 = vst [vmem:[#allocation5 + $0x3c0] sm:$0xff] %v2939
      %2972 = vst [vmem:[#allocation5 + $0x408] sm:$0xff] %v2940
      %2973 = vst [vmem:[#allocation5 + $0x450] sm:$0xff] %v2941
      %2974 = vst [vmem:[#allocation5 + $0x498] sm:$0xff] %v2942
      %2975 = vst [vmem:[#allocation5 + $0x4e0] sm:$0xff] %v2943
      %2976 = vst [vmem:[#allocation5 + $0x528] sm:$0xff] %v2944
      %2977 = vst [vmem:[#allocation5 + $0x570] sm:$0xff] %v2945
      %2978 = vst [vmem:[#allocation5 + $0x5b8] sm:$0xff] %v2946
      %2979 = vst [vmem:[#allocation5 + $0x600] sm:$0xff] %v2947
      %2980 = vst [vmem:[#allocation5 + $0x648] sm:$0xff] %v2948
      %2981 = vst [vmem:[#allocation5 + $0x690] sm:$0xff] %v2949
      %2982 = vst [vmem:[#allocation5 + $0x6d8] sm:$0xff] %v2950
      %2983 = vst [vmem:[#allocation5 + $0x720] sm:$0xff] %v2951
      %2984 = vst [vmem:[#allocation5 + $0x768] sm:$0xff] %v2952
      %2985 = vst [vmem:[#allocation5 + $0x7b0] sm:$0xff] %v2953
      %2986 = vst [vmem:[#allocation5 + $0x7f8] sm:$0xff] %v2954
      %2987 = vst [vmem:[#allocation5 + $0x840] sm:$0xff] %v2955
      %2988 = vst [vmem:[#allocation5 + $0x888] sm:$0xff] %v2956
      %2989 = vst [vmem:[#allocation5 + $0x8d0] sm:$0xff] %v2957
      %v2990 = vld [vmem:[%s2700 + $0x8] sm:$0xff]
      %v2991 = vld [vmem:[%s2700 + $0x10] sm:$0xff]
      %v2992 = vld [vmem:[%s2700 + $0x28] sm:$0xff]
      %v2993 = vld [vmem:[%s2700 + $0x30] sm:$0xff]
      %v2994 = vld [vmem:[%s2700 + $0x48] sm:$0xff]
      %v2995 = vld [vmem:[%s2700 + $0x50] sm:$0xff]
      %v2996 = vld [vmem:[%s2700 + $0x68] sm:$0xff]
      %v2997 = vld [vmem:[%s2700 + $0x70] sm:$0xff]
      %v2998 = vld [vmem:[%s2700 + $0x88] sm:$0xff]
      %v2999 = vld [vmem:[%s2700 + $0x90] sm:$0xff]
      %v3000 = vld [vmem:[%s2700 + $0xa8] sm:$0xff]
      %v3001 = vld [vmem:[%s2700 + $0xb0] sm:$0xff]
      %v3002 = vld [vmem:[%s2700 + $0xc8] sm:$0xff]
      %v3003 = vld [vmem:[%s2700 + $0xd0] sm:$0xff]
      %v3004 = vld [vmem:[%s2700 + $0xe8] sm:$0xff]
      %v3005 = vld [vmem:[%s2700 + $0xf0] sm:$0xff]
      %v3006 = vld [vmem:[%s2700 + $0x108] sm:$0xff]
      %v3007 = vld [vmem:[%s2700 + $0x110] sm:$0xff]
      %v3008 = vld [vmem:[%s2700 + $0x128] sm:$0xff]
      %v3009 = vld [vmem:[%s2700 + $0x130] sm:$0xff]
      %v3010 = vld [vmem:[%s2700 + $0x148] sm:$0xff]
      %v3011 = vld [vmem:[%s2700 + $0x150] sm:$0xff]
      %v3012 = vld [vmem:[%s2700 + $0x168] sm:$0xff]
      %v3013 = vld [vmem:[%s2700 + $0x170] sm:$0xff]
      %v3014 = vld [vmem:[%s2700 + $0x188] sm:$0xff]
      %v3015 = vld [vmem:[%s2700 + $0x190] sm:$0xff]
      %v3016 = vld [vmem:[%s2700 + $0x1a8] sm:$0xff]
      %v3017 = vld [vmem:[%s2700 + $0x1b0] sm:$0xff]
      %v3018 = vld [vmem:[%s2700 + $0x1c8] sm:$0xff]
      %v3019 = vld [vmem:[%s2700 + $0x1d0] sm:$0xff]
      %v3020 = vld [vmem:[%s2700 + $0x1e8] sm:$0xff]
      %v3021 = vld [vmem:[%s2700 + $0x1f0] sm:$0xff]
      %3022 = vst [vmem:[#allocation5 + $0x20] sm:$0xff] %v2990
      %3023 = vst [vmem:[#allocation5 + $0x68] sm:$0xff] %v2991
      %3024 = vst [vmem:[#allocation5 + $0xb0] sm:$0xff] %v2992
      %3025 = vst [vmem:[#allocation5 + $0xf8] sm:$0xff] %v2993
      %3026 = vst [vmem:[#allocation5 + $0x140] sm:$0xff] %v2994
      %3027 = vst [vmem:[#allocation5 + $0x188] sm:$0xff] %v2995
      %3028 = vst [vmem:[#allocation5 + $0x1d0] sm:$0xff] %v2996
      %3029 = vst [vmem:[#allocation5 + $0x218] sm:$0xff] %v2997
      %3030 = vst [vmem:[#allocation5 + $0x260] sm:$0xff] %v2998
      %3031 = vst [vmem:[#allocation5 + $0x2a8] sm:$0xff] %v2999
      %3032 = vst [vmem:[#allocation5 + $0x2f0] sm:$0xff] %v3000
      %3033 = vst [vmem:[#allocation5 + $0x338] sm:$0xff] %v3001
      %3034 = vst [vmem:[#allocation5 + $0x380] sm:$0xff] %v3002
      %3035 = vst [vmem:[#allocation5 + $0x3c8] sm:$0xff] %v3003
      %3036 = vst [vmem:[#allocation5 + $0x410] sm:$0xff] %v3004
      %3037 = vst [vmem:[#allocation5 + $0x458] sm:$0xff] %v3005
      %3038 = vst [vmem:[#allocation5 + $0x4a0] sm:$0xff] %v3006
      %3039 = vst [vmem:[#allocation5 + $0x4e8] sm:$0xff] %v3007
      %3040 = vst [vmem:[#allocation5 + $0x530] sm:$0xff] %v3008
      %3041 = vst [vmem:[#allocation5 + $0x578] sm:$0xff] %v3009
      %3042 = vst [vmem:[#allocation5 + $0x5c0] sm:$0xff] %v3010
      %3043 = vst [vmem:[#allocation5 + $0x608] sm:$0xff] %v3011
      %3044 = vst [vmem:[#allocation5 + $0x650] sm:$0xff] %v3012
      %3045 = vst [vmem:[#allocation5 + $0x698] sm:$0xff] %v3013
      %3046 = vst [vmem:[#allocation5 + $0x6e0] sm:$0xff] %v3014
      %3047 = vst [vmem:[#allocation5 + $0x728] sm:$0xff] %v3015
      %3048 = vst [vmem:[#allocation5 + $0x770] sm:$0xff] %v3016
      %3049 = vst [vmem:[#allocation5 + $0x7b8] sm:$0xff] %v3017
      %3050 = vst [vmem:[#allocation5 + $0x800] sm:$0xff] %v3018
      %3051 = vst [vmem:[#allocation5 + $0x848] sm:$0xff] %v3019
      %3052 = vst [vmem:[#allocation5 + $0x890] sm:$0xff] %v3020
      %3053 = vst [vmem:[#allocation5 + $0x8d8] sm:$0xff] %v3021
      %v3054 = vld [vmem:[%s2700 + $0x9] sm:$0xff]
      %v3055 = vld [vmem:[%s2700 + $0x11] sm:$0xff]
      %v3056 = vld [vmem:[%s2700 + $0x29] sm:$0xff]
      %v3057 = vld [vmem:[%s2700 + $0x31] sm:$0xff]
      %v3058 = vld [vmem:[%s2700 + $0x49] sm:$0xff]
      %v3059 = vld [vmem:[%s2700 + $0x51] sm:$0xff]
      %v3060 = vld [vmem:[%s2700 + $0x69] sm:$0xff]
      %v3061 = vld [vmem:[%s2700 + $0x71] sm:$0xff]
      %v3062 = vld [vmem:[%s2700 + $0x89] sm:$0xff]
      %v3063 = vld [vmem:[%s2700 + $0x91] sm:$0xff]
      %v3064 = vld [vmem:[%s2700 + $0xa9] sm:$0xff]
      %v3065 = vld [vmem:[%s2700 + $0xb1] sm:$0xff]
      %v3066 = vld [vmem:[%s2700 + $0xc9] sm:$0xff]
      %v3067 = vld [vmem:[%s2700 + $0xd1] sm:$0xff]
      %v3068 = vld [vmem:[%s2700 + $0xe9] sm:$0xff]
      %v3069 = vld [vmem:[%s2700 + $0xf1] sm:$0xff]
      %v3070 = vld [vmem:[%s2700 + $0x109] sm:$0xff]
      %v3071 = vld [vmem:[%s2700 + $0x111] sm:$0xff]
      %v3072 = vld [vmem:[%s2700 + $0x129] sm:$0xff]
      %v3073 = vld [vmem:[%s2700 + $0x131] sm:$0xff]
      %v3074 = vld [vmem:[%s2700 + $0x149] sm:$0xff]
      %v3075 = vld [vmem:[%s2700 + $0x151] sm:$0xff]
      %v3076 = vld [vmem:[%s2700 + $0x169] sm:$0xff]
      %v3077 = vld [vmem:[%s2700 + $0x171] sm:$0xff]
      %v3078 = vld [vmem:[%s2700 + $0x189] sm:$0xff]
      %v3079 = vld [vmem:[%s2700 + $0x191] sm:$0xff]
      %v3080 = vld [vmem:[%s2700 + $0x1a9] sm:$0xff]
      %v3081 = vld [vmem:[%s2700 + $0x1b1] sm:$0xff]
      %v3082 = vld [vmem:[%s2700 + $0x1c9] sm:$0xff]
      %v3083 = vld [vmem:[%s2700 + $0x1d1] sm:$0xff]
      %v3084 = vld [vmem:[%s2700 + $0x1e9] sm:$0xff]
      %v3085 = vld [vmem:[%s2700 + $0x1f1] sm:$0xff]
      %3086 = vst [vmem:[#allocation5 + $0x28] sm:$0xff] %v3054
      %3087 = vst [vmem:[#allocation5 + $0x70] sm:$0xff] %v3055
      %3088 = vst [vmem:[#allocation5 + $0xb8] sm:$0xff] %v3056
      %3089 = vst [vmem:[#allocation5 + $0x100] sm:$0xff] %v3057
      %3090 = vst [vmem:[#allocation5 + $0x148] sm:$0xff] %v3058
      %3091 = vst [vmem:[#allocation5 + $0x190] sm:$0xff] %v3059
      %3092 = vst [vmem:[#allocation5 + $0x1d8] sm:$0xff] %v3060
      %3093 = vst [vmem:[#allocation5 + $0x220] sm:$0xff] %v3061
      %3094 = vst [vmem:[#allocation5 + $0x268] sm:$0xff] %v3062
      %3095 = vst [vmem:[#allocation5 + $0x2b0] sm:$0xff] %v3063
      %3096 = vst [vmem:[#allocation5 + $0x2f8] sm:$0xff] %v3064
      %3097 = vst [vmem:[#allocation5 + $0x340] sm:$0xff] %v3065
      %3098 = vst [vmem:[#allocation5 + $0x388] sm:$0xff] %v3066
      %3099 = vst [vmem:[#allocation5 + $0x3d0] sm:$0xff] %v3067
      %3100 = vst [vmem:[#allocation5 + $0x418] sm:$0xff] %v3068
      %3101 = vst [vmem:[#allocation5 + $0x460] sm:$0xff] %v3069
      %3102 = vst [vmem:[#allocation5 + $0x4a8] sm:$0xff] %v3070
      %3103 = vst [vmem:[#allocation5 + $0x4f0] sm:$0xff] %v3071
      %3104 = vst [vmem:[#allocation5 + $0x538] sm:$0xff] %v3072
      %3105 = vst [vmem:[#allocation5 + $0x580] sm:$0xff] %v3073
      %3106 = vst [vmem:[#allocation5 + $0x5c8] sm:$0xff] %v3074
      %3107 = vst [vmem:[#allocation5 + $0x610] sm:$0xff] %v3075
      %3108 = vst [vmem:[#allocation5 + $0x658] sm:$0xff] %v3076
      %3109 = vst [vmem:[#allocation5 + $0x6a0] sm:$0xff] %v3077
      %3110 = vst [vmem:[#allocation5 + $0x6e8] sm:$0xff] %v3078
      %3111 = vst [vmem:[#allocation5 + $0x730] sm:$0xff] %v3079
      %3112 = vst [vmem:[#allocation5 + $0x778] sm:$0xff] %v3080
      %3113 = vst [vmem:[#allocation5 + $0x7c0] sm:$0xff] %v3081
      %3114 = vst [vmem:[#allocation5 + $0x808] sm:$0xff] %v3082
      %3115 = vst [vmem:[#allocation5 + $0x850] sm:$0xff] %v3083
      %3116 = vst [vmem:[#allocation5 + $0x898] sm:$0xff] %v3084
      %3117 = vst [vmem:[#allocation5 + $0x8e0] sm:$0xff] %v3085
      %s3118 = scalar_lea.vmem [#allocation3], 64
      %v3119 = vld [vmem:[%s3118 + $0x7] sm:$0xff]
      %v3120 = vld [vmem:[%s3118 + $0xf] sm:$0xff]
      %v3121 = vld [vmem:[%s3118 + $0x27] sm:$0xff]
      %v3122 = vld [vmem:[%s3118 + $0x2f] sm:$0xff]
      %v3123 = vld [vmem:[%s3118 + $0x47] sm:$0xff]
      %v3124 = vld [vmem:[%s3118 + $0x4f] sm:$0xff]
      %v3125 = vld [vmem:[%s3118 + $0x67] sm:$0xff]
      %v3126 = vld [vmem:[%s3118 + $0x6f] sm:$0xff]
      %v3127 = vld [vmem:[%s3118 + $0x87] sm:$0xff]
      %v3128 = vld [vmem:[%s3118 + $0x8f] sm:$0xff]
      %v3129 = vld [vmem:[%s3118 + $0xa7] sm:$0xff]
      %v3130 = vld [vmem:[%s3118 + $0xaf] sm:$0xff]
      %v3131 = vld [vmem:[%s3118 + $0xc7] sm:$0xff]
      %v3132 = vld [vmem:[%s3118 + $0xcf] sm:$0xff]
      %v3133 = vld [vmem:[%s3118 + $0xe7] sm:$0xff]
      %v3134 = vld [vmem:[%s3118 + $0xef] sm:$0xff]
      %v3135 = vld [vmem:[%s3118 + $0x107] sm:$0xff]
      %v3136 = vld [vmem:[%s3118 + $0x10f] sm:$0xff]
      %v3137 = vld [vmem:[%s3118 + $0x127] sm:$0xff]
      %v3138 = vld [vmem:[%s3118 + $0x12f] sm:$0xff]
      %v3139 = vld [vmem:[%s3118 + $0x147] sm:$0xff]
      %v3140 = vld [vmem:[%s3118 + $0x14f] sm:$0xff]
      %v3141 = vld [vmem:[%s3118 + $0x167] sm:$0xff]
      %v3142 = vld [vmem:[%s3118 + $0x16f] sm:$0xff]
      %v3143 = vld [vmem:[%s3118 + $0x187] sm:$0xff]
      %v3144 = vld [vmem:[%s3118 + $0x18f] sm:$0xff]
      %v3145 = vld [vmem:[%s3118 + $0x1a7] sm:$0xff]
      %v3146 = vld [vmem:[%s3118 + $0x1af] sm:$0xff]
      %v3147 = vld [vmem:[%s3118 + $0x1c7] sm:$0xff]
      %v3148 = vld [vmem:[%s3118 + $0x1cf] sm:$0xff]
      %v3149 = vld [vmem:[%s3118 + $0x1e7] sm:$0xff]
      %v3150 = vld [vmem:[%s3118 + $0x1ef] sm:$0xff]
      %3151 = vst [vmem:[#allocation5 + $0x30] sm:$0xff] %v3119
      %3152 = vst [vmem:[#allocation5 + $0x78] sm:$0xff] %v3120
      %3153 = vst [vmem:[#allocation5 + $0xc0] sm:$0xff] %v3121
      %3154 = vst [vmem:[#allocation5 + $0x108] sm:$0xff] %v3122
      %3155 = vst [vmem:[#allocation5 + $0x150] sm:$0xff] %v3123
      %3156 = vst [vmem:[#allocation5 + $0x198] sm:$0xff] %v3124
      %3157 = vst [vmem:[#allocation5 + $0x1e0] sm:$0xff] %v3125
      %3158 = vst [vmem:[#allocation5 + $0x228] sm:$0xff] %v3126
      %3159 = vst [vmem:[#allocation5 + $0x270] sm:$0xff] %v3127
      %3160 = vst [vmem:[#allocation5 + $0x2b8] sm:$0xff] %v3128
      %3161 = vst [vmem:[#allocation5 + $0x300] sm:$0xff] %v3129
      %3162 = vst [vmem:[#allocation5 + $0x348] sm:$0xff] %v3130
      %3163 = vst [vmem:[#allocation5 + $0x390] sm:$0xff] %v3131
      %3164 = vst [vmem:[#allocation5 + $0x3d8] sm:$0xff] %v3132
      %3165 = vst [vmem:[#allocation5 + $0x420] sm:$0xff] %v3133
      %3166 = vst [vmem:[#allocation5 + $0x468] sm:$0xff] %v3134
      %3167 = vst [vmem:[#allocation5 + $0x4b0] sm:$0xff] %v3135
      %3168 = vst [vmem:[#allocation5 + $0x4f8] sm:$0xff] %v3136
      %3169 = vst [vmem:[#allocation5 + $0x540] sm:$0xff] %v3137
      %3170 = vst [vmem:[#allocation5 + $0x588] sm:$0xff] %v3138
      %3171 = vst [vmem:[#allocation5 + $0x5d0] sm:$0xff] %v3139
      %3172 = vst [vmem:[#allocation5 + $0x618] sm:$0xff] %v3140
      %3173 = vst [vmem:[#allocation5 + $0x660] sm:$0xff] %v3141
      %3174 = vst [vmem:[#allocation5 + $0x6a8] sm:$0xff] %v3142
      %3175 = vst [vmem:[#allocation5 + $0x6f0] sm:$0xff] %v3143
      %3176 = vst [vmem:[#allocation5 + $0x738] sm:$0xff] %v3144
      %3177 = vst [vmem:[#allocation5 + $0x780] sm:$0xff] %v3145
      %3178 = vst [vmem:[#allocation5 + $0x7c8] sm:$0xff] %v3146
      %3179 = vst [vmem:[#allocation5 + $0x810] sm:$0xff] %v3147
      %3180 = vst [vmem:[#allocation5 + $0x858] sm:$0xff] %v3148
      %3181 = vst [vmem:[#allocation5 + $0x8a0] sm:$0xff] %v3149
      %3182 = vst [vmem:[#allocation5 + $0x8e8] sm:$0xff] %v3150
      %v3183 = vld [vmem:[%s3118 + $0x8] sm:$0xff]
      %v3184 = vld [vmem:[%s3118 + $0x10] sm:$0xff]
      %v3185 = vld [vmem:[%s3118 + $0x28] sm:$0xff]
      %v3186 = vld [vmem:[%s3118 + $0x30] sm:$0xff]
      %v3187 = vld [vmem:[%s3118 + $0x48] sm:$0xff]
      %v3188 = vld [vmem:[%s3118 + $0x50] sm:$0xff]
      %v3189 = vld [vmem:[%s3118 + $0x68] sm:$0xff]
      %v3190 = vld [vmem:[%s3118 + $0x70] sm:$0xff]
      %v3191 = vld [vmem:[%s3118 + $0x88] sm:$0xff]
      %v3192 = vld [vmem:[%s3118 + $0x90] sm:$0xff]
      %v3193 = vld [vmem:[%s3118 + $0xa8] sm:$0xff]
      %v3194 = vld [vmem:[%s3118 + $0xb0] sm:$0xff]
      %v3195 = vld [vmem:[%s3118 + $0xc8] sm:$0xff]
      %v3196 = vld [vmem:[%s3118 + $0xd0] sm:$0xff]
      %v3197 = vld [vmem:[%s3118 + $0xe8] sm:$0xff]
      %v3198 = vld [vmem:[%s3118 + $0xf0] sm:$0xff]
      %v3199 = vld [vmem:[%s3118 + $0x108] sm:$0xff]
      %v3200 = vld [vmem:[%s3118 + $0x110] sm:$0xff]
      %v3201 = vld [vmem:[%s3118 + $0x128] sm:$0xff]
      %v3202 = vld [vmem:[%s3118 + $0x130] sm:$0xff]
      %v3203 = vld [vmem:[%s3118 + $0x148] sm:$0xff]
      %v3204 = vld [vmem:[%s3118 + $0x150] sm:$0xff]
      %v3205 = vld [vmem:[%s3118 + $0x168] sm:$0xff]
      %v3206 = vld [vmem:[%s3118 + $0x170] sm:$0xff]
      %v3207 = vld [vmem:[%s3118 + $0x188] sm:$0xff]
      %v3208 = vld [vmem:[%s3118 + $0x190] sm:$0xff]
      %v3209 = vld [vmem:[%s3118 + $0x1a8] sm:$0xff]
      %v3210 = vld [vmem:[%s3118 + $0x1b0] sm:$0xff]
      %v3211 = vld [vmem:[%s3118 + $0x1c8] sm:$0xff]
      %v3212 = vld [vmem:[%s3118 + $0x1d0] sm:$0xff]
      %v3213 = vld [vmem:[%s3118 + $0x1e8] sm:$0xff]
      %v3214 = vld [vmem:[%s3118 + $0x1f0] sm:$0xff]
      %3215 = vst [vmem:[#allocation5 + $0x38] sm:$0xff] %v3183
      %3216 = vst [vmem:[#allocation5 + $0x80] sm:$0xff] %v3184
      %3217 = vst [vmem:[#allocation5 + $0xc8] sm:$0xff] %v3185
      %3218 = vst [vmem:[#allocation5 + $0x110] sm:$0xff] %v3186
      %3219 = vst [vmem:[#allocation5 + $0x158] sm:$0xff] %v3187
      %3220 = vst [vmem:[#allocation5 + $0x1a0] sm:$0xff] %v3188
      %3221 = vst [vmem:[#allocation5 + $0x1e8] sm:$0xff] %v3189
      %3222 = vst [vmem:[#allocation5 + $0x230] sm:$0xff] %v3190
      %3223 = vst [vmem:[#allocation5 + $0x278] sm:$0xff] %v3191
      %3224 = vst [vmem:[#allocation5 + $0x2c0] sm:$0xff] %v3192
      %3225 = vst [vmem:[#allocation5 + $0x308] sm:$0xff] %v3193
      %3226 = vst [vmem:[#allocation5 + $0x350] sm:$0xff] %v3194
      %3227 = vst [vmem:[#allocation5 + $0x398] sm:$0xff] %v3195
      %3228 = vst [vmem:[#allocation5 + $0x3e0] sm:$0xff] %v3196
      %3229 = vst [vmem:[#allocation5 + $0x428] sm:$0xff] %v3197
      %3230 = vst [vmem:[#allocation5 + $0x470] sm:$0xff] %v3198
      %3231 = vst [vmem:[#allocation5 + $0x4b8] sm:$0xff] %v3199
      %3232 = vst [vmem:[#allocation5 + $0x500] sm:$0xff] %v3200
      %3233 = vst [vmem:[#allocation5 + $0x548] sm:$0xff] %v3201
      %3234 = vst [vmem:[#allocation5 + $0x590] sm:$0xff] %v3202
      %3235 = vst [vmem:[#allocation5 + $0x5d8] sm:$0xff] %v3203
      %3236 = vst [vmem:[#allocation5 + $0x620] sm:$0xff] %v3204
      %3237 = vst [vmem:[#allocation5 + $0x668] sm:$0xff] %v3205
      %3238 = vst [vmem:[#allocation5 + $0x6b0] sm:$0xff] %v3206
      %3239 = vst [vmem:[#allocation5 + $0x6f8] sm:$0xff] %v3207
      %3240 = vst [vmem:[#allocation5 + $0x740] sm:$0xff] %v3208
      %3241 = vst [vmem:[#allocation5 + $0x788] sm:$0xff] %v3209
      %3242 = vst [vmem:[#allocation5 + $0x7d0] sm:$0xff] %v3210
      %3243 = vst [vmem:[#allocation5 + $0x818] sm:$0xff] %v3211
      %3244 = vst [vmem:[#allocation5 + $0x860] sm:$0xff] %v3212
      %3245 = vst [vmem:[#allocation5 + $0x8a8] sm:$0xff] %v3213
      %3246 = vst [vmem:[#allocation5 + $0x8f0] sm:$0xff] %v3214
      %v3247 = vld [vmem:[%s3118 + $0x9] sm:$0xff]
      %v3248 = vld [vmem:[%s3118 + $0x11] sm:$0xff]
      %v3249 = vld [vmem:[%s3118 + $0x29] sm:$0xff]
      %v3250 = vld [vmem:[%s3118 + $0x31] sm:$0xff]
      %v3251 = vld [vmem:[%s3118 + $0x49] sm:$0xff]
      %v3252 = vld [vmem:[%s3118 + $0x51] sm:$0xff]
      %v3253 = vld [vmem:[%s3118 + $0x69] sm:$0xff]
      %v3254 = vld [vmem:[%s3118 + $0x71] sm:$0xff]
      %v3255 = vld [vmem:[%s3118 + $0x89] sm:$0xff]
      %v3256 = vld [vmem:[%s3118 + $0x91] sm:$0xff]
      %v3257 = vld [vmem:[%s3118 + $0xa9] sm:$0xff]
      %v3258 = vld [vmem:[%s3118 + $0xb1] sm:$0xff]
      %v3259 = vld [vmem:[%s3118 + $0xc9] sm:$0xff]
      %v3260 = vld [vmem:[%s3118 + $0xd1] sm:$0xff]
      %v3261 = vld [vmem:[%s3118 + $0xe9] sm:$0xff]
      %v3262 = vld [vmem:[%s3118 + $0xf1] sm:$0xff]
      %v3263 = vld [vmem:[%s3118 + $0x109] sm:$0xff]
      %v3264 = vld [vmem:[%s3118 + $0x111] sm:$0xff]
      %v3265 = vld [vmem:[%s3118 + $0x129] sm:$0xff]
      %v3266 = vld [vmem:[%s3118 + $0x131] sm:$0xff]
      %v3267 = vld [vmem:[%s3118 + $0x149] sm:$0xff]
      %v3268 = vld [vmem:[%s3118 + $0x151] sm:$0xff]
      %v3269 = vld [vmem:[%s3118 + $0x169] sm:$0xff]
      %v3270 = vld [vmem:[%s3118 + $0x171] sm:$0xff]
      %v3271 = vld [vmem:[%s3118 + $0x189] sm:$0xff]
      %v3272 = vld [vmem:[%s3118 + $0x191] sm:$0xff]
      %v3273 = vld [vmem:[%s3118 + $0x1a9] sm:$0xff]
      %v3274 = vld [vmem:[%s3118 + $0x1b1] sm:$0xff]
      %v3275 = vld [vmem:[%s3118 + $0x1c9] sm:$0xff]
      %v3276 = vld [vmem:[%s3118 + $0x1d1] sm:$0xff]
      %v3277 = vld [vmem:[%s3118 + $0x1e9] sm:$0xff]
      %v3278 = vld [vmem:[%s3118 + $0x1f1] sm:$0xff]
      %3279 = vst [vmem:[#allocation5 + $0x40] sm:$0xff] %v3247
      %3280 = vst [vmem:[#allocation5 + $0x88] sm:$0xff] %v3248
      %3281 = vst [vmem:[#allocation5 + $0xd0] sm:$0xff] %v3249
      %3282 = vst [vmem:[#allocation5 + $0x118] sm:$0xff] %v3250
      %3283 = vst [vmem:[#allocation5 + $0x160] sm:$0xff] %v3251
      %3284 = vst [vmem:[#allocation5 + $0x1a8] sm:$0xff] %v3252
      %3285 = vst [vmem:[#allocation5 + $0x1f0] sm:$0xff] %v3253
      %3286 = vst [vmem:[#allocation5 + $0x238] sm:$0xff] %v3254
      %3287 = vst [vmem:[#allocation5 + $0x280] sm:$0xff] %v3255
      %3288 = vst [vmem:[#allocation5 + $0x2c8] sm:$0xff] %v3256
      %3289 = vst [vmem:[#allocation5 + $0x310] sm:$0xff] %v3257
      %3290 = vst [vmem:[#allocation5 + $0x358] sm:$0xff] %v3258
      %3291 = vst [vmem:[#allocation5 + $0x3a0] sm:$0xff] %v3259
      %3292 = vst [vmem:[#allocation5 + $0x3e8] sm:$0xff] %v3260
      %3293 = vst [vmem:[#allocation5 + $0x430] sm:$0xff] %v3261
      %3294 = vst [vmem:[#allocation5 + $0x478] sm:$0xff] %v3262
      %3295 = vst [vmem:[#allocation5 + $0x4c0] sm:$0xff] %v3263
      %3296 = vst [vmem:[#allocation5 + $0x508] sm:$0xff] %v3264
      %3297 = vst [vmem:[#allocation5 + $0x550] sm:$0xff] %v3265
      %3298 = vst [vmem:[#allocation5 + $0x598] sm:$0xff] %v3266
      %3299 = vst [vmem:[#allocation5 + $0x5e0] sm:$0xff] %v3267
      %3300 = vst [vmem:[#allocation5 + $0x628] sm:$0xff] %v3268
      %3301 = vst [vmem:[#allocation5 + $0x670] sm:$0xff] %v3269
      %3302 = vst [vmem:[#allocation5 + $0x6b8] sm:$0xff] %v3270
      %3303 = vst [vmem:[#allocation5 + $0x700] sm:$0xff] %v3271
      %3304 = vst [vmem:[#allocation5 + $0x748] sm:$0xff] %v3272
      %3305 = vst [vmem:[#allocation5 + $0x790] sm:$0xff] %v3273
      %3306 = vst [vmem:[#allocation5 + $0x7d8] sm:$0xff] %v3274
      %3307 = vst [vmem:[#allocation5 + $0x820] sm:$0xff] %v3275
      %3308 = vst [vmem:[#allocation5 + $0x868] sm:$0xff] %v3276
      %3309 = vst [vmem:[#allocation5 + $0x8b0] sm:$0xff] %v3277
      %3310 = vst [vmem:[#allocation5 + $0x8f8] sm:$0xff] %v3278
      %v3311 = vld [vmem:[#allocation5] sm:$0xff]
      %v3312 = vld [vmem:[#allocation5 + $0x8] sm:$0xff]
      %v3313 = vld [vmem:[#allocation5 + $0x10] sm:$0xff]
      %v3314 = vld [vmem:[#allocation5 + $0x18] sm:$0xff]
      %v3315 = vld [vmem:[#allocation5 + $0x20] sm:$0xff]
      %v3316 = vld [vmem:[#allocation5 + $0x28] sm:$0xff]
      %v3317 = vld [vmem:[#allocation5 + $0x30] sm:$0xff]
      %v3318 = vld [vmem:[#allocation5 + $0x38] sm:$0xff]
      %v3319 = vld [vmem:[#allocation5 + $0x40] sm:$0xff]
      %v3320 = vld [vmem:[#allocation5 + $0x48] sm:$0xff]
      %v3321 = vld [vmem:[#allocation5 + $0x50] sm:$0xff]
      %v3322 = vld [vmem:[#allocation5 + $0x58] sm:$0xff]
      %v3323 = vld [vmem:[#allocation5 + $0x60] sm:$0xff]
      %v3324 = vld [vmem:[#allocation5 + $0x68] sm:$0xff]
      %v3325 = vld [vmem:[#allocation5 + $0x70] sm:$0xff]
      %v3326 = vld [vmem:[#allocation5 + $0x78] sm:$0xff]
      %v3327 = vld [vmem:[#allocation5 + $0x80] sm:$0xff]
      %v3328 = vld [vmem:[#allocation5 + $0x88] sm:$0xff]
      %v3329 = vld [vmem:[#allocation5 + $0x90] sm:$0xff]
      %v3330 = vld [vmem:[#allocation5 + $0x98] sm:$0xff]
      %v3331 = vld [vmem:[#allocation5 + $0xa0] sm:$0xff]
      %v3332 = vld [vmem:[#allocation5 + $0xa8] sm:$0xff]
      %v3333 = vld [vmem:[#allocation5 + $0xb0] sm:$0xff]
      %v3334 = vld [vmem:[#allocation5 + $0xb8] sm:$0xff]
      %v3335 = vld [vmem:[#allocation5 + $0xc0] sm:$0xff]
      %v3336 = vld [vmem:[#allocation5 + $0xc8] sm:$0xff]
      %v3337 = vld [vmem:[#allocation5 + $0xd0] sm:$0xff]
      %v3338 = vld [vmem:[#allocation5 + $0xd8] sm:$0xff]
      %v3339 = vld [vmem:[#allocation5 + $0xe0] sm:$0xff]
      %v3340 = vld [vmem:[#allocation5 + $0xe8] sm:$0xff]
      %v3341 = vld [vmem:[#allocation5 + $0xf0] sm:$0xff]
      %v3342 = vld [vmem:[#allocation5 + $0xf8] sm:$0xff]
      %v3343 = vld [vmem:[#allocation5 + $0x100] sm:$0xff]
      %v3344 = vld [vmem:[#allocation5 + $0x108] sm:$0xff]
      %v3345 = vld [vmem:[#allocation5 + $0x110] sm:$0xff]
      %v3346 = vld [vmem:[#allocation5 + $0x118] sm:$0xff]
      %v3347 = vld [vmem:[#allocation5 + $0x120] sm:$0xff]
      %v3348 = vld [vmem:[#allocation5 + $0x128] sm:$0xff]
      %v3349 = vld [vmem:[#allocation5 + $0x130] sm:$0xff]
      %v3350 = vld [vmem:[#allocation5 + $0x138] sm:$0xff]
      %v3351 = vld [vmem:[#allocation5 + $0x140] sm:$0xff]
      %v3352 = vld [vmem:[#allocation5 + $0x148] sm:$0xff]
      %v3353 = vld [vmem:[#allocation5 + $0x150] sm:$0xff]
      %v3354 = vld [vmem:[#allocation5 + $0x158] sm:$0xff]
      %v3355 = vld [vmem:[#allocation5 + $0x160] sm:$0xff]
      %v3356 = vld [vmem:[#allocation5 + $0x168] sm:$0xff]
      %v3357 = vld [vmem:[#allocation5 + $0x170] sm:$0xff]
      %v3358 = vld [vmem:[#allocation5 + $0x178] sm:$0xff]
      %v3359 = vld [vmem:[#allocation5 + $0x180] sm:$0xff]
      %v3360 = vld [vmem:[#allocation5 + $0x188] sm:$0xff]
      %v3361 = vld [vmem:[#allocation5 + $0x190] sm:$0xff]
      %v3362 = vld [vmem:[#allocation5 + $0x198] sm:$0xff]
      %v3363 = vld [vmem:[#allocation5 + $0x1a0] sm:$0xff]
      %v3364 = vld [vmem:[#allocation5 + $0x1a8] sm:$0xff]
      %v3365 = vld [vmem:[#allocation5 + $0x1b0] sm:$0xff]
      %v3366 = vld [vmem:[#allocation5 + $0x1b8] sm:$0xff]
      %v3367 = vld [vmem:[#allocation5 + $0x1c0] sm:$0xff]
      %v3368 = vld [vmem:[#allocation5 + $0x1c8] sm:$0xff]
      %v3369 = vld [vmem:[#allocation5 + $0x1d0] sm:$0xff]
      %v3370 = vld [vmem:[#allocation5 + $0x1d8] sm:$0xff]
      %v3371 = vld [vmem:[#allocation5 + $0x1e0] sm:$0xff]
      %v3372 = vld [vmem:[#allocation5 + $0x1e8] sm:$0xff]
      %v3373 = vld [vmem:[#allocation5 + $0x1f0] sm:$0xff]
      %v3374 = vld [vmem:[#allocation5 + $0x1f8] sm:$0xff]
      %v3375 = vld [vmem:[#allocation5 + $0x200] sm:$0xff]
      %v3376 = vld [vmem:[#allocation5 + $0x208] sm:$0xff]
      %v3377 = vld [vmem:[#allocation5 + $0x210] sm:$0xff]
      %v3378 = vld [vmem:[#allocation5 + $0x218] sm:$0xff]
      %v3379 = vld [vmem:[#allocation5 + $0x220] sm:$0xff]
      %v3380 = vld [vmem:[#allocation5 + $0x228] sm:$0xff]
      %v3381 = vld [vmem:[#allocation5 + $0x230] sm:$0xff]
      %v3382 = vld [vmem:[#allocation5 + $0x238] sm:$0xff]
      %v3383 = vld [vmem:[#allocation5 + $0x240] sm:$0xff]
      %v3384 = vld [vmem:[#allocation5 + $0x248] sm:$0xff]
      %v3385 = vld [vmem:[#allocation5 + $0x250] sm:$0xff]
      %v3386 = vld [vmem:[#allocation5 + $0x258] sm:$0xff]
      %v3387 = vld [vmem:[#allocation5 + $0x260] sm:$0xff]
      %v3388 = vld [vmem:[#allocation5 + $0x268] sm:$0xff]
      %v3389 = vld [vmem:[#allocation5 + $0x270] sm:$0xff]
      %v3390 = vld [vmem:[#allocation5 + $0x278] sm:$0xff]
      %v3391 = vld [vmem:[#allocation5 + $0x280] sm:$0xff]
      %v3392 = vld [vmem:[#allocation5 + $0x288] sm:$0xff]
      %v3393 = vld [vmem:[#allocation5 + $0x290] sm:$0xff]
      %v3394 = vld [vmem:[#allocation5 + $0x298] sm:$0xff]
      %v3395 = vld [vmem:[#allocation5 + $0x2a0] sm:$0xff]
      %v3396 = vld [vmem:[#allocation5 + $0x2a8] sm:$0xff]
      %v3397 = vld [vmem:[#allocation5 + $0x2b0] sm:$0xff]
      %v3398 = vld [vmem:[#allocation5 + $0x2b8] sm:$0xff]
      %v3399 = vld [vmem:[#allocation5 + $0x2c0] sm:$0xff]
      %v3400 = vld [vmem:[#allocation5 + $0x2c8] sm:$0xff]
      %v3401 = vld [vmem:[#allocation5 + $0x2d0] sm:$0xff]
      %v3402 = vld [vmem:[#allocation5 + $0x2d8] sm:$0xff]
      %v3403 = vld [vmem:[#allocation5 + $0x2e0] sm:$0xff]
      %v3404 = vld [vmem:[#allocation5 + $0x2e8] sm:$0xff]
      %v3405 = vld [vmem:[#allocation5 + $0x2f0] sm:$0xff]
      %v3406 = vld [vmem:[#allocation5 + $0x2f8] sm:$0xff]
      %v3407 = vld [vmem:[#allocation5 + $0x300] sm:$0xff]
      %v3408 = vld [vmem:[#allocation5 + $0x308] sm:$0xff]
      %v3409 = vld [vmem:[#allocation5 + $0x310] sm:$0xff]
      %v3410 = vld [vmem:[#allocation5 + $0x318] sm:$0xff]
      %v3411 = vld [vmem:[#allocation5 + $0x320] sm:$0xff]
      %v3412 = vld [vmem:[#allocation5 + $0x328] sm:$0xff]
      %v3413 = vld [vmem:[#allocation5 + $0x330] sm:$0xff]
      %v3414 = vld [vmem:[#allocation5 + $0x338] sm:$0xff]
      %v3415 = vld [vmem:[#allocation5 + $0x340] sm:$0xff]
      %v3416 = vld [vmem:[#allocation5 + $0x348] sm:$0xff]
      %v3417 = vld [vmem:[#allocation5 + $0x350] sm:$0xff]
      %v3418 = vld [vmem:[#allocation5 + $0x358] sm:$0xff]
      %v3419 = vld [vmem:[#allocation5 + $0x360] sm:$0xff]
      %v3420 = vld [vmem:[#allocation5 + $0x368] sm:$0xff]
      %v3421 = vld [vmem:[#allocation5 + $0x370] sm:$0xff]
      %v3422 = vld [vmem:[#allocation5 + $0x378] sm:$0xff]
      %v3423 = vld [vmem:[#allocation5 + $0x380] sm:$0xff]
      %v3424 = vld [vmem:[#allocation5 + $0x388] sm:$0xff]
      %v3425 = vld [vmem:[#allocation5 + $0x390] sm:$0xff]
      %v3426 = vld [vmem:[#allocation5 + $0x398] sm:$0xff]
      %v3427 = vld [vmem:[#allocation5 + $0x3a0] sm:$0xff]
      %v3428 = vld [vmem:[#allocation5 + $0x3a8] sm:$0xff]
      %v3429 = vld [vmem:[#allocation5 + $0x3b0] sm:$0xff]
      %v3430 = vld [vmem:[#allocation5 + $0x3b8] sm:$0xff]
      %v3431 = vld [vmem:[#allocation5 + $0x3c0] sm:$0xff]
      %v3432 = vld [vmem:[#allocation5 + $0x3c8] sm:$0xff]
      %v3433 = vld [vmem:[#allocation5 + $0x3d0] sm:$0xff]
      %v3434 = vld [vmem:[#allocation5 + $0x3d8] sm:$0xff]
      %v3435 = vld [vmem:[#allocation5 + $0x3e0] sm:$0xff]
      %v3436 = vld [vmem:[#allocation5 + $0x3e8] sm:$0xff]
      %v3437 = vld [vmem:[#allocation5 + $0x3f0] sm:$0xff]
      %v3438 = vld [vmem:[#allocation5 + $0x3f8] sm:$0xff]
      %v3439 = vld [vmem:[#allocation5 + $0x400] sm:$0xff]
      %v3440 = vld [vmem:[#allocation5 + $0x408] sm:$0xff]
      %v3441 = vld [vmem:[#allocation5 + $0x410] sm:$0xff]
      %v3442 = vld [vmem:[#allocation5 + $0x418] sm:$0xff]
      %v3443 = vld [vmem:[#allocation5 + $0x420] sm:$0xff]
      %v3444 = vld [vmem:[#allocation5 + $0x428] sm:$0xff]
      %v3445 = vld [vmem:[#allocation5 + $0x430] sm:$0xff]
      %v3446 = vld [vmem:[#allocation5 + $0x438] sm:$0xff]
      %v3447 = vld [vmem:[#allocation5 + $0x440] sm:$0xff]
      %v3448 = vld [vmem:[#allocation5 + $0x448] sm:$0xff]
      %v3449 = vld [vmem:[#allocation5 + $0x450] sm:$0xff]
      %v3450 = vld [vmem:[#allocation5 + $0x458] sm:$0xff]
      %v3451 = vld [vmem:[#allocation5 + $0x460] sm:$0xff]
      %v3452 = vld [vmem:[#allocation5 + $0x468] sm:$0xff]
      %v3453 = vld [vmem:[#allocation5 + $0x470] sm:$0xff]
      %v3454 = vld [vmem:[#allocation5 + $0x478] sm:$0xff]
      %v3455 = vld [vmem:[#allocation5 + $0x480] sm:$0xff]
      %v3456 = vld [vmem:[#allocation5 + $0x488] sm:$0xff]
      %v3457 = vld [vmem:[#allocation5 + $0x490] sm:$0xff]
      %v3458 = vld [vmem:[#allocation5 + $0x498] sm:$0xff]
      %v3459 = vld [vmem:[#allocation5 + $0x4a0] sm:$0xff]
      %v3460 = vld [vmem:[#allocation5 + $0x4a8] sm:$0xff]
      %v3461 = vld [vmem:[#allocation5 + $0x4b0] sm:$0xff]
      %v3462 = vld [vmem:[#allocation5 + $0x4b8] sm:$0xff]
      %v3463 = vld [vmem:[#allocation5 + $0x4c0] sm:$0xff]
      %v3464 = vld [vmem:[#allocation5 + $0x4c8] sm:$0xff]
      %v3465 = vld [vmem:[#allocation5 + $0x4d0] sm:$0xff]
      %v3466 = vld [vmem:[#allocation5 + $0x4d8] sm:$0xff]
      %v3467 = vld [vmem:[#allocation5 + $0x4e0] sm:$0xff]
      %v3468 = vld [vmem:[#allocation5 + $0x4e8] sm:$0xff]
      %v3469 = vld [vmem:[#allocation5 + $0x4f0] sm:$0xff]
      %v3470 = vld [vmem:[#allocation5 + $0x4f8] sm:$0xff]
      %v3471 = vld [vmem:[#allocation5 + $0x500] sm:$0xff]
      %v3472 = vld [vmem:[#allocation5 + $0x508] sm:$0xff]
      %v3473 = vld [vmem:[#allocation5 + $0x510] sm:$0xff]
      %v3474 = vld [vmem:[#allocation5 + $0x518] sm:$0xff]
      %v3475 = vld [vmem:[#allocation5 + $0x520] sm:$0xff]
      %v3476 = vld [vmem:[#allocation5 + $0x528] sm:$0xff]
      %v3477 = vld [vmem:[#allocation5 + $0x530] sm:$0xff]
      %v3478 = vld [vmem:[#allocation5 + $0x538] sm:$0xff]
      %v3479 = vld [vmem:[#allocation5 + $0x540] sm:$0xff]
      %v3480 = vld [vmem:[#allocation5 + $0x548] sm:$0xff]
      %v3481 = vld [vmem:[#allocation5 + $0x550] sm:$0xff]
      %v3482 = vld [vmem:[#allocation5 + $0x558] sm:$0xff]
      %v3483 = vld [vmem:[#allocation5 + $0x560] sm:$0xff]
      %v3484 = vld [vmem:[#allocation5 + $0x568] sm:$0xff]
      %v3485 = vld [vmem:[#allocation5 + $0x570] sm:$0xff]
      %v3486 = vld [vmem:[#allocation5 + $0x578] sm:$0xff]
      %v3487 = vld [vmem:[#allocation5 + $0x580] sm:$0xff]
      %v3488 = vld [vmem:[#allocation5 + $0x588] sm:$0xff]
      %v3489 = vld [vmem:[#allocation5 + $0x590] sm:$0xff]
      %v3490 = vld [vmem:[#allocation5 + $0x598] sm:$0xff]
      %v3491 = vld [vmem:[#allocation5 + $0x5a0] sm:$0xff]
      %v3492 = vld [vmem:[#allocation5 + $0x5a8] sm:$0xff]
      %v3493 = vld [vmem:[#allocation5 + $0x5b0] sm:$0xff]
      %v3494 = vld [vmem:[#allocation5 + $0x5b8] sm:$0xff]
      %v3495 = vld [vmem:[#allocation5 + $0x5c0] sm:$0xff]
      %v3496 = vld [vmem:[#allocation5 + $0x5c8] sm:$0xff]
      %v3497 = vld [vmem:[#allocation5 + $0x5d0] sm:$0xff]
      %v3498 = vld [vmem:[#allocation5 + $0x5d8] sm:$0xff]
      %v3499 = vld [vmem:[#allocation5 + $0x5e0] sm:$0xff]
      %v3500 = vld [vmem:[#allocation5 + $0x5e8] sm:$0xff]
      %v3501 = vld [vmem:[#allocation5 + $0x5f0] sm:$0xff]
      %v3502 = vld [vmem:[#allocation5 + $0x5f8] sm:$0xff]
      %v3503 = vld [vmem:[#allocation5 + $0x600] sm:$0xff]
      %v3504 = vld [vmem:[#allocation5 + $0x608] sm:$0xff]
      %v3505 = vld [vmem:[#allocation5 + $0x610] sm:$0xff]
      %v3506 = vld [vmem:[#allocation5 + $0x618] sm:$0xff]
      %v3507 = vld [vmem:[#allocation5 + $0x620] sm:$0xff]
      %v3508 = vld [vmem:[#allocation5 + $0x628] sm:$0xff]
      %v3509 = vld [vmem:[#allocation5 + $0x630] sm:$0xff]
      %v3510 = vld [vmem:[#allocation5 + $0x638] sm:$0xff]
      %v3511 = vld [vmem:[#allocation5 + $0x640] sm:$0xff]
      %v3512 = vld [vmem:[#allocation5 + $0x648] sm:$0xff]
      %v3513 = vld [vmem:[#allocation5 + $0x650] sm:$0xff]
      %v3514 = vld [vmem:[#allocation5 + $0x658] sm:$0xff]
      %v3515 = vld [vmem:[#allocation5 + $0x660] sm:$0xff]
      %v3516 = vld [vmem:[#allocation5 + $0x668] sm:$0xff]
      %v3517 = vld [vmem:[#allocation5 + $0x670] sm:$0xff]
      %v3518 = vld [vmem:[#allocation5 + $0x678] sm:$0xff]
      %v3519 = vld [vmem:[#allocation5 + $0x680] sm:$0xff]
      %v3520 = vld [vmem:[#allocation5 + $0x688] sm:$0xff]
      %v3521 = vld [vmem:[#allocation5 + $0x690] sm:$0xff]
      %v3522 = vld [vmem:[#allocation5 + $0x698] sm:$0xff]
      %v3523 = vld [vmem:[#allocation5 + $0x6a0] sm:$0xff]
      %v3524 = vld [vmem:[#allocation5 + $0x6a8] sm:$0xff]
      %v3525 = vld [vmem:[#allocation5 + $0x6b0] sm:$0xff]
      %v3526 = vld [vmem:[#allocation5 + $0x6b8] sm:$0xff]
      %v3527 = vld [vmem:[#allocation5 + $0x6c0] sm:$0xff]
      %v3528 = vld [vmem:[#allocation5 + $0x6c8] sm:$0xff]
      %v3529 = vld [vmem:[#allocation5 + $0x6d0] sm:$0xff]
      %v3530 = vld [vmem:[#allocation5 + $0x6d8] sm:$0xff]
      %v3531 = vld [vmem:[#allocation5 + $0x6e0] sm:$0xff]
      %v3532 = vld [vmem:[#allocation5 + $0x6e8] sm:$0xff]
      %v3533 = vld [vmem:[#allocation5 + $0x6f0] sm:$0xff]
      %v3534 = vld [vmem:[#allocation5 + $0x6f8] sm:$0xff]
      %v3535 = vld [vmem:[#allocation5 + $0x700] sm:$0xff]
      %v3536 = vld [vmem:[#allocation5 + $0x708] sm:$0xff]
      %v3537 = vld [vmem:[#allocation5 + $0x710] sm:$0xff]
      %v3538 = vld [vmem:[#allocation5 + $0x718] sm:$0xff]
      %v3539 = vld [vmem:[#allocation5 + $0x720] sm:$0xff]
      %v3540 = vld [vmem:[#allocation5 + $0x728] sm:$0xff]
      %v3541 = vld [vmem:[#allocation5 + $0x730] sm:$0xff]
      %v3542 = vld [vmem:[#allocation5 + $0x738] sm:$0xff]
      %v3543 = vld [vmem:[#allocation5 + $0x740] sm:$0xff]
      %v3544 = vld [vmem:[#allocation5 + $0x748] sm:$0xff]
      %v3545 = vld [vmem:[#allocation5 + $0x750] sm:$0xff]
      %v3546 = vld [vmem:[#allocation5 + $0x758] sm:$0xff]
      %v3547 = vld [vmem:[#allocation5 + $0x760] sm:$0xff]
      %v3548 = vld [vmem:[#allocation5 + $0x768] sm:$0xff]
      %v3549 = vld [vmem:[#allocation5 + $0x770] sm:$0xff]
      %v3550 = vld [vmem:[#allocation5 + $0x778] sm:$0xff]
      %v3551 = vld [vmem:[#allocation5 + $0x780] sm:$0xff]
      %v3552 = vld [vmem:[#allocation5 + $0x788] sm:$0xff]
      %v3553 = vld [vmem:[#allocation5 + $0x790] sm:$0xff]
      %v3554 = vld [vmem:[#allocation5 + $0x798] sm:$0xff]
      %v3555 = vld [vmem:[#allocation5 + $0x7a0] sm:$0xff]
      %v3556 = vld [vmem:[#allocation5 + $0x7a8] sm:$0xff]
      %v3557 = vld [vmem:[#allocation5 + $0x7b0] sm:$0xff]
      %v3558 = vld [vmem:[#allocation5 + $0x7b8] sm:$0xff]
      %v3559 = vld [vmem:[#allocation5 + $0x7c0] sm:$0xff]
      %v3560 = vld [vmem:[#allocation5 + $0x7c8] sm:$0xff]
      %v3561 = vld [vmem:[#allocation5 + $0x7d0] sm:$0xff]
      %v3562 = vld [vmem:[#allocation5 + $0x7d8] sm:$0xff]
      %v3563 = vld [vmem:[#allocation5 + $0x7e0] sm:$0xff]
      %v3564 = vld [vmem:[#allocation5 + $0x7e8] sm:$0xff]
      %v3565 = vld [vmem:[#allocation5 + $0x7f0] sm:$0xff]
      %v3566 = vld [vmem:[#allocation5 + $0x7f8] sm:$0xff]
      %v3567 = vld [vmem:[#allocation5 + $0x800] sm:$0xff]
      %v3568 = vld [vmem:[#allocation5 + $0x808] sm:$0xff]
      %v3569 = vld [vmem:[#allocation5 + $0x810] sm:$0xff]
      %v3570 = vld [vmem:[#allocation5 + $0x818] sm:$0xff]
      %v3571 = vld [vmem:[#allocation5 + $0x820] sm:$0xff]
      %v3572 = vld [vmem:[#allocation5 + $0x828] sm:$0xff]
      %v3573 = vld [vmem:[#allocation5 + $0x830] sm:$0xff]
      %v3574 = vld [vmem:[#allocation5 + $0x838] sm:$0xff]
      %v3575 = vld [vmem:[#allocation5 + $0x840] sm:$0xff]
      %v3576 = vld [vmem:[#allocation5 + $0x848] sm:$0xff]
      %v3577 = vld [vmem:[#allocation5 + $0x850] sm:$0xff]
      %v3578 = vld [vmem:[#allocation5 + $0x858] sm:$0xff]
      %v3579 = vld [vmem:[#allocation5 + $0x860] sm:$0xff]
      %v3580 = vld [vmem:[#allocation5 + $0x868] sm:$0xff]
      %v3581 = vld [vmem:[#allocation5 + $0x870] sm:$0xff]
      %v3582 = vld [vmem:[#allocation5 + $0x878] sm:$0xff]
      %v3583 = vld [vmem:[#allocation5 + $0x880] sm:$0xff]
      %v3584 = vld [vmem:[#allocation5 + $0x888] sm:$0xff]
      %v3585 = vld [vmem:[#allocation5 + $0x890] sm:$0xff]
      %v3586 = vld [vmem:[#allocation5 + $0x898] sm:$0xff]
      %v3587 = vld [vmem:[#allocation5 + $0x8a0] sm:$0xff]
      %v3588 = vld [vmem:[#allocation5 + $0x8a8] sm:$0xff]
      %v3589 = vld [vmem:[#allocation5 + $0x8b0] sm:$0xff]
      %v3590 = vld [vmem:[#allocation5 + $0x8b8] sm:$0xff]
      %v3591 = vld [vmem:[#allocation5 + $0x8c0] sm:$0xff]
      %v3592 = vld [vmem:[#allocation5 + $0x8c8] sm:$0xff]
      %v3593 = vld [vmem:[#allocation5 + $0x8d0] sm:$0xff]
      %v3594 = vld [vmem:[#allocation5 + $0x8d8] sm:$0xff]
      %v3595 = vld [vmem:[#allocation5 + $0x8e0] sm:$0xff]
      %v3596 = vld [vmem:[#allocation5 + $0x8e8] sm:$0xff]
      %v3597 = vld [vmem:[#allocation5 + $0x8f0] sm:$0xff]
      %v3598 = vld [vmem:[#allocation5 + $0x8f8] sm:$0xff]
      %v3599 = vld [vmem:[%s3] sm:$0xff]
      %v3600 = vld [vmem:[%s3 + $0x8] sm:$0xff]
      %v3601 = vld [vmem:[%s3 + $0x10] sm:$0xff]
      %v3602 = vld [vmem:[%s3 + $0x18] sm:$0xff]
      %v3603 = vld [vmem:[%s3 + $0x20] sm:$0xff]
      %v3604 = vld [vmem:[%s3 + $0x28] sm:$0xff]
      %v3605 = vld [vmem:[%s3 + $0x30] sm:$0xff]
      %v3606 = vld [vmem:[%s3 + $0x38] sm:$0xff]
      %v3607 = vld [vmem:[%s3 + $0x40] sm:$0xff]
      %v3608 = vld [vmem:[%s3 + $0x48] sm:$0xff]
      %v3609 = vld [vmem:[%s3 + $0x50] sm:$0xff]
      %v3610 = vld [vmem:[%s3 + $0x58] sm:$0xff]
      %v3611 = vld [vmem:[%s3 + $0x60] sm:$0xff]
      %v3612 = vld [vmem:[%s3 + $0x68] sm:$0xff]
      %v3613 = vld [vmem:[%s3 + $0x70] sm:$0xff]
      %v3614 = vld [vmem:[%s3 + $0x78] sm:$0xff]
      %v3615 = vld [vmem:[%s3 + $0x80] sm:$0xff]
      %v3616 = vld [vmem:[%s3 + $0x88] sm:$0xff]
      %v3617 = vld [vmem:[%s3 + $0x90] sm:$0xff]
      %v3618 = vld [vmem:[%s3 + $0x98] sm:$0xff]
      %v3619 = vld [vmem:[%s3 + $0xa0] sm:$0xff]
      %v3620 = vld [vmem:[%s3 + $0xa8] sm:$0xff]
      %v3621 = vld [vmem:[%s3 + $0xb0] sm:$0xff]
      %v3622 = vld [vmem:[%s3 + $0xb8] sm:$0xff]
      %v3623 = vld [vmem:[%s3 + $0xc0] sm:$0xff]
      %v3624 = vld [vmem:[%s3 + $0xc8] sm:$0xff]
      %v3625 = vld [vmem:[%s3 + $0xd0] sm:$0xff]
      %v3626 = vld [vmem:[%s3 + $0xd8] sm:$0xff]
      %v3627 = vld [vmem:[%s3 + $0xe0] sm:$0xff]
      %v3628 = vld [vmem:[%s3 + $0xe8] sm:$0xff]
      %v3629 = vld [vmem:[%s3 + $0xf0] sm:$0xff]
      %v3630 = vld [vmem:[%s3 + $0xf8] sm:$0xff]
      %v3631 = vld [vmem:[%s3 + $0x100] sm:$0xff]
      %v3632 = vld [vmem:[%s3 + $0x108] sm:$0xff]
      %v3633 = vld [vmem:[%s3 + $0x110] sm:$0xff]
      %v3634 = vld [vmem:[%s3 + $0x118] sm:$0xff]
      %v3635 = vld [vmem:[%s3 + $0x120] sm:$0xff]
      %v3636 = vld [vmem:[%s3 + $0x128] sm:$0xff]
      %v3637 = vld [vmem:[%s3 + $0x130] sm:$0xff]
      %v3638 = vld [vmem:[%s3 + $0x138] sm:$0xff]
      %v3639 = vld [vmem:[%s3 + $0x140] sm:$0xff]
      %v3640 = vld [vmem:[%s3 + $0x148] sm:$0xff]
      %v3641 = vld [vmem:[%s3 + $0x150] sm:$0xff]
      %v3642 = vld [vmem:[%s3 + $0x158] sm:$0xff]
      %v3643 = vld [vmem:[%s3 + $0x160] sm:$0xff]
      %v3644 = vld [vmem:[%s3 + $0x168] sm:$0xff]
      %v3645 = vld [vmem:[%s3 + $0x170] sm:$0xff]
      %v3646 = vld [vmem:[%s3 + $0x178] sm:$0xff]
      %v3647 = vld [vmem:[%s3 + $0x180] sm:$0xff]
      %v3648 = vld [vmem:[%s3 + $0x188] sm:$0xff]
      %v3649 = vld [vmem:[%s3 + $0x190] sm:$0xff]
      %v3650 = vld [vmem:[%s3 + $0x198] sm:$0xff]
      %v3651 = vld [vmem:[%s3 + $0x1a0] sm:$0xff]
      %v3652 = vld [vmem:[%s3 + $0x1a8] sm:$0xff]
      %v3653 = vld [vmem:[%s3 + $0x1b0] sm:$0xff]
      %v3654 = vld [vmem:[%s3 + $0x1b8] sm:$0xff]
      %v3655 = vld [vmem:[%s3 + $0x1c0] sm:$0xff]
      %v3656 = vld [vmem:[%s3 + $0x1c8] sm:$0xff]
      %v3657 = vld [vmem:[%s3 + $0x1d0] sm:$0xff]
      %v3658 = vld [vmem:[%s3 + $0x1d8] sm:$0xff]
      %v3659 = vld [vmem:[%s3 + $0x1e0] sm:$0xff]
      %v3660 = vld [vmem:[%s3 + $0x1e8] sm:$0xff]
      %v3661 = vld [vmem:[%s3 + $0x1f0] sm:$0xff]
      %v3662 = vld [vmem:[%s3 + $0x1f8] sm:$0xff]
      %v3663 = vld [vmem:[%s3 + $0x200] sm:$0xff]
      %v3664 = vld [vmem:[%s3 + $0x208] sm:$0xff]
      %v3665 = vld [vmem:[%s3 + $0x210] sm:$0xff]
      %v3666 = vld [vmem:[%s3 + $0x218] sm:$0xff]
      %v3667 = vld [vmem:[%s3 + $0x220] sm:$0xff]
      %v3668 = vld [vmem:[%s3 + $0x228] sm:$0xff]
      %v3669 = vld [vmem:[%s3 + $0x230] sm:$0xff]
      %v3670 = vld [vmem:[%s3 + $0x238] sm:$0xff]
      %v3671 = vld [vmem:[%s3 + $0x240] sm:$0xff]
      %v3672 = vld [vmem:[%s3 + $0x248] sm:$0xff]
      %v3673 = vld [vmem:[%s3 + $0x250] sm:$0xff]
      %v3674 = vld [vmem:[%s3 + $0x258] sm:$0xff]
      %v3675 = vld [vmem:[%s3 + $0x260] sm:$0xff]
      %v3676 = vld [vmem:[%s3 + $0x268] sm:$0xff]
      %v3677 = vld [vmem:[%s3 + $0x270] sm:$0xff]
      %v3678 = vld [vmem:[%s3 + $0x278] sm:$0xff]
      %v3679 = vld [vmem:[%s3 + $0x280] sm:$0xff]
      %v3680 = vld [vmem:[%s3 + $0x288] sm:$0xff]
      %v3681 = vld [vmem:[%s3 + $0x290] sm:$0xff]
      %v3682 = vld [vmem:[%s3 + $0x298] sm:$0xff]
      %v3683 = vld [vmem:[%s3 + $0x2a0] sm:$0xff]
      %v3684 = vld [vmem:[%s3 + $0x2a8] sm:$0xff]
      %v3685 = vld [vmem:[%s3 + $0x2b0] sm:$0xff]
      %v3686 = vld [vmem:[%s3 + $0x2b8] sm:$0xff]
      %v3687 = vld [vmem:[%s3 + $0x2c0] sm:$0xff]
      %v3688 = vld [vmem:[%s3 + $0x2c8] sm:$0xff]
      %v3689 = vld [vmem:[%s3 + $0x2d0] sm:$0xff]
      %v3690 = vld [vmem:[%s3 + $0x2d8] sm:$0xff]
      %v3691 = vld [vmem:[%s3 + $0x2e0] sm:$0xff]
      %v3692 = vld [vmem:[%s3 + $0x2e8] sm:$0xff]
      %v3693 = vld [vmem:[%s3 + $0x2f0] sm:$0xff]
      %v3694 = vld [vmem:[%s3 + $0x2f8] sm:$0xff]
      %v3695 = vld [vmem:[%s3 + $0x300] sm:$0xff]
      %v3696 = vld [vmem:[%s3 + $0x308] sm:$0xff]
      %v3697 = vld [vmem:[%s3 + $0x310] sm:$0xff]
      %v3698 = vld [vmem:[%s3 + $0x318] sm:$0xff]
      %v3699 = vld [vmem:[%s3 + $0x320] sm:$0xff]
      %v3700 = vld [vmem:[%s3 + $0x328] sm:$0xff]
      %v3701 = vld [vmem:[%s3 + $0x330] sm:$0xff]
      %v3702 = vld [vmem:[%s3 + $0x338] sm:$0xff]
      %v3703 = vld [vmem:[%s3 + $0x340] sm:$0xff]
      %v3704 = vld [vmem:[%s3 + $0x348] sm:$0xff]
      %v3705 = vld [vmem:[%s3 + $0x350] sm:$0xff]
      %v3706 = vld [vmem:[%s3 + $0x358] sm:$0xff]
      %v3707 = vld [vmem:[%s3 + $0x360] sm:$0xff]
      %v3708 = vld [vmem:[%s3 + $0x368] sm:$0xff]
      %v3709 = vld [vmem:[%s3 + $0x370] sm:$0xff]
      %v3710 = vld [vmem:[%s3 + $0x378] sm:$0xff]
      %v3711 = vld [vmem:[%s3 + $0x380] sm:$0xff]
      %v3712 = vld [vmem:[%s3 + $0x388] sm:$0xff]
      %v3713 = vld [vmem:[%s3 + $0x390] sm:$0xff]
      %v3714 = vld [vmem:[%s3 + $0x398] sm:$0xff]
      %v3715 = vld [vmem:[%s3 + $0x3a0] sm:$0xff]
      %v3716 = vld [vmem:[%s3 + $0x3a8] sm:$0xff]
      %v3717 = vld [vmem:[%s3 + $0x3b0] sm:$0xff]
      %v3718 = vld [vmem:[%s3 + $0x3b8] sm:$0xff]
      %v3719 = vld [vmem:[%s3 + $0x3c0] sm:$0xff]
      %v3720 = vld [vmem:[%s3 + $0x3c8] sm:$0xff]
      %v3721 = vld [vmem:[%s3 + $0x3d0] sm:$0xff]
      %v3722 = vld [vmem:[%s3 + $0x3d8] sm:$0xff]
      %v3723 = vld [vmem:[%s3 + $0x3e0] sm:$0xff]
      %v3724 = vld [vmem:[%s3 + $0x3e8] sm:$0xff]
      %v3725 = vld [vmem:[%s3 + $0x3f0] sm:$0xff]
      %v3726 = vld [vmem:[%s3 + $0x3f8] sm:$0xff]
      %v3727 = vld [vmem:[%s3 + $0x400] sm:$0xff]
      %v3728 = vld [vmem:[%s3 + $0x408] sm:$0xff]
      %v3729 = vld [vmem:[%s3 + $0x410] sm:$0xff]
      %v3730 = vld [vmem:[%s3 + $0x418] sm:$0xff]
      %v3731 = vld [vmem:[%s3 + $0x420] sm:$0xff]
      %v3732 = vld [vmem:[%s3 + $0x428] sm:$0xff]
      %v3733 = vld [vmem:[%s3 + $0x430] sm:$0xff]
      %v3734 = vld [vmem:[%s3 + $0x438] sm:$0xff]
      %v3735 = vld [vmem:[%s3 + $0x440] sm:$0xff]
      %v3736 = vld [vmem:[%s3 + $0x448] sm:$0xff]
      %v3737 = vld [vmem:[%s3 + $0x450] sm:$0xff]
      %v3738 = vld [vmem:[%s3 + $0x458] sm:$0xff]
      %v3739 = vld [vmem:[%s3 + $0x460] sm:$0xff]
      %v3740 = vld [vmem:[%s3 + $0x468] sm:$0xff]
      %v3741 = vld [vmem:[%s3 + $0x470] sm:$0xff]
      %v3742 = vld [vmem:[%s3 + $0x478] sm:$0xff]
      %v3743 = vld [vmem:[%s4] sm:$0x1]
      %v3745 = vlaneseq
      %v3746 = vshrl.u32 %v3745, 7
      %v3747 = vsub.s32 0, %v3746
      %v3748 = vrot.slane %v3743, %v3747
      %3750 = vmatprep.subr.mxu0 0.0
      %3751 = vmatpush1.msra.mxu0 %v3599
      %3752 = vmatprep.subr.mxu0 0.0
      %3753 = vmatpush1.msra.mxu0 %v3600
      %3754 = vmatprep.subr.mxu0 0.0
      %3755 = vmatpush1.msra.mxu0 %v3601
      %3756 = vmatprep.subr.mxu0 0.0
      %3757 = vmatpush1.msra.mxu0 %v3602
      %3758 = vmatprep.subr.mxu0 0.0
      %3759 = vmatpush1.msra.mxu0 %v3603
      %3760 = vmatprep.subr.mxu0 0.0
      %3761 = vmatpush1.msra.mxu0 %v3604
      %3762 = vmatprep.subr.mxu0 0.0
      %3763 = vmatpush1.msra.mxu0 %v3605
      %3764 = vmatprep.subr.mxu0 0.0
      %3765 = vmatpush1.msra.mxu0 %v3606
      %3766 = vmatprep.subr.mxu0 0.0
      %3767 = vmatpush1.msra.mxu0 %v3607
      %3768 = vmatprep.subr.mxu0 0.0
      %3769 = vmatpush1.msra.mxu0 %v3608
      %3770 = vmatprep.subr.mxu0 0.0
      %3771 = vmatpush1.msra.mxu0 %v3609
      %3772 = vmatprep.subr.mxu0 0.0
      %3773 = vmatpush1.msra.mxu0 %v3610
      %3774 = vmatprep.subr.mxu0 0.0
      %3775 = vmatpush1.msra.mxu0 %v3611
      %3776 = vmatprep.subr.mxu0 0.0
      %3777 = vmatpush1.msra.mxu0 %v3612
      %3778 = vmatprep.subr.mxu0 0.0
      %3779 = vmatpush1.msra.mxu0 %v3613
      %3780 = vmatprep.subr.mxu0 0.0
      %3781 = vmatpush1.msra.mxu0 %v3614
      %3782 = vmatprep.subr.mxu0 0.0
      %3783 = vmatpush1.msra.mxu0 %v3615
      %3784 = vmatprep.subr.mxu0 0.0
      %3785 = vmatpush1.msra.mxu0 %v3616
      %3786 = vmatprep.subr.mxu0 0.0
      %3787 = vmatpush1.msra.mxu0 %v3617
      %3788 = vmatprep.subr.mxu0 0.0
      %3789 = vmatpush1.msra.mxu0 %v3618
      %3790 = vmatprep.subr.mxu0 0.0
      %3791 = vmatpush1.msra.mxu0 %v3619
      %3792 = vmatprep.subr.mxu0 0.0
      %3793 = vmatpush1.msra.mxu0 %v3620
      %3794 = vmatprep.subr.mxu0 0.0
      %3795 = vmatpush1.msra.mxu0 %v3621
      %3796 = vmatprep.subr.mxu0 0.0
      %3797 = vmatpush1.msra.mxu0 %v3622
      %3798 = vmatprep.subr.mxu0 0.0
      %3799 = vmatpush1.msra.mxu0 %v3623
      %3800 = vmatprep.subr.mxu0 0.0
      %3801 = vmatpush1.msra.mxu0 %v3624
      %3802 = vmatprep.subr.mxu0 0.0
      %3803 = vmatpush1.msra.mxu0 %v3625
      %3804 = vmatprep.subr.mxu0 0.0
      %3805 = vmatpush1.msra.mxu0 %v3626
      %3806 = vmatprep.subr.mxu0 0.0
      %3807 = vmatpush1.msra.mxu0 %v3627
      %3808 = vmatprep.subr.mxu0 0.0
      %3809 = vmatpush1.msra.mxu0 %v3628
      %3810 = vmatprep.subr.mxu0 0.0
      %3811 = vmatpush1.msra.mxu0 %v3629
      %3812 = vmatprep.subr.mxu0 0.0
      %3813 = vmatpush1.msra.mxu0 %v3630
      %3814 = vmatprep.mubr.f32.mxu0 %v3312
      %3815 = vmatmul.mubr.f32.gmra.mrb[0].mxu0 %v3311
      %v3816 = vpop.f32.mrb[0].mxu0
      %v3817 = vadd.f32 %v3748, %v3816
      %v3818 = vpop.f32.mrb[0].mxu0
      %3819 = vmatprep.mubr.f32.mxu0 %v3321
      %3820 = vmatmul.mubr.f32.gmra.mrb[0].mxu0 %v3320
      %v3821 = vpop.f32.mrb[0].mxu0
      %v3822 = vadd.f32 %v3748, %v3821
      %v3823 = vpop.f32.mrb[0].mxu0
      %3824 = vmatprep.mubr.f32.mxu0 %v3330
      %3825 = vmatmul.mubr.f32.gmra.mrb[0].mxu0 %v3329
      %v3826 = vpop.f32.mrb[0].mxu0
      %v3827 = vadd.f32 %v3748, %v3826
      %v3828 = vpop.f32.mrb[0].mxu0
      %3829 = vmatprep.mubr.f32.mxu0 %v3339
      %3830 = vmatmul.mubr.f32.gmra.mrb[0].mxu0 %v3338
      %v3831 = vpop.f32.mrb[0].mxu0
      %v3832 = vadd.f32 %v3748, %v3831
      %v3833 = vpop.f32.mrb[0].mxu0
      %3834 = vmatprep.mubr.f32.mxu0 %v3348
      %3835 = vmatmul.mubr.f32.gmra.mrb[0].mxu0 %v3347
      %v3836 = vpop.f32.mrb[0].mxu0
      %v3837 = vadd.f32 %v3748, %v3836
      %v3838 = vpop.f32.mrb[0].mxu0
      %3839 = vmatprep.mubr.f32.mxu0 %v3357
      %3840 = vmatmul.mubr.f32.gmra.mrb[0].mxu0 %v3356
      %v3841 = vpop.f32.mrb[0].mxu0
      %v3842 = vadd.f32 %v3748, %v3841
      %v3843 = vpop.f32.mrb[0].mxu0
      %3844 = vmatprep.mubr.f32.mxu0 %v3366
      %3845 = vmatmul.mubr.f32.gmra.mrb[0].mxu0 %v3365
      %v3846 = vpop.f32.mrb[0].mxu0
      %v3847 = vadd.f32 %v3748, %v3846
      %v3848 = vpop.f32.mrb[0].mxu0
      %3849 = vmatprep.mubr.f32.mxu0 %v3375
      %3850 = vmatmul.mubr.f32.gmra.mrb[0].mxu0 %v3374
      %v3851 = vpop.f32.mrb[0].mxu0
      %v3852 = vadd.f32 %v3748, %v3851
      %v3853 = vpop.f32.mrb[0].mxu0
      %3854 = vmatprep.mubr.f32.mxu0 %v3384
      %3855 = vmatmul.mubr.f32.gmra.mrb[0].mxu0 %v3383
      %v3856 = vpop.f32.mrb[0].mxu0
      %v3857 = vadd.f32 %v3748, %v3856
      %v3858 = vpop.f32.mrb[0].mxu0
      %3859 = vmatprep.mubr.f32.mxu0 %v3393
      %3860 = vmatmul.mubr.f32.gmra.mrb[0].mxu0 %v3392
      %v3861 = vpop.f32.mrb[0].mxu0
      %v3862 = vadd.f32 %v3748, %v3861
      %v3863 = vpop.f32.mrb[0].mxu0
      %3864 = vmatprep.mubr.f32.mxu0 %v3402
      %3865 = vmatmul.mubr.f32.gmra.mrb[0].mxu0 %v3401
      %v3866 = vpop.f32.mrb[0].mxu0
      %v3867 = vadd.f32 %v3748, %v3866
      %v3868 = vpop.f32.mrb[0].mxu0
      %3869 = vmatprep.mubr.f32.mxu0 %v3411
      %3870 = vmatmul.mubr.f32.gmra.mrb[0].mxu0 %v3410
      %v3871 = vpop.f32.mrb[0].mxu0
      %v3872 = vadd.f32 %v3748, %v3871
      %v3873 = vpop.f32.mrb[0].mxu0
      %3874 = vmatprep.mubr.f32.mxu0 %v3420
      %3875 = vmatmul.mubr.f32.gmra.mrb[0].mxu0 %v3419
      %v3876 = vpop.f32.mrb[0].mxu0
      %v3877 = vadd.f32 %v3748, %v3876
      %v3878 = vpop.f32.mrb[0].mxu0
      %3879 = vmatprep.mubr.f32.mxu0 %v3429
      %3880 = vmatmul.mubr.f32.gmra.mrb[0].mxu0 %v3428
      %v3881 = vpop.f32.mrb[0].mxu0
      %v3882 = vadd.f32 %v3748, %v3881
      %v3883 = vpop.f32.mrb[0].mxu0
      %3884 = vmatprep.mubr.f32.mxu0 %v3438
      %3885 = vmatmul.mubr.f32.gmra.mrb[0].mxu0 %v3437
      %v3886 = vpop.f32.mrb[0].mxu0
      %v3887 = vadd.f32 %v3748, %v3886
      %v3888 = vpop.f32.mrb[0].mxu0
      %3889 = vmatprep.mubr.f32.mxu0 %v3447
      %3890 = vmatmul.mubr.f32.gmra.mrb[0].mxu0 %v3446
      %v3891 = vpop.f32.mrb[0].mxu0
      %v3892 = vadd.f32 %v3748, %v3891
      %v3893 = vpop.f32.mrb[0].mxu0
      %3894 = vmatprep.mubr.f32.mxu0 %v3456
      %3895 = vmatmul.mubr.f32.gmra.mrb[0].mxu0 %v3455
      %v3896 = vpop.f32.mrb[0].mxu0
      %v3897 = vadd.f32 %v3748, %v3896
      %v3898 = vpop.f32.mrb[0].mxu0
      %3899 = vmatprep.mubr.f32.mxu0 %v3465
      %3900 = vmatmul.mubr.f32.gmra.mrb[0].mxu0 %v3464
      %v3901 = vpop.f32.mrb[0].mxu0
      %v3902 = vadd.f32 %v3748, %v3901
      %v3903 = vpop.f32.mrb[0].mxu0
      %3904 = vmatprep.mubr.f32.mxu0 %v3474
      %3905 = vmatmul.mubr.f32.gmra.mrb[0].mxu0 %v3473
      %v3906 = vpop.f32.mrb[0].mxu0
      %v3907 = vadd.f32 %v3748, %v3906
      %v3908 = vpop.f32.mrb[0].mxu0
      %3909 = vmatprep.mubr.f32.mxu0 %v3483
      %3910 = vmatmul.mubr.f32.gmra.mrb[0].mxu0 %v3482
      %v3911 = vpop.f32.mrb[0].mxu0
      %v3912 = vadd.f32 %v3748, %v3911
      %v3913 = vpop.f32.mrb[0].mxu0
      %3914 = vmatprep.mubr.f32.mxu0 %v3492
      %3915 = vmatmul.mubr.f32.gmra.mrb[0].mxu0 %v3491
      %v3916 = vpop.f32.mrb[0].mxu0
      %v3917 = vadd.f32 %v3748, %v3916
      %v3918 = vpop.f32.mrb[0].mxu0
      %3919 = vmatprep.mubr.f32.mxu0 %v3501
      %3920 = vmatmul.mubr.f32.gmra.mrb[0].mxu0 %v3500
      %v3921 = vpop.f32.mrb[0].mxu0
      %v3922 = vadd.f32 %v3748, %v3921
      %v3923 = vpop.f32.mrb[0].mxu0
      %3924 = vmatprep.mubr.f32.mxu0 %v3510
      %3925 = vmatmul.mubr.f32.gmra.mrb[0].mxu0 %v3509
      %v3926 = vpop.f32.mrb[0].mxu0
      %v3927 = vadd.f32 %v3748, %v3926
      %v3928 = vpop.f32.mrb[0].mxu0
      %3929 = vmatprep.mubr.f32.mxu0 %v3519
      %3930 = vmatmul.mubr.f32.gmra.mrb[0].mxu0 %v3518
      %v3931 = vpop.f32.mrb[0].mxu0
      %v3932 = vadd.f32 %v3748, %v3931
      %v3933 = vpop.f32.mrb[0].mxu0
      %3934 = vmatprep.mubr.f32.mxu0 %v3528
      %3935 = vmatmul.mubr.f32.gmra.mrb[0].mxu0 %v3527
      %v3936 = vpop.f32.mrb[0].mxu0
      %v3937 = vadd.f32 %v3748, %v3936
      %v3938 = vpop.f32.mrb[0].mxu0
      %3939 = vmatprep.mubr.f32.mxu0 %v3537
      %3940 = vmatmul.mubr.f32.gmra.mrb[0].mxu0 %v3536
      %v3941 = vpop.f32.mrb[0].mxu0
      %v3942 = vadd.f32 %v3748, %v3941
      %v3943 = vpop.f32.mrb[0].mxu0
      %3944 = vmatprep.mubr.f32.mxu0 %v3546
      %3945 = vmatmul.mubr.f32.gmra.mrb[0].mxu0 %v3545
      %v3946 = vpop.f32.mrb[0].mxu0
      %v3947 = vadd.f32 %v3748, %v3946
      %v3948 = vpop.f32.mrb[0].mxu0
      %3949 = vmatprep.mubr.f32.mxu0 %v3555
      %3950 = vmatmul.mubr.f32.gmra.mrb[0].mxu0 %v3554
      %v3951 = vpop.f32.mrb[0].mxu0
      %v3952 = vadd.f32 %v3748, %v3951
      %v3953 = vpop.f32.mrb[0].mxu0
      %3954 = vmatprep.mubr.f32.mxu0 %v3564
      %3955 = vmatmul.mubr.f32.gmra.mrb[0].mxu0 %v3563
      %v3956 = vpop.f32.mrb[0].mxu0
      %v3957 = vadd.f32 %v3748, %v3956
      %v3958 = vpop.f32.mrb[0].mxu0
      %3959 = vmatprep.mubr.f32.mxu0 %v3573
      %3960 = vmatmul.mubr.f32.gmra.mrb[0].mxu0 %v3572
      %v3961 = vpop.f32.mrb[0].mxu0
      %v3962 = vadd.f32 %v3748, %v3961
      %v3963 = vpop.f32.mrb[0].mxu0
      %3964 = vmatprep.mubr.f32.mxu0 %v3582
      %3965 = vmatmul.mubr.f32.gmra.mrb[0].mxu0 %v3581
      %v3966 = vpop.f32.mrb[0].mxu0
      %v3967 = vadd.f32 %v3748, %v3966
      %v3968 = vpop.f32.mrb[0].mxu0
      %3969 = vmatprep.mubr.f32.mxu0 %v3591
      %3970 = vmatmul.mubr.f32.gmra.mrb[0].mxu0 %v3590
      %v3971 = vpop.f32.mrb[0].mxu0
      %v3972 = vadd.f32 %v3748, %v3971
      %v3973 = vpop.f32.mrb[0].mxu0
      %3974 = vdwg.mxu0
      %3975 = vmatprep.subr.mxu0 0.0
      %3976 = vmatpush1.msra.mxu0 %v3631
      %3977 = vmatprep.subr.mxu0 0.0
      %3978 = vmatpush1.msra.mxu0 %v3632
      %3979 = vmatprep.subr.mxu0 0.0
      %3980 = vmatpush1.msra.mxu0 %v3633
      %3981 = vmatprep.subr.mxu0 0.0
      %3982 = vmatpush1.msra.mxu0 %v3634
      %3983 = vmatprep.subr.mxu0 0.0
      %3984 = vmatpush1.msra.mxu0 %v3635
      %3985 = vmatprep.subr.mxu0 0.0
      %3986 = vmatpush1.msra.mxu0 %v3636
      %3987 = vmatprep.subr.mxu0 0.0
      %3988 = vmatpush1.msra.mxu0 %v3637
      %3989 = vmatprep.subr.mxu0 0.0
      %3990 = vmatpush1.msra.mxu0 %v3638
      %3991 = vmatprep.subr.mxu0 0.0
      %3992 = vmatpush1.msra.mxu0 %v3639
      %3993 = vmatprep.subr.mxu0 0.0
      %3994 = vmatpush1.msra.mxu0 %v3640
      %3995 = vmatprep.subr.mxu0 0.0
      %3996 = vmatpush1.msra.mxu0 %v3641
      %3997 = vmatprep.subr.mxu0 0.0
      %3998 = vmatpush1.msra.mxu0 %v3642
      %3999 = vmatprep.subr.mxu0 0.0
      %4000 = vmatpush1.msra.mxu0 %v3643
      %4001 = vmatprep.subr.mxu0 0.0
      %4002 = vmatpush1.msra.mxu0 %v3644
      %4003 = vmatprep.subr.mxu0 0.0
      %4004 = vmatpush1.msra.mxu0 %v3645
      %4005 = vmatprep.subr.mxu0 0.0
      %4006 = vmatpush1.msra.mxu0 %v3646
      %4007 = vmatprep.subr.mxu0 0.0
      %4008 = vmatpush1.msra.mxu0 %v3647
      %4009 = vmatprep.subr.mxu0 0.0
      %4010 = vmatpush1.msra.mxu0 %v3648
      %4011 = vmatprep.subr.mxu0 0.0
      %4012 = vmatpush1.msra.mxu0 %v3649
      %4013 = vmatprep.subr.mxu0 0.0
      %4014 = vmatpush1.msra.mxu0 %v3650
      %4015 = vmatprep.subr.mxu0 0.0
      %4016 = vmatpush1.msra.mxu0 %v3651
      %4017 = vmatprep.subr.mxu0 0.0
      %4018 = vmatpush1.msra.mxu0 %v3652
      %4019 = vmatprep.subr.mxu0 0.0
      %4020 = vmatpush1.msra.mxu0 %v3653
      %4021 = vmatprep.subr.mxu0 0.0
      %4022 = vmatpush1.msra.mxu0 %v3654
      %4023 = vmatprep.subr.mxu0 0.0
      %4024 = vmatpush1.msra.mxu0 %v3655
      %4025 = vmatprep.subr.mxu0 0.0
      %4026 = vmatpush1.msra.mxu0 %v3656
      %4027 = vmatprep.subr.mxu0 0.0
      %4028 = vmatpush1.msra.mxu0 %v3657
      %4029 = vmatprep.subr.mxu0 0.0
      %4030 = vmatpush1.msra.mxu0 %v3658
      %4031 = vmatprep.subr.mxu0 0.0
      %4032 = vmatpush1.msra.mxu0 %v3659
      %4033 = vmatprep.subr.mxu0 0.0
      %4034 = vmatpush1.msra.mxu0 %v3660
      %4035 = vmatprep.subr.mxu0 0.0
      %4036 = vmatpush1.msra.mxu0 %v3661
      %4037 = vmatprep.subr.mxu0 0.0
      %4038 = vmatpush1.msra.mxu0 %v3662
      %4039 = vmatprep.mubr.f32.mxu0 %v3314
      %4040 = vmatmul.mubr.f32.gmra.mrb[0].mxu0 %v3313
      %v4041 = vpop.f32.mrb[0].mxu0
      %v4042 = vadd.f32 %v3817, %v4041
      %v4043 = vpop.f32.mrb[0].mxu0
      %4044 = vmatprep.mubr.f32.mxu0 %v3323
      %4045 = vmatmul.mubr.f32.gmra.mrb[0].mxu0 %v3322
      %v4046 = vpop.f32.mrb[0].mxu0
      %v4047 = vadd.f32 %v3822, %v4046
      %v4048 = vpop.f32.mrb[0].mxu0
      %4049 = vmatprep.mubr.f32.mxu0 %v3332
      %4050 = vmatmul.mubr.f32.gmra.mrb[0].mxu0 %v3331
      %v4051 = vpop.f32.mrb[0].mxu0
      %v4052 = vadd.f32 %v3827, %v4051
      %v4053 = vpop.f32.mrb[0].mxu0
      %4054 = vmatprep.mubr.f32.mxu0 %v3341
      %4055 = vmatmul.mubr.f32.gmra.mrb[0].mxu0 %v3340
      %v4056 = vpop.f32.mrb[0].mxu0
      %v4057 = vadd.f32 %v3832, %v4056
      %v4058 = vpop.f32.mrb[0].mxu0
      %4059 = vmatprep.mubr.f32.mxu0 %v3350
      %4060 = vmatmul.mubr.f32.gmra.mrb[0].mxu0 %v3349
      %v4061 = vpop.f32.mrb[0].mxu0
      %v4062 = vadd.f32 %v3837, %v4061
      %v4063 = vpop.f32.mrb[0].mxu0
      %4064 = vmatprep.mubr.f32.mxu0 %v3359
      %4065 = vmatmul.mubr.f32.gmra.mrb[0].mxu0 %v3358
      %v4066 = vpop.f32.mrb[0].mxu0
      %v4067 = vadd.f32 %v3842, %v4066
      %v4068 = vpop.f32.mrb[0].mxu0
      %4069 = vmatprep.mubr.f32.mxu0 %v3368
      %4070 = vmatmul.mubr.f32.gmra.mrb[0].mxu0 %v3367
      %v4071 = vpop.f32.mrb[0].mxu0
      %v4072 = vadd.f32 %v3847, %v4071
      %v4073 = vpop.f32.mrb[0].mxu0
      %4074 = vmatprep.mubr.f32.mxu0 %v3377
      %4075 = vmatmul.mubr.f32.gmra.mrb[0].mxu0 %v3376
      %v4076 = vpop.f32.mrb[0].mxu0
      %v4077 = vadd.f32 %v3852, %v4076
      %v4078 = vpop.f32.mrb[0].mxu0
      %4079 = vmatprep.mubr.f32.mxu0 %v3386
      %4080 = vmatmul.mubr.f32.gmra.mrb[0].mxu0 %v3385
      %v4081 = vpop.f32.mrb[0].mxu0
      %v4082 = vadd.f32 %v3857, %v4081
      %v4083 = vpop.f32.mrb[0].mxu0
      %4084 = vmatprep.mubr.f32.mxu0 %v3395
      %4085 = vmatmul.mubr.f32.gmra.mrb[0].mxu0 %v3394
      %v4086 = vpop.f32.mrb[0].mxu0
      %v4087 = vadd.f32 %v3862, %v4086
      %v4088 = vpop.f32.mrb[0].mxu0
      %4089 = vmatprep.mubr.f32.mxu0 %v3404
      %4090 = vmatmul.mubr.f32.gmra.mrb[0].mxu0 %v3403
      %v4091 = vpop.f32.mrb[0].mxu0
      %v4092 = vadd.f32 %v3867, %v4091
      %v4093 = vpop.f32.mrb[0].mxu0
      %4094 = vmatprep.mubr.f32.mxu0 %v3413
      %4095 = vmatmul.mubr.f32.gmra.mrb[0].mxu0 %v3412
      %v4096 = vpop.f32.mrb[0].mxu0
      %v4097 = vadd.f32 %v3872, %v4096
      %v4098 = vpop.f32.mrb[0].mxu0
      %4099 = vmatprep.mubr.f32.mxu0 %v3422
      %4100 = vmatmul.mubr.f32.gmra.mrb[0].mxu0 %v3421
      %v4101 = vpop.f32.mrb[0].mxu0
      %v4102 = vadd.f32 %v3877, %v4101
      %v4103 = vpop.f32.mrb[0].mxu0
      %4104 = vmatprep.mubr.f32.mxu0 %v3431
      %4105 = vmatmul.mubr.f32.gmra.mrb[0].mxu0 %v3430
      %v4106 = vpop.f32.mrb[0].mxu0
      %v4107 = vadd.f32 %v3882, %v4106
      %v4108 = vpop.f32.mrb[0].mxu0
      %4109 = vmatprep.mubr.f32.mxu0 %v3440
      %4110 = vmatmul.mubr.f32.gmra.mrb[0].mxu0 %v3439
      %v4111 = vpop.f32.mrb[0].mxu0
      %v4112 = vadd.f32 %v3887, %v4111
      %v4113 = vpop.f32.mrb[0].mxu0
      %4114 = vmatprep.mubr.f32.mxu0 %v3449
      %4115 = vmatmul.mubr.f32.gmra.mrb[0].mxu0 %v3448
      %v4116 = vpop.f32.mrb[0].mxu0
      %v4117 = vadd.f32 %v3892, %v4116
      %v4118 = vpop.f32.mrb[0].mxu0
      %4119 = vmatprep.mubr.f32.mxu0 %v3458
      %4120 = vmatmul.mubr.f32.gmra.mrb[0].mxu0 %v3457
      %v4121 = vpop.f32.mrb[0].mxu0
      %v4122 = vadd.f32 %v3897, %v4121
      %v4123 = vpop.f32.mrb[0].mxu0
      %4124 = vmatprep.mubr.f32.mxu0 %v3467
      %4125 = vmatmul.mubr.f32.gmra.mrb[0].mxu0 %v3466
      %v4126 = vpop.f32.mrb[0].mxu0
      %v4127 = vadd.f32 %v3902, %v4126
      %v4128 = vpop.f32.mrb[0].mxu0
      %4129 = vmatprep.mubr.f32.mxu0 %v3476
      %4130 = vmatmul.mubr.f32.gmra.mrb[0].mxu0 %v3475
      %v4131 = vpop.f32.mrb[0].mxu0
      %v4132 = vadd.f32 %v3907, %v4131
      %v4133 = vpop.f32.mrb[0].mxu0
      %4134 = vmatprep.mubr.f32.mxu0 %v3485
      %4135 = vmatmul.mubr.f32.gmra.mrb[0].mxu0 %v3484
      %v4136 = vpop.f32.mrb[0].mxu0
      %v4137 = vadd.f32 %v3912, %v4136
      %v4138 = vpop.f32.mrb[0].mxu0
      %4139 = vmatprep.mubr.f32.mxu0 %v3494
      %4140 = vmatmul.mubr.f32.gmra.mrb[0].mxu0 %v3493
      %v4141 = vpop.f32.mrb[0].mxu0
      %v4142 = vadd.f32 %v3917, %v4141
      %v4143 = vpop.f32.mrb[0].mxu0
      %4144 = vmatprep.mubr.f32.mxu0 %v3503
      %4145 = vmatmul.mubr.f32.gmra.mrb[0].mxu0 %v3502
      %v4146 = vpop.f32.mrb[0].mxu0
      %v4147 = vadd.f32 %v3922, %v4146
      %v4148 = vpop.f32.mrb[0].mxu0
      %4149 = vmatprep.mubr.f32.mxu0 %v3512
      %4150 = vmatmul.mubr.f32.gmra.mrb[0].mxu0 %v3511
      %v4151 = vpop.f32.mrb[0].mxu0
      %v4152 = vadd.f32 %v3927, %v4151
      %v4153 = vpop.f32.mrb[0].mxu0
      %4154 = vmatprep.mubr.f32.mxu0 %v3521
      %4155 = vmatmul.mubr.f32.gmra.mrb[0].mxu0 %v3520
      %v4156 = vpop.f32.mrb[0].mxu0
      %v4157 = vadd.f32 %v3932, %v4156
      %v4158 = vpop.f32.mrb[0].mxu0
      %4159 = vmatprep.mubr.f32.mxu0 %v3530
      %4160 = vmatmul.mubr.f32.gmra.mrb[0].mxu0 %v3529
      %v4161 = vpop.f32.mrb[0].mxu0
      %v4162 = vadd.f32 %v3937, %v4161
      %v4163 = vpop.f32.mrb[0].mxu0
      %4164 = vmatprep.mubr.f32.mxu0 %v3539
      %4165 = vmatmul.mubr.f32.gmra.mrb[0].mxu0 %v3538
      %v4166 = vpop.f32.mrb[0].mxu0
      %v4167 = vadd.f32 %v3942, %v4166
      %v4168 = vpop.f32.mrb[0].mxu0
      %4169 = vmatprep.mubr.f32.mxu0 %v3548
      %4170 = vmatmul.mubr.f32.gmra.mrb[0].mxu0 %v3547
      %v4171 = vpop.f32.mrb[0].mxu0
      %v4172 = vadd.f32 %v3947, %v4171
      %v4173 = vpop.f32.mrb[0].mxu0
      %4174 = vmatprep.mubr.f32.mxu0 %v3557
      %4175 = vmatmul.mubr.f32.gmra.mrb[0].mxu0 %v3556
      %v4176 = vpop.f32.mrb[0].mxu0
      %v4177 = vadd.f32 %v3952, %v4176
      %v4178 = vpop.f32.mrb[0].mxu0
      %4179 = vmatprep.mubr.f32.mxu0 %v3566
      %4180 = vmatmul.mubr.f32.gmra.mrb[0].mxu0 %v3565
      %v4181 = vpop.f32.mrb[0].mxu0
      %v4182 = vadd.f32 %v3957, %v4181
      %v4183 = vpop.f32.mrb[0].mxu0
      %4184 = vmatprep.mubr.f32.mxu0 %v3575
      %4185 = vmatmul.mubr.f32.gmra.mrb[0].mxu0 %v3574
      %v4186 = vpop.f32.mrb[0].mxu0
      %v4187 = vadd.f32 %v3962, %v4186
      %v4188 = vpop.f32.mrb[0].mxu0
      %4189 = vmatprep.mubr.f32.mxu0 %v3584
      %4190 = vmatmul.mubr.f32.gmra.mrb[0].mxu0 %v3583
      %v4191 = vpop.f32.mrb[0].mxu0
      %v4192 = vadd.f32 %v3967, %v4191
      %v4193 = vpop.f32.mrb[0].mxu0
      %4194 = vmatprep.mubr.f32.mxu0 %v3593
      %4195 = vmatmul.mubr.f32.gmra.mrb[0].mxu0 %v3592
      %v4196 = vpop.f32.mrb[0].mxu0
      %v4197 = vadd.f32 %v3972, %v4196
      %v4198 = vpop.f32.mrb[0].mxu0
      %4199 = vdwg.mxu0
      %4200 = vmatprep.subr.mxu0 0.0
      %4201 = vmatpush1.msra.mxu0 %v3663
      %4202 = vmatprep.subr.mxu0 0.0
      %4203 = vmatpush1.msra.mxu0 %v3664
      %4204 = vmatprep.subr.mxu0 0.0
      %4205 = vmatpush1.msra.mxu0 %v3665
      %4206 = vmatprep.subr.mxu0 0.0
      %4207 = vmatpush1.msra.mxu0 %v3666
      %4208 = vmatprep.subr.mxu0 0.0
      %4209 = vmatpush1.msra.mxu0 %v3667
      %4210 = vmatprep.subr.mxu0 0.0
      %4211 = vmatpush1.msra.mxu0 %v3668
      %4212 = vmatprep.subr.mxu0 0.0
      %4213 = vmatpush1.msra.mxu0 %v3669
      %4214 = vmatprep.subr.mxu0 0.0
      %4215 = vmatpush1.msra.mxu0 %v3670
      %4216 = vmatprep.subr.mxu0 0.0
      %4217 = vmatpush1.msra.mxu0 %v3671
      %4218 = vmatprep.subr.mxu0 0.0
      %4219 = vmatpush1.msra.mxu0 %v3672
      %4220 = vmatprep.subr.mxu0 0.0
      %4221 = vmatpush1.msra.mxu0 %v3673
      %4222 = vmatprep.subr.mxu0 0.0
      %4223 = vmatpush1.msra.mxu0 %v3674
      %4224 = vmatprep.subr.mxu0 0.0
      %4225 = vmatpush1.msra.mxu0 %v3675
      %4226 = vmatprep.subr.mxu0 0.0
      %4227 = vmatpush1.msra.mxu0 %v3676
      %4228 = vmatprep.subr.mxu0 0.0
      %4229 = vmatpush1.msra.mxu0 %v3677
      %4230 = vmatprep.subr.mxu0 0.0
      %4231 = vmatpush1.msra.mxu0 %v3678
      %4232 = vmatprep.subr.mxu0 0.0
      %4233 = vmatpush1.msra.mxu0 %v3679
      %4234 = vmatprep.subr.mxu0 0.0
      %4235 = vmatpush1.msra.mxu0 %v3680
      %4236 = vmatprep.subr.mxu0 0.0
      %4237 = vmatpush1.msra.mxu0 %v3681
      %4238 = vmatprep.subr.mxu0 0.0
      %4239 = vmatpush1.msra.mxu0 %v3682
      %4240 = vmatprep.subr.mxu0 0.0
      %4241 = vmatpush1.msra.mxu0 %v3683
      %4242 = vmatprep.subr.mxu0 0.0
      %4243 = vmatpush1.msra.mxu0 %v3684
      %4244 = vmatprep.subr.mxu0 0.0
      %4245 = vmatpush1.msra.mxu0 %v3685
      %4246 = vmatprep.subr.mxu0 0.0
      %4247 = vmatpush1.msra.mxu0 %v3686
      %4248 = vmatprep.subr.mxu0 0.0
      %4249 = vmatpush1.msra.mxu0 %v3687
      %4250 = vmatprep.subr.mxu0 0.0
      %4251 = vmatpush1.msra.mxu0 %v3688
      %4252 = vmatprep.subr.mxu0 0.0
      %4253 = vmatpush1.msra.mxu0 %v3689
      %4254 = vmatprep.subr.mxu0 0.0
      %4255 = vmatpush1.msra.mxu0 %v3690
      %4256 = vmatprep.subr.mxu0 0.0
      %4257 = vmatpush1.msra.mxu0 %v3691
      %4258 = vmatprep.subr.mxu0 0.0
      %4259 = vmatpush1.msra.mxu0 %v3692
      %4260 = vmatprep.subr.mxu0 0.0
      %4261 = vmatpush1.msra.mxu0 %v3693
      %4262 = vmatprep.subr.mxu0 0.0
      %4263 = vmatpush1.msra.mxu0 %v3694
      %4264 = vmatprep.mubr.f32.mxu0 %v3316
      %4265 = vmatmul.mubr.f32.gmra.mrb[0].mxu0 %v3315
      %v4266 = vpop.f32.mrb[0].mxu0
      %v4267 = vadd.f32 %v4042, %v4266
      %v4268 = vpop.f32.mrb[0].mxu0
      %4269 = vmatprep.mubr.f32.mxu0 %v3325
      %4270 = vmatmul.mubr.f32.gmra.mrb[0].mxu0 %v3324
      %v4271 = vpop.f32.mrb[0].mxu0
      %v4272 = vadd.f32 %v4047, %v4271
      %v4273 = vpop.f32.mrb[0].mxu0
      %4274 = vmatprep.mubr.f32.mxu0 %v3334
      %4275 = vmatmul.mubr.f32.gmra.mrb[0].mxu0 %v3333
      %v4276 = vpop.f32.mrb[0].mxu0
      %v4277 = vadd.f32 %v4052, %v4276
      %v4278 = vpop.f32.mrb[0].mxu0
      %4279 = vmatprep.mubr.f32.mxu0 %v3343
      %4280 = vmatmul.mubr.f32.gmra.mrb[0].mxu0 %v3342
      %v4281 = vpop.f32.mrb[0].mxu0
      %v4282 = vadd.f32 %v4057, %v4281
      %v4283 = vpop.f32.mrb[0].mxu0
      %4284 = vmatprep.mubr.f32.mxu0 %v3352
      %4285 = vmatmul.mubr.f32.gmra.mrb[0].mxu0 %v3351
      %v4286 = vpop.f32.mrb[0].mxu0
      %v4287 = vadd.f32 %v4062, %v4286
      %v4288 = vpop.f32.mrb[0].mxu0
      %4289 = vmatprep.mubr.f32.mxu0 %v3361
      %4290 = vmatmul.mubr.f32.gmra.mrb[0].mxu0 %v3360
      %v4291 = vpop.f32.mrb[0].mxu0
      %v4292 = vadd.f32 %v4067, %v4291
      %v4293 = vpop.f32.mrb[0].mxu0
      %4294 = vmatprep.mubr.f32.mxu0 %v3370
      %4295 = vmatmul.mubr.f32.gmra.mrb[0].mxu0 %v3369
      %v4296 = vpop.f32.mrb[0].mxu0
      %v4297 = vadd.f32 %v4072, %v4296
      %v4298 = vpop.f32.mrb[0].mxu0
      %4299 = vmatprep.mubr.f32.mxu0 %v3379
      %4300 = vmatmul.mubr.f32.gmra.mrb[0].mxu0 %v3378
      %v4301 = vpop.f32.mrb[0].mxu0
      %v4302 = vadd.f32 %v4077, %v4301
      %v4303 = vpop.f32.mrb[0].mxu0
      %4304 = vmatprep.mubr.f32.mxu0 %v3388
      %4305 = vmatmul.mubr.f32.gmra.mrb[0].mxu0 %v3387
      %v4306 = vpop.f32.mrb[0].mxu0
      %v4307 = vadd.f32 %v4082, %v4306
      %v4308 = vpop.f32.mrb[0].mxu0
      %4309 = vmatprep.mubr.f32.mxu0 %v3397
      %4310 = vmatmul.mubr.f32.gmra.mrb[0].mxu0 %v3396
      %v4311 = vpop.f32.mrb[0].mxu0
      %v4312 = vadd.f32 %v4087, %v4311
      %v4313 = vpop.f32.mrb[0].mxu0
      %4314 = vmatprep.mubr.f32.mxu0 %v3406
      %4315 = vmatmul.mubr.f32.gmra.mrb[0].mxu0 %v3405
      %v4316 = vpop.f32.mrb[0].mxu0
      %v4317 = vadd.f32 %v4092, %v4316
      %v4318 = vpop.f32.mrb[0].mxu0
      %4319 = vmatprep.mubr.f32.mxu0 %v3415
      %4320 = vmatmul.mubr.f32.gmra.mrb[0].mxu0 %v3414
      %v4321 = vpop.f32.mrb[0].mxu0
      %v4322 = vadd.f32 %v4097, %v4321
      %v4323 = vpop.f32.mrb[0].mxu0
      %4324 = vmatprep.mubr.f32.mxu0 %v3424
      %4325 = vmatmul.mubr.f32.gmra.mrb[0].mxu0 %v3423
      %v4326 = vpop.f32.mrb[0].mxu0
      %v4327 = vadd.f32 %v4102, %v4326
      %v4328 = vpop.f32.mrb[0].mxu0
      %4329 = vmatprep.mubr.f32.mxu0 %v3433
      %4330 = vmatmul.mubr.f32.gmra.mrb[0].mxu0 %v3432
      %v4331 = vpop.f32.mrb[0].mxu0
      %v4332 = vadd.f32 %v4107, %v4331
      %v4333 = vpop.f32.mrb[0].mxu0
      %4334 = vmatprep.mubr.f32.mxu0 %v3442
      %4335 = vmatmul.mubr.f32.gmra.mrb[0].mxu0 %v3441
      %v4336 = vpop.f32.mrb[0].mxu0
      %v4337 = vadd.f32 %v4112, %v4336
      %v4338 = vpop.f32.mrb[0].mxu0
      %4339 = vmatprep.mubr.f32.mxu0 %v3451
      %4340 = vmatmul.mubr.f32.gmra.mrb[0].mxu0 %v3450
      %v4341 = vpop.f32.mrb[0].mxu0
      %v4342 = vadd.f32 %v4117, %v4341
      %v4343 = vpop.f32.mrb[0].mxu0
      %4344 = vmatprep.mubr.f32.mxu0 %v3460
      %4345 = vmatmul.mubr.f32.gmra.mrb[0].mxu0 %v3459
      %v4346 = vpop.f32.mrb[0].mxu0
      %v4347 = vadd.f32 %v4122, %v4346
      %v4348 = vpop.f32.mrb[0].mxu0
      %4349 = vmatprep.mubr.f32.mxu0 %v3469
      %4350 = vmatmul.mubr.f32.gmra.mrb[0].mxu0 %v3468
      %v4351 = vpop.f32.mrb[0].mxu0
      %v4352 = vadd.f32 %v4127, %v4351
      %v4353 = vpop.f32.mrb[0].mxu0
      %4354 = vmatprep.mubr.f32.mxu0 %v3478
      %4355 = vmatmul.mubr.f32.gmra.mrb[0].mxu0 %v3477
      %v4356 = vpop.f32.mrb[0].mxu0
      %v4357 = vadd.f32 %v4132, %v4356
      %v4358 = vpop.f32.mrb[0].mxu0
      %4359 = vmatprep.mubr.f32.mxu0 %v3487
      %4360 = vmatmul.mubr.f32.gmra.mrb[0].mxu0 %v3486
      %v4361 = vpop.f32.mrb[0].mxu0
      %v4362 = vadd.f32 %v4137, %v4361
      %v4363 = vpop.f32.mrb[0].mxu0
      %4364 = vmatprep.mubr.f32.mxu0 %v3496
      %4365 = vmatmul.mubr.f32.gmra.mrb[0].mxu0 %v3495
      %v4366 = vpop.f32.mrb[0].mxu0
      %v4367 = vadd.f32 %v4142, %v4366
      %v4368 = vpop.f32.mrb[0].mxu0
      %4369 = vmatprep.mubr.f32.mxu0 %v3505
      %4370 = vmatmul.mubr.f32.gmra.mrb[0].mxu0 %v3504
      %v4371 = vpop.f32.mrb[0].mxu0
      %v4372 = vadd.f32 %v4147, %v4371
      %v4373 = vpop.f32.mrb[0].mxu0
      %4374 = vmatprep.mubr.f32.mxu0 %v3514
      %4375 = vmatmul.mubr.f32.gmra.mrb[0].mxu0 %v3513
      %v4376 = vpop.f32.mrb[0].mxu0
      %v4377 = vadd.f32 %v4152, %v4376
      %v4378 = vpop.f32.mrb[0].mxu0
      %4379 = vmatprep.mubr.f32.mxu0 %v3523
      %4380 = vmatmul.mubr.f32.gmra.mrb[0].mxu0 %v3522
      %v4381 = vpop.f32.mrb[0].mxu0
      %v4382 = vadd.f32 %v4157, %v4381
      %v4383 = vpop.f32.mrb[0].mxu0
      %4384 = vmatprep.mubr.f32.mxu0 %v3532
      %4385 = vmatmul.mubr.f32.gmra.mrb[0].mxu0 %v3531
      %v4386 = vpop.f32.mrb[0].mxu0
      %v4387 = vadd.f32 %v4162, %v4386
      %v4388 = vpop.f32.mrb[0].mxu0
      %4389 = vmatprep.mubr.f32.mxu0 %v3541
      %4390 = vmatmul.mubr.f32.gmra.mrb[0].mxu0 %v3540
      %v4391 = vpop.f32.mrb[0].mxu0
      %v4392 = vadd.f32 %v4167, %v4391
      %v4393 = vpop.f32.mrb[0].mxu0
      %4394 = vmatprep.mubr.f32.mxu0 %v3550
      %4395 = vmatmul.mubr.f32.gmra.mrb[0].mxu0 %v3549
      %v4396 = vpop.f32.mrb[0].mxu0
      %v4397 = vadd.f32 %v4172, %v4396
      %v4398 = vpop.f32.mrb[0].mxu0
      %4399 = vmatprep.mubr.f32.mxu0 %v3559
      %4400 = vmatmul.mubr.f32.gmra.mrb[0].mxu0 %v3558
      %v4401 = vpop.f32.mrb[0].mxu0
      %v4402 = vadd.f32 %v4177, %v4401
      %v4403 = vpop.f32.mrb[0].mxu0
      %4404 = vmatprep.mubr.f32.mxu0 %v3568
      %4405 = vmatmul.mubr.f32.gmra.mrb[0].mxu0 %v3567
      %v4406 = vpop.f32.mrb[0].mxu0
      %v4407 = vadd.f32 %v4182, %v4406
      %v4408 = vpop.f32.mrb[0].mxu0
      %4409 = vmatprep.mubr.f32.mxu0 %v3577
      %4410 = vmatmul.mubr.f32.gmra.mrb[0].mxu0 %v3576
      %v4411 = vpop.f32.mrb[0].mxu0
      %v4412 = vadd.f32 %v4187, %v4411
      %v4413 = vpop.f32.mrb[0].mxu0
      %4414 = vmatprep.mubr.f32.mxu0 %v3586
      %4415 = vmatmul.mubr.f32.gmra.mrb[0].mxu0 %v3585
      %v4416 = vpop.f32.mrb[0].mxu0
      %v4417 = vadd.f32 %v4192, %v4416
      %v4418 = vpop.f32.mrb[0].mxu0
      %4419 = vmatprep.mubr.f32.mxu0 %v3595
      %4420 = vmatmul.mubr.f32.gmra.mrb[0].mxu0 %v3594
      %v4421 = vpop.f32.mrb[0].mxu0
      %v4422 = vadd.f32 %v4197, %v4421
      %v4423 = vpop.f32.mrb[0].mxu0
      %4424 = vdwg.mxu0
      %4425 = vmatprep.subr.mxu0 0.0
      %4426 = vmatpush1.msra.mxu0 %v3695
      %4427 = vmatprep.subr.mxu0 0.0
      %4428 = vmatpush1.msra.mxu0 %v3696
      %4429 = vmatprep.subr.mxu0 0.0
      %4430 = vmatpush1.msra.mxu0 %v3697
      %4431 = vmatprep.subr.mxu0 0.0
      %4432 = vmatpush1.msra.mxu0 %v3698
      %4433 = vmatprep.subr.mxu0 0.0
      %4434 = vmatpush1.msra.mxu0 %v3699
      %4435 = vmatprep.subr.mxu0 0.0
      %4436 = vmatpush1.msra.mxu0 %v3700
      %4437 = vmatprep.subr.mxu0 0.0
      %4438 = vmatpush1.msra.mxu0 %v3701
      %4439 = vmatprep.subr.mxu0 0.0
      %4440 = vmatpush1.msra.mxu0 %v3702
      %4441 = vmatprep.subr.mxu0 0.0
      %4442 = vmatpush1.msra.mxu0 %v3703
      %4443 = vmatprep.subr.mxu0 0.0
      %4444 = vmatpush1.msra.mxu0 %v3704
      %4445 = vmatprep.subr.mxu0 0.0
      %4446 = vmatpush1.msra.mxu0 %v3705
      %4447 = vmatprep.subr.mxu0 0.0
      %4448 = vmatpush1.msra.mxu0 %v3706
      %4449 = vmatprep.subr.mxu0 0.0
      %4450 = vmatpush1.msra.mxu0 %v3707
      %4451 = vmatprep.subr.mxu0 0.0
      %4452 = vmatpush1.msra.mxu0 %v3708
      %4453 = vmatprep.subr.mxu0 0.0
      %4454 = vmatpush1.msra.mxu0 %v3709
      %4455 = vmatprep.subr.mxu0 0.0
      %4456 = vmatpush1.msra.mxu0 %v3710
      %4457 = vmatprep.subr.mxu0 0.0
      %4458 = vmatpush1.msra.mxu0 %v3711
      %4459 = vmatprep.subr.mxu0 0.0
      %4460 = vmatpush1.msra.mxu0 %v3712
      %4461 = vmatprep.subr.mxu0 0.0
      %4462 = vmatpush1.msra.mxu0 %v3713
      %4463 = vmatprep.subr.mxu0 0.0
      %4464 = vmatpush1.msra.mxu0 %v3714
      %4465 = vmatprep.subr.mxu0 0.0
      %4466 = vmatpush1.msra.mxu0 %v3715
      %4467 = vmatprep.subr.mxu0 0.0
      %4468 = vmatpush1.msra.mxu0 %v3716
      %4469 = vmatprep.subr.mxu0 0.0
      %4470 = vmatpush1.msra.mxu0 %v3717
      %4471 = vmatprep.subr.mxu0 0.0
      %4472 = vmatpush1.msra.mxu0 %v3718
      %4473 = vmatprep.subr.mxu0 0.0
      %4474 = vmatpush1.msra.mxu0 %v3719
      %4475 = vmatprep.subr.mxu0 0.0
      %4476 = vmatpush1.msra.mxu0 %v3720
      %4477 = vmatprep.subr.mxu0 0.0
      %4478 = vmatpush1.msra.mxu0 %v3721
      %4479 = vmatprep.subr.mxu0 0.0
      %4480 = vmatpush1.msra.mxu0 %v3722
      %4481 = vmatprep.subr.mxu0 0.0
      %4482 = vmatpush1.msra.mxu0 %v3723
      %4483 = vmatprep.subr.mxu0 0.0
      %4484 = vmatpush1.msra.mxu0 %v3724
      %4485 = vmatprep.subr.mxu0 0.0
      %4486 = vmatpush1.msra.mxu0 %v3725
      %4487 = vmatprep.subr.mxu0 0.0
      %4488 = vmatpush1.msra.mxu0 %v3726
      %4489 = vmatprep.mubr.f32.mxu0 %v3318
      %4490 = vmatmul.mubr.f32.gmra.mrb[0].mxu0 %v3317
      %v4491 = vpop.f32.mrb[0].mxu0
      %v4492 = vadd.f32 %v4267, %v4491
      %v4493 = vpop.f32.mrb[0].mxu0
      %4494 = vmatprep.mubr.f32.mxu0 %v3327
      %4495 = vmatmul.mubr.f32.gmra.mrb[0].mxu0 %v3326
      %v4496 = vpop.f32.mrb[0].mxu0
      %v4497 = vadd.f32 %v4272, %v4496
      %v4498 = vpop.f32.mrb[0].mxu0
      %4499 = vmatprep.mubr.f32.mxu0 %v3336
      %4500 = vmatmul.mubr.f32.gmra.mrb[0].mxu0 %v3335
      %v4501 = vpop.f32.mrb[0].mxu0
      %v4502 = vadd.f32 %v4277, %v4501
      %v4503 = vpop.f32.mrb[0].mxu0
      %4504 = vmatprep.mubr.f32.mxu0 %v3345
      %4505 = vmatmul.mubr.f32.gmra.mrb[0].mxu0 %v3344
      %v4506 = vpop.f32.mrb[0].mxu0
      %v4507 = vadd.f32 %v4282, %v4506
      %v4508 = vpop.f32.mrb[0].mxu0
      %4509 = vmatprep.mubr.f32.mxu0 %v3354
      %4510 = vmatmul.mubr.f32.gmra.mrb[0].mxu0 %v3353
      %v4511 = vpop.f32.mrb[0].mxu0
      %v4512 = vadd.f32 %v4287, %v4511
      %v4513 = vpop.f32.mrb[0].mxu0
      %4514 = vmatprep.mubr.f32.mxu0 %v3363
      %4515 = vmatmul.mubr.f32.gmra.mrb[0].mxu0 %v3362
      %v4516 = vpop.f32.mrb[0].mxu0
      %v4517 = vadd.f32 %v4292, %v4516
      %v4518 = vpop.f32.mrb[0].mxu0
      %4519 = vmatprep.mubr.f32.mxu0 %v3372
      %4520 = vmatmul.mubr.f32.gmra.mrb[0].mxu0 %v3371
      %v4521 = vpop.f32.mrb[0].mxu0
      %v4522 = vadd.f32 %v4297, %v4521
      %v4523 = vpop.f32.mrb[0].mxu0
      %4524 = vmatprep.mubr.f32.mxu0 %v3381
      %4525 = vmatmul.mubr.f32.gmra.mrb[0].mxu0 %v3380
      %v4526 = vpop.f32.mrb[0].mxu0
      %v4527 = vadd.f32 %v4302, %v4526
      %v4528 = vpop.f32.mrb[0].mxu0
      %4529 = vmatprep.mubr.f32.mxu0 %v3390
      %4530 = vmatmul.mubr.f32.gmra.mrb[0].mxu0 %v3389
      %v4531 = vpop.f32.mrb[0].mxu0
      %v4532 = vadd.f32 %v4307, %v4531
      %v4533 = vpop.f32.mrb[0].mxu0
      %4534 = vmatprep.mubr.f32.mxu0 %v3399
      %4535 = vmatmul.mubr.f32.gmra.mrb[0].mxu0 %v3398
      %v4536 = vpop.f32.mrb[0].mxu0
      %v4537 = vadd.f32 %v4312, %v4536
      %v4538 = vpop.f32.mrb[0].mxu0
      %4539 = vmatprep.mubr.f32.mxu0 %v3408
      %4540 = vmatmul.mubr.f32.gmra.mrb[0].mxu0 %v3407
      %v4541 = vpop.f32.mrb[0].mxu0
      %v4542 = vadd.f32 %v4317, %v4541
      %v4543 = vpop.f32.mrb[0].mxu0
      %4544 = vmatprep.mubr.f32.mxu0 %v3417
      %4545 = vmatmul.mubr.f32.gmra.mrb[0].mxu0 %v3416
      %v4546 = vpop.f32.mrb[0].mxu0
      %v4547 = vadd.f32 %v4322, %v4546
      %v4548 = vpop.f32.mrb[0].mxu0
      %4549 = vmatprep.mubr.f32.mxu0 %v3426
      %4550 = vmatmul.mubr.f32.gmra.mrb[0].mxu0 %v3425
      %v4551 = vpop.f32.mrb[0].mxu0
      %v4552 = vadd.f32 %v4327, %v4551
      %v4553 = vpop.f32.mrb[0].mxu0
      %4554 = vmatprep.mubr.f32.mxu0 %v3435
      %4555 = vmatmul.mubr.f32.gmra.mrb[0].mxu0 %v3434
      %v4556 = vpop.f32.mrb[0].mxu0
      %v4557 = vadd.f32 %v4332, %v4556
      %v4558 = vpop.f32.mrb[0].mxu0
      %4559 = vmatprep.mubr.f32.mxu0 %v3444
      %4560 = vmatmul.mubr.f32.gmra.mrb[0].mxu0 %v3443
      %v4561 = vpop.f32.mrb[0].mxu0
      %v4562 = vadd.f32 %v4337, %v4561
      %v4563 = vpop.f32.mrb[0].mxu0
      %4564 = vmatprep.mubr.f32.mxu0 %v3453
      %4565 = vmatmul.mubr.f32.gmra.mrb[0].mxu0 %v3452
      %v4566 = vpop.f32.mrb[0].mxu0
      %v4567 = vadd.f32 %v4342, %v4566
      %v4568 = vpop.f32.mrb[0].mxu0
      %4569 = vmatprep.mubr.f32.mxu0 %v3462
      %4570 = vmatmul.mubr.f32.gmra.mrb[0].mxu0 %v3461
      %v4571 = vpop.f32.mrb[0].mxu0
      %v4572 = vadd.f32 %v4347, %v4571
      %v4573 = vpop.f32.mrb[0].mxu0
      %4574 = vmatprep.mubr.f32.mxu0 %v3471
      %4575 = vmatmul.mubr.f32.gmra.mrb[0].mxu0 %v3470
      %v4576 = vpop.f32.mrb[0].mxu0
      %v4577 = vadd.f32 %v4352, %v4576
      %v4578 = vpop.f32.mrb[0].mxu0
      %4579 = vmatprep.mubr.f32.mxu0 %v3480
      %4580 = vmatmul.mubr.f32.gmra.mrb[0].mxu0 %v3479
      %v4581 = vpop.f32.mrb[0].mxu0
      %v4582 = vadd.f32 %v4357, %v4581
      %v4583 = vpop.f32.mrb[0].mxu0
      %4584 = vmatprep.mubr.f32.mxu0 %v3489
      %4585 = vmatmul.mubr.f32.gmra.mrb[0].mxu0 %v3488
      %v4586 = vpop.f32.mrb[0].mxu0
      %v4587 = vadd.f32 %v4362, %v4586
      %v4588 = vpop.f32.mrb[0].mxu0
      %4589 = vmatprep.mubr.f32.mxu0 %v3498
      %4590 = vmatmul.mubr.f32.gmra.mrb[0].mxu0 %v3497
      %v4591 = vpop.f32.mrb[0].mxu0
      %v4592 = vadd.f32 %v4367, %v4591
      %v4593 = vpop.f32.mrb[0].mxu0
      %4594 = vmatprep.mubr.f32.mxu0 %v3507
      %4595 = vmatmul.mubr.f32.gmra.mrb[0].mxu0 %v3506
      %v4596 = vpop.f32.mrb[0].mxu0
      %v4597 = vadd.f32 %v4372, %v4596
      %v4598 = vpop.f32.mrb[0].mxu0
      %4599 = vmatprep.mubr.f32.mxu0 %v3516
      %4600 = vmatmul.mubr.f32.gmra.mrb[0].mxu0 %v3515
      %v4601 = vpop.f32.mrb[0].mxu0
      %v4602 = vadd.f32 %v4377, %v4601
      %v4603 = vpop.f32.mrb[0].mxu0
      %4604 = vmatprep.mubr.f32.mxu0 %v3525
      %4605 = vmatmul.mubr.f32.gmra.mrb[0].mxu0 %v3524
      %v4606 = vpop.f32.mrb[0].mxu0
      %v4607 = vadd.f32 %v4382, %v4606
      %v4608 = vpop.f32.mrb[0].mxu0
      %4609 = vmatprep.mubr.f32.mxu0 %v3534
      %4610 = vmatmul.mubr.f32.gmra.mrb[0].mxu0 %v3533
      %v4611 = vpop.f32.mrb[0].mxu0
      %v4612 = vadd.f32 %v4387, %v4611
      %v4613 = vpop.f32.mrb[0].mxu0
      %4614 = vmatprep.mubr.f32.mxu0 %v3543
      %4615 = vmatmul.mubr.f32.gmra.mrb[0].mxu0 %v3542
      %v4616 = vpop.f32.mrb[0].mxu0
      %v4617 = vadd.f32 %v4392, %v4616
      %v4618 = vpop.f32.mrb[0].mxu0
      %4619 = vmatprep.mubr.f32.mxu0 %v3552
      %4620 = vmatmul.mubr.f32.gmra.mrb[0].mxu0 %v3551
      %v4621 = vpop.f32.mrb[0].mxu0
      %v4622 = vadd.f32 %v4397, %v4621
      %v4623 = vpop.f32.mrb[0].mxu0
      %4624 = vmatprep.mubr.f32.mxu0 %v3561
      %4625 = vmatmul.mubr.f32.gmra.mrb[0].mxu0 %v3560
      %v4626 = vpop.f32.mrb[0].mxu0
      %v4627 = vadd.f32 %v4402, %v4626
      %v4628 = vpop.f32.mrb[0].mxu0
      %4629 = vmatprep.mubr.f32.mxu0 %v3570
      %4630 = vmatmul.mubr.f32.gmra.mrb[0].mxu0 %v3569
      %v4631 = vpop.f32.mrb[0].mxu0
      %v4632 = vadd.f32 %v4407, %v4631
      %v4633 = vpop.f32.mrb[0].mxu0
      %4634 = vmatprep.mubr.f32.mxu0 %v3579
      %4635 = vmatmul.mubr.f32.gmra.mrb[0].mxu0 %v3578
      %v4636 = vpop.f32.mrb[0].mxu0
      %v4637 = vadd.f32 %v4412, %v4636
      %v4638 = vpop.f32.mrb[0].mxu0
      %4639 = vmatprep.mubr.f32.mxu0 %v3588
      %4640 = vmatmul.mubr.f32.gmra.mrb[0].mxu0 %v3587
      %v4641 = vpop.f32.mrb[0].mxu0
      %v4642 = vadd.f32 %v4417, %v4641
      %v4643 = vpop.f32.mrb[0].mxu0
      %4644 = vmatprep.mubr.f32.mxu0 %v3597
      %4645 = vmatmul.mubr.f32.gmra.mrb[0].mxu0 %v3596
      %v4646 = vpop.f32.mrb[0].mxu0
      %v4647 = vadd.f32 %v4422, %v4646
      %v4648 = vpop.f32.mrb[0].mxu0
      %4649 = vdwg.mxu0
      %4650 = vmatprep.subr.mxu0 0.0
      %4651 = vmatpush1.msra.mxu0 %v3727
      %4652 = vmatprep.subr.mxu0 0.0
      %4653 = vmatpush1.msra.mxu0 %v3728
      %4654 = vmatprep.subr.mxu0 0.0
      %4655 = vmatpush1.msra.mxu0 %v3729
      %4656 = vmatprep.subr.mxu0 0.0
      %4657 = vmatpush1.msra.mxu0 %v3730
      %4658 = vmatprep.subr.mxu0 0.0
      %4659 = vmatpush1.msra.mxu0 %v3731
      %4660 = vmatprep.subr.mxu0 0.0
      %4661 = vmatpush1.msra.mxu0 %v3732
      %4662 = vmatprep.subr.mxu0 0.0
      %4663 = vmatpush1.msra.mxu0 %v3733
      %4664 = vmatprep.subr.mxu0 0.0
      %4665 = vmatpush1.msra.mxu0 %v3734
      %4666 = vmatprep.subr.mxu0 0.0
      %4667 = vmatpush1.msra.mxu0 %v3735
      %4668 = vmatprep.subr.mxu0 0.0
      %4669 = vmatpush1.msra.mxu0 %v3736
      %4670 = vmatprep.subr.mxu0 0.0
      %4671 = vmatpush1.msra.mxu0 %v3737
      %4672 = vmatprep.subr.mxu0 0.0
      %4673 = vmatpush1.msra.mxu0 %v3738
      %4674 = vmatprep.subr.mxu0 0.0
      %4675 = vmatpush1.msra.mxu0 %v3739
      %4676 = vmatprep.subr.mxu0 0.0
      %4677 = vmatpush1.msra.mxu0 %v3740
      %4678 = vmatprep.subr.mxu0 0.0
      %4679 = vmatpush1.msra.mxu0 %v3741
      %4680 = vmatprep.subr.mxu0 0.0
      %4681 = vmatpush1.msra.mxu0 %v3742
      %4682 = vmatprep.subr.mxu0 0.0
      %4683 = vmatpush1.msra.mxu0 0.0
      %4684 = vmatprep.subr.mxu0 0.0
      %4685 = vmatpush1.msra.mxu0 0.0
      %4686 = vmatprep.subr.mxu0 0.0
      %4687 = vmatpush1.msra.mxu0 0.0
      %4688 = vmatprep.subr.mxu0 0.0
      %4689 = vmatpush1.msra.mxu0 0.0
      %4690 = vmatprep.subr.mxu0 0.0
      %4691 = vmatpush1.msra.mxu0 0.0
      %4692 = vmatprep.subr.mxu0 0.0
      %4693 = vmatpush1.msra.mxu0 0.0
      %4694 = vmatprep.subr.mxu0 0.0
      %4695 = vmatpush1.msra.mxu0 0.0
      %4696 = vmatprep.subr.mxu0 0.0
      %4697 = vmatpush1.msra.mxu0 0.0
      %4698 = vmatprep.subr.mxu0 0.0
      %4699 = vmatpush1.msra.mxu0 0.0
      %4700 = vmatprep.subr.mxu0 0.0
      %4701 = vmatpush1.msra.mxu0 0.0
      %4702 = vmatprep.subr.mxu0 0.0
      %4703 = vmatpush1.msra.mxu0 0.0
      %4704 = vmatprep.subr.mxu0 0.0
      %4705 = vmatpush1.msra.mxu0 0.0
      %4706 = vmatprep.subr.mxu0 0.0
      %4707 = vmatpush1.msra.mxu0 0.0
      %4708 = vmatprep.subr.mxu0 0.0
      %4709 = vmatpush1.msra.mxu0 0.0
      %4710 = vmatprep.subr.mxu0 0.0
      %4711 = vmatpush1.msra.mxu0 0.0
      %4712 = vmatprep.subr.mxu0 0.0
      %4713 = vmatpush1.msra.mxu0 0.0
      %4714 = vmatprep.mubr.f32.mxu0 0.0
      %4715 = vmatmul.mubr.f32.gmra.mrb[0].mxu0 %v3319
      %v4716 = vpop.f32.mrb[0].mxu0
      %v4717 = vadd.f32 %v4492, %v4716
      %v4718 = vpop.f32.mrb[0].mxu0
      %4719 = vmatprep.mubr.f32.mxu0 0.0
      %4720 = vmatmul.mubr.f32.gmra.mrb[0].mxu0 %v3328
      %v4721 = vpop.f32.mrb[0].mxu0
      %v4722 = vadd.f32 %v4497, %v4721
      %v4723 = vpop.f32.mrb[0].mxu0
      %4724 = vmatprep.mubr.f32.mxu0 0.0
      %4725 = vmatmul.mubr.f32.gmra.mrb[0].mxu0 %v3337
      %v4726 = vpop.f32.mrb[0].mxu0
      %v4727 = vadd.f32 %v4502, %v4726
      %v4728 = vpop.f32.mrb[0].mxu0
      %4729 = vmatprep.mubr.f32.mxu0 0.0
      %4730 = vmatmul.mubr.f32.gmra.mrb[0].mxu0 %v3346
      %v4731 = vpop.f32.mrb[0].mxu0
      %v4732 = vadd.f32 %v4507, %v4731
      %v4733 = vpop.f32.mrb[0].mxu0
      %4734 = vmatprep.mubr.f32.mxu0 0.0
      %4735 = vmatmul.mubr.f32.gmra.mrb[0].mxu0 %v3355
      %v4736 = vpop.f32.mrb[0].mxu0
      %v4737 = vadd.f32 %v4512, %v4736
      %v4738 = vpop.f32.mrb[0].mxu0
      %4739 = vmatprep.mubr.f32.mxu0 0.0
      %4740 = vmatmul.mubr.f32.gmra.mrb[0].mxu0 %v3364
      %v4741 = vpop.f32.mrb[0].mxu0
      %v4742 = vadd.f32 %v4517, %v4741
      %v4743 = vpop.f32.mrb[0].mxu0
      %4744 = vmatprep.mubr.f32.mxu0 0.0
      %4745 = vmatmul.mubr.f32.gmra.mrb[0].mxu0 %v3373
      %v4746 = vpop.f32.mrb[0].mxu0
      %v4747 = vadd.f32 %v4522, %v4746
      %v4748 = vpop.f32.mrb[0].mxu0
      %4749 = vmatprep.mubr.f32.mxu0 0.0
      %4750 = vmatmul.mubr.f32.gmra.mrb[0].mxu0 %v3382
      %v4751 = vpop.f32.mrb[0].mxu0
      %v4752 = vadd.f32 %v4527, %v4751
      %v4753 = vpop.f32.mrb[0].mxu0
      %4754 = vmatprep.mubr.f32.mxu0 0.0
      %4755 = vmatmul.mubr.f32.gmra.mrb[0].mxu0 %v3391
      %v4756 = vpop.f32.mrb[0].mxu0
      %v4757 = vadd.f32 %v4532, %v4756
      %v4758 = vpop.f32.mrb[0].mxu0
      %4759 = vmatprep.mubr.f32.mxu0 0.0
      %4760 = vmatmul.mubr.f32.gmra.mrb[0].mxu0 %v3400
      %v4761 = vpop.f32.mrb[0].mxu0
      %v4762 = vadd.f32 %v4537, %v4761
      %v4763 = vpop.f32.mrb[0].mxu0
      %4764 = vmatprep.mubr.f32.mxu0 0.0
      %4765 = vmatmul.mubr.f32.gmra.mrb[0].mxu0 %v3409
      %v4766 = vpop.f32.mrb[0].mxu0
      %v4767 = vadd.f32 %v4542, %v4766
      %v4768 = vpop.f32.mrb[0].mxu0
      %4769 = vmatprep.mubr.f32.mxu0 0.0
      %4770 = vmatmul.mubr.f32.gmra.mrb[0].mxu0 %v3418
      %v4771 = vpop.f32.mrb[0].mxu0
      %v4772 = vadd.f32 %v4547, %v4771
      %v4773 = vpop.f32.mrb[0].mxu0
      %4774 = vmatprep.mubr.f32.mxu0 0.0
      %4775 = vmatmul.mubr.f32.gmra.mrb[0].mxu0 %v3427
      %v4776 = vpop.f32.mrb[0].mxu0
      %v4777 = vadd.f32 %v4552, %v4776
      %v4778 = vpop.f32.mrb[0].mxu0
      %4779 = vmatprep.mubr.f32.mxu0 0.0
      %4780 = vmatmul.mubr.f32.gmra.mrb[0].mxu0 %v3436
      %v4781 = vpop.f32.mrb[0].mxu0
      %v4782 = vadd.f32 %v4557, %v4781
      %v4783 = vpop.f32.mrb[0].mxu0
      %4784 = vmatprep.mubr.f32.mxu0 0.0
      %4785 = vmatmul.mubr.f32.gmra.mrb[0].mxu0 %v3445
      %v4786 = vpop.f32.mrb[0].mxu0
      %v4787 = vadd.f32 %v4562, %v4786
      %v4788 = vpop.f32.mrb[0].mxu0
      %4789 = vmatprep.mubr.f32.mxu0 0.0
      %4790 = vmatmul.mubr.f32.gmra.mrb[0].mxu0 %v3454
      %v4791 = vpop.f32.mrb[0].mxu0
      %v4792 = vadd.f32 %v4567, %v4791
      %v4793 = vpop.f32.mrb[0].mxu0
      %4794 = vmatprep.mubr.f32.mxu0 0.0
      %4795 = vmatmul.mubr.f32.gmra.mrb[0].mxu0 %v3463
      %v4796 = vpop.f32.mrb[0].mxu0
      %v4797 = vadd.f32 %v4572, %v4796
      %v4798 = vpop.f32.mrb[0].mxu0
      %4799 = vmatprep.mubr.f32.mxu0 0.0
      %4800 = vmatmul.mubr.f32.gmra.mrb[0].mxu0 %v3472
      %v4801 = vpop.f32.mrb[0].mxu0
      %v4802 = vadd.f32 %v4577, %v4801
      %v4803 = vpop.f32.mrb[0].mxu0
      %4804 = vmatprep.mubr.f32.mxu0 0.0
      %4805 = vmatmul.mubr.f32.gmra.mrb[0].mxu0 %v3481
      %v4806 = vpop.f32.mrb[0].mxu0
      %v4807 = vadd.f32 %v4582, %v4806
      %v4808 = vpop.f32.mrb[0].mxu0
      %4809 = vmatprep.mubr.f32.mxu0 0.0
      %4810 = vmatmul.mubr.f32.gmra.mrb[0].mxu0 %v3490
      %v4811 = vpop.f32.mrb[0].mxu0
      %v4812 = vadd.f32 %v4587, %v4811
      %v4813 = vpop.f32.mrb[0].mxu0
      %4814 = vmatprep.mubr.f32.mxu0 0.0
      %4815 = vmatmul.mubr.f32.gmra.mrb[0].mxu0 %v3499
      %v4816 = vpop.f32.mrb[0].mxu0
      %v4817 = vadd.f32 %v4592, %v4816
      %v4818 = vpop.f32.mrb[0].mxu0
      %4819 = vmatprep.mubr.f32.mxu0 0.0
      %4820 = vmatmul.mubr.f32.gmra.mrb[0].mxu0 %v3508
      %v4821 = vpop.f32.mrb[0].mxu0
      %v4822 = vadd.f32 %v4597, %v4821
      %v4823 = vpop.f32.mrb[0].mxu0
      %4824 = vmatprep.mubr.f32.mxu0 0.0
      %4825 = vmatmul.mubr.f32.gmra.mrb[0].mxu0 %v3517
      %v4826 = vpop.f32.mrb[0].mxu0
      %v4827 = vadd.f32 %v4602, %v4826
      %v4828 = vpop.f32.mrb[0].mxu0
      %4829 = vmatprep.mubr.f32.mxu0 0.0
      %4830 = vmatmul.mubr.f32.gmra.mrb[0].mxu0 %v3526
      %v4831 = vpop.f32.mrb[0].mxu0
      %v4832 = vadd.f32 %v4607, %v4831
      %v4833 = vpop.f32.mrb[0].mxu0
      %4834 = vmatprep.mubr.f32.mxu0 0.0
      %4835 = vmatmul.mubr.f32.gmra.mrb[0].mxu0 %v3535
      %v4836 = vpop.f32.mrb[0].mxu0
      %v4837 = vadd.f32 %v4612, %v4836
      %v4838 = vpop.f32.mrb[0].mxu0
      %4839 = vmatprep.mubr.f32.mxu0 0.0
      %4840 = vmatmul.mubr.f32.gmra.mrb[0].mxu0 %v3544
      %v4841 = vpop.f32.mrb[0].mxu0
      %v4842 = vadd.f32 %v4617, %v4841
      %v4843 = vpop.f32.mrb[0].mxu0
      %4844 = vmatprep.mubr.f32.mxu0 0.0
      %4845 = vmatmul.mubr.f32.gmra.mrb[0].mxu0 %v3553
      %v4846 = vpop.f32.mrb[0].mxu0
      %v4847 = vadd.f32 %v4622, %v4846
      %v4848 = vpop.f32.mrb[0].mxu0
      %4849 = vmatprep.mubr.f32.mxu0 0.0
      %4850 = vmatmul.mubr.f32.gmra.mrb[0].mxu0 %v3562
      %v4851 = vpop.f32.mrb[0].mxu0
      %v4852 = vadd.f32 %v4627, %v4851
      %v4853 = vpop.f32.mrb[0].mxu0
      %4854 = vmatprep.mubr.f32.mxu0 0.0
      %4855 = vmatmul.mubr.f32.gmra.mrb[0].mxu0 %v3571
      %v4856 = vpop.f32.mrb[0].mxu0
      %v4857 = vadd.f32 %v4632, %v4856
      %v4858 = vpop.f32.mrb[0].mxu0
      %4859 = vmatprep.mubr.f32.mxu0 0.0
      %4860 = vmatmul.mubr.f32.gmra.mrb[0].mxu0 %v3580
      %v4861 = vpop.f32.mrb[0].mxu0
      %v4862 = vadd.f32 %v4637, %v4861
      %v4863 = vpop.f32.mrb[0].mxu0
      %4864 = vmatprep.mubr.f32.mxu0 0.0
      %4865 = vmatmul.mubr.f32.gmra.mrb[0].mxu0 %v3589
      %v4866 = vpop.f32.mrb[0].mxu0
      %v4867 = vadd.f32 %v4642, %v4866
      %v4868 = vpop.f32.mrb[0].mxu0
      %4869 = vmatprep.mubr.f32.mxu0 0.0
      %4870 = vmatmul.mubr.f32.gmra.mrb[0].mxu0 %v3598
      %v4871 = vpop.f32.mrb[0].mxu0
      %v4872 = vadd.f32 %v4647, %v4871
      %v4873 = vpop.f32.mrb[0].mxu0
      %4874 = vdwg.mxu0
      %s4875 = scalar_lea.vmem [#allocation4], 32
      %vm4876 = vcmask 130048
      %4877 = vst.msk [vmem:[%s4875 + $0x8] sm:$0xff] %vm4876, %v4717
      %4878 = vst.msk [vmem:[%s4875 + $0x10] sm:$0xff] %vm4876, %v4722
      %4879 = vst.msk [vmem:[%s4875 + $0x28] sm:$0xff] %vm4876, %v4727
      %4880 = vst.msk [vmem:[%s4875 + $0x30] sm:$0xff] %vm4876, %v4732
      %4881 = vst.msk [vmem:[%s4875 + $0x48] sm:$0xff] %vm4876, %v4737
      %4882 = vst.msk [vmem:[%s4875 + $0x50] sm:$0xff] %vm4876, %v4742
      %4883 = vst.msk [vmem:[%s4875 + $0x68] sm:$0xff] %vm4876, %v4747
      %4884 = vst.msk [vmem:[%s4875 + $0x70] sm:$0xff] %vm4876, %v4752
      %4885 = vst.msk [vmem:[%s4875 + $0x88] sm:$0xff] %vm4876, %v4757
      %4886 = vst.msk [vmem:[%s4875 + $0x90] sm:$0xff] %vm4876, %v4762
      %4887 = vst.msk [vmem:[%s4875 + $0xa8] sm:$0xff] %vm4876, %v4767
      %4888 = vst.msk [vmem:[%s4875 + $0xb0] sm:$0xff] %vm4876, %v4772
      %4889 = vst.msk [vmem:[%s4875 + $0xc8] sm:$0xff] %vm4876, %v4777
      %4890 = vst.msk [vmem:[%s4875 + $0xd0] sm:$0xff] %vm4876, %v4782
      %4891 = vst.msk [vmem:[%s4875 + $0xe8] sm:$0xff] %vm4876, %v4787
      %4892 = vst.msk [vmem:[%s4875 + $0xf0] sm:$0xff] %vm4876, %v4792
      %4893 = vst.msk [vmem:[%s4875 + $0x108] sm:$0xff] %vm4876, %v4797
      %4894 = vst.msk [vmem:[%s4875 + $0x110] sm:$0xff] %vm4876, %v4802
      %4895 = vst.msk [vmem:[%s4875 + $0x128] sm:$0xff] %vm4876, %v4807
      %4896 = vst.msk [vmem:[%s4875 + $0x130] sm:$0xff] %vm4876, %v4812
      %4897 = vst.msk [vmem:[%s4875 + $0x148] sm:$0xff] %vm4876, %v4817
      %4898 = vst.msk [vmem:[%s4875 + $0x150] sm:$0xff] %vm4876, %v4822
      %4899 = vst.msk [vmem:[%s4875 + $0x168] sm:$0xff] %vm4876, %v4827
      %4900 = vst.msk [vmem:[%s4875 + $0x170] sm:$0xff] %vm4876, %v4832
      %4901 = vst.msk [vmem:[%s4875 + $0x188] sm:$0xff] %vm4876, %v4837
      %4902 = vst.msk [vmem:[%s4875 + $0x190] sm:$0xff] %vm4876, %v4842
      %4903 = vst.msk [vmem:[%s4875 + $0x1a8] sm:$0xff] %vm4876, %v4847
      %4904 = vst.msk [vmem:[%s4875 + $0x1b0] sm:$0xff] %vm4876, %v4852
      %4905 = vst.msk [vmem:[%s4875 + $0x1c8] sm:$0xff] %vm4876, %v4857
      %4906 = vst.msk [vmem:[%s4875 + $0x1d0] sm:$0xff] %vm4876, %v4862
      %4907 = vst.msk [vmem:[%s4875 + $0x1e8] sm:$0xff] %vm4876, %v4867
      %4908 = vst.msk [vmem:[%s4875 + $0x1f0] sm:$0xff] %vm4876, %v4872
      %v4909 = vld [vmem:[#allocation4 + $0x7] sm:$0xff]
      %v4910 = vld [vmem:[#allocation4 + $0xf] sm:$0xff]
      %v4911 = vld [vmem:[#allocation4 + $0x27] sm:$0xff]
      %v4912 = vld [vmem:[#allocation4 + $0x2f] sm:$0xff]
      %v4913 = vld [vmem:[#allocation4 + $0x47] sm:$0xff]
      %v4914 = vld [vmem:[#allocation4 + $0x4f] sm:$0xff]
      %v4915 = vld [vmem:[#allocation4 + $0x67] sm:$0xff]
      %v4916 = vld [vmem:[#allocation4 + $0x6f] sm:$0xff]
      %v4917 = vld [vmem:[#allocation4 + $0x87] sm:$0xff]
      %v4918 = vld [vmem:[#allocation4 + $0x8f] sm:$0xff]
      %v4919 = vld [vmem:[#allocation4 + $0xa7] sm:$0xff]
      %v4920 = vld [vmem:[#allocation4 + $0xaf] sm:$0xff]
      %v4921 = vld [vmem:[#allocation4 + $0xc7] sm:$0xff]
      %v4922 = vld [vmem:[#allocation4 + $0xcf] sm:$0xff]
      %v4923 = vld [vmem:[#allocation4 + $0xe7] sm:$0xff]
      %v4924 = vld [vmem:[#allocation4 + $0xef] sm:$0xff]
      %v4925 = vld [vmem:[#allocation4 + $0x107] sm:$0xff]
      %v4926 = vld [vmem:[#allocation4 + $0x10f] sm:$0xff]
      %v4927 = vld [vmem:[#allocation4 + $0x127] sm:$0xff]
      %v4928 = vld [vmem:[#allocation4 + $0x12f] sm:$0xff]
      %v4929 = vld [vmem:[#allocation4 + $0x147] sm:$0xff]
      %v4930 = vld [vmem:[#allocation4 + $0x14f] sm:$0xff]
      %v4931 = vld [vmem:[#allocation4 + $0x167] sm:$0xff]
      %v4932 = vld [vmem:[#allocation4 + $0x16f] sm:$0xff]
      %v4933 = vld [vmem:[#allocation4 + $0x187] sm:$0xff]
      %v4934 = vld [vmem:[#allocation4 + $0x18f] sm:$0xff]
      %v4935 = vld [vmem:[#allocation4 + $0x1a7] sm:$0xff]
      %v4936 = vld [vmem:[#allocation4 + $0x1af] sm:$0xff]
      %v4937 = vld [vmem:[#allocation4 + $0x1c7] sm:$0xff]
      %v4938 = vld [vmem:[#allocation4 + $0x1cf] sm:$0xff]
      %v4939 = vld [vmem:[#allocation4 + $0x1e7] sm:$0xff]
      %v4940 = vld [vmem:[#allocation4 + $0x1ef] sm:$0xff]
      %4941 = vst [vmem:[#allocation5] sm:$0xff] %v4909
      %4942 = vst [vmem:[#allocation5 + $0x48] sm:$0xff] %v4910
      %4943 = vst [vmem:[#allocation5 + $0x90] sm:$0xff] %v4911
      %4944 = vst [vmem:[#allocation5 + $0xd8] sm:$0xff] %v4912
      %4945 = vst [vmem:[#allocation5 + $0x120] sm:$0xff] %v4913
      %4946 = vst [vmem:[#allocation5 + $0x168] sm:$0xff] %v4914
      %4947 = vst [vmem:[#allocation5 + $0x1b0] sm:$0xff] %v4915
      %4948 = vst [vmem:[#allocation5 + $0x1f8] sm:$0xff] %v4916
      %4949 = vst [vmem:[#allocation5 + $0x240] sm:$0xff] %v4917
      %4950 = vst [vmem:[#allocation5 + $0x288] sm:$0xff] %v4918
      %4951 = vst [vmem:[#allocation5 + $0x2d0] sm:$0xff] %v4919
      %4952 = vst [vmem:[#allocation5 + $0x318] sm:$0xff] %v4920
      %4953 = vst [vmem:[#allocation5 + $0x360] sm:$0xff] %v4921
      %4954 = vst [vmem:[#allocation5 + $0x3a8] sm:$0xff] %v4922
      %4955 = vst [vmem:[#allocation5 + $0x3f0] sm:$0xff] %v4923
      %4956 = vst [vmem:[#allocation5 + $0x438] sm:$0xff] %v4924
      %4957 = vst [vmem:[#allocation5 + $0x480] sm:$0xff] %v4925
      %4958 = vst [vmem:[#allocation5 + $0x4c8] sm:$0xff] %v4926
      %4959 = vst [vmem:[#allocation5 + $0x510] sm:$0xff] %v4927
      %4960 = vst [vmem:[#allocation5 + $0x558] sm:$0xff] %v4928
      %4961 = vst [vmem:[#allocation5 + $0x5a0] sm:$0xff] %v4929
      %4962 = vst [vmem:[#allocation5 + $0x5e8] sm:$0xff] %v4930
      %4963 = vst [vmem:[#allocation5 + $0x630] sm:$0xff] %v4931
      %4964 = vst [vmem:[#allocation5 + $0x678] sm:$0xff] %v4932
      %4965 = vst [vmem:[#allocation5 + $0x6c0] sm:$0xff] %v4933
      %4966 = vst [vmem:[#allocation5 + $0x708] sm:$0xff] %v4934
      %4967 = vst [vmem:[#allocation5 + $0x750] sm:$0xff] %v4935
      %4968 = vst [vmem:[#allocation5 + $0x798] sm:$0xff] %v4936
      %4969 = vst [vmem:[#allocation5 + $0x7e0] sm:$0xff] %v4937
      %4970 = vst [vmem:[#allocation5 + $0x828] sm:$0xff] %v4938
      %4971 = vst [vmem:[#allocation5 + $0x870] sm:$0xff] %v4939
      %4972 = vst [vmem:[#allocation5 + $0x8b8] sm:$0xff] %v4940
      %v4973 = vld [vmem:[#allocation4 + $0x8] sm:$0xff]
      %v4974 = vld [vmem:[#allocation4 + $0x10] sm:$0xff]
      %v4975 = vld [vmem:[#allocation4 + $0x28] sm:$0xff]
      %v4976 = vld [vmem:[#allocation4 + $0x30] sm:$0xff]
      %v4977 = vld [vmem:[#allocation4 + $0x48] sm:$0xff]
      %v4978 = vld [vmem:[#allocation4 + $0x50] sm:$0xff]
      %v4979 = vld [vmem:[#allocation4 + $0x68] sm:$0xff]
      %v4980 = vld [vmem:[#allocation4 + $0x70] sm:$0xff]
      %v4981 = vld [vmem:[#allocation4 + $0x88] sm:$0xff]
      %v4982 = vld [vmem:[#allocation4 + $0x90] sm:$0xff]
      %v4983 = vld [vmem:[#allocation4 + $0xa8] sm:$0xff]
      %v4984 = vld [vmem:[#allocation4 + $0xb0] sm:$0xff]
      %v4985 = vld [vmem:[#allocation4 + $0xc8] sm:$0xff]
      %v4986 = vld [vmem:[#allocation4 + $0xd0] sm:$0xff]
      %v4987 = vld [vmem:[#allocation4 + $0xe8] sm:$0xff]
      %v4988 = vld [vmem:[#allocation4 + $0xf0] sm:$0xff]
      %v4989 = vld [vmem:[#allocation4 + $0x108] sm:$0xff]
      %v4990 = vld [vmem:[#allocation4 + $0x110] sm:$0xff]
      %v4991 = vld [vmem:[#allocation4 + $0x128] sm:$0xff]
      %v4992 = vld [vmem:[#allocation4 + $0x130] sm:$0xff]
      %v4993 = vld [vmem:[#allocation4 + $0x148] sm:$0xff]
      %v4994 = vld [vmem:[#allocation4 + $0x150] sm:$0xff]
      %v4995 = vld [vmem:[#allocation4 + $0x168] sm:$0xff]
      %v4996 = vld [vmem:[#allocation4 + $0x170] sm:$0xff]
      %v4997 = vld [vmem:[#allocation4 + $0x188] sm:$0xff]
      %v4998 = vld [vmem:[#allocation4 + $0x190] sm:$0xff]
      %v4999 = vld [vmem:[#allocation4 + $0x1a8] sm:$0xff]
      %v5000 = vld [vmem:[#allocation4 + $0x1b0] sm:$0xff]
      %v5001 = vld [vmem:[#allocation4 + $0x1c8] sm:$0xff]
      %v5002 = vld [vmem:[#allocation4 + $0x1d0] sm:$0xff]
      %v5003 = vld [vmem:[#allocation4 + $0x1e8] sm:$0xff]
      %v5004 = vld [vmem:[#allocation4 + $0x1f0] sm:$0xff]
      %5005 = vst [vmem:[#allocation5 + $0x8] sm:$0xff] %v4973
      %5006 = vst [vmem:[#allocation5 + $0x50] sm:$0xff] %v4974
      %5007 = vst [vmem:[#allocation5 + $0x98] sm:$0xff] %v4975
      %5008 = vst [vmem:[#allocation5 + $0xe0] sm:$0xff] %v4976
      %5009 = vst [vmem:[#allocation5 + $0x128] sm:$0xff] %v4977
      %5010 = vst [vmem:[#allocation5 + $0x170] sm:$0xff] %v4978
      %5011 = vst [vmem:[#allocation5 + $0x1b8] sm:$0xff] %v4979
      %5012 = vst [vmem:[#allocation5 + $0x200] sm:$0xff] %v4980
      %5013 = vst [vmem:[#allocation5 + $0x248] sm:$0xff] %v4981
      %5014 = vst [vmem:[#allocation5 + $0x290] sm:$0xff] %v4982
      %5015 = vst [vmem:[#allocation5 + $0x2d8] sm:$0xff] %v4983
      %5016 = vst [vmem:[#allocation5 + $0x320] sm:$0xff] %v4984
      %5017 = vst [vmem:[#allocation5 + $0x368] sm:$0xff] %v4985
      %5018 = vst [vmem:[#allocation5 + $0x3b0] sm:$0xff] %v4986
      %5019 = vst [vmem:[#allocation5 + $0x3f8] sm:$0xff] %v4987
      %5020 = vst [vmem:[#allocation5 + $0x440] sm:$0xff] %v4988
      %5021 = vst [vmem:[#allocation5 + $0x488] sm:$0xff] %v4989
      %5022 = vst [vmem:[#allocation5 + $0x4d0] sm:$0xff] %v4990
      %5023 = vst [vmem:[#allocation5 + $0x518] sm:$0xff] %v4991
      %5024 = vst [vmem:[#allocation5 + $0x560] sm:$0xff] %v4992
      %5025 = vst [vmem:[#allocation5 + $0x5a8] sm:$0xff] %v4993
      %5026 = vst [vmem:[#allocation5 + $0x5f0] sm:$0xff] %v4994
      %5027 = vst [vmem:[#allocation5 + $0x638] sm:$0xff] %v4995
      %5028 = vst [vmem:[#allocation5 + $0x680] sm:$0xff] %v4996
      %5029 = vst [vmem:[#allocation5 + $0x6c8] sm:$0xff] %v4997
      %5030 = vst [vmem:[#allocation5 + $0x710] sm:$0xff] %v4998
      %5031 = vst [vmem:[#allocation5 + $0x758] sm:$0xff] %v4999
      %5032 = vst [vmem:[#allocation5 + $0x7a0] sm:$0xff] %v5000
      %5033 = vst [vmem:[#allocation5 + $0x7e8] sm:$0xff] %v5001
      %5034 = vst [vmem:[#allocation5 + $0x830] sm:$0xff] %v5002
      %5035 = vst [vmem:[#allocation5 + $0x878] sm:$0xff] %v5003
      %5036 = vst [vmem:[#allocation5 + $0x8c0] sm:$0xff] %v5004
      %v5037 = vld [vmem:[#allocation4 + $0x9] sm:$0xff]
      %v5038 = vld [vmem:[#allocation4 + $0x11] sm:$0xff]
      %v5039 = vld [vmem:[#allocation4 + $0x29] sm:$0xff]
      %v5040 = vld [vmem:[#allocation4 + $0x31] sm:$0xff]
      %v5041 = vld [vmem:[#allocation4 + $0x49] sm:$0xff]
      %v5042 = vld [vmem:[#allocation4 + $0x51] sm:$0xff]
      %v5043 = vld [vmem:[#allocation4 + $0x69] sm:$0xff]
      %v5044 = vld [vmem:[#allocation4 + $0x71] sm:$0xff]
      %v5045 = vld [vmem:[#allocation4 + $0x89] sm:$0xff]
      %v5046 = vld [vmem:[#allocation4 + $0x91] sm:$0xff]
      %v5047 = vld [vmem:[#allocation4 + $0xa9] sm:$0xff]
      %v5048 = vld [vmem:[#allocation4 + $0xb1] sm:$0xff]
      %v5049 = vld [vmem:[#allocation4 + $0xc9] sm:$0xff]
      %v5050 = vld [vmem:[#allocation4 + $0xd1] sm:$0xff]
      %v5051 = vld [vmem:[#allocation4 + $0xe9] sm:$0xff]
      %v5052 = vld [vmem:[#allocation4 + $0xf1] sm:$0xff]
      %v5053 = vld [vmem:[#allocation4 + $0x109] sm:$0xff]
      %v5054 = vld [vmem:[#allocation4 + $0x111] sm:$0xff]
      %v5055 = vld [vmem:[#allocation4 + $0x129] sm:$0xff]
      %v5056 = vld [vmem:[#allocation4 + $0x131] sm:$0xff]
      %v5057 = vld [vmem:[#allocation4 + $0x149] sm:$0xff]
      %v5058 = vld [vmem:[#allocation4 + $0x151] sm:$0xff]
      %v5059 = vld [vmem:[#allocation4 + $0x169] sm:$0xff]
      %v5060 = vld [vmem:[#allocation4 + $0x171] sm:$0xff]
      %v5061 = vld [vmem:[#allocation4 + $0x189] sm:$0xff]
      %v5062 = vld [vmem:[#allocation4 + $0x191] sm:$0xff]
      %v5063 = vld [vmem:[#allocation4 + $0x1a9] sm:$0xff]
      %v5064 = vld [vmem:[#allocation4 + $0x1b1] sm:$0xff]
      %v5065 = vld [vmem:[#allocation4 + $0x1c9] sm:$0xff]
      %v5066 = vld [vmem:[#allocation4 + $0x1d1] sm:$0xff]
      %v5067 = vld [vmem:[#allocation4 + $0x1e9] sm:$0xff]
      %v5068 = vld [vmem:[#allocation4 + $0x1f1] sm:$0xff]
      %5069 = vst [vmem:[#allocation5 + $0x10] sm:$0xff] %v5037
      %5070 = vst [vmem:[#allocation5 + $0x58] sm:$0xff] %v5038
      %5071 = vst [vmem:[#allocation5 + $0xa0] sm:$0xff] %v5039
      %5072 = vst [vmem:[#allocation5 + $0xe8] sm:$0xff] %v5040
      %5073 = vst [vmem:[#allocation5 + $0x130] sm:$0xff] %v5041
      %5074 = vst [vmem:[#allocation5 + $0x178] sm:$0xff] %v5042
      %5075 = vst [vmem:[#allocation5 + $0x1c0] sm:$0xff] %v5043
      %5076 = vst [vmem:[#allocation5 + $0x208] sm:$0xff] %v5044
      %5077 = vst [vmem:[#allocation5 + $0x250] sm:$0xff] %v5045
      %5078 = vst [vmem:[#allocation5 + $0x298] sm:$0xff] %v5046
      %5079 = vst [vmem:[#allocation5 + $0x2e0] sm:$0xff] %v5047
      %5080 = vst [vmem:[#allocation5 + $0x328] sm:$0xff] %v5048
      %5081 = vst [vmem:[#allocation5 + $0x370] sm:$0xff] %v5049
      %5082 = vst [vmem:[#allocation5 + $0x3b8] sm:$0xff] %v5050
      %5083 = vst [vmem:[#allocation5 + $0x400] sm:$0xff] %v5051
      %5084 = vst [vmem:[#allocation5 + $0x448] sm:$0xff] %v5052
      %5085 = vst [vmem:[#allocation5 + $0x490] sm:$0xff] %v5053
      %5086 = vst [vmem:[#allocation5 + $0x4d8] sm:$0xff] %v5054
      %5087 = vst [vmem:[#allocation5 + $0x520] sm:$0xff] %v5055
      %5088 = vst [vmem:[#allocation5 + $0x568] sm:$0xff] %v5056
      %5089 = vst [vmem:[#allocation5 + $0x5b0] sm:$0xff] %v5057
      %5090 = vst [vmem:[#allocation5 + $0x5f8] sm:$0xff] %v5058
      %5091 = vst [vmem:[#allocation5 + $0x640] sm:$0xff] %v5059
      %5092 = vst [vmem:[#allocation5 + $0x688] sm:$0xff] %v5060
      %5093 = vst [vmem:[#allocation5 + $0x6d0] sm:$0xff] %v5061
      %5094 = vst [vmem:[#allocation5 + $0x718] sm:$0xff] %v5062
      %5095 = vst [vmem:[#allocation5 + $0x760] sm:$0xff] %v5063
      %5096 = vst [vmem:[#allocation5 + $0x7a8] sm:$0xff] %v5064
      %5097 = vst [vmem:[#allocation5 + $0x7f0] sm:$0xff] %v5065
      %5098 = vst [vmem:[#allocation5 + $0x838] sm:$0xff] %v5066
      %5099 = vst [vmem:[#allocation5 + $0x880] sm:$0xff] %v5067
      %5100 = vst [vmem:[#allocation5 + $0x8c8] sm:$0xff] %v5068
      %v5101 = vld [vmem:[%s4875 + $0x7] sm:$0xff]
      %v5102 = vld [vmem:[%s4875 + $0xf] sm:$0xff]
      %v5103 = vld [vmem:[%s4875 + $0x27] sm:$0xff]
      %v5104 = vld [vmem:[%s4875 + $0x2f] sm:$0xff]
      %v5105 = vld [vmem:[%s4875 + $0x47] sm:$0xff]
      %v5106 = vld [vmem:[%s4875 + $0x4f] sm:$0xff]
      %v5107 = vld [vmem:[%s4875 + $0x67] sm:$0xff]
      %v5108 = vld [vmem:[%s4875 + $0x6f] sm:$0xff]
      %v5109 = vld [vmem:[%s4875 + $0x87] sm:$0xff]
      %v5110 = vld [vmem:[%s4875 + $0x8f] sm:$0xff]
      %v5111 = vld [vmem:[%s4875 + $0xa7] sm:$0xff]
      %v5112 = vld [vmem:[%s4875 + $0xaf] sm:$0xff]
      %v5113 = vld [vmem:[%s4875 + $0xc7] sm:$0xff]
      %v5114 = vld [vmem:[%s4875 + $0xcf] sm:$0xff]
      %v5115 = vld [vmem:[%s4875 + $0xe7] sm:$0xff]
      %v5116 = vld [vmem:[%s4875 + $0xef] sm:$0xff]
      %v5117 = vld [vmem:[%s4875 + $0x107] sm:$0xff]
      %v5118 = vld [vmem:[%s4875 + $0x10f] sm:$0xff]
      %v5119 = vld [vmem:[%s4875 + $0x127] sm:$0xff]
      %v5120 = vld [vmem:[%s4875 + $0x12f] sm:$0xff]
      %v5121 = vld [vmem:[%s4875 + $0x147] sm:$0xff]
      %v5122 = vld [vmem:[%s4875 + $0x14f] sm:$0xff]
      %v5123 = vld [vmem:[%s4875 + $0x167] sm:$0xff]
      %v5124 = vld [vmem:[%s4875 + $0x16f] sm:$0xff]
      %v5125 = vld [vmem:[%s4875 + $0x187] sm:$0xff]
      %v5126 = vld [vmem:[%s4875 + $0x18f] sm:$0xff]
      %v5127 = vld [vmem:[%s4875 + $0x1a7] sm:$0xff]
      %v5128 = vld [vmem:[%s4875 + $0x1af] sm:$0xff]
      %v5129 = vld [vmem:[%s4875 + $0x1c7] sm:$0xff]
      %v5130 = vld [vmem:[%s4875 + $0x1cf] sm:$0xff]
      %v5131 = vld [vmem:[%s4875 + $0x1e7] sm:$0xff]
      %v5132 = vld [vmem:[%s4875 + $0x1ef] sm:$0xff]
      %5133 = vst [vmem:[#allocation5 + $0x18] sm:$0xff] %v5101
      %5134 = vst [vmem:[#allocation5 + $0x60] sm:$0xff] %v5102
      %5135 = vst [vmem:[#allocation5 + $0xa8] sm:$0xff] %v5103
      %5136 = vst [vmem:[#allocation5 + $0xf0] sm:$0xff] %v5104
      %5137 = vst [vmem:[#allocation5 + $0x138] sm:$0xff] %v5105
      %5138 = vst [vmem:[#allocation5 + $0x180] sm:$0xff] %v5106
      %5139 = vst [vmem:[#allocation5 + $0x1c8] sm:$0xff] %v5107
      %5140 = vst [vmem:[#allocation5 + $0x210] sm:$0xff] %v5108
      %5141 = vst [vmem:[#allocation5 + $0x258] sm:$0xff] %v5109
      %5142 = vst [vmem:[#allocation5 + $0x2a0] sm:$0xff] %v5110
      %5143 = vst [vmem:[#allocation5 + $0x2e8] sm:$0xff] %v5111
      %5144 = vst [vmem:[#allocation5 + $0x330] sm:$0xff] %v5112
      %5145 = vst [vmem:[#allocation5 + $0x378] sm:$0xff] %v5113
      %5146 = vst [vmem:[#allocation5 + $0x3c0] sm:$0xff] %v5114
      %5147 = vst [vmem:[#allocation5 + $0x408] sm:$0xff] %v5115
      %5148 = vst [vmem:[#allocation5 + $0x450] sm:$0xff] %v5116
      %5149 = vst [vmem:[#allocation5 + $0x498] sm:$0xff] %v5117
      %5150 = vst [vmem:[#allocation5 + $0x4e0] sm:$0xff] %v5118
      %5151 = vst [vmem:[#allocation5 + $0x528] sm:$0xff] %v5119
      %5152 = vst [vmem:[#allocation5 + $0x570] sm:$0xff] %v5120
      %5153 = vst [vmem:[#allocation5 + $0x5b8] sm:$0xff] %v5121
      %5154 = vst [vmem:[#allocation5 + $0x600] sm:$0xff] %v5122
      %5155 = vst [vmem:[#allocation5 + $0x648] sm:$0xff] %v5123
      %5156 = vst [vmem:[#allocation5 + $0x690] sm:$0xff] %v5124
      %5157 = vst [vmem:[#allocation5 + $0x6d8] sm:$0xff] %v5125
      %5158 = vst [vmem:[#allocation5 + $0x720] sm:$0xff] %v5126
      %5159 = vst [vmem:[#allocation5 + $0x768] sm:$0xff] %v5127
      %5160 = vst [vmem:[#allocation5 + $0x7b0] sm:$0xff] %v5128
      %5161 = vst [vmem:[#allocation5 + $0x7f8] sm:$0xff] %v5129
      %5162 = vst [vmem:[#allocation5 + $0x840] sm:$0xff] %v5130
      %5163 = vst [vmem:[#allocation5 + $0x888] sm:$0xff] %v5131
      %5164 = vst [vmem:[#allocation5 + $0x8d0] sm:$0xff] %v5132
      %v5165 = vld [vmem:[%s4875 + $0x8] sm:$0xff]
      %v5166 = vld [vmem:[%s4875 + $0x10] sm:$0xff]
      %v5167 = vld [vmem:[%s4875 + $0x28] sm:$0xff]
      %v5168 = vld [vmem:[%s4875 + $0x30] sm:$0xff]
      %v5169 = vld [vmem:[%s4875 + $0x48] sm:$0xff]
      %v5170 = vld [vmem:[%s4875 + $0x50] sm:$0xff]
      %v5171 = vld [vmem:[%s4875 + $0x68] sm:$0xff]
      %v5172 = vld [vmem:[%s4875 + $0x70] sm:$0xff]
      %v5173 = vld [vmem:[%s4875 + $0x88] sm:$0xff]
      %v5174 = vld [vmem:[%s4875 + $0x90] sm:$0xff]
      %v5175 = vld [vmem:[%s4875 + $0xa8] sm:$0xff]
      %v5176 = vld [vmem:[%s4875 + $0xb0] sm:$0xff]
      %v5177 = vld [vmem:[%s4875 + $0xc8] sm:$0xff]
      %v5178 = vld [vmem:[%s4875 + $0xd0] sm:$0xff]
      %v5179 = vld [vmem:[%s4875 + $0xe8] sm:$0xff]
      %v5180 = vld [vmem:[%s4875 + $0xf0] sm:$0xff]
      %v5181 = vld [vmem:[%s4875 + $0x108] sm:$0xff]
      %v5182 = vld [vmem:[%s4875 + $0x110] sm:$0xff]
      %v5183 = vld [vmem:[%s4875 + $0x128] sm:$0xff]
      %v5184 = vld [vmem:[%s4875 + $0x130] sm:$0xff]
      %v5185 = vld [vmem:[%s4875 + $0x148] sm:$0xff]
      %v5186 = vld [vmem:[%s4875 + $0x150] sm:$0xff]
      %v5187 = vld [vmem:[%s4875 + $0x168] sm:$0xff]
      %v5188 = vld [vmem:[%s4875 + $0x170] sm:$0xff]
      %v5189 = vld [vmem:[%s4875 + $0x188] sm:$0xff]
      %v5190 = vld [vmem:[%s4875 + $0x190] sm:$0xff]
      %v5191 = vld [vmem:[%s4875 + $0x1a8] sm:$0xff]
      %v5192 = vld [vmem:[%s4875 + $0x1b0] sm:$0xff]
      %v5193 = vld [vmem:[%s4875 + $0x1c8] sm:$0xff]
      %v5194 = vld [vmem:[%s4875 + $0x1d0] sm:$0xff]
      %v5195 = vld [vmem:[%s4875 + $0x1e8] sm:$0xff]
      %v5196 = vld [vmem:[%s4875 + $0x1f0] sm:$0xff]
      %5197 = vst [vmem:[#allocation5 + $0x20] sm:$0xff] %v5165
      %5198 = vst [vmem:[#allocation5 + $0x68] sm:$0xff] %v5166
      %5199 = vst [vmem:[#allocation5 + $0xb0] sm:$0xff] %v5167
      %5200 = vst [vmem:[#allocation5 + $0xf8] sm:$0xff] %v5168
      %5201 = vst [vmem:[#allocation5 + $0x140] sm:$0xff] %v5169
      %5202 = vst [vmem:[#allocation5 + $0x188] sm:$0xff] %v5170
      %5203 = vst [vmem:[#allocation5 + $0x1d0] sm:$0xff] %v5171
      %5204 = vst [vmem:[#allocation5 + $0x218] sm:$0xff] %v5172
      %5205 = vst [vmem:[#allocation5 + $0x260] sm:$0xff] %v5173
      %5206 = vst [vmem:[#allocation5 + $0x2a8] sm:$0xff] %v5174
      %5207 = vst [vmem:[#allocation5 + $0x2f0] sm:$0xff] %v5175
      %5208 = vst [vmem:[#allocation5 + $0x338] sm:$0xff] %v5176
      %5209 = vst [vmem:[#allocation5 + $0x380] sm:$0xff] %v5177
      %5210 = vst [vmem:[#allocation5 + $0x3c8] sm:$0xff] %v5178
      %5211 = vst [vmem:[#allocation5 + $0x410] sm:$0xff] %v5179
      %5212 = vst [vmem:[#allocation5 + $0x458] sm:$0xff] %v5180
      %5213 = vst [vmem:[#allocation5 + $0x4a0] sm:$0xff] %v5181
      %5214 = vst [vmem:[#allocation5 + $0x4e8] sm:$0xff] %v5182
      %5215 = vst [vmem:[#allocation5 + $0x530] sm:$0xff] %v5183
      %5216 = vst [vmem:[#allocation5 + $0x578] sm:$0xff] %v5184
      %5217 = vst [vmem:[#allocation5 + $0x5c0] sm:$0xff] %v5185
      %5218 = vst [vmem:[#allocation5 + $0x608] sm:$0xff] %v5186
      %5219 = vst [vmem:[#allocation5 + $0x650] sm:$0xff] %v5187
      %5220 = vst [vmem:[#allocation5 + $0x698] sm:$0xff] %v5188
      %5221 = vst [vmem:[#allocation5 + $0x6e0] sm:$0xff] %v5189
      %5222 = vst [vmem:[#allocation5 + $0x728] sm:$0xff] %v5190
      %5223 = vst [vmem:[#allocation5 + $0x770] sm:$0xff] %v5191
      %5224 = vst [vmem:[#allocation5 + $0x7b8] sm:$0xff] %v5192
      %5225 = vst [vmem:[#allocation5 + $0x800] sm:$0xff] %v5193
      %5226 = vst [vmem:[#allocation5 + $0x848] sm:$0xff] %v5194
      %5227 = vst [vmem:[#allocation5 + $0x890] sm:$0xff] %v5195
      %5228 = vst [vmem:[#allocation5 + $0x8d8] sm:$0xff] %v5196
      %v5229 = vld [vmem:[%s4875 + $0x9] sm:$0xff]
      %v5230 = vld [vmem:[%s4875 + $0x11] sm:$0xff]
      %v5231 = vld [vmem:[%s4875 + $0x29] sm:$0xff]
      %v5232 = vld [vmem:[%s4875 + $0x31] sm:$0xff]
      %v5233 = vld [vmem:[%s4875 + $0x49] sm:$0xff]
      %v5234 = vld [vmem:[%s4875 + $0x51] sm:$0xff]
      %v5235 = vld [vmem:[%s4875 + $0x69] sm:$0xff]
      %v5236 = vld [vmem:[%s4875 + $0x71] sm:$0xff]
      %v5237 = vld [vmem:[%s4875 + $0x89] sm:$0xff]
      %v5238 = vld [vmem:[%s4875 + $0x91] sm:$0xff]
      %v5239 = vld [vmem:[%s4875 + $0xa9] sm:$0xff]
      %v5240 = vld [vmem:[%s4875 + $0xb1] sm:$0xff]
      %v5241 = vld [vmem:[%s4875 + $0xc9] sm:$0xff]
      %v5242 = vld [vmem:[%s4875 + $0xd1] sm:$0xff]
      %v5243 = vld [vmem:[%s4875 + $0xe9] sm:$0xff]
      %v5244 = vld [vmem:[%s4875 + $0xf1] sm:$0xff]
      %v5245 = vld [vmem:[%s4875 + $0x109] sm:$0xff]
      %v5246 = vld [vmem:[%s4875 + $0x111] sm:$0xff]
      %v5247 = vld [vmem:[%s4875 + $0x129] sm:$0xff]
      %v5248 = vld [vmem:[%s4875 + $0x131] sm:$0xff]
      %v5249 = vld [vmem:[%s4875 + $0x149] sm:$0xff]
      %v5250 = vld [vmem:[%s4875 + $0x151] sm:$0xff]
      %v5251 = vld [vmem:[%s4875 + $0x169] sm:$0xff]
      %v5252 = vld [vmem:[%s4875 + $0x171] sm:$0xff]
      %v5253 = vld [vmem:[%s4875 + $0x189] sm:$0xff]
      %v5254 = vld [vmem:[%s4875 + $0x191] sm:$0xff]
      %v5255 = vld [vmem:[%s4875 + $0x1a9] sm:$0xff]
      %v5256 = vld [vmem:[%s4875 + $0x1b1] sm:$0xff]
      %v5257 = vld [vmem:[%s4875 + $0x1c9] sm:$0xff]
      %v5258 = vld [vmem:[%s4875 + $0x1d1] sm:$0xff]
      %v5259 = vld [vmem:[%s4875 + $0x1e9] sm:$0xff]
      %v5260 = vld [vmem:[%s4875 + $0x1f1] sm:$0xff]
      %5261 = vst [vmem:[#allocation5 + $0x28] sm:$0xff] %v5229
      %5262 = vst [vmem:[#allocation5 + $0x70] sm:$0xff] %v5230
      %5263 = vst [vmem:[#allocation5 + $0xb8] sm:$0xff] %v5231
      %5264 = vst [vmem:[#allocation5 + $0x100] sm:$0xff] %v5232
      %5265 = vst [vmem:[#allocation5 + $0x148] sm:$0xff] %v5233
      %5266 = vst [vmem:[#allocation5 + $0x190] sm:$0xff] %v5234
      %5267 = vst [vmem:[#allocation5 + $0x1d8] sm:$0xff] %v5235
      %5268 = vst [vmem:[#allocation5 + $0x220] sm:$0xff] %v5236
      %5269 = vst [vmem:[#allocation5 + $0x268] sm:$0xff] %v5237
      %5270 = vst [vmem:[#allocation5 + $0x2b0] sm:$0xff] %v5238
      %5271 = vst [vmem:[#allocation5 + $0x2f8] sm:$0xff] %v5239
      %5272 = vst [vmem:[#allocation5 + $0x340] sm:$0xff] %v5240
      %5273 = vst [vmem:[#allocation5 + $0x388] sm:$0xff] %v5241
      %5274 = vst [vmem:[#allocation5 + $0x3d0] sm:$0xff] %v5242
      %5275 = vst [vmem:[#allocation5 + $0x418] sm:$0xff] %v5243
      %5276 = vst [vmem:[#allocation5 + $0x460] sm:$0xff] %v5244
      %5277 = vst [vmem:[#allocation5 + $0x4a8] sm:$0xff] %v5245
      %5278 = vst [vmem:[#allocation5 + $0x4f0] sm:$0xff] %v5246
      %5279 = vst [vmem:[#allocation5 + $0x538] sm:$0xff] %v5247
      %5280 = vst [vmem:[#allocation5 + $0x580] sm:$0xff] %v5248
      %5281 = vst [vmem:[#allocation5 + $0x5c8] sm:$0xff] %v5249
      %5282 = vst [vmem:[#allocation5 + $0x610] sm:$0xff] %v5250
      %5283 = vst [vmem:[#allocation5 + $0x658] sm:$0xff] %v5251
      %5284 = vst [vmem:[#allocation5 + $0x6a0] sm:$0xff] %v5252
      %5285 = vst [vmem:[#allocation5 + $0x6e8] sm:$0xff] %v5253
      %5286 = vst [vmem:[#allocation5 + $0x730] sm:$0xff] %v5254
      %5287 = vst [vmem:[#allocation5 + $0x778] sm:$0xff] %v5255
      %5288 = vst [vmem:[#allocation5 + $0x7c0] sm:$0xff] %v5256
      %5289 = vst [vmem:[#allocation5 + $0x808] sm:$0xff] %v5257
      %5290 = vst [vmem:[#allocation5 + $0x850] sm:$0xff] %v5258
      %5291 = vst [vmem:[#allocation5 + $0x898] sm:$0xff] %v5259
      %5292 = vst [vmem:[#allocation5 + $0x8e0] sm:$0xff] %v5260
      %s5293 = scalar_lea.vmem [#allocation4], 64
      %v5294 = vld [vmem:[%s5293 + $0x7] sm:$0xff]
      %v5295 = vld [vmem:[%s5293 + $0xf] sm:$0xff]
      %v5296 = vld [vmem:[%s5293 + $0x27] sm:$0xff]
      %v5297 = vld [vmem:[%s5293 + $0x2f] sm:$0xff]
      %v5298 = vld [vmem:[%s5293 + $0x47] sm:$0xff]
      %v5299 = vld [vmem:[%s5293 + $0x4f] sm:$0xff]
      %v5300 = vld [vmem:[%s5293 + $0x67] sm:$0xff]
      %v5301 = vld [vmem:[%s5293 + $0x6f] sm:$0xff]
      %v5302 = vld [vmem:[%s5293 + $0x87] sm:$0xff]
      %v5303 = vld [vmem:[%s5293 + $0x8f] sm:$0xff]
      %v5304 = vld [vmem:[%s5293 + $0xa7] sm:$0xff]
      %v5305 = vld [vmem:[%s5293 + $0xaf] sm:$0xff]
      %v5306 = vld [vmem:[%s5293 + $0xc7] sm:$0xff]
      %v5307 = vld [vmem:[%s5293 + $0xcf] sm:$0xff]
      %v5308 = vld [vmem:[%s5293 + $0xe7] sm:$0xff]
      %v5309 = vld [vmem:[%s5293 + $0xef] sm:$0xff]
      %v5310 = vld [vmem:[%s5293 + $0x107] sm:$0xff]
      %v5311 = vld [vmem:[%s5293 + $0x10f] sm:$0xff]
      %v5312 = vld [vmem:[%s5293 + $0x127] sm:$0xff]
      %v5313 = vld [vmem:[%s5293 + $0x12f] sm:$0xff]
      %v5314 = vld [vmem:[%s5293 + $0x147] sm:$0xff]
      %v5315 = vld [vmem:[%s5293 + $0x14f] sm:$0xff]
      %v5316 = vld [vmem:[%s5293 + $0x167] sm:$0xff]
      %v5317 = vld [vmem:[%s5293 + $0x16f] sm:$0xff]
      %v5318 = vld [vmem:[%s5293 + $0x187] sm:$0xff]
      %v5319 = vld [vmem:[%s5293 + $0x18f] sm:$0xff]
      %v5320 = vld [vmem:[%s5293 + $0x1a7] sm:$0xff]
      %v5321 = vld [vmem:[%s5293 + $0x1af] sm:$0xff]
      %v5322 = vld [vmem:[%s5293 + $0x1c7] sm:$0xff]
      %v5323 = vld [vmem:[%s5293 + $0x1cf] sm:$0xff]
      %v5324 = vld [vmem:[%s5293 + $0x1e7] sm:$0xff]
      %v5325 = vld [vmem:[%s5293 + $0x1ef] sm:$0xff]
      %5326 = vst [vmem:[#allocation5 + $0x30] sm:$0xff] %v5294
      %5327 = vst [vmem:[#allocation5 + $0x78] sm:$0xff] %v5295
      %5328 = vst [vmem:[#allocation5 + $0xc0] sm:$0xff] %v5296
      %5329 = vst [vmem:[#allocation5 + $0x108] sm:$0xff] %v5297
      %5330 = vst [vmem:[#allocation5 + $0x150] sm:$0xff] %v5298
      %5331 = vst [vmem:[#allocation5 + $0x198] sm:$0xff] %v5299
      %5332 = vst [vmem:[#allocation5 + $0x1e0] sm:$0xff] %v5300
      %5333 = vst [vmem:[#allocation5 + $0x228] sm:$0xff] %v5301
      %5334 = vst [vmem:[#allocation5 + $0x270] sm:$0xff] %v5302
      %5335 = vst [vmem:[#allocation5 + $0x2b8] sm:$0xff] %v5303
      %5336 = vst [vmem:[#allocation5 + $0x300] sm:$0xff] %v5304
      %5337 = vst [vmem:[#allocation5 + $0x348] sm:$0xff] %v5305
      %5338 = vst [vmem:[#allocation5 + $0x390] sm:$0xff] %v5306
      %5339 = vst [vmem:[#allocation5 + $0x3d8] sm:$0xff] %v5307
      %5340 = vst [vmem:[#allocation5 + $0x420] sm:$0xff] %v5308
      %5341 = vst [vmem:[#allocation5 + $0x468] sm:$0xff] %v5309
      %5342 = vst [vmem:[#allocation5 + $0x4b0] sm:$0xff] %v5310
      %5343 = vst [vmem:[#allocation5 + $0x4f8] sm:$0xff] %v5311
      %5344 = vst [vmem:[#allocation5 + $0x540] sm:$0xff] %v5312
      %5345 = vst [vmem:[#allocation5 + $0x588] sm:$0xff] %v5313
      %5346 = vst [vmem:[#allocation5 + $0x5d0] sm:$0xff] %v5314
      %5347 = vst [vmem:[#allocation5 + $0x618] sm:$0xff] %v5315
      %5348 = vst [vmem:[#allocation5 + $0x660] sm:$0xff] %v5316
      %5349 = vst [vmem:[#allocation5 + $0x6a8] sm:$0xff] %v5317
      %5350 = vst [vmem:[#allocation5 + $0x6f0] sm:$0xff] %v5318
      %5351 = vst [vmem:[#allocation5 + $0x738] sm:$0xff] %v5319
      %5352 = vst [vmem:[#allocation5 + $0x780] sm:$0xff] %v5320
      %5353 = vst [vmem:[#allocation5 + $0x7c8] sm:$0xff] %v5321
      %5354 = vst [vmem:[#allocation5 + $0x810] sm:$0xff] %v5322
      %5355 = vst [vmem:[#allocation5 + $0x858] sm:$0xff] %v5323
      %5356 = vst [vmem:[#allocation5 + $0x8a0] sm:$0xff] %v5324
      %5357 = vst [vmem:[#allocation5 + $0x8e8] sm:$0xff] %v5325
      %v5358 = vld [vmem:[%s5293 + $0x8] sm:$0xff]
      %v5359 = vld [vmem:[%s5293 + $0x10] sm:$0xff]
      %v5360 = vld [vmem:[%s5293 + $0x28] sm:$0xff]
      %v5361 = vld [vmem:[%s5293 + $0x30] sm:$0xff]
      %v5362 = vld [vmem:[%s5293 + $0x48] sm:$0xff]
      %v5363 = vld [vmem:[%s5293 + $0x50] sm:$0xff]
      %v5364 = vld [vmem:[%s5293 + $0x68] sm:$0xff]
      %v5365 = vld [vmem:[%s5293 + $0x70] sm:$0xff]
      %v5366 = vld [vmem:[%s5293 + $0x88] sm:$0xff]
      %v5367 = vld [vmem:[%s5293 + $0x90] sm:$0xff]
      %v5368 = vld [vmem:[%s5293 + $0xa8] sm:$0xff]
      %v5369 = vld [vmem:[%s5293 + $0xb0] sm:$0xff]
      %v5370 = vld [vmem:[%s5293 + $0xc8] sm:$0xff]
      %v5371 = vld [vmem:[%s5293 + $0xd0] sm:$0xff]
      %v5372 = vld [vmem:[%s5293 + $0xe8] sm:$0xff]
      %v5373 = vld [vmem:[%s5293 + $0xf0] sm:$0xff]
      %v5374 = vld [vmem:[%s5293 + $0x108] sm:$0xff]
      %v5375 = vld [vmem:[%s5293 + $0x110] sm:$0xff]
      %v5376 = vld [vmem:[%s5293 + $0x128] sm:$0xff]
      %v5377 = vld [vmem:[%s5293 + $0x130] sm:$0xff]
      %v5378 = vld [vmem:[%s5293 + $0x148] sm:$0xff]
      %v5379 = vld [vmem:[%s5293 + $0x150] sm:$0xff]
      %v5380 = vld [vmem:[%s5293 + $0x168] sm:$0xff]
      %v5381 = vld [vmem:[%s5293 + $0x170] sm:$0xff]
      %v5382 = vld [vmem:[%s5293 + $0x188] sm:$0xff]
      %v5383 = vld [vmem:[%s5293 + $0x190] sm:$0xff]
      %v5384 = vld [vmem:[%s5293 + $0x1a8] sm:$0xff]
      %v5385 = vld [vmem:[%s5293 + $0x1b0] sm:$0xff]
      %v5386 = vld [vmem:[%s5293 + $0x1c8] sm:$0xff]
      %v5387 = vld [vmem:[%s5293 + $0x1d0] sm:$0xff]
      %v5388 = vld [vmem:[%s5293 + $0x1e8] sm:$0xff]
      %v5389 = vld [vmem:[%s5293 + $0x1f0] sm:$0xff]
      %5390 = vst [vmem:[#allocation5 + $0x38] sm:$0xff] %v5358
      %5391 = vst [vmem:[#allocation5 + $0x80] sm:$0xff] %v5359
      %5392 = vst [vmem:[#allocation5 + $0xc8] sm:$0xff] %v5360
      %5393 = vst [vmem:[#allocation5 + $0x110] sm:$0xff] %v5361
      %5394 = vst [vmem:[#allocation5 + $0x158] sm:$0xff] %v5362
      %5395 = vst [vmem:[#allocation5 + $0x1a0] sm:$0xff] %v5363
      %5396 = vst [vmem:[#allocation5 + $0x1e8] sm:$0xff] %v5364
      %5397 = vst [vmem:[#allocation5 + $0x230] sm:$0xff] %v5365
      %5398 = vst [vmem:[#allocation5 + $0x278] sm:$0xff] %v5366
      %5399 = vst [vmem:[#allocation5 + $0x2c0] sm:$0xff] %v5367
      %5400 = vst [vmem:[#allocation5 + $0x308] sm:$0xff] %v5368
      %5401 = vst [vmem:[#allocation5 + $0x350] sm:$0xff] %v5369
      %5402 = vst [vmem:[#allocation5 + $0x398] sm:$0xff] %v5370
      %5403 = vst [vmem:[#allocation5 + $0x3e0] sm:$0xff] %v5371
      %5404 = vst [vmem:[#allocation5 + $0x428] sm:$0xff] %v5372
      %5405 = vst [vmem:[#allocation5 + $0x470] sm:$0xff] %v5373
      %5406 = vst [vmem:[#allocation5 + $0x4b8] sm:$0xff] %v5374
      %5407 = vst [vmem:[#allocation5 + $0x500] sm:$0xff] %v5375
      %5408 = vst [vmem:[#allocation5 + $0x548] sm:$0xff] %v5376
      %5409 = vst [vmem:[#allocation5 + $0x590] sm:$0xff] %v5377
      %5410 = vst [vmem:[#allocation5 + $0x5d8] sm:$0xff] %v5378
      %5411 = vst [vmem:[#allocation5 + $0x620] sm:$0xff] %v5379
      %5412 = vst [vmem:[#allocation5 + $0x668] sm:$0xff] %v5380
      %5413 = vst [vmem:[#allocation5 + $0x6b0] sm:$0xff] %v5381
      %5414 = vst [vmem:[#allocation5 + $0x6f8] sm:$0xff] %v5382
      %5415 = vst [vmem:[#allocation5 + $0x740] sm:$0xff] %v5383
      %5416 = vst [vmem:[#allocation5 + $0x788] sm:$0xff] %v5384
      %5417 = vst [vmem:[#allocation5 + $0x7d0] sm:$0xff] %v5385
      %5418 = vst [vmem:[#allocation5 + $0x818] sm:$0xff] %v5386
      %5419 = vst [vmem:[#allocation5 + $0x860] sm:$0xff] %v5387
      %5420 = vst [vmem:[#allocation5 + $0x8a8] sm:$0xff] %v5388
      %5421 = vst [vmem:[#allocation5 + $0x8f0] sm:$0xff] %v5389
      %v5422 = vld [vmem:[%s5293 + $0x9] sm:$0xff]
      %v5423 = vld [vmem:[%s5293 + $0x11] sm:$0xff]
      %v5424 = vld [vmem:[%s5293 + $0x29] sm:$0xff]
      %v5425 = vld [vmem:[%s5293 + $0x31] sm:$0xff]
      %v5426 = vld [vmem:[%s5293 + $0x49] sm:$0xff]
      %v5427 = vld [vmem:[%s5293 + $0x51] sm:$0xff]
      %v5428 = vld [vmem:[%s5293 + $0x69] sm:$0xff]
      %v5429 = vld [vmem:[%s5293 + $0x71] sm:$0xff]
      %v5430 = vld [vmem:[%s5293 + $0x89] sm:$0xff]
      %v5431 = vld [vmem:[%s5293 + $0x91] sm:$0xff]
      %v5432 = vld [vmem:[%s5293 + $0xa9] sm:$0xff]
      %v5433 = vld [vmem:[%s5293 + $0xb1] sm:$0xff]
      %v5434 = vld [vmem:[%s5293 + $0xc9] sm:$0xff]
      %v5435 = vld [vmem:[%s5293 + $0xd1] sm:$0xff]
      %v5436 = vld [vmem:[%s5293 + $0xe9] sm:$0xff]
      %v5437 = vld [vmem:[%s5293 + $0xf1] sm:$0xff]
      %v5438 = vld [vmem:[%s5293 + $0x109] sm:$0xff]
      %v5439 = vld [vmem:[%s5293 + $0x111] sm:$0xff]
      %v5440 = vld [vmem:[%s5293 + $0x129] sm:$0xff]
      %v5441 = vld [vmem:[%s5293 + $0x131] sm:$0xff]
      %v5442 = vld [vmem:[%s5293 + $0x149] sm:$0xff]
      %v5443 = vld [vmem:[%s5293 + $0x151] sm:$0xff]
      %v5444 = vld [vmem:[%s5293 + $0x169] sm:$0xff]
      %v5445 = vld [vmem:[%s5293 + $0x171] sm:$0xff]
      %v5446 = vld [vmem:[%s5293 + $0x189] sm:$0xff]
      %v5447 = vld [vmem:[%s5293 + $0x191] sm:$0xff]
      %v5448 = vld [vmem:[%s5293 + $0x1a9] sm:$0xff]
      %v5449 = vld [vmem:[%s5293 + $0x1b1] sm:$0xff]
      %v5450 = vld [vmem:[%s5293 + $0x1c9] sm:$0xff]
      %v5451 = vld [vmem:[%s5293 + $0x1d1] sm:$0xff]
      %v5452 = vld [vmem:[%s5293 + $0x1e9] sm:$0xff]
      %v5453 = vld [vmem:[%s5293 + $0x1f1] sm:$0xff]
      %5454 = vst [vmem:[#allocation5 + $0x40] sm:$0xff] %v5422
      %5455 = vst [vmem:[#allocation5 + $0x88] sm:$0xff] %v5423
      %5456 = vst [vmem:[#allocation5 + $0xd0] sm:$0xff] %v5424
      %5457 = vst [vmem:[#allocation5 + $0x118] sm:$0xff] %v5425
      %5458 = vst [vmem:[#allocation5 + $0x160] sm:$0xff] %v5426
      %5459 = vst [vmem:[#allocation5 + $0x1a8] sm:$0xff] %v5427
      %5460 = vst [vmem:[#allocation5 + $0x1f0] sm:$0xff] %v5428
      %5461 = vst [vmem:[#allocation5 + $0x238] sm:$0xff] %v5429
      %5462 = vst [vmem:[#allocation5 + $0x280] sm:$0xff] %v5430
      %5463 = vst [vmem:[#allocation5 + $0x2c8] sm:$0xff] %v5431
      %5464 = vst [vmem:[#allocation5 + $0x310] sm:$0xff] %v5432
      %5465 = vst [vmem:[#allocation5 + $0x358] sm:$0xff] %v5433
      %5466 = vst [vmem:[#allocation5 + $0x3a0] sm:$0xff] %v5434
      %5467 = vst [vmem:[#allocation5 + $0x3e8] sm:$0xff] %v5435
      %5468 = vst [vmem:[#allocation5 + $0x430] sm:$0xff] %v5436
      %5469 = vst [vmem:[#allocation5 + $0x478] sm:$0xff] %v5437
      %5470 = vst [vmem:[#allocation5 + $0x4c0] sm:$0xff] %v5438
      %5471 = vst [vmem:[#allocation5 + $0x508] sm:$0xff] %v5439
      %5472 = vst [vmem:[#allocation5 + $0x550] sm:$0xff] %v5440
      %5473 = vst [vmem:[#allocation5 + $0x598] sm:$0xff] %v5441
      %5474 = vst [vmem:[#allocation5 + $0x5e0] sm:$0xff] %v5442
      %5475 = vst [vmem:[#allocation5 + $0x628] sm:$0xff] %v5443
      %5476 = vst [vmem:[#allocation5 + $0x670] sm:$0xff] %v5444
      %5477 = vst [vmem:[#allocation5 + $0x6b8] sm:$0xff] %v5445
      %5478 = vst [vmem:[#allocation5 + $0x700] sm:$0xff] %v5446
      %5479 = vst [vmem:[#allocation5 + $0x748] sm:$0xff] %v5447
      %5480 = vst [vmem:[#allocation5 + $0x790] sm:$0xff] %v5448
      %5481 = vst [vmem:[#allocation5 + $0x7d8] sm:$0xff] %v5449
      %5482 = vst [vmem:[#allocation5 + $0x820] sm:$0xff] %v5450
      %5483 = vst [vmem:[#allocation5 + $0x868] sm:$0xff] %v5451
      %5484 = vst [vmem:[#allocation5 + $0x8b0] sm:$0xff] %v5452
      %5485 = vst [vmem:[#allocation5 + $0x8f8] sm:$0xff] %v5453
      %v5486 = vld [vmem:[#allocation5] sm:$0xff]
      %v5487 = vld [vmem:[#allocation5 + $0x8] sm:$0xff]
      %v5488 = vld [vmem:[#allocation5 + $0x10] sm:$0xff]
      %v5489 = vld [vmem:[#allocation5 + $0x18] sm:$0xff]
      %v5490 = vld [vmem:[#allocation5 + $0x20] sm:$0xff]
      %v5491 = vld [vmem:[#allocation5 + $0x28] sm:$0xff]
      %v5492 = vld [vmem:[#allocation5 + $0x30] sm:$0xff]
      %v5493 = vld [vmem:[#allocation5 + $0x38] sm:$0xff]
      %v5494 = vld [vmem:[#allocation5 + $0x40] sm:$0xff]
      %v5495 = vld [vmem:[#allocation5 + $0x48] sm:$0xff]
      %v5496 = vld [vmem:[#allocation5 + $0x50] sm:$0xff]
      %v5497 = vld [vmem:[#allocation5 + $0x58] sm:$0xff]
      %v5498 = vld [vmem:[#allocation5 + $0x60] sm:$0xff]
      %v5499 = vld [vmem:[#allocation5 + $0x68] sm:$0xff]
      %v5500 = vld [vmem:[#allocation5 + $0x70] sm:$0xff]
      %v5501 = vld [vmem:[#allocation5 + $0x78] sm:$0xff]
      %v5502 = vld [vmem:[#allocation5 + $0x80] sm:$0xff]
      %v5503 = vld [vmem:[#allocation5 + $0x88] sm:$0xff]
      %v5504 = vld [vmem:[#allocation5 + $0x90] sm:$0xff]
      %v5505 = vld [vmem:[#allocation5 + $0x98] sm:$0xff]
      %v5506 = vld [vmem:[#allocation5 + $0xa0] sm:$0xff]
      %v5507 = vld [vmem:[#allocation5 + $0xa8] sm:$0xff]
      %v5508 = vld [vmem:[#allocation5 + $0xb0] sm:$0xff]
      %v5509 = vld [vmem:[#allocation5 + $0xb8] sm:$0xff]
      %v5510 = vld [vmem:[#allocation5 + $0xc0] sm:$0xff]
      %v5511 = vld [vmem:[#allocation5 + $0xc8] sm:$0xff]
      %v5512 = vld [vmem:[#allocation5 + $0xd0] sm:$0xff]
      %v5513 = vld [vmem:[#allocation5 + $0xd8] sm:$0xff]
      %v5514 = vld [vmem:[#allocation5 + $0xe0] sm:$0xff]
      %v5515 = vld [vmem:[#allocation5 + $0xe8] sm:$0xff]
      %v5516 = vld [vmem:[#allocation5 + $0xf0] sm:$0xff]
      %v5517 = vld [vmem:[#allocation5 + $0xf8] sm:$0xff]
      %v5518 = vld [vmem:[#allocation5 + $0x100] sm:$0xff]
      %v5519 = vld [vmem:[#allocation5 + $0x108] sm:$0xff]
      %v5520 = vld [vmem:[#allocation5 + $0x110] sm:$0xff]
      %v5521 = vld [vmem:[#allocation5 + $0x118] sm:$0xff]
      %v5522 = vld [vmem:[#allocation5 + $0x120] sm:$0xff]
      %v5523 = vld [vmem:[#allocation5 + $0x128] sm:$0xff]
      %v5524 = vld [vmem:[#allocation5 + $0x130] sm:$0xff]
      %v5525 = vld [vmem:[#allocation5 + $0x138] sm:$0xff]
      %v5526 = vld [vmem:[#allocation5 + $0x140] sm:$0xff]
      %v5527 = vld [vmem:[#allocation5 + $0x148] sm:$0xff]
      %v5528 = vld [vmem:[#allocation5 + $0x150] sm:$0xff]
      %v5529 = vld [vmem:[#allocation5 + $0x158] sm:$0xff]
      %v5530 = vld [vmem:[#allocation5 + $0x160] sm:$0xff]
      %v5531 = vld [vmem:[#allocation5 + $0x168] sm:$0xff]
      %v5532 = vld [vmem:[#allocation5 + $0x170] sm:$0xff]
      %v5533 = vld [vmem:[#allocation5 + $0x178] sm:$0xff]
      %v5534 = vld [vmem:[#allocation5 + $0x180] sm:$0xff]
      %v5535 = vld [vmem:[#allocation5 + $0x188] sm:$0xff]
      %v5536 = vld [vmem:[#allocation5 + $0x190] sm:$0xff]
      %v5537 = vld [vmem:[#allocation5 + $0x198] sm:$0xff]
      %v5538 = vld [vmem:[#allocation5 + $0x1a0] sm:$0xff]
      %v5539 = vld [vmem:[#allocation5 + $0x1a8] sm:$0xff]
      %v5540 = vld [vmem:[#allocation5 + $0x1b0] sm:$0xff]
      %v5541 = vld [vmem:[#allocation5 + $0x1b8] sm:$0xff]
      %v5542 = vld [vmem:[#allocation5 + $0x1c0] sm:$0xff]
      %v5543 = vld [vmem:[#allocation5 + $0x1c8] sm:$0xff]
      %v5544 = vld [vmem:[#allocation5 + $0x1d0] sm:$0xff]
      %v5545 = vld [vmem:[#allocation5 + $0x1d8] sm:$0xff]
      %v5546 = vld [vmem:[#allocation5 + $0x1e0] sm:$0xff]
      %v5547 = vld [vmem:[#allocation5 + $0x1e8] sm:$0xff]
      %v5548 = vld [vmem:[#allocation5 + $0x1f0] sm:$0xff]
      %v5549 = vld [vmem:[#allocation5 + $0x1f8] sm:$0xff]
      %v5550 = vld [vmem:[#allocation5 + $0x200] sm:$0xff]
      %v5551 = vld [vmem:[#allocation5 + $0x208] sm:$0xff]
      %v5552 = vld [vmem:[#allocation5 + $0x210] sm:$0xff]
      %v5553 = vld [vmem:[#allocation5 + $0x218] sm:$0xff]
      %v5554 = vld [vmem:[#allocation5 + $0x220] sm:$0xff]
      %v5555 = vld [vmem:[#allocation5 + $0x228] sm:$0xff]
      %v5556 = vld [vmem:[#allocation5 + $0x230] sm:$0xff]
      %v5557 = vld [vmem:[#allocation5 + $0x238] sm:$0xff]
      %v5558 = vld [vmem:[#allocation5 + $0x240] sm:$0xff]
      %v5559 = vld [vmem:[#allocation5 + $0x248] sm:$0xff]
      %v5560 = vld [vmem:[#allocation5 + $0x250] sm:$0xff]
      %v5561 = vld [vmem:[#allocation5 + $0x258] sm:$0xff]
      %v5562 = vld [vmem:[#allocation5 + $0x260] sm:$0xff]
      %v5563 = vld [vmem:[#allocation5 + $0x268] sm:$0xff]
      %v5564 = vld [vmem:[#allocation5 + $0x270] sm:$0xff]
      %v5565 = vld [vmem:[#allocation5 + $0x278] sm:$0xff]
      %v5566 = vld [vmem:[#allocation5 + $0x280] sm:$0xff]
      %v5567 = vld [vmem:[#allocation5 + $0x288] sm:$0xff]
      %v5568 = vld [vmem:[#allocation5 + $0x290] sm:$0xff]
      %v5569 = vld [vmem:[#allocation5 + $0x298] sm:$0xff]
      %v5570 = vld [vmem:[#allocation5 + $0x2a0] sm:$0xff]
      %v5571 = vld [vmem:[#allocation5 + $0x2a8] sm:$0xff]
      %v5572 = vld [vmem:[#allocation5 + $0x2b0] sm:$0xff]
      %v5573 = vld [vmem:[#allocation5 + $0x2b8] sm:$0xff]
      %v5574 = vld [vmem:[#allocation5 + $0x2c0] sm:$0xff]
      %v5575 = vld [vmem:[#allocation5 + $0x2c8] sm:$0xff]
      %v5576 = vld [vmem:[#allocation5 + $0x2d0] sm:$0xff]
      %v5577 = vld [vmem:[#allocation5 + $0x2d8] sm:$0xff]
      %v5578 = vld [vmem:[#allocation5 + $0x2e0] sm:$0xff]
      %v5579 = vld [vmem:[#allocation5 + $0x2e8] sm:$0xff]
      %v5580 = vld [vmem:[#allocation5 + $0x2f0] sm:$0xff]
      %v5581 = vld [vmem:[#allocation5 + $0x2f8] sm:$0xff]
      %v5582 = vld [vmem:[#allocation5 + $0x300] sm:$0xff]
      %v5583 = vld [vmem:[#allocation5 + $0x308] sm:$0xff]
      %v5584 = vld [vmem:[#allocation5 + $0x310] sm:$0xff]
      %v5585 = vld [vmem:[#allocation5 + $0x318] sm:$0xff]
      %v5586 = vld [vmem:[#allocation5 + $0x320] sm:$0xff]
      %v5587 = vld [vmem:[#allocation5 + $0x328] sm:$0xff]
      %v5588 = vld [vmem:[#allocation5 + $0x330] sm:$0xff]
      %v5589 = vld [vmem:[#allocation5 + $0x338] sm:$0xff]
      %v5590 = vld [vmem:[#allocation5 + $0x340] sm:$0xff]
      %v5591 = vld [vmem:[#allocation5 + $0x348] sm:$0xff]
      %v5592 = vld [vmem:[#allocation5 + $0x350] sm:$0xff]
      %v5593 = vld [vmem:[#allocation5 + $0x358] sm:$0xff]
      %v5594 = vld [vmem:[#allocation5 + $0x360] sm:$0xff]
      %v5595 = vld [vmem:[#allocation5 + $0x368] sm:$0xff]
      %v5596 = vld [vmem:[#allocation5 + $0x370] sm:$0xff]
      %v5597 = vld [vmem:[#allocation5 + $0x378] sm:$0xff]
      %v5598 = vld [vmem:[#allocation5 + $0x380] sm:$0xff]
      %v5599 = vld [vmem:[#allocation5 + $0x388] sm:$0xff]
      %v5600 = vld [vmem:[#allocation5 + $0x390] sm:$0xff]
      %v5601 = vld [vmem:[#allocation5 + $0x398] sm:$0xff]
      %v5602 = vld [vmem:[#allocation5 + $0x3a0] sm:$0xff]
      %v5603 = vld [vmem:[#allocation5 + $0x3a8] sm:$0xff]
      %v5604 = vld [vmem:[#allocation5 + $0x3b0] sm:$0xff]
      %v5605 = vld [vmem:[#allocation5 + $0x3b8] sm:$0xff]
      %v5606 = vld [vmem:[#allocation5 + $0x3c0] sm:$0xff]
      %v5607 = vld [vmem:[#allocation5 + $0x3c8] sm:$0xff]
      %v5608 = vld [vmem:[#allocation5 + $0x3d0] sm:$0xff]
      %v5609 = vld [vmem:[#allocation5 + $0x3d8] sm:$0xff]
      %v5610 = vld [vmem:[#allocation5 + $0x3e0] sm:$0xff]
      %v5611 = vld [vmem:[#allocation5 + $0x3e8] sm:$0xff]
      %v5612 = vld [vmem:[#allocation5 + $0x3f0] sm:$0xff]
      %v5613 = vld [vmem:[#allocation5 + $0x3f8] sm:$0xff]
      %v5614 = vld [vmem:[#allocation5 + $0x400] sm:$0xff]
      %v5615 = vld [vmem:[#allocation5 + $0x408] sm:$0xff]
      %v5616 = vld [vmem:[#allocation5 + $0x410] sm:$0xff]
      %v5617 = vld [vmem:[#allocation5 + $0x418] sm:$0xff]
      %v5618 = vld [vmem:[#allocation5 + $0x420] sm:$0xff]
      %v5619 = vld [vmem:[#allocation5 + $0x428] sm:$0xff]
      %v5620 = vld [vmem:[#allocation5 + $0x430] sm:$0xff]
      %v5621 = vld [vmem:[#allocation5 + $0x438] sm:$0xff]
      %v5622 = vld [vmem:[#allocation5 + $0x440] sm:$0xff]
      %v5623 = vld [vmem:[#allocation5 + $0x448] sm:$0xff]
      %v5624 = vld [vmem:[#allocation5 + $0x450] sm:$0xff]
      %v5625 = vld [vmem:[#allocation5 + $0x458] sm:$0xff]
      %v5626 = vld [vmem:[#allocation5 + $0x460] sm:$0xff]
      %v5627 = vld [vmem:[#allocation5 + $0x468] sm:$0xff]
      %v5628 = vld [vmem:[#allocation5 + $0x470] sm:$0xff]
      %v5629 = vld [vmem:[#allocation5 + $0x478] sm:$0xff]
      %v5630 = vld [vmem:[#allocation5 + $0x480] sm:$0xff]
      %v5631 = vld [vmem:[#allocation5 + $0x488] sm:$0xff]
      %v5632 = vld [vmem:[#allocation5 + $0x490] sm:$0xff]
      %v5633 = vld [vmem:[#allocation5 + $0x498] sm:$0xff]
      %v5634 = vld [vmem:[#allocation5 + $0x4a0] sm:$0xff]
      %v5635 = vld [vmem:[#allocation5 + $0x4a8] sm:$0xff]
      %v5636 = vld [vmem:[#allocation5 + $0x4b0] sm:$0xff]
      %v5637 = vld [vmem:[#allocation5 + $0x4b8] sm:$0xff]
      %v5638 = vld [vmem:[#allocation5 + $0x4c0] sm:$0xff]
      %v5639 = vld [vmem:[#allocation5 + $0x4c8] sm:$0xff]
      %v5640 = vld [vmem:[#allocation5 + $0x4d0] sm:$0xff]
      %v5641 = vld [vmem:[#allocation5 + $0x4d8] sm:$0xff]
      %v5642 = vld [vmem:[#allocation5 + $0x4e0] sm:$0xff]
      %v5643 = vld [vmem:[#allocation5 + $0x4e8] sm:$0xff]
      %v5644 = vld [vmem:[#allocation5 + $0x4f0] sm:$0xff]
      %v5645 = vld [vmem:[#allocation5 + $0x4f8] sm:$0xff]
      %v5646 = vld [vmem:[#allocation5 + $0x500] sm:$0xff]
      %v5647 = vld [vmem:[#allocation5 + $0x508] sm:$0xff]
      %v5648 = vld [vmem:[#allocation5 + $0x510] sm:$0xff]
      %v5649 = vld [vmem:[#allocation5 + $0x518] sm:$0xff]
      %v5650 = vld [vmem:[#allocation5 + $0x520] sm:$0xff]
      %v5651 = vld [vmem:[#allocation5 + $0x528] sm:$0xff]
      %v5652 = vld [vmem:[#allocation5 + $0x530] sm:$0xff]
      %v5653 = vld [vmem:[#allocation5 + $0x538] sm:$0xff]
      %v5654 = vld [vmem:[#allocation5 + $0x540] sm:$0xff]
      %v5655 = vld [vmem:[#allocation5 + $0x548] sm:$0xff]
      %v5656 = vld [vmem:[#allocation5 + $0x550] sm:$0xff]
      %v5657 = vld [vmem:[#allocation5 + $0x558] sm:$0xff]
      %v5658 = vld [vmem:[#allocation5 + $0x560] sm:$0xff]
      %v5659 = vld [vmem:[#allocation5 + $0x568] sm:$0xff]
      %v5660 = vld [vmem:[#allocation5 + $0x570] sm:$0xff]
      %v5661 = vld [vmem:[#allocation5 + $0x578] sm:$0xff]
      %v5662 = vld [vmem:[#allocation5 + $0x580] sm:$0xff]
      %v5663 = vld [vmem:[#allocation5 + $0x588] sm:$0xff]
      %v5664 = vld [vmem:[#allocation5 + $0x590] sm:$0xff]
      %v5665 = vld [vmem:[#allocation5 + $0x598] sm:$0xff]
      %v5666 = vld [vmem:[#allocation5 + $0x5a0] sm:$0xff]
      %v5667 = vld [vmem:[#allocation5 + $0x5a8] sm:$0xff]
      %v5668 = vld [vmem:[#allocation5 + $0x5b0] sm:$0xff]
      %v5669 = vld [vmem:[#allocation5 + $0x5b8] sm:$0xff]
      %v5670 = vld [vmem:[#allocation5 + $0x5c0] sm:$0xff]
      %v5671 = vld [vmem:[#allocation5 + $0x5c8] sm:$0xff]
      %v5672 = vld [vmem:[#allocation5 + $0x5d0] sm:$0xff]
      %v5673 = vld [vmem:[#allocation5 + $0x5d8] sm:$0xff]
      %v5674 = vld [vmem:[#allocation5 + $0x5e0] sm:$0xff]
      %v5675 = vld [vmem:[#allocation5 + $0x5e8] sm:$0xff]
      %v5676 = vld [vmem:[#allocation5 + $0x5f0] sm:$0xff]
      %v5677 = vld [vmem:[#allocation5 + $0x5f8] sm:$0xff]
      %v5678 = vld [vmem:[#allocation5 + $0x600] sm:$0xff]
      %v5679 = vld [vmem:[#allocation5 + $0x608] sm:$0xff]
      %v5680 = vld [vmem:[#allocation5 + $0x610] sm:$0xff]
      %v5681 = vld [vmem:[#allocation5 + $0x618] sm:$0xff]
      %v5682 = vld [vmem:[#allocation5 + $0x620] sm:$0xff]
      %v5683 = vld [vmem:[#allocation5 + $0x628] sm:$0xff]
      %v5684 = vld [vmem:[#allocation5 + $0x630] sm:$0xff]
      %v5685 = vld [vmem:[#allocation5 + $0x638] sm:$0xff]
      %v5686 = vld [vmem:[#allocation5 + $0x640] sm:$0xff]
      %v5687 = vld [vmem:[#allocation5 + $0x648] sm:$0xff]
      %v5688 = vld [vmem:[#allocation5 + $0x650] sm:$0xff]
      %v5689 = vld [vmem:[#allocation5 + $0x658] sm:$0xff]
      %v5690 = vld [vmem:[#allocation5 + $0x660] sm:$0xff]
      %v5691 = vld [vmem:[#allocation5 + $0x668] sm:$0xff]
      %v5692 = vld [vmem:[#allocation5 + $0x670] sm:$0xff]
      %v5693 = vld [vmem:[#allocation5 + $0x678] sm:$0xff]
      %v5694 = vld [vmem:[#allocation5 + $0x680] sm:$0xff]
      %v5695 = vld [vmem:[#allocation5 + $0x688] sm:$0xff]
      %v5696 = vld [vmem:[#allocation5 + $0x690] sm:$0xff]
      %v5697 = vld [vmem:[#allocation5 + $0x698] sm:$0xff]
      %v5698 = vld [vmem:[#allocation5 + $0x6a0] sm:$0xff]
      %v5699 = vld [vmem:[#allocation5 + $0x6a8] sm:$0xff]
      %v5700 = vld [vmem:[#allocation5 + $0x6b0] sm:$0xff]
      %v5701 = vld [vmem:[#allocation5 + $0x6b8] sm:$0xff]
      %v5702 = vld [vmem:[#allocation5 + $0x6c0] sm:$0xff]
      %v5703 = vld [vmem:[#allocation5 + $0x6c8] sm:$0xff]
      %v5704 = vld [vmem:[#allocation5 + $0x6d0] sm:$0xff]
      %v5705 = vld [vmem:[#allocation5 + $0x6d8] sm:$0xff]
      %v5706 = vld [vmem:[#allocation5 + $0x6e0] sm:$0xff]
      %v5707 = vld [vmem:[#allocation5 + $0x6e8] sm:$0xff]
      %v5708 = vld [vmem:[#allocation5 + $0x6f0] sm:$0xff]
      %v5709 = vld [vmem:[#allocation5 + $0x6f8] sm:$0xff]
      %v5710 = vld [vmem:[#allocation5 + $0x700] sm:$0xff]
      %v5711 = vld [vmem:[#allocation5 + $0x708] sm:$0xff]
      %v5712 = vld [vmem:[#allocation5 + $0x710] sm:$0xff]
      %v5713 = vld [vmem:[#allocation5 + $0x718] sm:$0xff]
      %v5714 = vld [vmem:[#allocation5 + $0x720] sm:$0xff]
      %v5715 = vld [vmem:[#allocation5 + $0x728] sm:$0xff]
      %v5716 = vld [vmem:[#allocation5 + $0x730] sm:$0xff]
      %v5717 = vld [vmem:[#allocation5 + $0x738] sm:$0xff]
      %v5718 = vld [vmem:[#allocation5 + $0x740] sm:$0xff]
      %v5719 = vld [vmem:[#allocation5 + $0x748] sm:$0xff]
      %v5720 = vld [vmem:[#allocation5 + $0x750] sm:$0xff]
      %v5721 = vld [vmem:[#allocation5 + $0x758] sm:$0xff]
      %v5722 = vld [vmem:[#allocation5 + $0x760] sm:$0xff]
      %v5723 = vld [vmem:[#allocation5 + $0x768] sm:$0xff]
      %v5724 = vld [vmem:[#allocation5 + $0x770] sm:$0xff]
      %v5725 = vld [vmem:[#allocation5 + $0x778] sm:$0xff]
      %v5726 = vld [vmem:[#allocation5 + $0x780] sm:$0xff]
      %v5727 = vld [vmem:[#allocation5 + $0x788] sm:$0xff]
      %v5728 = vld [vmem:[#allocation5 + $0x790] sm:$0xff]
      %v5729 = vld [vmem:[#allocation5 + $0x798] sm:$0xff]
      %v5730 = vld [vmem:[#allocation5 + $0x7a0] sm:$0xff]
      %v5731 = vld [vmem:[#allocation5 + $0x7a8] sm:$0xff]
      %v5732 = vld [vmem:[#allocation5 + $0x7b0] sm:$0xff]
      %v5733 = vld [vmem:[#allocation5 + $0x7b8] sm:$0xff]
      %v5734 = vld [vmem:[#allocation5 + $0x7c0] sm:$0xff]
      %v5735 = vld [vmem:[#allocation5 + $0x7c8] sm:$0xff]
      %v5736 = vld [vmem:[#allocation5 + $0x7d0] sm:$0xff]
      %v5737 = vld [vmem:[#allocation5 + $0x7d8] sm:$0xff]
      %v5738 = vld [vmem:[#allocation5 + $0x7e0] sm:$0xff]
      %v5739 = vld [vmem:[#allocation5 + $0x7e8] sm:$0xff]
      %v5740 = vld [vmem:[#allocation5 + $0x7f0] sm:$0xff]
      %v5741 = vld [vmem:[#allocation5 + $0x7f8] sm:$0xff]
      %v5742 = vld [vmem:[#allocation5 + $0x800] sm:$0xff]
      %v5743 = vld [vmem:[#allocation5 + $0x808] sm:$0xff]
      %v5744 = vld [vmem:[#allocation5 + $0x810] sm:$0xff]
      %v5745 = vld [vmem:[#allocation5 + $0x818] sm:$0xff]
      %v5746 = vld [vmem:[#allocation5 + $0x820] sm:$0xff]
      %v5747 = vld [vmem:[#allocation5 + $0x828] sm:$0xff]
      %v5748 = vld [vmem:[#allocation5 + $0x830] sm:$0xff]
      %v5749 = vld [vmem:[#allocation5 + $0x838] sm:$0xff]
      %v5750 = vld [vmem:[#allocation5 + $0x840] sm:$0xff]
      %v5751 = vld [vmem:[#allocation5 + $0x848] sm:$0xff]
      %v5752 = vld [vmem:[#allocation5 + $0x850] sm:$0xff]
      %v5753 = vld [vmem:[#allocation5 + $0x858] sm:$0xff]
      %v5754 = vld [vmem:[#allocation5 + $0x860] sm:$0xff]
      %v5755 = vld [vmem:[#allocation5 + $0x868] sm:$0xff]
      %v5756 = vld [vmem:[#allocation5 + $0x870] sm:$0xff]
      %v5757 = vld [vmem:[#allocation5 + $0x878] sm:$0xff]
      %v5758 = vld [vmem:[#allocation5 + $0x880] sm:$0xff]
      %v5759 = vld [vmem:[#allocation5 + $0x888] sm:$0xff]
      %v5760 = vld [vmem:[#allocation5 + $0x890] sm:$0xff]
      %v5761 = vld [vmem:[#allocation5 + $0x898] sm:$0xff]
      %v5762 = vld [vmem:[#allocation5 + $0x8a0] sm:$0xff]
      %v5763 = vld [vmem:[#allocation5 + $0x8a8] sm:$0xff]
      %v5764 = vld [vmem:[#allocation5 + $0x8b0] sm:$0xff]
      %v5765 = vld [vmem:[#allocation5 + $0x8b8] sm:$0xff]
      %v5766 = vld [vmem:[#allocation5 + $0x8c0] sm:$0xff]
      %v5767 = vld [vmem:[#allocation5 + $0x8c8] sm:$0xff]
      %v5768 = vld [vmem:[#allocation5 + $0x8d0] sm:$0xff]
      %v5769 = vld [vmem:[#allocation5 + $0x8d8] sm:$0xff]
      %v5770 = vld [vmem:[#allocation5 + $0x8e0] sm:$0xff]
      %v5771 = vld [vmem:[#allocation5 + $0x8e8] sm:$0xff]
      %v5772 = vld [vmem:[#allocation5 + $0x8f0] sm:$0xff]
      %v5773 = vld [vmem:[#allocation5 + $0x8f8] sm:$0xff]
      %v5774 = vadd.f32 %v5486, %v5495
      %v5775 = vadd.f32 %v5774, %v5504
      %v5776 = vadd.f32 %v5775, %v5513
      %v5777 = vadd.f32 %v5776, %v5522
      %v5778 = vadd.f32 %v5777, %v5531
      %v5779 = vadd.f32 %v5778, %v5540
      %v5780 = vadd.f32 %v5779, %v5549
      %v5781 = vadd.f32 %v5780, %v5558
      %v5782 = vadd.f32 %v5781, %v5567
      %v5783 = vadd.f32 %v5782, %v5576
      %v5784 = vadd.f32 %v5783, %v5585
      %v5785 = vadd.f32 %v5784, %v5594
      %v5786 = vadd.f32 %v5785, %v5603
      %v5787 = vadd.f32 %v5786, %v5612
      %v5788 = vadd.f32 %v5787, %v5621
      %v5789 = vadd.f32 %v5788, %v5630
      %v5790 = vadd.f32 %v5789, %v5639
      %v5791 = vadd.f32 %v5790, %v5648
      %v5792 = vadd.f32 %v5791, %v5657
      %v5793 = vadd.f32 %v5792, %v5666
      %v5794 = vadd.f32 %v5793, %v5675
      %v5795 = vadd.f32 %v5794, %v5684
      %v5796 = vadd.f32 %v5795, %v5693
      %v5797 = vadd.f32 %v5796, %v5702
      %v5798 = vadd.f32 %v5797, %v5711
      %v5799 = vadd.f32 %v5798, %v5720
      %v5800 = vadd.f32 %v5799, %v5729
      %v5801 = vadd.f32 %v5800, %v5738
      %v5802 = vadd.f32 %v5801, %v5747
      %v5803 = vadd.f32 %v5802, %v5756
      %v5804 = vadd.f32 %v5803, %v5765
      %v5805 = vrot.slane %v5804, 4
      %v5806 = vadd.f32 %v5804, %v5805
      %v5807 = vrot.slane %v5806, 2
      %v5808 = vadd.f32 %v5806, %v5807
      %v5809 = vrot.slane %v5808, 1
      %v5810 = vadd.f32 %v5808, %v5809
      %v5811 = vadd.f32 %v5487, %v5496
      %v5812 = vadd.f32 %v5811, %v5505
      %v5813 = vadd.f32 %v5812, %v5514
      %v5814 = vadd.f32 %v5813, %v5523
      %v5815 = vadd.f32 %v5814, %v5532
      %v5816 = vadd.f32 %v5815, %v5541
      %v5817 = vadd.f32 %v5816, %v5550
      %v5818 = vadd.f32 %v5817, %v5559
      %v5819 = vadd.f32 %v5818, %v5568
      %v5820 = vadd.f32 %v5819, %v5577
      %v5821 = vadd.f32 %v5820, %v5586
      %v5822 = vadd.f32 %v5821, %v5595
      %v5823 = vadd.f32 %v5822, %v5604
      %v5824 = vadd.f32 %v5823, %v5613
      %v5825 = vadd.f32 %v5824, %v5622
      %v5826 = vadd.f32 %v5825, %v5631
      %v5827 = vadd.f32 %v5826, %v5640
      %v5828 = vadd.f32 %v5827, %v5649
      %v5829 = vadd.f32 %v5828, %v5658
      %v5830 = vadd.f32 %v5829, %v5667
      %v5831 = vadd.f32 %v5830, %v5676
      %v5832 = vadd.f32 %v5831, %v5685
      %v5833 = vadd.f32 %v5832, %v5694
      %v5834 = vadd.f32 %v5833, %v5703
      %v5835 = vadd.f32 %v5834, %v5712
      %v5836 = vadd.f32 %v5835, %v5721
      %v5837 = vadd.f32 %v5836, %v5730
      %v5838 = vadd.f32 %v5837, %v5739
      %v5839 = vadd.f32 %v5838, %v5748
      %v5840 = vadd.f32 %v5839, %v5757
      %v5841 = vadd.f32 %v5840, %v5766
      %v5842 = vrot.slane %v5841, 4
      %v5843 = vadd.f32 %v5841, %v5842
      %v5844 = vrot.slane %v5843, 2
      %v5845 = vadd.f32 %v5843, %v5844
      %v5846 = vrot.slane %v5845, 1
      %v5847 = vadd.f32 %v5845, %v5846
      %v5848 = vadd.f32 %v5488, %v5497
      %v5849 = vadd.f32 %v5848, %v5506
      %v5850 = vadd.f32 %v5849, %v5515
      %v5851 = vadd.f32 %v5850, %v5524
      %v5852 = vadd.f32 %v5851, %v5533
      %v5853 = vadd.f32 %v5852, %v5542
      %v5854 = vadd.f32 %v5853, %v5551
      %v5855 = vadd.f32 %v5854, %v5560
      %v5856 = vadd.f32 %v5855, %v5569
      %v5857 = vadd.f32 %v5856, %v5578
      %v5858 = vadd.f32 %v5857, %v5587
      %v5859 = vadd.f32 %v5858, %v5596
      %v5860 = vadd.f32 %v5859, %v5605
      %v5861 = vadd.f32 %v5860, %v5614
      %v5862 = vadd.f32 %v5861, %v5623
      %v5863 = vadd.f32 %v5862, %v5632
      %v5864 = vadd.f32 %v5863, %v5641
      %v5865 = vadd.f32 %v5864, %v5650
      %v5866 = vadd.f32 %v5865, %v5659
      %v5867 = vadd.f32 %v5866, %v5668
      %v5868 = vadd.f32 %v5867, %v5677
      %v5869 = vadd.f32 %v5868, %v5686
      %v5870 = vadd.f32 %v5869, %v5695
      %v5871 = vadd.f32 %v5870, %v5704
      %v5872 = vadd.f32 %v5871, %v5713
      %v5873 = vadd.f32 %v5872, %v5722
      %v5874 = vadd.f32 %v5873, %v5731
      %v5875 = vadd.f32 %v5874, %v5740
      %v5876 = vadd.f32 %v5875, %v5749
      %v5877 = vadd.f32 %v5876, %v5758
      %v5878 = vadd.f32 %v5877, %v5767
      %v5879 = vrot.slane %v5878, 4
      %v5880 = vadd.f32 %v5878, %v5879
      %v5881 = vrot.slane %v5880, 2
      %v5882 = vadd.f32 %v5880, %v5881
      %v5883 = vrot.slane %v5882, 1
      %v5884 = vadd.f32 %v5882, %v5883
      %v5885 = vadd.f32 %v5489, %v5498
      %v5886 = vadd.f32 %v5885, %v5507
      %v5887 = vadd.f32 %v5886, %v5516
      %v5888 = vadd.f32 %v5887, %v5525
      %v5889 = vadd.f32 %v5888, %v5534
      %v5890 = vadd.f32 %v5889, %v5543
      %v5891 = vadd.f32 %v5890, %v5552
      %v5892 = vadd.f32 %v5891, %v5561
      %v5893 = vadd.f32 %v5892, %v5570
      %v5894 = vadd.f32 %v5893, %v5579
      %v5895 = vadd.f32 %v5894, %v5588
      %v5896 = vadd.f32 %v5895, %v5597
      %v5897 = vadd.f32 %v5896, %v5606
      %v5898 = vadd.f32 %v5897, %v5615
      %v5899 = vadd.f32 %v5898, %v5624
      %v5900 = vadd.f32 %v5899, %v5633
      %v5901 = vadd.f32 %v5900, %v5642
      %v5902 = vadd.f32 %v5901, %v5651
      %v5903 = vadd.f32 %v5902, %v5660
      %v5904 = vadd.f32 %v5903, %v5669
      %v5905 = vadd.f32 %v5904, %v5678
      %v5906 = vadd.f32 %v5905, %v5687
      %v5907 = vadd.f32 %v5906, %v5696
      %v5908 = vadd.f32 %v5907, %v5705
      %v5909 = vadd.f32 %v5908, %v5714
      %v5910 = vadd.f32 %v5909, %v5723
      %v5911 = vadd.f32 %v5910, %v5732
      %v5912 = vadd.f32 %v5911, %v5741
      %v5913 = vadd.f32 %v5912, %v5750
      %v5914 = vadd.f32 %v5913, %v5759
      %v5915 = vadd.f32 %v5914, %v5768
      %v5916 = vrot.slane %v5915, 4
      %v5917 = vadd.f32 %v5915, %v5916
      %v5918 = vrot.slane %v5917, 2
      %v5919 = vadd.f32 %v5917, %v5918
      %v5920 = vrot.slane %v5919, 1
      %v5921 = vadd.f32 %v5919, %v5920
      %v5922 = vadd.f32 %v5490, %v5499
      %v5923 = vadd.f32 %v5922, %v5508
      %v5924 = vadd.f32 %v5923, %v5517
      %v5925 = vadd.f32 %v5924, %v5526
      %v5926 = vadd.f32 %v5925, %v5535
      %v5927 = vadd.f32 %v5926, %v5544
      %v5928 = vadd.f32 %v5927, %v5553
      %v5929 = vadd.f32 %v5928, %v5562
      %v5930 = vadd.f32 %v5929, %v5571
      %v5931 = vadd.f32 %v5930, %v5580
      %v5932 = vadd.f32 %v5931, %v5589
      %v5933 = vadd.f32 %v5932, %v5598
      %v5934 = vadd.f32 %v5933, %v5607
      %v5935 = vadd.f32 %v5934, %v5616
      %v5936 = vadd.f32 %v5935, %v5625
      %v5937 = vadd.f32 %v5936, %v5634
      %v5938 = vadd.f32 %v5937, %v5643
      %v5939 = vadd.f32 %v5938, %v5652
      %v5940 = vadd.f32 %v5939, %v5661
      %v5941 = vadd.f32 %v5940, %v5670
      %v5942 = vadd.f32 %v5941, %v5679
      %v5943 = vadd.f32 %v5942, %v5688
      %v5944 = vadd.f32 %v5943, %v5697
      %v5945 = vadd.f32 %v5944, %v5706
      %v5946 = vadd.f32 %v5945, %v5715
      %v5947 = vadd.f32 %v5946, %v5724
      %v5948 = vadd.f32 %v5947, %v5733
      %v5949 = vadd.f32 %v5948, %v5742
      %v5950 = vadd.f32 %v5949, %v5751
      %v5951 = vadd.f32 %v5950, %v5760
      %v5952 = vadd.f32 %v5951, %v5769
      %v5953 = vrot.slane %v5952, 4
      %v5954 = vadd.f32 %v5952, %v5953
      %v5955 = vrot.slane %v5954, 2
      %v5956 = vadd.f32 %v5954, %v5955
      %v5957 = vrot.slane %v5956, 1
      %v5958 = vadd.f32 %v5956, %v5957
      %v5959 = vadd.f32 %v5491, %v5500
      %v5960 = vadd.f32 %v5959, %v5509
      %v5961 = vadd.f32 %v5960, %v5518
      %v5962 = vadd.f32 %v5961, %v5527
      %v5963 = vadd.f32 %v5962, %v5536
      %v5964 = vadd.f32 %v5963, %v5545
      %v5965 = vadd.f32 %v5964, %v5554
      %v5966 = vadd.f32 %v5965, %v5563
      %v5967 = vadd.f32 %v5966, %v5572
      %v5968 = vadd.f32 %v5967, %v5581
      %v5969 = vadd.f32 %v5968, %v5590
      %v5970 = vadd.f32 %v5969, %v5599
      %v5971 = vadd.f32 %v5970, %v5608
      %v5972 = vadd.f32 %v5971, %v5617
      %v5973 = vadd.f32 %v5972, %v5626
      %v5974 = vadd.f32 %v5973, %v5635
      %v5975 = vadd.f32 %v5974, %v5644
      %v5976 = vadd.f32 %v5975, %v5653
      %v5977 = vadd.f32 %v5976, %v5662
      %v5978 = vadd.f32 %v5977, %v5671
      %v5979 = vadd.f32 %v5978, %v5680
      %v5980 = vadd.f32 %v5979, %v5689
      %v5981 = vadd.f32 %v5980, %v5698
      %v5982 = vadd.f32 %v5981, %v5707
      %v5983 = vadd.f32 %v5982, %v5716
      %v5984 = vadd.f32 %v5983, %v5725
      %v5985 = vadd.f32 %v5984, %v5734
      %v5986 = vadd.f32 %v5985, %v5743
      %v5987 = vadd.f32 %v5986, %v5752
      %v5988 = vadd.f32 %v5987, %v5761
      %v5989 = vadd.f32 %v5988, %v5770
      %v5990 = vrot.slane %v5989, 4
      %v5991 = vadd.f32 %v5989, %v5990
      %v5992 = vrot.slane %v5991, 2
      %v5993 = vadd.f32 %v5991, %v5992
      %v5994 = vrot.slane %v5993, 1
      %v5995 = vadd.f32 %v5993, %v5994
      %v5996 = vadd.f32 %v5492, %v5501
      %v5997 = vadd.f32 %v5996, %v5510
      %v5998 = vadd.f32 %v5997, %v5519
      %v5999 = vadd.f32 %v5998, %v5528
      %v6000 = vadd.f32 %v5999, %v5537
      %v6001 = vadd.f32 %v6000, %v5546
      %v6002 = vadd.f32 %v6001, %v5555
      %v6003 = vadd.f32 %v6002, %v5564
      %v6004 = vadd.f32 %v6003, %v5573
      %v6005 = vadd.f32 %v6004, %v5582
      %v6006 = vadd.f32 %v6005, %v5591
      %v6007 = vadd.f32 %v6006, %v5600
      %v6008 = vadd.f32 %v6007, %v5609
      %v6009 = vadd.f32 %v6008, %v5618
      %v6010 = vadd.f32 %v6009, %v5627
      %v6011 = vadd.f32 %v6010, %v5636
      %v6012 = vadd.f32 %v6011, %v5645
      %v6013 = vadd.f32 %v6012, %v5654
      %v6014 = vadd.f32 %v6013, %v5663
      %v6015 = vadd.f32 %v6014, %v5672
      %v6016 = vadd.f32 %v6015, %v5681
      %v6017 = vadd.f32 %v6016, %v5690
      %v6018 = vadd.f32 %v6017, %v5699
      %v6019 = vadd.f32 %v6018, %v5708
      %v6020 = vadd.f32 %v6019, %v5717
      %v6021 = vadd.f32 %v6020, %v5726
      %v6022 = vadd.f32 %v6021, %v5735
      %v6023 = vadd.f32 %v6022, %v5744
      %v6024 = vadd.f32 %v6023, %v5753
      %v6025 = vadd.f32 %v6024, %v5762
      %v6026 = vadd.f32 %v6025, %v5771
      %v6027 = vrot.slane %v6026, 4
      %v6028 = vadd.f32 %v6026, %v6027
      %v6029 = vrot.slane %v6028, 2
      %v6030 = vadd.f32 %v6028, %v6029
      %v6031 = vrot.slane %v6030, 1
      %v6032 = vadd.f32 %v6030, %v6031
      %v6033 = vadd.f32 %v5493, %v5502
      %v6034 = vadd.f32 %v6033, %v5511
      %v6035 = vadd.f32 %v6034, %v5520
      %v6036 = vadd.f32 %v6035, %v5529
      %v6037 = vadd.f32 %v6036, %v5538
      %v6038 = vadd.f32 %v6037, %v5547
      %v6039 = vadd.f32 %v6038, %v5556
      %v6040 = vadd.f32 %v6039, %v5565
      %v6041 = vadd.f32 %v6040, %v5574
      %v6042 = vadd.f32 %v6041, %v5583
      %v6043 = vadd.f32 %v6042, %v5592
      %v6044 = vadd.f32 %v6043, %v5601
      %v6045 = vadd.f32 %v6044, %v5610
      %v6046 = vadd.f32 %v6045, %v5619
      %v6047 = vadd.f32 %v6046, %v5628
      %v6048 = vadd.f32 %v6047, %v5637
      %v6049 = vadd.f32 %v6048, %v5646
      %v6050 = vadd.f32 %v6049, %v5655
      %v6051 = vadd.f32 %v6050, %v5664
      %v6052 = vadd.f32 %v6051, %v5673
      %v6053 = vadd.f32 %v6052, %v5682
      %v6054 = vadd.f32 %v6053, %v5691
      %v6055 = vadd.f32 %v6054, %v5700
      %v6056 = vadd.f32 %v6055, %v5709
      %v6057 = vadd.f32 %v6056, %v5718
      %v6058 = vadd.f32 %v6057, %v5727
      %v6059 = vadd.f32 %v6058, %v5736
      %v6060 = vadd.f32 %v6059, %v5745
      %v6061 = vadd.f32 %v6060, %v5754
      %v6062 = vadd.f32 %v6061, %v5763
      %v6063 = vadd.f32 %v6062, %v5772
      %v6064 = vrot.slane %v6063, 4
      %v6065 = vadd.f32 %v6063, %v6064
      %v6066 = vrot.slane %v6065, 2
      %v6067 = vadd.f32 %v6065, %v6066
      %v6068 = vrot.slane %v6067, 1
      %v6069 = vadd.f32 %v6067, %v6068
      %v6070 = vadd.f32 %v5494, %v5503
      %v6071 = vadd.f32 %v6070, %v5512
      %v6072 = vadd.f32 %v6071, %v5521
      %v6073 = vadd.f32 %v6072, %v5530
      %v6074 = vadd.f32 %v6073, %v5539
      %v6075 = vadd.f32 %v6074, %v5548
      %v6076 = vadd.f32 %v6075, %v5557
      %v6077 = vadd.f32 %v6076, %v5566
      %v6078 = vadd.f32 %v6077, %v5575
      %v6079 = vadd.f32 %v6078, %v5584
      %v6080 = vadd.f32 %v6079, %v5593
      %v6081 = vadd.f32 %v6080, %v5602
      %v6082 = vadd.f32 %v6081, %v5611
      %v6083 = vadd.f32 %v6082, %v5620
      %v6084 = vadd.f32 %v6083, %v5629
      %v6085 = vadd.f32 %v6084, %v5638
      %v6086 = vadd.f32 %v6085, %v5647
      %v6087 = vadd.f32 %v6086, %v5656
      %v6088 = vadd.f32 %v6087, %v5665
      %v6089 = vadd.f32 %v6088, %v5674
      %v6090 = vadd.f32 %v6089, %v5683
      %v6091 = vadd.f32 %v6090, %v5692
      %v6092 = vadd.f32 %v6091, %v5701
      %v6093 = vadd.f32 %v6092, %v5710
      %v6094 = vadd.f32 %v6093, %v5719
      %v6095 = vadd.f32 %v6094, %v5728
      %v6096 = vadd.f32 %v6095, %v5737
      %v6097 = vadd.f32 %v6096, %v5746
      %v6098 = vadd.f32 %v6097, %v5755
      %v6099 = vadd.f32 %v6098, %v5764
      %v6100 = vadd.f32 %v6099, %v5773
      %v6101 = vrot.slane %v6100, 4
      %v6102 = vadd.f32 %v6100, %v6101
      %v6103 = vrot.slane %v6102, 2
      %v6104 = vadd.f32 %v6102, %v6103
      %v6105 = vrot.slane %v6104, 1
      %v6106 = vadd.f32 %v6104, %v6105
      %v6107 = vrcp.pop 256.0
      %v6108 = vmul.f32 %v5810, %v6107
      %v6109 = vmul.f32 %v5847, %v6107
      %v6110 = vmul.f32 %v5884, %v6107
      %v6111 = vmul.f32 %v5921, %v6107
      %v6112 = vmul.f32 %v5958, %v6107
      %v6113 = vmul.f32 %v5995, %v6107
      %v6114 = vmul.f32 %v6032, %v6107
      %v6115 = vmul.f32 %v6069, %v6107
      %v6116 = vmul.f32 %v6106, %v6107
      %v6117 = vld [vmem:[%s5] sm:$0xff]
      %v6118 = vld [vmem:[%s5 + $0x8] sm:$0x1]
      %v6121 = vlaneseq
      %v6122 = vshrl.u32 %v6121, 7
      %v6123 = vsub.s32 0, %v6122
      %v6124 = vrot.slane %v6117, %v6123
      %v6125 = vlaneseq
      %v6126 = vshrl.u32 %v6125, 7
      %v6127 = vsub.s32 1, %v6126
      %v6128 = vrot.slane %v6117, %v6127
      %v6129 = vlaneseq
      %v6130 = vshrl.u32 %v6129, 7
      %v6131 = vsub.s32 2, %v6130
      %v6132 = vrot.slane %v6117, %v6131
      %v6133 = vlaneseq
      %v6134 = vshrl.u32 %v6133, 7
      %v6135 = vsub.s32 3, %v6134
      %v6136 = vrot.slane %v6117, %v6135
      %v6137 = vlaneseq
      %v6138 = vshrl.u32 %v6137, 7
      %v6139 = vsub.s32 4, %v6138
      %v6140 = vrot.slane %v6117, %v6139
      %v6141 = vlaneseq
      %v6142 = vshrl.u32 %v6141, 7
      %v6143 = vsub.s32 5, %v6142
      %v6144 = vrot.slane %v6117, %v6143
      %v6145 = vlaneseq
      %v6146 = vshrl.u32 %v6145, 7
      %v6147 = vsub.s32 6, %v6146
      %v6148 = vrot.slane %v6117, %v6147
      %v6149 = vlaneseq
      %v6150 = vshrl.u32 %v6149, 7
      %v6151 = vsub.s32 7, %v6150
      %v6152 = vrot.slane %v6117, %v6151
      %v6153 = vlaneseq
      %v6154 = vshrl.u32 %v6153, 7
      %v6155 = vsub.s32 0, %v6154
      %v6156 = vrot.slane %v6118, %v6155
      %v6166 = vmul.f32 %v6108, %v6124
      %v6167 = vmul.f32 %v6109, %v6128
      %v6168 = vmul.f32 %v6110, %v6132
      %v6169 = vmul.f32 %v6111, %v6136
      %v6170 = vmul.f32 %v6112, %v6140
      %v6171 = vmul.f32 %v6113, %v6144
      %v6172 = vmul.f32 %v6114, %v6148
      %v6173 = vmul.f32 %v6115, %v6152
      %v6174 = vmul.f32 %v6116, %v6156
      %vm6175 = vcmask 1040384
      %v6176 = vsel %vm6175, %v6166, 0.0
      %v6177 = vsel %vm6175, %v6167, 0.0
      %v6178 = vadd.f32 %v6176, %v6177
      %v6179 = vsel %vm6175, %v6168, 0.0
      %v6180 = vadd.f32 %v6178, %v6179
      %v6181 = vsel %vm6175, %v6169, 0.0
      %v6182 = vadd.f32 %v6180, %v6181
      %v6183 = vsel %vm6175, %v6170, 0.0
      %v6184 = vadd.f32 %v6182, %v6183
      %v6185 = vsel %vm6175, %v6171, 0.0
      %v6186 = vadd.f32 %v6184, %v6185
      %v6187 = vsel %vm6175, %v6172, 0.0
      %v6188 = vadd.f32 %v6186, %v6187
      %v6189 = vsel %vm6175, %v6173, 0.0
      %v6190 = vadd.f32 %v6188, %v6189
      %v6191 = vsel %vm6175, %v6174, 0.0
      %v6192 = vadd.f32 %v6190, %v6191
      %6193 = vadd.xlane.f32.xlu0 %v6192
      %v6194 = vpop.xlane.xlu0 %6193
      %v6195 = vld [vmem:[#allocation6] sm:$0x1]
      %v6196 = vadd.f32 %v6194, %v6195
      %vm6197 = vcmask 0
      %6198 = vst.msk [vmem:[%s276] sm:$0x1] %vm6197, %v6196
      %p6199 = scmp.lt.s32.totalorder %s20, 1
      %s6200 = scalar_select %p6199, %s20, 1
      %s6201 = scalar_lea.vmem %s7, %s6200
      // Predicated region
      $region49: #{discriminator_forward.1} parent=47 // pred_check
        %p6202 = pneg %p190
      $region50: #{discriminator_forward.1} parent=47 // pred_check_branch
        %6204 = sbr.rel (%p6202) target = $region52
      $region51: #{discriminator_forward.1} parent=47 // pred_region
        _
      $region52: #{discriminator_forward.1} parent=47 // pred_fallthru
        _
    $region48: #{discriminator_forward.1} parent=5 // pred_fallthru
      _
    %p6205 = scmp.le.s32.totalorder 2, %s15
    // Predicated region
    $region53: #{discriminator_forward.1} parent=5 // pred_check
      %p6206 = pneg %p6205
    $region54: #{discriminator_forward.1} parent=5 // pred_check_branch
      %6208 = sbr.rel (%p6206) target = $region56
    $region55: #{discriminator_forward.1} parent=5 // pred_region
      %s6209 = ssub.s32 %s15, 2
      // Predicated region
      $region57: #{discriminator_forward.1} parent=55 // pred_check
        %p6210 = pneg %p196
      $region58: #{discriminator_forward.1} parent=55 // pred_check_branch
        %6212 = sbr.rel (%p6210) target = $region60
      $region59: #{discriminator_forward.1} parent=55 // pred_region
        %p6213 = scmp.lt.s32.totalorder %s21, 1
        %s6214 = scalar_select %p6213, %s21, 1
        %s6215 = scalar_lea.vmem %s7, %s6214
      $region60: #{discriminator_forward.1} parent=55 // pred_fallthru
        _
    $region56: #{discriminator_forward.1} parent=5 // pred_fallthru
      _
  $region6: #{discriminator_forward.1} parent=0 // loop_footer
    %s19 = sadd.s32 1, %s15
  $region7: #{discriminator_forward.1} parent=0 // loop_footer_branch
    %14 = sbr.rel target = $region3
  $region8: #{discriminator_forward.1} parent=0 // loop_exit
    _

</llo_original>
